<compile_context>
chip_gen: v5e
topology: v5e:2x2
jax: 0.10.0
libtpu: 0.0.40
codegen_flags: <defaults>
</compile_context>

<pallas_src>
import functools

import jax
import jax.numpy as jnp
from jax.experimental import pallas as pl
from jax.experimental.pallas import tpu as pltpu


def _lcagcn_kernel(T, S, x_ref, wsf_ref, bsf_ref, wtm_ref, bcat_ref,
                   wes_ref, bef_ref, wa1_ref, ba1_ref, wa2_ref, ba2_ref,
                   feat_ref):
    M = x_ref.shape[0]          # B * S rows (B batch elements per grid step)
    B = M // S

    x = x_ref[...]                                                 # (M, 8) f32

    # conv_spatial (1x1, 3->128, in-channels zero-padded to 8) + BN1 + ReLU
    h = jnp.maximum(
        jnp.dot(x, wsf_ref[...], preferred_element_type=jnp.float32)
        + bsf_ref[...], 0.0)                                       # (M, 128)

    # temporal index of every row (row = b*S + v*T + t  ->  row % T == t);
    # boundary masks built ONCE per distinct shift d, reused by both stages.
    row_t = jax.lax.broadcasted_iota(jnp.int32, (M, 1), 0) % T
    masks = {d: ((row_t + d >= 0) & (row_t + d < T)).astype(jnp.float32)
             for d in range(-4, 5) if d != 0}

    def tconv(inp, w_ref, K):
        # Temporal (K,1) 'same' conv as ONE stacked matmul: lane-concat the K
        # shifted/masked slabs -> (M, K*128) bf16 and do a single dot with the
        # pre-stacked (K*128, Cout) weight.  MXU-internal accumulation removes
        # the K-1 explicit f32 accumulator adds; on v6e/v7x the deep (>=256)
        # contraction halves the LHS pushes.  Rolls are f32 (portable); the
        # mask is fused into the single per-shift bf16 cast (also zeroes any
        # wrap-around across joint/batch boundaries, which makes the batch
        # stacking safe).
        P = K // 2
        slabs = []
        for k in range(K):
            d = k - P
            if d == 0:
                slabs.append(inp.astype(jnp.bfloat16))
            else:
                rolled = pltpu.roll(inp, shift=(-d) % M, axis=0)
                slabs.append((rolled * masks[d]).astype(jnp.bfloat16))
        stacked = jnp.concatenate(slabs, axis=1)                   # (M, K*128)
        return jnp.dot(stacked, w_ref[...],
                       preferred_element_type=jnp.float32)

    # conv_t1 (k=3) + conv_t2 (k=9) as ONE merged 9-tap weight: output cols
    # 0..63 hold conv_t1 (its taps live at merged taps 3..5), cols 64..127
    # hold conv_t2, so one tconv == torch.cat([conv_t1(h), conv_t2(h)], dim=1).
    cat = tconv(h, wtm_ref, 9) + bcat_ref[...]                     # (M, 128)

    # conv_extra (k=3) + folded BN2 + ReLU + residual
    y = jnp.maximum(tconv(cat, wes_ref, 3) + bef_ref[...], 0.0) + cat

    # joint attention: 1x1 (128->64, bf16 MXU) -> ReLU -> 1x1 (64->1) -> sigmoid
    a1 = jnp.maximum(
        jnp.dot(y.astype(jnp.bfloat16), wa1_ref[...],
                preferred_element_type=jnp.float32)
        + ba1_ref[...], 0.0)                                       # (M, 64)
    logit = jnp.sum(a1 * wa2_ref[...], axis=-1, keepdims=True) + ba2_ref[...]
    z = y * jax.nn.sigmoid(logit)                                  # (M, 128)

    # AdaptiveAvgPool2d((1,1)): per-batch-element mean over its S = V*T rows.
    inv_s = 1.0 / S
    if S % 8 == 0:
        feat = jnp.sum(z.reshape(B, S, 128), axis=1) * inv_s       # layout-free
    else:
        feat = jnp.concatenate(
            [jnp.sum(z[b * S:(b + 1) * S], axis=0, keepdims=True)
             for b in range(B)], axis=0) * inv_s
    feat_ref[...] = feat.astype(feat_ref.dtype)


def _prepare_kernel_params(p):
    """Pad / merge / pre-stack / cast the natural folded params into kernel operands."""
    wsf8 = jnp.pad(p['wsf'], ((0, 5), (0, 0)))                 # (8, 128) f32
    bsf = p['bsf'][None, :]
    # merged 9-tap temporal weight: wt2 in output cols 64..127 (all taps),
    # wt1 in cols 0..63 at taps 3..5 (its d = -1,0,1 offsets); pre-stacked
    # tap-major to (9*128, 128) bf16 so the kernel does ONE stacked dot.
    wtm = jnp.zeros((9, 128, 128), jnp.float32)
    wtm = wtm.at[:, :, 64:].set(p['wt2'])
    wtm = wtm.at[3:6, :, :64].set(p['wt1'])
    wtm = wtm.reshape(9 * 128, 128).astype(jnp.bfloat16)
    bcat = jnp.concatenate([p['bt1'], p['bt2']])[None, :]
    wes = p['wes'].reshape(3 * 128, 128).astype(jnp.bfloat16)  # stacked 3-tap
    bef = p['bef'][None, :]
    wa1 = p['wa1'].astype(jnp.bfloat16)                        # bf16 MXU operand
    return [wsf8, bsf, wtm, bcat, wes, bef,
            wa1, p['ba1'][None, :], p['wa2'][None, :], p['ba2'][None, :]]


def lcagcn_forward(x_nchw, params, batch_block=8, vmem_act_budget=24 << 20):
    """x_nchw: (N, 3, T, V) float32. Returns (logits (N, num_class), features (N, 128))."""
    N, C, T, V = x_nchw.shape
    assert C == 3
    S = V * T

    # Batch elements per grid step: cap by (a) the requested block, (b) a VMEM
    # activation budget (~16 live (S,128) f32-equivalent slabs per element; at
    # realistic T*V this keeps v5e's / v7x's tighter scoped VMEM from spilling)
    # and (c) >= 2 grid steps when N >= 2 so the "parallel" batch axis can
    # actually shard across v7x's two TensorCores.
    per_elem_bytes = 16 * S * 128 * 4
    b_vmem = max(1, vmem_act_budget // per_elem_bytes)
    B = max(1, min(batch_block, int(b_vmem), N))
    if N >= 2:
        B = min(B, (N + 1) // 2)
    Np = pl.cdiv(N, B) * B                      # pad batch up to a multiple of B

    x = jnp.transpose(x_nchw, (0, 3, 2, 1)).reshape(N, S, 3)     # channels last
    x = jnp.pad(x, ((0, Np - N), (0, 0), (0, 5)))                # batch pad + chan 3->8
    x_flat = x.reshape(Np * S, 8)

    kparams = _prepare_kernel_params(params)

    def const_spec(p):
        nd = p.ndim
        return pl.BlockSpec(p.shape, lambda n, _nd=nd: (0,) * _nd)

    in_specs = ([pl.BlockSpec((B * S, 8), lambda n: (n, 0))]
                + [const_spec(p) for p in kparams])
    # lane-dense (B, 128) feature slab per step; leading grid dim is squeezed
    # so the last two block dims always equal the full array dims (any B).
    out_specs = pl.BlockSpec((None, B, 128), lambda n: (n, 0, 0))
    out_shape = jax.ShapeDtypeStruct((Np // B, B, 128), jnp.float32)

    kernel = functools.partial(_lcagcn_kernel, T, S)
    feat = pl.pallas_call(
        kernel,
        out_shape=out_shape,
        grid_spec=pltpu.PrefetchScalarGridSpec(
            num_scalar_prefetch=0,
            grid=(Np // B,),
            in_specs=in_specs,
            out_specs=out_specs),
        compiler_params=pltpu.CompilerParams(
            dimension_semantics=("parallel",),      # batch axis is independent
            vmem_limit_bytes=32 * 1024 * 1024),     # raise v5e's 16 MiB default
    )(x_flat, *kparams)

    feat = feat.reshape(Np, 128)[:N]
    # fc head (128->64->num_class) in plain XLA: M=1-per-row matmuls are MXU
    # degenerates in-kernel and the 10-lane output forces masked stores.
    # TODO(synk): Dropout(0.5) is identity in inference; train-mode RNG not implemented.
    f1 = jax.nn.relu(feat @ params['w1'] + params['b1'])
    out = f1 @ params['w2'] + params['b2']
    return out, feat


def init_params(key, num_class=10):
    """Deterministic synthetic parameters, with eval-mode BatchNorm folded in."""
    ks = jax.random.split(key, 24)
    eps = 1e-5

    def nrm(k, shape, fan_in):
        return jax.random.normal(k, shape, jnp.float32) / jnp.sqrt(fan_in)

    # conv_spatial: Conv2d(3, 128, 1) + bn1 (folded)
    ws = nrm(ks[0], (3, 128), 3.0)
    bs = nrm(ks[1], (128,), 3.0)
    g1 = 1.0 + 0.1 * jax.random.normal(ks[2], (128,), jnp.float32)
    b1n = 0.1 * jax.random.normal(ks[3], (128,), jnp.float32)
    m1 = 0.1 * jax.random.normal(ks[4], (128,), jnp.float32)
    v1 = jax.random.uniform(ks[5], (128,), jnp.float32, 0.5, 1.5)
    s1 = g1 / jnp.sqrt(v1 + eps)
    t1 = b1n - m1 * s1
    wsf = ws * s1[None, :]
    bsf = bs * s1 + t1

    # conv_t1: Conv2d(128, 64, (3,1)); conv_t2: Conv2d(128, 64, (9,1))
    wt1 = nrm(ks[6], (3, 128, 64), 128.0 * 3)
    bt1 = nrm(ks[7], (64,), 128.0 * 3)
    wt2 = nrm(ks[8], (9, 128, 64), 128.0 * 9)
    bt2 = nrm(ks[9], (64,), 128.0 * 9)

    # conv_extra: Conv2d(128, 128, (3,1)) + bn2 (folded)
    we = nrm(ks[10], (3, 128, 128), 128.0 * 3)
    be = nrm(ks[11], (128,), 128.0 * 3)
    g2 = 1.0 + 0.1 * jax.random.normal(ks[12], (128,), jnp.float32)
    b2n = 0.1 * jax.random.normal(ks[13], (128,), jnp.float32)
    m2 = 0.1 * jax.random.normal(ks[14], (128,), jnp.float32)
    v2 = jax.random.uniform(ks[15], (128,), jnp.float32, 0.5, 1.5)
    s2 = g2 / jnp.sqrt(v2 + eps)
    t2 = b2n - m2 * s2
    wes = we * s2[None, None, :]
    bef = be * s2 + t2

    # joint_attention: Conv2d(128,64,1) -> ReLU -> Conv2d(64,1,1) -> Sigmoid
    wa1 = nrm(ks[16], (128, 64), 128.0)
    ba1 = nrm(ks[17], (64,), 128.0)
    wa2 = nrm(ks[18], (64,), 64.0)
    ba2 = nrm(ks[19], (1,), 64.0)

    # fc1: Linear(128, 64); fc2: Linear(64, num_class)
    w1 = nrm(ks[20], (128, 64), 128.0)
    b1 = nrm(ks[21], (64,), 128.0)
    w2 = nrm(ks[22], (64, num_class), 64.0)
    b2 = nrm(ks[23], (num_class,), 64.0)

    return dict(wsf=wsf, bsf=bsf, wt1=wt1, bt1=bt1, wt2=wt2, bt2=bt2,
                wes=wes, bef=bef, wa1=wa1, ba1=ba1, wa2=wa2, ba2=ba2,
                w1=w1, b1=b1, w2=w2, b2=b2)


def lcagcn_reference(x_nchw, p):
    """Pure-JAX f32 reference (pad-based temporal convs), same folded params."""
    N, _, T, V = x_nchw.shape
    x = jnp.transpose(x_nchw, (0, 3, 2, 1))  # (N, V, T, 3)
    h = jax.nn.relu(jnp.einsum('nvtc,cd->nvtd', x, p['wsf']) + p['bsf'])

    def tconv(inp, w):
        K = w.shape[0]
        P = K // 2
        xp = jnp.pad(inp, ((0, 0), (0, 0), (P, P), (0, 0)))
        out = jnp.zeros(inp.shape[:3] + (w.shape[2],), jnp.float32)
        for k in range(K):
            out = out + jnp.einsum('nvtc,cd->nvtd', xp[:, :, k:k + T, :], w[k])
        return out

    x1 = tconv(h, p['wt1']) + p['bt1']
    x2 = tconv(h, p['wt2']) + p['bt2']
    cat = jnp.concatenate([x1, x2], axis=-1)
    ex = tconv(cat, p['wes']) + p['bef']
    y = jax.nn.relu(ex) + cat
    a1 = jax.nn.relu(jnp.einsum('nvtc,cd->nvtd', y, p['wa1']) + p['ba1'])
    logit = jnp.sum(a1 * p['wa2'], axis=-1, keepdims=True) + p['ba2']
    z = y * jax.nn.sigmoid(logit)
    feat = jnp.mean(z, axis=(1, 2))
    f1 = jax.nn.relu(feat @ p['w1'] + p['b1'])
    out = f1 @ p['w2'] + p['b2']
    return out, feat


if __name__ == "__main__":
    key = jax.random.PRNGKey(0)
    kx, kp = jax.random.split(key)

    N, T, V, num_class = 2, 16, 20, 10   # num_point=20 joints, small T
    x = jax.random.normal(kx, (N, 3, T, V), jnp.float32)
    params = init_params(kp, num_class=num_class)

    out, feat = jax.block_until_ready(lcagcn_forward(x, params))

    ref_out, ref_feat = lcagcn_reference(x, params)
    assert out.shape == (N, num_class) and feat.shape == (N, 128)
    assert jnp.allclose(out, ref_out, atol=5e-2, rtol=5e-2)
    assert jnp.allclose(feat, ref_feat, atol=5e-2, rtol=5e-2)

    print("KERNEL_OK")
</pallas_src>

<mosaic_0001>
module attributes {stable_mosaic.version = 11 : i64} {
  func.func @_lcagcn_kernel(%arg0: i32, %arg1: memref<320x8xf32, #tpu.memory_space<vmem>>, %arg2: memref<8x128xf32, #tpu.memory_space<vmem>>, %arg3: memref<1x128xf32, #tpu.memory_space<vmem>>, %arg4: memref<1152x128xbf16, #tpu.memory_space<vmem>>, %arg5: memref<1x128xf32, #tpu.memory_space<vmem>>, %arg6: memref<384x128xbf16, #tpu.memory_space<vmem>>, %arg7: memref<1x128xf32, #tpu.memory_space<vmem>>, %arg8: memref<128x64xbf16, #tpu.memory_space<vmem>>, %arg9: memref<1x64xf32, #tpu.memory_space<vmem>>, %arg10: memref<1x64xf32, #tpu.memory_space<vmem>>, %arg11: memref<1x1xf32, #tpu.memory_space<vmem>>, %arg12: memref<1x1x128xf32, #tpu.memory_space<vmem>>) attributes {dimension_semantics = [#tpu.dimension_semantics<parallel>], iteration_bounds = array<i64: 2>, scalar_prefetch = 0 : i64, scratch_operands = 0 : i64, tpu.core_type = #tpu.core_type<tc>, window_params = [{transform_indices = @transform_0, window_bounds = array<i64: 320, 8>}, {pipeline_mode = #tpu.pipeline_mode<synchronous>, transform_indices = @transform_1, window_bounds = array<i64: 8, 128>}, {pipeline_mode = #tpu.pipeline_mode<synchronous>, transform_indices = @transform_2, window_bounds = array<i64: 1, 128>}, {pipeline_mode = #tpu.pipeline_mode<synchronous>, transform_indices = @transform_3, window_bounds = array<i64: 1152, 128>}, {pipeline_mode = #tpu.pipeline_mode<synchronous>, transform_indices = @transform_4, window_bounds = array<i64: 1, 128>}, {pipeline_mode = #tpu.pipeline_mode<synchronous>, transform_indices = @transform_5, window_bounds = array<i64: 384, 128>}, {pipeline_mode = #tpu.pipeline_mode<synchronous>, transform_indices = @transform_6, window_bounds = array<i64: 1, 128>}, {pipeline_mode = #tpu.pipeline_mode<synchronous>, transform_indices = @transform_7, window_bounds = array<i64: 128, 64>}, {pipeline_mode = #tpu.pipeline_mode<synchronous>, transform_indices = @transform_8, window_bounds = array<i64: 1, 64>}, {pipeline_mode = #tpu.pipeline_mode<synchronous>, transform_indices = @transform_9, window_bounds = array<i64: 1, 64>}, {pipeline_mode = #tpu.pipeline_mode<synchronous>, transform_indices = @transform_10, window_bounds = array<i64: 1, 1>}, {transform_indices = @transform_11, window_bounds = array<i64: 1, 1, 128>}]} {
    %c0 = arith.constant 0 : index
    %c0_0 = arith.constant 0 : index
    %0 = vector.load %arg1[%c0, %c0_0] : memref<320x8xf32, #tpu.memory_space<vmem>>, vector<320x8xf32>
    %c0_1 = arith.constant 0 : index
    %c0_2 = arith.constant 0 : index
    %1 = vector.load %arg2[%c0_1, %c0_2] : memref<8x128xf32, #tpu.memory_space<vmem>>, vector<8x128xf32>
    %cst = arith.constant dense<0.000000e+00> : vector<320x128xf32>
    %2 = tpu.matmul %0, %1, %cst {dimension_numbers = #tpu.dot_dimension_numbers<[1], [0], [0], [1], [0, 0, 1, 1], [], []>} : vector<320x8xf32>, vector<8x128xf32>, vector<320x128xf32> -> vector<320x128xf32>
    %c0_3 = arith.constant 0 : index
    %c0_4 = arith.constant 0 : index
    %3 = vector.load %arg3[%c0_3, %c0_4] : memref<1x128xf32, #tpu.memory_space<vmem>>, vector<1x128xf32>
    %4 = vector.broadcast %3 : vector<1x128xf32> to vector<320x128xf32>
    %5 = arith.addf %2, %4 : vector<320x128xf32>
    %cst_5 = arith.constant 0.000000e+00 : f32
    %6 = vector.broadcast %cst_5 : f32 to vector<320x128xf32>
    %7 = arith.maximumf %5, %6 : vector<320x128xf32>
    %8 = tpu.iota {dimensions = array<i32: 0>} : vector<320x1xi32>
    %c16_i32 = arith.constant 16 : i32
    %c0_i32 = arith.constant 0 : i32
    %9 = arith.cmpi eq, %c16_i32, %c0_i32 : i32
    %c1_i32 = arith.constant 1 : i32
    %10 = arith.select %9, %c1_i32, %c16_i32 : i32
    %11 = vector.broadcast %10 : i32 to vector<320x1xi32>
    %12 = arith.remsi %8, %11 : vector<320x1xi32>
    %c0_i32_6 = arith.constant 0 : i32
    %13 = vector.broadcast %c0_i32_6 : i32 to vector<320x1xi32>
    %14 = arith.cmpi ne, %12, %13 : vector<320x1xi32>
    %c0_i32_7 = arith.constant 0 : i32
    %15 = vector.broadcast %c0_i32_7 : i32 to vector<320x1xi32>
    %16 = arith.cmpi slt, %12, %15 : vector<320x1xi32>
    %c0_i32_8 = arith.constant 0 : i32
    %17 = arith.cmpi slt, %10, %c0_i32_8 : i32
    %18 = vector.broadcast %17 : i1 to vector<320x1xi1>
    %19 = vector.broadcast %18 : vector<320x1xi1> to vector<320x1xi1>
    %20 = arith.xori %16, %19 : vector<320x1xi1>
    %21 = arith.andi %20, %14 : vector<320x1xi1>
    %22 = vector.broadcast %10 : i32 to vector<320x1xi32>
    %23 = arith.addi %12, %22 : vector<320x1xi32>
    %24 = arith.select %21, %23, %12 : vector<320x1xi1>, vector<320x1xi32>
    %c-4_i32 = arith.constant -4 : i32
    %25 = vector.broadcast %c-4_i32 : i32 to vector<320x1xi32>
    %26 = arith.addi %24, %25 : vector<320x1xi32>
    %c0_i32_9 = arith.constant 0 : i32
    %27 = vector.broadcast %c0_i32_9 : i32 to vector<320x1xi32>
    %28 = arith.cmpi sge, %26, %27 : vector<320x1xi32>
    %c-4_i32_10 = arith.constant -4 : i32
    %29 = vector.broadcast %c-4_i32_10 : i32 to vector<320x1xi32>
    %30 = arith.addi %24, %29 : vector<320x1xi32>
    %c16_i32_11 = arith.constant 16 : i32
    %31 = vector.broadcast %c16_i32_11 : i32 to vector<320x1xi32>
    %32 = arith.cmpi slt, %30, %31 : vector<320x1xi32>
    %33 = arith.andi %28, %32 : vector<320x1xi1>
    %34 = arith.extui %33 : vector<320x1xi1> to vector<320x1xi32>
    %35 = arith.sitofp %34 : vector<320x1xi32> to vector<320x1xf32>
    %c-3_i32 = arith.constant -3 : i32
    %36 = vector.broadcast %c-3_i32 : i32 to vector<320x1xi32>
    %37 = arith.addi %24, %36 : vector<320x1xi32>
    %c0_i32_12 = arith.constant 0 : i32
    %38 = vector.broadcast %c0_i32_12 : i32 to vector<320x1xi32>
    %39 = arith.cmpi sge, %37, %38 : vector<320x1xi32>
    %c-3_i32_13 = arith.constant -3 : i32
    %40 = vector.broadcast %c-3_i32_13 : i32 to vector<320x1xi32>
    %41 = arith.addi %24, %40 : vector<320x1xi32>
    %c16_i32_14 = arith.constant 16 : i32
    %42 = vector.broadcast %c16_i32_14 : i32 to vector<320x1xi32>
    %43 = arith.cmpi slt, %41, %42 : vector<320x1xi32>
    %44 = arith.andi %39, %43 : vector<320x1xi1>
    %45 = arith.extui %44 : vector<320x1xi1> to vector<320x1xi32>
    %46 = arith.sitofp %45 : vector<320x1xi32> to vector<320x1xf32>
    %c-2_i32 = arith.constant -2 : i32
    %47 = vector.broadcast %c-2_i32 : i32 to vector<320x1xi32>
    %48 = arith.addi %24, %47 : vector<320x1xi32>
    %c0_i32_15 = arith.constant 0 : i32
    %49 = vector.broadcast %c0_i32_15 : i32 to vector<320x1xi32>
    %50 = arith.cmpi sge, %48, %49 : vector<320x1xi32>
    %c-2_i32_16 = arith.constant -2 : i32
    %51 = vector.broadcast %c-2_i32_16 : i32 to vector<320x1xi32>
    %52 = arith.addi %24, %51 : vector<320x1xi32>
    %c16_i32_17 = arith.constant 16 : i32
    %53 = vector.broadcast %c16_i32_17 : i32 to vector<320x1xi32>
    %54 = arith.cmpi slt, %52, %53 : vector<320x1xi32>
    %55 = arith.andi %50, %54 : vector<320x1xi1>
    %56 = arith.extui %55 : vector<320x1xi1> to vector<320x1xi32>
    %57 = arith.sitofp %56 : vector<320x1xi32> to vector<320x1xf32>
    %c-1_i32 = arith.constant -1 : i32
    %58 = vector.broadcast %c-1_i32 : i32 to vector<320x1xi32>
    %59 = arith.addi %24, %58 : vector<320x1xi32>
    %c0_i32_18 = arith.constant 0 : i32
    %60 = vector.broadcast %c0_i32_18 : i32 to vector<320x1xi32>
    %61 = arith.cmpi sge, %59, %60 : vector<320x1xi32>
    %c-1_i32_19 = arith.constant -1 : i32
    %62 = vector.broadcast %c-1_i32_19 : i32 to vector<320x1xi32>
    %63 = arith.addi %24, %62 : vector<320x1xi32>
    %c16_i32_20 = arith.constant 16 : i32
    %64 = vector.broadcast %c16_i32_20 : i32 to vector<320x1xi32>
    %65 = arith.cmpi slt, %63, %64 : vector<320x1xi32>
    %66 = arith.andi %61, %65 : vector<320x1xi1>
    %67 = arith.extui %66 : vector<320x1xi1> to vector<320x1xi32>
    %68 = arith.sitofp %67 : vector<320x1xi32> to vector<320x1xf32>
    %c1_i32_21 = arith.constant 1 : i32
    %69 = vector.broadcast %c1_i32_21 : i32 to vector<320x1xi32>
    %70 = arith.addi %24, %69 : vector<320x1xi32>
    %c0_i32_22 = arith.constant 0 : i32
    %71 = vector.broadcast %c0_i32_22 : i32 to vector<320x1xi32>
    %72 = arith.cmpi sge, %70, %71 : vector<320x1xi32>
    %c1_i32_23 = arith.constant 1 : i32
    %73 = vector.broadcast %c1_i32_23 : i32 to vector<320x1xi32>
    %74 = arith.addi %24, %73 : vector<320x1xi32>
    %c16_i32_24 = arith.constant 16 : i32
    %75 = vector.broadcast %c16_i32_24 : i32 to vector<320x1xi32>
    %76 = arith.cmpi slt, %74, %75 : vector<320x1xi32>
    %77 = arith.andi %72, %76 : vector<320x1xi1>
    %78 = arith.extui %77 : vector<320x1xi1> to vector<320x1xi32>
    %79 = arith.sitofp %78 : vector<320x1xi32> to vector<320x1xf32>
    %c2_i32 = arith.constant 2 : i32
    %80 = vector.broadcast %c2_i32 : i32 to vector<320x1xi32>
    %81 = arith.addi %24, %80 : vector<320x1xi32>
    %c0_i32_25 = arith.constant 0 : i32
    %82 = vector.broadcast %c0_i32_25 : i32 to vector<320x1xi32>
    %83 = arith.cmpi sge, %81, %82 : vector<320x1xi32>
    %c2_i32_26 = arith.constant 2 : i32
    %84 = vector.broadcast %c2_i32_26 : i32 to vector<320x1xi32>
    %85 = arith.addi %24, %84 : vector<320x1xi32>
    %c16_i32_27 = arith.constant 16 : i32
    %86 = vector.broadcast %c16_i32_27 : i32 to vector<320x1xi32>
    %87 = arith.cmpi slt, %85, %86 : vector<320x1xi32>
    %88 = arith.andi %83, %87 : vector<320x1xi1>
    %89 = arith.extui %88 : vector<320x1xi1> to vector<320x1xi32>
    %90 = arith.sitofp %89 : vector<320x1xi32> to vector<320x1xf32>
    %c3_i32 = arith.constant 3 : i32
    %91 = vector.broadcast %c3_i32 : i32 to vector<320x1xi32>
    %92 = arith.addi %24, %91 : vector<320x1xi32>
    %c0_i32_28 = arith.constant 0 : i32
    %93 = vector.broadcast %c0_i32_28 : i32 to vector<320x1xi32>
    %94 = arith.cmpi sge, %92, %93 : vector<320x1xi32>
    %c3_i32_29 = arith.constant 3 : i32
    %95 = vector.broadcast %c3_i32_29 : i32 to vector<320x1xi32>
    %96 = arith.addi %24, %95 : vector<320x1xi32>
    %c16_i32_30 = arith.constant 16 : i32
    %97 = vector.broadcast %c16_i32_30 : i32 to vector<320x1xi32>
    %98 = arith.cmpi slt, %96, %97 : vector<320x1xi32>
    %99 = arith.andi %94, %98 : vector<320x1xi1>
    %100 = arith.extui %99 : vector<320x1xi1> to vector<320x1xi32>
    %101 = arith.sitofp %100 : vector<320x1xi32> to vector<320x1xf32>
    %c4_i32 = arith.constant 4 : i32
    %102 = vector.broadcast %c4_i32 : i32 to vector<320x1xi32>
    %103 = arith.addi %24, %102 : vector<320x1xi32>
    %c0_i32_31 = arith.constant 0 : i32
    %104 = vector.broadcast %c0_i32_31 : i32 to vector<320x1xi32>
    %105 = arith.cmpi sge, %103, %104 : vector<320x1xi32>
    %c4_i32_32 = arith.constant 4 : i32
    %106 = vector.broadcast %c4_i32_32 : i32 to vector<320x1xi32>
    %107 = arith.addi %24, %106 : vector<320x1xi32>
    %c16_i32_33 = arith.constant 16 : i32
    %108 = vector.broadcast %c16_i32_33 : i32 to vector<320x1xi32>
    %109 = arith.cmpi slt, %107, %108 : vector<320x1xi32>
    %110 = arith.andi %105, %109 : vector<320x1xi1>
    %111 = arith.extui %110 : vector<320x1xi1> to vector<320x1xi32>
    %112 = arith.sitofp %111 : vector<320x1xi32> to vector<320x1xf32>
    %c4_i32_34 = arith.constant 4 : i32
    %113 = tpu.dynamic_rotate %7 by %c4_i32_34 dim 0 : vector<320x128xf32>, i32 -> vector<320x128xf32>
    %114 = vector.broadcast %35 : vector<320x1xf32> to vector<320x128xf32>
    %115 = arith.mulf %113, %114 : vector<320x128xf32>
    %116 = arith.truncf %115 : vector<320x128xf32> to vector<320x128xbf16>
    %c3_i32_35 = arith.constant 3 : i32
    %117 = tpu.dynamic_rotate %7 by %c3_i32_35 dim 0 : vector<320x128xf32>, i32 -> vector<320x128xf32>
    %118 = vector.broadcast %46 : vector<320x1xf32> to vector<320x128xf32>
    %119 = arith.mulf %117, %118 : vector<320x128xf32>
    %120 = arith.truncf %119 : vector<320x128xf32> to vector<320x128xbf16>
    %c2_i32_36 = arith.constant 2 : i32
    %121 = tpu.dynamic_rotate %7 by %c2_i32_36 dim 0 : vector<320x128xf32>, i32 -> vector<320x128xf32>
    %122 = vector.broadcast %57 : vector<320x1xf32> to vector<320x128xf32>
    %123 = arith.mulf %121, %122 : vector<320x128xf32>
    %124 = arith.truncf %123 : vector<320x128xf32> to vector<320x128xbf16>
    %c1_i32_37 = arith.constant 1 : i32
    %125 = tpu.dynamic_rotate %7 by %c1_i32_37 dim 0 : vector<320x128xf32>, i32 -> vector<320x128xf32>
    %126 = vector.broadcast %68 : vector<320x1xf32> to vector<320x128xf32>
    %127 = arith.mulf %125, %126 : vector<320x128xf32>
    %128 = arith.truncf %127 : vector<320x128xf32> to vector<320x128xbf16>
    %129 = arith.truncf %7 : vector<320x128xf32> to vector<320x128xbf16>
    %c319_i32 = arith.constant 319 : i32
    %130 = tpu.dynamic_rotate %7 by %c319_i32 dim 0 : vector<320x128xf32>, i32 -> vector<320x128xf32>
    %131 = vector.broadcast %79 : vector<320x1xf32> to vector<320x128xf32>
    %132 = arith.mulf %130, %131 : vector<320x128xf32>
    %133 = arith.truncf %132 : vector<320x128xf32> to vector<320x128xbf16>
    %c318_i32 = arith.constant 318 : i32
    %134 = tpu.dynamic_rotate %7 by %c318_i32 dim 0 : vector<320x128xf32>, i32 -> vector<320x128xf32>
    %135 = vector.broadcast %90 : vector<320x1xf32> to vector<320x128xf32>
    %136 = arith.mulf %134, %135 : vector<320x128xf32>
    %137 = arith.truncf %136 : vector<320x128xf32> to vector<320x128xbf16>
    %c317_i32 = arith.constant 317 : i32
    %138 = tpu.dynamic_rotate %7 by %c317_i32 dim 0 : vector<320x128xf32>, i32 -> vector<320x128xf32>
    %139 = vector.broadcast %101 : vector<320x1xf32> to vector<320x128xf32>
    %140 = arith.mulf %138, %139 : vector<320x128xf32>
    %141 = arith.truncf %140 : vector<320x128xf32> to vector<320x128xbf16>
    %c316_i32 = arith.constant 316 : i32
    %142 = tpu.dynamic_rotate %7 by %c316_i32 dim 0 : vector<320x128xf32>, i32 -> vector<320x128xf32>
    %143 = vector.broadcast %112 : vector<320x1xf32> to vector<320x128xf32>
    %144 = arith.mulf %142, %143 : vector<320x128xf32>
    %145 = arith.truncf %144 : vector<320x128xf32> to vector<320x128xbf16>
    %146 = tpu.concatenate %116, %120, %124, %128, %129, %133, %137, %141, %145 in 1 : vector<320x128xbf16>, vector<320x128xbf16>, vector<320x128xbf16>, vector<320x128xbf16>, vector<320x128xbf16>, vector<320x128xbf16>, vector<320x128xbf16>, vector<320x128xbf16>, vector<320x128xbf16> -> vector<320x1152xbf16>
    %c0_38 = arith.constant 0 : index
    %c0_39 = arith.constant 0 : index
    %147 = vector.load %arg4[%c0_38, %c0_39] : memref<1152x128xbf16, #tpu.memory_space<vmem>>, vector<1152x128xbf16>
    %cst_40 = arith.constant dense<0.000000e+00> : vector<320x128xf32>
    %148 = tpu.matmul %146, %147, %cst_40 {dimension_numbers = #tpu.dot_dimension_numbers<[1], [0], [0], [1], [0, 0, 1, 1], [], []>} : vector<320x1152xbf16>, vector<1152x128xbf16>, vector<320x128xf32> -> vector<320x128xf32>
    %c0_41 = arith.constant 0 : index
    %c0_42 = arith.constant 0 : index
    %149 = vector.load %arg5[%c0_41, %c0_42] : memref<1x128xf32, #tpu.memory_space<vmem>>, vector<1x128xf32>
    %150 = vector.broadcast %149 : vector<1x128xf32> to vector<320x128xf32>
    %151 = arith.addf %148, %150 : vector<320x128xf32>
    %c1_i32_43 = arith.constant 1 : i32
    %152 = tpu.dynamic_rotate %151 by %c1_i32_43 dim 0 : vector<320x128xf32>, i32 -> vector<320x128xf32>
    %153 = vector.broadcast %68 : vector<320x1xf32> to vector<320x128xf32>
    %154 = arith.mulf %152, %153 : vector<320x128xf32>
    %155 = arith.truncf %154 : vector<320x128xf32> to vector<320x128xbf16>
    %156 = arith.truncf %151 : vector<320x128xf32> to vector<320x128xbf16>
    %c319_i32_44 = arith.constant 319 : i32
    %157 = tpu.dynamic_rotate %151 by %c319_i32_44 dim 0 : vector<320x128xf32>, i32 -> vector<320x128xf32>
    %158 = vector.broadcast %79 : vector<320x1xf32> to vector<320x128xf32>
    %159 = arith.mulf %157, %158 : vector<320x128xf32>
    %160 = arith.truncf %159 : vector<320x128xf32> to vector<320x128xbf16>
    %161 = tpu.concatenate %155, %156, %160 in 1 : vector<320x128xbf16>, vector<320x128xbf16>, vector<320x128xbf16> -> vector<320x384xbf16>
    %c0_45 = arith.constant 0 : index
    %c0_46 = arith.constant 0 : index
    %162 = vector.load %arg6[%c0_45, %c0_46] : memref<384x128xbf16, #tpu.memory_space<vmem>>, vector<384x128xbf16>
    %cst_47 = arith.constant dense<0.000000e+00> : vector<320x128xf32>
    %163 = tpu.matmul %161, %162, %cst_47 {dimension_numbers = #tpu.dot_dimension_numbers<[1], [0], [0], [1], [0, 0, 1, 1], [], []>} : vector<320x384xbf16>, vector<384x128xbf16>, vector<320x128xf32> -> vector<320x128xf32>
    %c0_48 = arith.constant 0 : index
    %c0_49 = arith.constant 0 : index
    %164 = vector.load %arg7[%c0_48, %c0_49] : memref<1x128xf32, #tpu.memory_space<vmem>>, vector<1x128xf32>
    %165 = vector.broadcast %164 : vector<1x128xf32> to vector<320x128xf32>
    %166 = arith.addf %163, %165 : vector<320x128xf32>
    %cst_50 = arith.constant 0.000000e+00 : f32
    %167 = vector.broadcast %cst_50 : f32 to vector<320x128xf32>
    %168 = arith.maximumf %166, %167 : vector<320x128xf32>
    %169 = arith.addf %168, %151 : vector<320x128xf32>
    %170 = arith.truncf %169 : vector<320x128xf32> to vector<320x128xbf16>
    %c0_51 = arith.constant 0 : index
    %c0_52 = arith.constant 0 : index
    %171 = vector.load %arg8[%c0_51, %c0_52] : memref<128x64xbf16, #tpu.memory_space<vmem>>, vector<128x64xbf16>
    %cst_53 = arith.constant dense<0.000000e+00> : vector<320x64xf32>
    %172 = tpu.matmul %170, %171, %cst_53 {dimension_numbers = #tpu.dot_dimension_numbers<[1], [0], [0], [1], [0, 0, 1, 1], [], []>} : vector<320x128xbf16>, vector<128x64xbf16>, vector<320x64xf32> -> vector<320x64xf32>
    %c0_54 = arith.constant 0 : index
    %c0_55 = arith.constant 0 : index
    %173 = vector.load %arg9[%c0_54, %c0_55] : memref<1x64xf32, #tpu.memory_space<vmem>>, vector<1x64xf32>
    %174 = vector.broadcast %173 : vector<1x64xf32> to vector<320x64xf32>
    %175 = arith.addf %172, %174 : vector<320x64xf32>
    %cst_56 = arith.constant 0.000000e+00 : f32
    %176 = vector.broadcast %cst_56 : f32 to vector<320x64xf32>
    %177 = arith.maximumf %175, %176 : vector<320x64xf32>
    %c0_57 = arith.constant 0 : index
    %c0_58 = arith.constant 0 : index
    %178 = vector.load %arg10[%c0_57, %c0_58] : memref<1x64xf32, #tpu.memory_space<vmem>>, vector<1x64xf32>
    %179 = vector.broadcast %178 : vector<1x64xf32> to vector<320x64xf32>
    %180 = arith.mulf %177, %179 : vector<320x64xf32>
    %cst_59 = arith.constant dense<0.000000e+00> : vector<320xf32>
    %181 = vector.multi_reduction <add>, %180, %cst_59 [1] : vector<320x64xf32> to vector<320xf32>
    %182 = vector.shape_cast %181 : vector<320xf32> to vector<320x1xf32>
    %c0_60 = arith.constant 0 : index
    %c0_61 = arith.constant 0 : index
    %183 = vector.load %arg11[%c0_60, %c0_61] : memref<1x1xf32, #tpu.memory_space<vmem>>, vector<1x1xf32>
    %184 = vector.broadcast %183 : vector<1x1xf32> to vector<320x1xf32>
    %185 = arith.addf %182, %184 : vector<320x1xf32>
    %186 = arith.negf %185 : vector<320x1xf32>
    %187 = math.exp %186 : vector<320x1xf32>
    %cst_62 = arith.constant 1.000000e+00 : f32
    %188 = vector.broadcast %cst_62 : f32 to vector<320x1xf32>
    %189 = arith.addf %188, %187 : vector<320x1xf32>
    %190 = arith.divf %188, %189 : vector<320x1xf32>
    %191 = vector.broadcast %190 : vector<320x1xf32> to vector<320x128xf32>
    %192 = arith.mulf %169, %191 : vector<320x128xf32>
    %193 = vector.shape_cast %192 : vector<320x128xf32> to vector<1x320x128xf32>
    %cst_63 = arith.constant dense<0.000000e+00> : vector<1x128xf32>
    %194 = vector.multi_reduction <add>, %193, %cst_63 [1] : vector<1x320x128xf32> to vector<1x128xf32>
    %cst_64 = arith.constant 3.125000e-03 : f32
    %195 = vector.broadcast %cst_64 : f32 to vector<1x128xf32>
    %196 = arith.mulf %194, %195 : vector<1x128xf32>
    %c0_65 = arith.constant 0 : index
    %c0_66 = arith.constant 0 : index
    %c0_67 = arith.constant 0 : index
    %197 = vector.load %arg12[%c0_65, %c0_66, %c0_67] : memref<1x1x128xf32, #tpu.memory_space<vmem>>, vector<1x1x128xf32>
    %198 = vector.shape_cast %197 : vector<1x1x128xf32> to vector<1x128xf32>
    %199 = vector.shape_cast %196 : vector<1x128xf32> to vector<1x1x128xf32>
    tpu.vector_store %arg12[%c0_65, %c0_66, %c0_67], %199 {strides = array<i32>} : memref<1x1x128xf32, #tpu.memory_space<vmem>>, vector<1x1x128xf32>,
    return
  }
  func.func @transform_0(%arg0: i32) -> (i32, i32) {
    %c0_i32 = arith.constant 0 : i32
    %c0_i32_0 = arith.constant 0 : i32
    return %arg0, %c0_i32 : i32, i32
  }
  func.func @transform_1(%arg0: i32) -> (i32, i32) {
    %c0_i32 = arith.constant 0 : i32
    %c0_i32_0 = arith.constant 0 : i32
    %c0_i32_1 = arith.constant 0 : i32
    return %c0_i32, %c0_i32_0 : i32, i32
  }
  func.func @transform_2(%arg0: i32) -> (i32, i32) {
    %c0_i32 = arith.constant 0 : i32
    %c0_i32_0 = arith.constant 0 : i32
    %c0_i32_1 = arith.constant 0 : i32
    return %c0_i32, %c0_i32_0 : i32, i32
  }
  func.func @transform_3(%arg0: i32) -> (i32, i32) {
    %c0_i32 = arith.constant 0 : i32
    %c0_i32_0 = arith.constant 0 : i32
    %c0_i32_1 = arith.constant 0 : i32
    return %c0_i32, %c0_i32_0 : i32, i32
  }
  func.func @transform_4(%arg0: i32) -> (i32, i32) {
    %c0_i32 = arith.constant 0 : i32
    %c0_i32_0 = arith.constant 0 : i32
    %c0_i32_1 = arith.constant 0 : i32
    return %c0_i32, %c0_i32_0 : i32, i32
  }
  func.func @transform_5(%arg0: i32) -> (i32, i32) {
    %c0_i32 = arith.constant 0 : i32
    %c0_i32_0 = arith.constant 0 : i32
    %c0_i32_1 = arith.constant 0 : i32
    return %c0_i32, %c0_i32_0 : i32, i32
  }
  func.func @transform_6(%arg0: i32) -> (i32, i32) {
    %c0_i32 = arith.constant 0 : i32
    %c0_i32_0 = arith.constant 0 : i32
    %c0_i32_1 = arith.constant 0 : i32
    return %c0_i32, %c0_i32_0 : i32, i32
  }
  func.func @transform_7(%arg0: i32) -> (i32, i32) {
    %c0_i32 = arith.constant 0 : i32
    %c0_i32_0 = arith.constant 0 : i32
    %c0_i32_1 = arith.constant 0 : i32
    return %c0_i32, %c0_i32_0 : i32, i32
  }
  func.func @transform_8(%arg0: i32) -> (i32, i32) {
    %c0_i32 = arith.constant 0 : i32
    %c0_i32_0 = arith.constant 0 : i32
    %c0_i32_1 = arith.constant 0 : i32
    return %c0_i32, %c0_i32_0 : i32, i32
  }
  func.func @transform_9(%arg0: i32) -> (i32, i32) {
    %c0_i32 = arith.constant 0 : i32
    %c0_i32_0 = arith.constant 0 : i32
    %c0_i32_1 = arith.constant 0 : i32
    return %c0_i32, %c0_i32_0 : i32, i32
  }
  func.func @transform_10(%arg0: i32) -> (i32, i32) {
    %c0_i32 = arith.constant 0 : i32
    %c0_i32_0 = arith.constant 0 : i32
    %c0_i32_1 = arith.constant 0 : i32
    return %c0_i32, %c0_i32_0 : i32, i32
  }
  func.func @transform_11(%arg0: i32) -> (i32, i32, i32) {
    %c0_i32 = arith.constant 0 : i32
    %c0_i32_0 = arith.constant 0 : i32
    %c0_i32_1 = arith.constant 0 : i32
    return %arg0, %c0_i32, %c0_i32_0 : i32, i32, i32
  }
}

</mosaic_0001>

<llo_original>
// kernel: tpu_custom_call.1
$region0: #{tpu_custom_call.1}
  #allocation0 [shape = 'u32[]', space=smem, size = 0x4, offset = 0x4, fixed_abs, tag = 'smem constant byte address 0x4 - core index']
  #allocation1 [shape = 'u32[72,128]{1,0:T(1,128)}', space=vmem, size = 0x9000, scoped, tag = 'internal scratch']
  #allocation2 [shape = 'f32[1,1]{1,0:T(1,128)S(1)}', space=vmem, size = 0x200, scoped, tag = 'scoped memory for tpu_custom_call.1']
  %s0 = inlined_call_operand.vmem [shape: f32[640,8], index: 0, kind: input, shape index: {}]
  %s1 = inlined_call_operand.vmem [shape: f32[8,128], index: 1, kind: input, shape index: {}]
  %s2 = inlined_call_operand.vmem [shape: f32[1,128], index: 2, kind: input, shape index: {}]
  %s3 = inlined_call_operand.vmem [shape: bf16[1152,128], index: 3, kind: input, shape index: {}]
  %s4 = inlined_call_operand.vmem [shape: f32[1,128], index: 4, kind: input, shape index: {}]
  %s5 = inlined_call_operand.hbm [shape: bf16[384,128], index: 5, kind: input, shape index: {}]
  %s6 = inlined_call_operand.vmem [shape: f32[1,128], index: 6, kind: input, shape index: {}]
  %s7 = inlined_call_operand.vmem [shape: bf16[128,64], index: 7, kind: input, shape index: {}]
  %s8 = inlined_call_operand.vmem [shape: f32[1,64], index: 8, kind: input, shape index: {}]
  %s9 = inlined_call_operand.vmem [shape: f32[1,64], index: 9, kind: input, shape index: {}]
  %s10 = inlined_call_operand.<no memory space> [shape: f32[1,1], index: 10, kind: input, shape index: {}]
  %s11 = inlined_call_operand.hbm [shape: f32[2,1,128], index: 11, kind: output, shape index: {}]
  %s12 = sld [smem:[#allocation0]]
  $region81: #{tpu_custom_call.1} parent=0
    _
  %s14 = ssub.s32 1, %s12
  %s15 = scalar_select 0, %s14, %s12
  %v16 = vstv %s10
  %17 = vst [vmem:[#allocation2] sm:$0x1] %v16
  $region1: #{tpu_custom_call.1} parent=0
    #allocation3 [shape = 'u8[98304]{0}', space=vmem, size = 0x18000, scoped, tag = 'input window, operand 5, single buffered']
    #allocation4 [shape = 's32[2]{0}', space=sflag, size = 0x8, scoped, tag = 'scoped memory for tpu_custom_call.1']
    #allocation5 [shape = 's32[2]{0}', space=sflag, size = 0x8, scoped, tag = 'scoped memory for tpu_custom_call.1']
    #allocation6 [shape = 'u8[1024]{0}', space=vmem, size = 0x400, scoped, tag = 'output window, operand 0']
    %18 = vsyncpa [#allocation4], 0
    %19 = vsyncpa [#allocation5], 0
    %s20 = scalar_lea.sflag [#allocation5], 1
    %21 = vsyncpa %s20, 0
    loop: start=0, step=1, limit=4
    $region2: #{tpu_custom_call.1} parent=1 // loop_pre_header
      _
    $region3: #{tpu_custom_call.1} parent=1 // loop_header
      %s23 = sphi 0, %s27
      %p24 = scmp.ge.s32.totalorder %s23, 4
      %s33 = sphi 0, %s35
      %s36 = sphi 0, %s33
      %s37 = sphi 0, %s36
      %s53 = sphi 0, %s37
      %s57 = sphi 0, %s57
      %s59 = sphi 0, %s57
      %s60 = sphi 0, %s59
      %s74 = sphi 0, %s60
      %s78 = sphi 0, %s78
      %s80 = sphi 0, %s78
      %s81 = sphi 0, %s80
      %s95 = sphi 0, %s81
      %s99 = sphi 0, %s99
      %s101 = sphi 0, %s99
      %s102 = sphi 0, %s101
      %s116 = sphi 0, %s102
      %s120 = sphi 0, %s120
      %s122 = sphi 0, %s120
      %s123 = sphi 0, %s122
      %s137 = sphi 0, %s123
      %s141 = sphi 0, %s141
      %s143 = sphi 0, %s141
      %s144 = sphi 0, %s143
      %s158 = sphi 0, %s144
      %s162 = sphi 0, %s162
      %s164 = sphi 0, %s162
      %s165 = sphi 0, %s164
      %s179 = sphi 0, %s165
      %s183 = sphi 0, %s183
      %s185 = sphi 0, %s183
      %s186 = sphi 0, %s185
      %s200 = sphi 0, %s186
      %s204 = sphi 0, %s204
      %s206 = sphi 0, %s204
      %s207 = sphi 0, %s206
      %s221 = sphi 0, %s207
      %s225 = sphi 0, %s225
      %s227 = sphi 0, %s225
      %s228 = sphi 0, %s227
      %s242 = sphi 0, %s228
      %s246 = sphi 0, %s246
      %s248 = sphi 0, %s246
      %s249 = sphi 0, %s248
      %s263 = sphi 0, %s249
      %s269 = sphi 0, %s271
      %s272 = sphi 0, %s269
      %s273 = sphi 0, %s272
      %s289 = sphi 0, %s273
    $region4: #{tpu_custom_call.1} parent=1 // loop_header_branch
      %26 = sbr.rel (%p24) target = $region8
    $region5: #{tpu_custom_call.1} parent=1 // loop_body
      %s28 = ssub.s32 %s23, 1
      %s29 = ssub.s32 %s23, 2
      %s30 = sadd.s32 %s23, 1
      %s31 = ssub.s32 %s23, %s30
      %p32 = scmp.eq.s32.totalorder %s31, 0
      %s34 = sadd.s32 %s33, 1
      %s35 = scalar_select %p32, %s33, %s34
      %p38 = pneg %p32
      %p39 = scmp.eq.s32.totalorder %s23, 1
      %p40 = por %p38, %p39
      %p41 = scmp.ne.s32.totalorder %s33, %s36
      %p42 = scmp.eq.s32.totalorder %s23, 0
      %p43 = por %p41, %p42
      %p44 = scmp.ne.s32.totalorder %s33, %s36
      %p45 = scmp.eq.s32.totalorder %s28, 1
      %p46 = por %p44, %p45
      %p47 = scmp.ne.s32.totalorder %s36, %s37
      %p48 = scmp.eq.s32.totalorder %s28, 0
      %p49 = por %p47, %p48
      %p50 = scmp.ne.s32.totalorder %s36, %s37
      %p51 = scmp.eq.s32.totalorder %s29, 1
      %p52 = por %p50, %p51
      %p54 = scmp.ne.s32.totalorder %s37, %s53
      %p55 = scmp.eq.s32.totalorder %s29, 0
      %p56 = por %p54, %p55
      %s58 = sadd.s32 %s57, 1
      %p61 = scmp.eq.s32.totalorder %s23, 1
      %p62 = scmp.ne.s32.totalorder %s57, %s59
      %p63 = scmp.eq.s32.totalorder %s23, 0
      %p64 = por %p62, %p63
      %p65 = scmp.ne.s32.totalorder %s57, %s59
      %p66 = scmp.eq.s32.totalorder %s28, 1
      %p67 = por %p65, %p66
      %p68 = scmp.ne.s32.totalorder %s59, %s60
      %p69 = scmp.eq.s32.totalorder %s28, 0
      %p70 = por %p68, %p69
      %p71 = scmp.ne.s32.totalorder %s59, %s60
      %p72 = scmp.eq.s32.totalorder %s29, 1
      %p73 = por %p71, %p72
      %p75 = scmp.ne.s32.totalorder %s60, %s74
      %p76 = scmp.eq.s32.totalorder %s29, 0
      %p77 = por %p75, %p76
      %s79 = sadd.s32 %s78, 1
      %p82 = scmp.eq.s32.totalorder %s23, 1
      %p83 = scmp.ne.s32.totalorder %s78, %s80
      %p84 = scmp.eq.s32.totalorder %s23, 0
      %p85 = por %p83, %p84
      %p86 = scmp.ne.s32.totalorder %s78, %s80
      %p87 = scmp.eq.s32.totalorder %s28, 1
      %p88 = por %p86, %p87
      %p89 = scmp.ne.s32.totalorder %s80, %s81
      %p90 = scmp.eq.s32.totalorder %s28, 0
      %p91 = por %p89, %p90
      %p92 = scmp.ne.s32.totalorder %s80, %s81
      %p93 = scmp.eq.s32.totalorder %s29, 1
      %p94 = por %p92, %p93
      %p96 = scmp.ne.s32.totalorder %s81, %s95
      %p97 = scmp.eq.s32.totalorder %s29, 0
      %p98 = por %p96, %p97
      %s100 = sadd.s32 %s99, 1
      %p103 = scmp.eq.s32.totalorder %s23, 1
      %p104 = scmp.ne.s32.totalorder %s99, %s101
      %p105 = scmp.eq.s32.totalorder %s23, 0
      %p106 = por %p104, %p105
      %p107 = scmp.ne.s32.totalorder %s99, %s101
      %p108 = scmp.eq.s32.totalorder %s28, 1
      %p109 = por %p107, %p108
      %p110 = scmp.ne.s32.totalorder %s101, %s102
      %p111 = scmp.eq.s32.totalorder %s28, 0
      %p112 = por %p110, %p111
      %p113 = scmp.ne.s32.totalorder %s101, %s102
      %p114 = scmp.eq.s32.totalorder %s29, 1
      %p115 = por %p113, %p114
      %p117 = scmp.ne.s32.totalorder %s102, %s116
      %p118 = scmp.eq.s32.totalorder %s29, 0
      %p119 = por %p117, %p118
      %s121 = sadd.s32 %s120, 1
      %p124 = scmp.eq.s32.totalorder %s23, 1
      %p125 = scmp.ne.s32.totalorder %s120, %s122
      %p126 = scmp.eq.s32.totalorder %s23, 0
      %p127 = por %p125, %p126
      %p128 = scmp.ne.s32.totalorder %s120, %s122
      %p129 = scmp.eq.s32.totalorder %s28, 1
      %p130 = por %p128, %p129
      %p131 = scmp.ne.s32.totalorder %s122, %s123
      %p132 = scmp.eq.s32.totalorder %s28, 0
      %p133 = por %p131, %p132
      %p134 = scmp.ne.s32.totalorder %s122, %s123
      %p135 = scmp.eq.s32.totalorder %s29, 1
      %p136 = por %p134, %p135
      %p138 = scmp.ne.s32.totalorder %s123, %s137
      %p139 = scmp.eq.s32.totalorder %s29, 0
      %p140 = por %p138, %p139
      %s142 = sadd.s32 %s141, 1
      %p145 = scmp.eq.s32.totalorder %s23, 1
      %p146 = scmp.ne.s32.totalorder %s141, %s143
      %p147 = scmp.eq.s32.totalorder %s23, 0
      %p148 = por %p146, %p147
      %p149 = scmp.ne.s32.totalorder %s141, %s143
      %p150 = scmp.eq.s32.totalorder %s28, 1
      %p151 = por %p149, %p150
      %p152 = scmp.ne.s32.totalorder %s143, %s144
      %p153 = scmp.eq.s32.totalorder %s28, 0
      %p154 = por %p152, %p153
      %p155 = scmp.ne.s32.totalorder %s143, %s144
      %p156 = scmp.eq.s32.totalorder %s29, 1
      %p157 = por %p155, %p156
      %p159 = scmp.ne.s32.totalorder %s144, %s158
      %p160 = scmp.eq.s32.totalorder %s29, 0
      %p161 = por %p159, %p160
      %s163 = sadd.s32 %s162, 1
      %p166 = scmp.eq.s32.totalorder %s23, 1
      %p167 = scmp.ne.s32.totalorder %s162, %s164
      %p168 = scmp.eq.s32.totalorder %s23, 0
      %p169 = por %p167, %p168
      %p170 = scmp.ne.s32.totalorder %s162, %s164
      %p171 = scmp.eq.s32.totalorder %s28, 1
      %p172 = por %p170, %p171
      %p173 = scmp.ne.s32.totalorder %s164, %s165
      %p174 = scmp.eq.s32.totalorder %s28, 0
      %p175 = por %p173, %p174
      %p176 = scmp.ne.s32.totalorder %s164, %s165
      %p177 = scmp.eq.s32.totalorder %s29, 1
      %p178 = por %p176, %p177
      %p180 = scmp.ne.s32.totalorder %s165, %s179
      %p181 = scmp.eq.s32.totalorder %s29, 0
      %p182 = por %p180, %p181
      %s184 = sadd.s32 %s183, 1
      %p187 = scmp.eq.s32.totalorder %s23, 1
      %p188 = scmp.ne.s32.totalorder %s183, %s185
      %p189 = scmp.eq.s32.totalorder %s23, 0
      %p190 = por %p188, %p189
      %p191 = scmp.ne.s32.totalorder %s183, %s185
      %p192 = scmp.eq.s32.totalorder %s28, 1
      %p193 = por %p191, %p192
      %p194 = scmp.ne.s32.totalorder %s185, %s186
      %p195 = scmp.eq.s32.totalorder %s28, 0
      %p196 = por %p194, %p195
      %p197 = scmp.ne.s32.totalorder %s185, %s186
      %p198 = scmp.eq.s32.totalorder %s29, 1
      %p199 = por %p197, %p198
      %p201 = scmp.ne.s32.totalorder %s186, %s200
      %p202 = scmp.eq.s32.totalorder %s29, 0
      %p203 = por %p201, %p202
      %s205 = sadd.s32 %s204, 1
      %p208 = scmp.eq.s32.totalorder %s23, 1
      %p209 = scmp.ne.s32.totalorder %s204, %s206
      %p210 = scmp.eq.s32.totalorder %s23, 0
      %p211 = por %p209, %p210
      %p212 = scmp.ne.s32.totalorder %s204, %s206
      %p213 = scmp.eq.s32.totalorder %s28, 1
      %p214 = por %p212, %p213
      %p215 = scmp.ne.s32.totalorder %s206, %s207
      %p216 = scmp.eq.s32.totalorder %s28, 0
      %p217 = por %p215, %p216
      %p218 = scmp.ne.s32.totalorder %s206, %s207
      %p219 = scmp.eq.s32.totalorder %s29, 1
      %p220 = por %p218, %p219
      %p222 = scmp.ne.s32.totalorder %s207, %s221
      %p223 = scmp.eq.s32.totalorder %s29, 0
      %p224 = por %p222, %p223
      %s226 = sadd.s32 %s225, 1
      %p229 = scmp.eq.s32.totalorder %s23, 1
      %p230 = scmp.ne.s32.totalorder %s225, %s227
      %p231 = scmp.eq.s32.totalorder %s23, 0
      %p232 = por %p230, %p231
      %p233 = scmp.ne.s32.totalorder %s225, %s227
      %p234 = scmp.eq.s32.totalorder %s28, 1
      %p235 = por %p233, %p234
      %p236 = scmp.ne.s32.totalorder %s227, %s228
      %p237 = scmp.eq.s32.totalorder %s28, 0
      %p238 = por %p236, %p237
      %p239 = scmp.ne.s32.totalorder %s227, %s228
      %p240 = scmp.eq.s32.totalorder %s29, 1
      %p241 = por %p239, %p240
      %p243 = scmp.ne.s32.totalorder %s228, %s242
      %p244 = scmp.eq.s32.totalorder %s29, 0
      %p245 = por %p243, %p244
      %s247 = sadd.s32 %s246, 1
      %p250 = scmp.eq.s32.totalorder %s23, 1
      %p251 = scmp.ne.s32.totalorder %s246, %s248
      %p252 = scmp.eq.s32.totalorder %s23, 0
      %p253 = por %p251, %p252
      %p254 = scmp.ne.s32.totalorder %s246, %s248
      %p255 = scmp.eq.s32.totalorder %s28, 1
      %p256 = por %p254, %p255
      %p257 = scmp.ne.s32.totalorder %s248, %s249
      %p258 = scmp.eq.s32.totalorder %s28, 0
      %p259 = por %p257, %p258
      %p260 = scmp.ne.s32.totalorder %s248, %s249
      %p261 = scmp.eq.s32.totalorder %s29, 1
      %p262 = por %p260, %p261
      %p264 = scmp.ne.s32.totalorder %s249, %s263
      %p265 = scmp.eq.s32.totalorder %s29, 0
      %p266 = por %p264, %p265
      %s267 = ssub.s32 %s23, %s30
      %p268 = scmp.eq.s32.totalorder %s267, 0
      %s270 = sadd.s32 %s269, 1
      %s271 = scalar_select %p268, %s269, %s270
      %p274 = pneg %p268
      %p275 = scmp.eq.s32.totalorder %s23, 1
      %p276 = por %p274, %p275
      %p277 = scmp.ne.s32.totalorder %s269, %s272
      %p278 = scmp.eq.s32.totalorder %s23, 0
      %p279 = por %p277, %p278
      %p280 = scmp.ne.s32.totalorder %s269, %s272
      %p281 = scmp.eq.s32.totalorder %s28, 1
      %p282 = por %p280, %p281
      %p283 = scmp.ne.s32.totalorder %s272, %s273
      %p284 = scmp.eq.s32.totalorder %s28, 0
      %p285 = por %p283, %p284
      %p286 = scmp.ne.s32.totalorder %s272, %s273
      %p287 = scmp.eq.s32.totalorder %s29, 1
      %p288 = por %p286, %p287
      %p290 = scmp.ne.s32.totalorder %s273, %s289
      %p291 = scmp.eq.s32.totalorder %s29, 0
      %p292 = por %p290, %p291
      %p293 = scmp.le.s32.totalorder 1, %s23
      %p294 = scmp.lt.s32.totalorder %s23, 3
      %p295 = pnand %p293, %p294
      %p296 = pneg %p295
      // Predicated region
      $region9: #{tpu_custom_call.1} parent=5 // pred_check
        _
      $region10: #{tpu_custom_call.1} parent=5 // pred_check_branch
        %298 = sbr.rel (%p295) target = $region12
      $region11: #{tpu_custom_call.1} parent=5 // pred_region
        %s299 = ssub.s32 %s23, 1
        // Predicated region
        $region13: #{tpu_custom_call.1} parent=11 // pred_check
          %p300 = pneg %p70
        $region14: #{tpu_custom_call.1} parent=11 // pred_check_branch
          %302 = sbr.rel (%p300) target = $region16
        $region15: #{tpu_custom_call.1} parent=11 // pred_region
          _
        $region16: #{tpu_custom_call.1} parent=11 // pred_fallthru
          _
        // Predicated region
        $region17: #{tpu_custom_call.1} parent=11 // pred_check
          %p303 = pneg %p91
        $region18: #{tpu_custom_call.1} parent=11 // pred_check_branch
          %305 = sbr.rel (%p303) target = $region20
        $region19: #{tpu_custom_call.1} parent=11 // pred_region
          _
        $region20: #{tpu_custom_call.1} parent=11 // pred_fallthru
          _
        // Predicated region
        $region21: #{tpu_custom_call.1} parent=11 // pred_check
          %p306 = pneg %p112
        $region22: #{tpu_custom_call.1} parent=11 // pred_check_branch
          %308 = sbr.rel (%p306) target = $region24
        $region23: #{tpu_custom_call.1} parent=11 // pred_region
          _
        $region24: #{tpu_custom_call.1} parent=11 // pred_fallthru
          _
        // Predicated region
        $region25: #{tpu_custom_call.1} parent=11 // pred_check
          %p309 = pneg %p133
        $region26: #{tpu_custom_call.1} parent=11 // pred_check_branch
          %311 = sbr.rel (%p309) target = $region28
        $region27: #{tpu_custom_call.1} parent=11 // pred_region
          _
        $region28: #{tpu_custom_call.1} parent=11 // pred_fallthru
          _
        // Predicated region
        $region29: #{tpu_custom_call.1} parent=11 // pred_check
          %p312 = pneg %p154
        $region30: #{tpu_custom_call.1} parent=11 // pred_check_branch
          %314 = sbr.rel (%p312) target = $region32
        $region31: #{tpu_custom_call.1} parent=11 // pred_region
          %316 = vsyncadd [#allocation4], 0
          %s317 = sshll.u32 %s5, 4
          %s318 = int_to_ptr.hbm [resolvable:$true] %s317
          %s319 = sshll.u32 [#allocation3], 4
          %s320 = int_to_ptr.vmem [resolvable:$true] %s319
          %325 = dma.hbm_to_vmem [thread:$0]  %s318, 3072, %s320, [#allocation4], 64, 64, 4
        $region32: #{tpu_custom_call.1} parent=11 // pred_fallthru
          _
        // Predicated region
        $region33: #{tpu_custom_call.1} parent=11 // pred_check
          %p326 = pneg %p175
        $region34: #{tpu_custom_call.1} parent=11 // pred_check_branch
          %328 = sbr.rel (%p326) target = $region36
        $region35: #{tpu_custom_call.1} parent=11 // pred_region
          _
        $region36: #{tpu_custom_call.1} parent=11 // pred_fallthru
          _
        // Predicated region
        $region37: #{tpu_custom_call.1} parent=11 // pred_check
          %p329 = pneg %p196
        $region38: #{tpu_custom_call.1} parent=11 // pred_check_branch
          %331 = sbr.rel (%p329) target = $region40
        $region39: #{tpu_custom_call.1} parent=11 // pred_region
          _
        $region40: #{tpu_custom_call.1} parent=11 // pred_fallthru
          _
        // Predicated region
        $region41: #{tpu_custom_call.1} parent=11 // pred_check
          %p332 = pneg %p217
        $region42: #{tpu_custom_call.1} parent=11 // pred_check_branch
          %334 = sbr.rel (%p332) target = $region44
        $region43: #{tpu_custom_call.1} parent=11 // pred_region
          _
        $region44: #{tpu_custom_call.1} parent=11 // pred_fallthru
          _
        // Predicated region
        $region45: #{tpu_custom_call.1} parent=11 // pred_check
          %p335 = pneg %p238
        $region46: #{tpu_custom_call.1} parent=11 // pred_check_branch
          %337 = sbr.rel (%p335) target = $region48
        $region47: #{tpu_custom_call.1} parent=11 // pred_region
          _
        $region48: #{tpu_custom_call.1} parent=11 // pred_fallthru
          _
        // Predicated region
        $region49: #{tpu_custom_call.1} parent=11 // pred_check
          %p338 = pneg %p259
        $region50: #{tpu_custom_call.1} parent=11 // pred_check_branch
          %340 = sbr.rel (%p338) target = $region52
        $region51: #{tpu_custom_call.1} parent=11 // pred_region
          _
        $region52: #{tpu_custom_call.1} parent=11 // pred_fallthru
          _
      $region12: #{tpu_custom_call.1} parent=5 // pred_fallthru
        _
      %p341 = scmp.lt.s32.totalorder %s23, 2
      // Predicated region
      $region53: #{tpu_custom_call.1} parent=5 // pred_check
        %p342 = pneg %p341
      $region54: #{tpu_custom_call.1} parent=5 // pred_check_branch
        %344 = sbr.rel (%p342) target = $region56
      $region55: #{tpu_custom_call.1} parent=5 // pred_region
        // Predicated region
        $region57: #{tpu_custom_call.1} parent=55 // pred_check
          %p345 = pneg %p43
        $region58: #{tpu_custom_call.1} parent=55 // pred_check_branch
          %347 = sbr.rel (%p345) target = $region60
        $region59: #{tpu_custom_call.1} parent=55 // pred_region
          %s348 = smul.u32 40, %s23
          %p349 = scmp.lt.s32.totalorder %s348, 79
          %s350 = scalar_select %p349, %s348, 79
          %s351 = smul.addr %s350, 8
          %s352 = scalar_lea.vmem %s0, %s351
          %s353 = smul.u32 40, %s23
        $region60: #{tpu_custom_call.1} parent=55 // pred_fallthru
          _
      $region56: #{tpu_custom_call.1} parent=5 // pred_fallthru
        _
      %p354 = scmp.le.s32.totalorder 1, %s23
      %p355 = scmp.lt.s32.totalorder %s23, 3
      %p356 = pnand %p354, %p355
      %p357 = pneg %p356
      // Predicated region
      $region61: #{tpu_custom_call.1} parent=5 // pred_check
        _
      $region62: #{tpu_custom_call.1} parent=5 // pred_check_branch
        %359 = sbr.rel (%p356) target = $region64
      $region63: #{tpu_custom_call.1} parent=5 // pred_region
        %s360 = ssub.s32 %s23, 1
        // Predicated region
        $region65: #{tpu_custom_call.1} parent=63 // pred_check
          %p361 = pneg %p154
        $region66: #{tpu_custom_call.1} parent=63 // pred_check_branch
          %363 = sbr.rel (%p361) target = $region68
        $region67: #{tpu_custom_call.1} parent=63 // pred_region
          %365 = dma.done [#allocation4], 3072
        $region68: #{tpu_custom_call.1} parent=63 // pred_fallthru
          _
        %s366 = smul.u32 40, %s28
        %p367 = scmp.lt.s32.totalorder %s366, 79
        %s368 = scalar_select %p367, %s366, 79
        %s369 = smul.addr %s368, 8
        %s370 = scalar_lea.vmem %s0, %s369
        %p371 = pneg %p49
        %p372 = pneg %p46
        %p373 = pneg %p70
        %p374 = pneg %p67
        %p375 = pneg %p91
        %p376 = pneg %p88
        %p377 = pneg %p112
        %p378 = pneg %p109
        %p379 = pneg %p133
        %p380 = pneg %p130
        %p381 = pneg %p154
        %p382 = pneg %p151
        %p383 = pneg %p175
        %p384 = pneg %p172
        %p385 = pneg %p196
        %p386 = pneg %p193
        %p387 = pneg %p217
        %p388 = pneg %p214
        %p389 = pneg %p238
        %p390 = pneg %p235
        %p391 = pneg %p259
        %p392 = pneg %p256
        %p393 = pneg %p285
        %p394 = pneg %p282
        %s395 = sand.u32 %s272, 1
        %s396 = scalar_lea.sflag [#allocation5], %s395
        %s397 = sand.u32 %s272, 1
        %s398 = scalar_lea.vmem [#allocation6], %s397
        %s399 = smul.u32 40, %s28
        %p400 = scmp.lt.s32.totalorder %s399, 79
        %s401 = scalar_select %p400, %s399, 79
        %s402 = smul.addr %s401, 8
        %s403 = scalar_lea.vmem %s0, %s402
        %s404 = smul.u32 40, %s28
        %v405 = vld [vmem:[%s403] sm:$0xff]
        %v406 = vld [vmem:[%s403 + $0x8] sm:$0xff]
        %v407 = vld [vmem:[%s403 + $0x10] sm:$0xff]
        %v408 = vld [vmem:[%s403 + $0x18] sm:$0xff]
        %v409 = vld [vmem:[%s403 + $0x20] sm:$0xff]
        %v410 = vld [vmem:[%s403 + $0x28] sm:$0xff]
        %v411 = vld [vmem:[%s403 + $0x30] sm:$0xff]
        %v412 = vld [vmem:[%s403 + $0x38] sm:$0xff]
        %v413 = vld [vmem:[%s403 + $0x40] sm:$0xff]
        %v414 = vld [vmem:[%s403 + $0x48] sm:$0xff]
        %v415 = vld [vmem:[%s403 + $0x50] sm:$0xff]
        %v416 = vld [vmem:[%s403 + $0x58] sm:$0xff]
        %v417 = vld [vmem:[%s403 + $0x60] sm:$0xff]
        %v418 = vld [vmem:[%s403 + $0x68] sm:$0xff]
        %v419 = vld [vmem:[%s403 + $0x70] sm:$0xff]
        %v420 = vld [vmem:[%s403 + $0x78] sm:$0xff]
        %v421 = vld [vmem:[%s403 + $0x80] sm:$0xff]
        %v422 = vld [vmem:[%s403 + $0x88] sm:$0xff]
        %v423 = vld [vmem:[%s403 + $0x90] sm:$0xff]
        %v424 = vld [vmem:[%s403 + $0x98] sm:$0xff]
        %v425 = vld [vmem:[%s403 + $0xa0] sm:$0xff]
        %v426 = vld [vmem:[%s403 + $0xa8] sm:$0xff]
        %v427 = vld [vmem:[%s403 + $0xb0] sm:$0xff]
        %v428 = vld [vmem:[%s403 + $0xb8] sm:$0xff]
        %v429 = vld [vmem:[%s403 + $0xc0] sm:$0xff]
        %v430 = vld [vmem:[%s403 + $0xc8] sm:$0xff]
        %v431 = vld [vmem:[%s403 + $0xd0] sm:$0xff]
        %v432 = vld [vmem:[%s403 + $0xd8] sm:$0xff]
        %v433 = vld [vmem:[%s403 + $0xe0] sm:$0xff]
        %v434 = vld [vmem:[%s403 + $0xe8] sm:$0xff]
        %v435 = vld [vmem:[%s403 + $0xf0] sm:$0xff]
        %v436 = vld [vmem:[%s403 + $0xf8] sm:$0xff]
        %v437 = vld [vmem:[%s403 + $0x100] sm:$0xff]
        %v438 = vld [vmem:[%s403 + $0x108] sm:$0xff]
        %v439 = vld [vmem:[%s403 + $0x110] sm:$0xff]
        %v440 = vld [vmem:[%s403 + $0x118] sm:$0xff]
        %v441 = vld [vmem:[%s403 + $0x120] sm:$0xff]
        %v442 = vld [vmem:[%s403 + $0x128] sm:$0xff]
        %v443 = vld [vmem:[%s403 + $0x130] sm:$0xff]
        %v444 = vld [vmem:[%s403 + $0x138] sm:$0xff]
        %v445 = vld [vmem:[%s1] sm:$0xff]
        %v446 = vld [vmem:[%s2] sm:$0x1]
        %v448 = vperm.slane %v446, 0
        %vm450 = vcmask 64512
        %v452 = vsel %vm450, %v405, 0
        %v455 = vsel %vm450, %v406, 0
        %v458 = vsel %vm450, %v407, 0
        %v461 = vsel %vm450, %v408, 0
        %v464 = vsel %vm450, %v409, 0
        %v467 = vsel %vm450, %v410, 0
        %v470 = vsel %vm450, %v411, 0
        %v473 = vsel %vm450, %v412, 0
        %v476 = vsel %vm450, %v413, 0
        %v479 = vsel %vm450, %v414, 0
        %v482 = vsel %vm450, %v415, 0
        %v485 = vsel %vm450, %v416, 0
        %v488 = vsel %vm450, %v417, 0
        %v491 = vsel %vm450, %v418, 0
        %v494 = vsel %vm450, %v419, 0
        %v497 = vsel %vm450, %v420, 0
        %v500 = vsel %vm450, %v421, 0
        %v503 = vsel %vm450, %v422, 0
        %v506 = vsel %vm450, %v423, 0
        %v509 = vsel %vm450, %v424, 0
        %v512 = vsel %vm450, %v425, 0
        %v515 = vsel %vm450, %v426, 0
        %v518 = vsel %vm450, %v427, 0
        %v521 = vsel %vm450, %v428, 0
        %v524 = vsel %vm450, %v429, 0
        %v527 = vsel %vm450, %v430, 0
        %v530 = vsel %vm450, %v431, 0
        %v533 = vsel %vm450, %v432, 0
        %v536 = vsel %vm450, %v433, 0
        %v539 = vsel %vm450, %v434, 0
        %v542 = vsel %vm450, %v435, 0
        %v545 = vsel %vm450, %v436, 0
        %v548 = vsel %vm450, %v437, 0
        %v551 = vsel %vm450, %v438, 0
        %v554 = vsel %vm450, %v439, 0
        %v557 = vsel %vm450, %v440, 0
        %v560 = vsel %vm450, %v441, 0
        %v563 = vsel %vm450, %v442, 0
        %v566 = vsel %vm450, %v443, 0
        %v569 = vsel %vm450, %v444, 0
        %571 = vmatpush.msra.mxu0 0.0
        %572 = vmatpush.msra.mxu0 0.0
        %573 = vmatpush.msra.mxu0 0.0
        %574 = vmatpush.msra.mxu0 0.0
        %575 = vmatpush.msra.mxu0 0.0
        %576 = vmatpush.msra.mxu0 0.0
        %577 = vmatpush.msra.mxu0 0.0
        %578 = vmatpush.msra.mxu0 0.0
        %579 = vmatpush.msra.mxu0 0.0
        %580 = vmatpush.msra.mxu0 0.0
        %581 = vmatpush.msra.mxu0 0.0
        %582 = vmatpush.msra.mxu0 0.0
        %583 = vmatpush.msra.mxu0 0.0
        %584 = vmatpush.msra.mxu0 0.0
        %585 = vmatpush.msra.mxu0 0.0
        %586 = vmatpush.msra.mxu0 %v445
        %587 = vmatmul.f32.gmra.mxu0 %v452
        %v588 = vpop.f32.mrf.mxu0
        %v589 = vadd.f32 %v448, %v588
        %590 = vmatmul.f32.gmra.mxu0 %v455
        %v591 = vpop.f32.mrf.mxu0
        %v592 = vadd.f32 %v448, %v591
        %593 = vmatmul.f32.gmra.mxu0 %v458
        %v594 = vpop.f32.mrf.mxu0
        %v595 = vadd.f32 %v448, %v594
        %596 = vmatmul.f32.gmra.mxu0 %v461
        %v597 = vpop.f32.mrf.mxu0
        %v598 = vadd.f32 %v448, %v597
        %599 = vmatmul.f32.gmra.mxu0 %v464
        %v600 = vpop.f32.mrf.mxu0
        %v601 = vadd.f32 %v448, %v600
        %602 = vmatmul.f32.gmra.mxu0 %v467
        %v603 = vpop.f32.mrf.mxu0
        %v604 = vadd.f32 %v448, %v603
        %605 = vmatmul.f32.gmra.mxu0 %v470
        %v606 = vpop.f32.mrf.mxu0
        %v607 = vadd.f32 %v448, %v606
        %608 = vmatmul.f32.gmra.mxu0 %v473
        %v609 = vpop.f32.mrf.mxu0
        %v610 = vadd.f32 %v448, %v609
        %611 = vmatmul.f32.gmra.mxu0 %v476
        %v612 = vpop.f32.mrf.mxu0
        %v613 = vadd.f32 %v448, %v612
        %614 = vmatmul.f32.gmra.mxu0 %v479
        %v615 = vpop.f32.mrf.mxu0
        %v616 = vadd.f32 %v448, %v615
        %617 = vmatmul.f32.gmra.mxu0 %v482
        %v618 = vpop.f32.mrf.mxu0
        %v619 = vadd.f32 %v448, %v618
        %620 = vmatmul.f32.gmra.mxu0 %v485
        %v621 = vpop.f32.mrf.mxu0
        %v622 = vadd.f32 %v448, %v621
        %623 = vmatmul.f32.gmra.mxu0 %v488
        %v624 = vpop.f32.mrf.mxu0
        %v625 = vadd.f32 %v448, %v624
        %626 = vmatmul.f32.gmra.mxu0 %v491
        %v627 = vpop.f32.mrf.mxu0
        %v628 = vadd.f32 %v448, %v627
        %629 = vmatmul.f32.gmra.mxu0 %v494
        %v630 = vpop.f32.mrf.mxu0
        %v631 = vadd.f32 %v448, %v630
        %632 = vmatmul.f32.gmra.mxu0 %v497
        %v633 = vpop.f32.mrf.mxu0
        %v634 = vadd.f32 %v448, %v633
        %635 = vmatmul.f32.gmra.mxu0 %v500
        %v636 = vpop.f32.mrf.mxu0
        %v637 = vadd.f32 %v448, %v636
        %638 = vmatmul.f32.gmra.mxu0 %v503
        %v639 = vpop.f32.mrf.mxu0
        %v640 = vadd.f32 %v448, %v639
        %641 = vmatmul.f32.gmra.mxu0 %v506
        %v642 = vpop.f32.mrf.mxu0
        %v643 = vadd.f32 %v448, %v642
        %644 = vmatmul.f32.gmra.mxu0 %v509
        %v645 = vpop.f32.mrf.mxu0
        %v646 = vadd.f32 %v448, %v645
        %647 = vmatmul.f32.gmra.mxu0 %v512
        %v648 = vpop.f32.mrf.mxu0
        %v649 = vadd.f32 %v448, %v648
        %650 = vmatmul.f32.gmra.mxu0 %v515
        %v651 = vpop.f32.mrf.mxu0
        %v652 = vadd.f32 %v448, %v651
        %653 = vmatmul.f32.gmra.mxu0 %v518
        %v654 = vpop.f32.mrf.mxu0
        %v655 = vadd.f32 %v448, %v654
        %656 = vmatmul.f32.gmra.mxu0 %v521
        %v657 = vpop.f32.mrf.mxu0
        %v658 = vadd.f32 %v448, %v657
        %659 = vmatmul.f32.gmra.mxu0 %v524
        %v660 = vpop.f32.mrf.mxu0
        %v661 = vadd.f32 %v448, %v660
        %662 = vmatmul.f32.gmra.mxu0 %v527
        %v663 = vpop.f32.mrf.mxu0
        %v664 = vadd.f32 %v448, %v663
        %665 = vmatmul.f32.gmra.mxu0 %v530
        %v666 = vpop.f32.mrf.mxu0
        %v667 = vadd.f32 %v448, %v666
        %668 = vmatmul.f32.gmra.mxu0 %v533
        %v669 = vpop.f32.mrf.mxu0
        %v670 = vadd.f32 %v448, %v669
        %671 = vmatmul.f32.gmra.mxu0 %v536
        %v672 = vpop.f32.mrf.mxu0
        %v673 = vadd.f32 %v448, %v672
        %674 = vmatmul.f32.gmra.mxu0 %v539
        %v675 = vpop.f32.mrf.mxu0
        %v676 = vadd.f32 %v448, %v675
        %677 = vmatmul.f32.gmra.mxu0 %v542
        %v678 = vpop.f32.mrf.mxu0
        %v679 = vadd.f32 %v448, %v678
        %680 = vmatmul.f32.gmra.mxu0 %v545
        %v681 = vpop.f32.mrf.mxu0
        %v682 = vadd.f32 %v448, %v681
        %683 = vmatmul.f32.gmra.mxu0 %v548
        %v684 = vpop.f32.mrf.mxu0
        %v685 = vadd.f32 %v448, %v684
        %686 = vmatmul.f32.gmra.mxu0 %v551
        %v687 = vpop.f32.mrf.mxu0
        %v688 = vadd.f32 %v448, %v687
        %689 = vmatmul.f32.gmra.mxu0 %v554
        %v690 = vpop.f32.mrf.mxu0
        %v691 = vadd.f32 %v448, %v690
        %692 = vmatmul.f32.gmra.mxu0 %v557
        %v693 = vpop.f32.mrf.mxu0
        %v694 = vadd.f32 %v448, %v693
        %695 = vmatmul.f32.gmra.mxu0 %v560
        %v696 = vpop.f32.mrf.mxu0
        %v697 = vadd.f32 %v448, %v696
        %698 = vmatmul.f32.gmra.mxu0 %v563
        %v699 = vpop.f32.mrf.mxu0
        %v700 = vadd.f32 %v448, %v699
        %701 = vmatmul.f32.gmra.mxu0 %v566
        %v702 = vpop.f32.mrf.mxu0
        %v703 = vadd.f32 %v448, %v702
        %704 = vmatmul.f32.gmra.mxu0 %v569
        %v705 = vpop.f32.mrf.mxu0
        %v706 = vadd.f32 %v448, %v705
        %707 = vdwg.mxu0
        %v708 = vmax.f32 %v589, 0.0
        %v709 = vmax.f32 %v592, 0.0
        %v710 = vmax.f32 %v595, 0.0
        %v711 = vmax.f32 %v598, 0.0
        %v712 = vmax.f32 %v601, 0.0
        %v713 = vmax.f32 %v604, 0.0
        %v714 = vmax.f32 %v607, 0.0
        %v715 = vmax.f32 %v610, 0.0
        %v716 = vmax.f32 %v613, 0.0
        %v717 = vmax.f32 %v616, 0.0
        %v718 = vmax.f32 %v619, 0.0
        %v719 = vmax.f32 %v622, 0.0
        %v720 = vmax.f32 %v625, 0.0
        %v721 = vmax.f32 %v628, 0.0
        %v722 = vmax.f32 %v631, 0.0
        %v723 = vmax.f32 %v634, 0.0
        %v724 = vmax.f32 %v637, 0.0
        %v725 = vmax.f32 %v640, 0.0
        %v726 = vmax.f32 %v643, 0.0
        %v727 = vmax.f32 %v646, 0.0
        %v728 = vmax.f32 %v649, 0.0
        %v729 = vmax.f32 %v652, 0.0
        %v730 = vmax.f32 %v655, 0.0
        %v731 = vmax.f32 %v658, 0.0
        %v732 = vmax.f32 %v661, 0.0
        %v733 = vmax.f32 %v664, 0.0
        %v734 = vmax.f32 %v667, 0.0
        %v735 = vmax.f32 %v670, 0.0
        %v736 = vmax.f32 %v673, 0.0
        %v737 = vmax.f32 %v676, 0.0
        %v738 = vmax.f32 %v679, 0.0
        %v739 = vmax.f32 %v682, 0.0
        %v740 = vmax.f32 %v685, 0.0
        %v741 = vmax.f32 %v688, 0.0
        %v742 = vmax.f32 %v691, 0.0
        %v743 = vmax.f32 %v694, 0.0
        %v744 = vmax.f32 %v697, 0.0
        %v745 = vmax.f32 %v700, 0.0
        %v746 = vmax.f32 %v703, 0.0
        %v747 = vmax.f32 %v706, 0.0
        %v748 = vlaneseq
        %v749 = vshrl.u32 %v748, 7
        %v750 = vadd.s32 %v749, 8
        %v751 = vadd.s32 %v749, 16
        %v752 = vadd.s32 %v749, 24
        %v753 = vadd.s32 %v749, 32
        %v754 = vadd.s32 %v749, 40
        %v755 = vadd.s32 %v749, 48
        %v756 = vadd.s32 %v749, 56
        %v757 = vadd.s32 %v749, 64
        %v758 = vadd.s32 %v749, 72
        %v759 = vadd.s32 %v749, 80
        %v760 = vadd.s32 %v749, 88
        %v761 = vadd.s32 %v749, 96
        %v762 = vadd.s32 %v749, 104
        %v763 = vadd.s32 %v749, 112
        %v764 = vadd.s32 %v749, 120
        %v765 = vadd.s32 %v749, 128
        %v766 = vadd.s32 %v749, 136
        %v767 = vadd.s32 %v749, 144
        %v768 = vadd.s32 %v749, 152
        %v769 = vadd.s32 %v749, 160
        %v770 = vadd.s32 %v749, 168
        %v771 = vadd.s32 %v749, 176
        %v772 = vadd.s32 %v749, 184
        %v773 = vadd.s32 %v749, 192
        %v774 = vadd.s32 %v749, 200
        %v775 = vadd.s32 %v749, 208
        %v776 = vadd.s32 %v749, 216
        %v777 = vadd.s32 %v749, 224
        %v778 = vadd.s32 %v749, 232
        %v779 = vadd.s32 %v749, 240
        %v780 = vadd.s32 %v749, 248
        %v781 = vadd.s32 %v749, 256
        %v782 = vadd.s32 %v749, 264
        %v783 = vadd.s32 %v749, 272
        %v784 = vadd.s32 %v749, 280
        %v785 = vadd.s32 %v749, 288
        %v786 = vadd.s32 %v749, 296
        %v787 = vadd.s32 %v749, 304
        %v788 = vadd.s32 %v749, 312
        %vm789 = vcmp.lt.s32.totalorder %v749, 0
        %v790 = vsub.s32 0, %v749
        %v791 = vsel %vm789, %v790, %v749
        %v792 = vshrl.u32 %v791, 4
        %v793 = vand.u32 %v791, 15
        %v794 = vsub.s32 0, %v793
        %v795 = vsel %vm789, %v794, %v793
        %vm796 = vcmp.lt.s32.totalorder %v750, 0
        %v797 = vsub.s32 0, %v750
        %v798 = vsel %vm796, %v797, %v750
        %v799 = vshrl.u32 %v798, 4
        %v800 = vand.u32 %v798, 15
        %v801 = vsub.s32 0, %v800
        %v802 = vsel %vm796, %v801, %v800
        %vm803 = vcmp.lt.s32.totalorder %v751, 0
        %v804 = vsub.s32 0, %v751
        %v805 = vsel %vm803, %v804, %v751
        %v806 = vshrl.u32 %v805, 4
        %v807 = vand.u32 %v805, 15
        %v808 = vsub.s32 0, %v807
        %v809 = vsel %vm803, %v808, %v807
        %vm810 = vcmp.lt.s32.totalorder %v752, 0
        %v811 = vsub.s32 0, %v752
        %v812 = vsel %vm810, %v811, %v752
        %v813 = vshrl.u32 %v812, 4
        %v814 = vand.u32 %v812, 15
        %v815 = vsub.s32 0, %v814
        %v816 = vsel %vm810, %v815, %v814
        %vm817 = vcmp.lt.s32.totalorder %v753, 0
        %v818 = vsub.s32 0, %v753
        %v819 = vsel %vm817, %v818, %v753
        %v820 = vshrl.u32 %v819, 4
        %v821 = vand.u32 %v819, 15
        %v822 = vsub.s32 0, %v821
        %v823 = vsel %vm817, %v822, %v821
        %vm824 = vcmp.lt.s32.totalorder %v754, 0
        %v825 = vsub.s32 0, %v754
        %v826 = vsel %vm824, %v825, %v754
        %v827 = vshrl.u32 %v826, 4
        %v828 = vand.u32 %v826, 15
        %v829 = vsub.s32 0, %v828
        %v830 = vsel %vm824, %v829, %v828
        %vm831 = vcmp.lt.s32.totalorder %v755, 0
        %v832 = vsub.s32 0, %v755
        %v833 = vsel %vm831, %v832, %v755
        %v834 = vshrl.u32 %v833, 4
        %v835 = vand.u32 %v833, 15
        %v836 = vsub.s32 0, %v835
        %v837 = vsel %vm831, %v836, %v835
        %vm838 = vcmp.lt.s32.totalorder %v756, 0
        %v839 = vsub.s32 0, %v756
        %v840 = vsel %vm838, %v839, %v756
        %v841 = vshrl.u32 %v840, 4
        %v842 = vand.u32 %v840, 15
        %v843 = vsub.s32 0, %v842
        %v844 = vsel %vm838, %v843, %v842
        %vm845 = vcmp.lt.s32.totalorder %v757, 0
        %v846 = vsub.s32 0, %v757
        %v847 = vsel %vm845, %v846, %v757
        %v848 = vshrl.u32 %v847, 4
        %v849 = vand.u32 %v847, 15
        %v850 = vsub.s32 0, %v849
        %v851 = vsel %vm845, %v850, %v849
        %vm852 = vcmp.lt.s32.totalorder %v758, 0
        %v853 = vsub.s32 0, %v758
        %v854 = vsel %vm852, %v853, %v758
        %v855 = vshrl.u32 %v854, 4
        %v856 = vand.u32 %v854, 15
        %v857 = vsub.s32 0, %v856
        %v858 = vsel %vm852, %v857, %v856
        %vm859 = vcmp.lt.s32.totalorder %v759, 0
        %v860 = vsub.s32 0, %v759
        %v861 = vsel %vm859, %v860, %v759
        %v862 = vshrl.u32 %v861, 4
        %v863 = vand.u32 %v861, 15
        %v864 = vsub.s32 0, %v863
        %v865 = vsel %vm859, %v864, %v863
        %vm866 = vcmp.lt.s32.totalorder %v760, 0
        %v867 = vsub.s32 0, %v760
        %v868 = vsel %vm866, %v867, %v760
        %v869 = vshrl.u32 %v868, 4
        %v870 = vand.u32 %v868, 15
        %v871 = vsub.s32 0, %v870
        %v872 = vsel %vm866, %v871, %v870
        %vm873 = vcmp.lt.s32.totalorder %v761, 0
        %v874 = vsub.s32 0, %v761
        %v875 = vsel %vm873, %v874, %v761
        %v876 = vshrl.u32 %v875, 4
        %v877 = vand.u32 %v875, 15
        %v878 = vsub.s32 0, %v877
        %v879 = vsel %vm873, %v878, %v877
        %vm880 = vcmp.lt.s32.totalorder %v762, 0
        %v881 = vsub.s32 0, %v762
        %v882 = vsel %vm880, %v881, %v762
        %v883 = vshrl.u32 %v882, 4
        %v884 = vand.u32 %v882, 15
        %v885 = vsub.s32 0, %v884
        %v886 = vsel %vm880, %v885, %v884
        %vm887 = vcmp.lt.s32.totalorder %v763, 0
        %v888 = vsub.s32 0, %v763
        %v889 = vsel %vm887, %v888, %v763
        %v890 = vshrl.u32 %v889, 4
        %v891 = vand.u32 %v889, 15
        %v892 = vsub.s32 0, %v891
        %v893 = vsel %vm887, %v892, %v891
        %vm894 = vcmp.lt.s32.totalorder %v764, 0
        %v895 = vsub.s32 0, %v764
        %v896 = vsel %vm894, %v895, %v764
        %v897 = vshrl.u32 %v896, 4
        %v898 = vand.u32 %v896, 15
        %v899 = vsub.s32 0, %v898
        %v900 = vsel %vm894, %v899, %v898
        %vm901 = vcmp.lt.s32.totalorder %v765, 0
        %v902 = vsub.s32 0, %v765
        %v903 = vsel %vm901, %v902, %v765
        %v904 = vshrl.u32 %v903, 4
        %v905 = vand.u32 %v903, 15
        %v906 = vsub.s32 0, %v905
        %v907 = vsel %vm901, %v906, %v905
        %vm908 = vcmp.lt.s32.totalorder %v766, 0
        %v909 = vsub.s32 0, %v766
        %v910 = vsel %vm908, %v909, %v766
        %v911 = vshrl.u32 %v910, 4
        %v912 = vand.u32 %v910, 15
        %v913 = vsub.s32 0, %v912
        %v914 = vsel %vm908, %v913, %v912
        %vm915 = vcmp.lt.s32.totalorder %v767, 0
        %v916 = vsub.s32 0, %v767
        %v917 = vsel %vm915, %v916, %v767
        %v918 = vshrl.u32 %v917, 4
        %v919 = vand.u32 %v917, 15
        %v920 = vsub.s32 0, %v919
        %v921 = vsel %vm915, %v920, %v919
        %vm922 = vcmp.lt.s32.totalorder %v768, 0
        %v923 = vsub.s32 0, %v768
        %v924 = vsel %vm922, %v923, %v768
        %v925 = vshrl.u32 %v924, 4
        %v926 = vand.u32 %v924, 15
        %v927 = vsub.s32 0, %v926
        %v928 = vsel %vm922, %v927, %v926
        %vm929 = vcmp.lt.s32.totalorder %v769, 0
        %v930 = vsub.s32 0, %v769
        %v931 = vsel %vm929, %v930, %v769
        %v932 = vshrl.u32 %v931, 4
        %v933 = vand.u32 %v931, 15
        %v934 = vsub.s32 0, %v933
        %v935 = vsel %vm929, %v934, %v933
        %vm936 = vcmp.lt.s32.totalorder %v770, 0
        %v937 = vsub.s32 0, %v770
        %v938 = vsel %vm936, %v937, %v770
        %v939 = vshrl.u32 %v938, 4
        %v940 = vand.u32 %v938, 15
        %v941 = vsub.s32 0, %v940
        %v942 = vsel %vm936, %v941, %v940
        %vm943 = vcmp.lt.s32.totalorder %v771, 0
        %v944 = vsub.s32 0, %v771
        %v945 = vsel %vm943, %v944, %v771
        %v946 = vshrl.u32 %v945, 4
        %v947 = vand.u32 %v945, 15
        %v948 = vsub.s32 0, %v947
        %v949 = vsel %vm943, %v948, %v947
        %vm950 = vcmp.lt.s32.totalorder %v772, 0
        %v951 = vsub.s32 0, %v772
        %v952 = vsel %vm950, %v951, %v772
        %v953 = vshrl.u32 %v952, 4
        %v954 = vand.u32 %v952, 15
        %v955 = vsub.s32 0, %v954
        %v956 = vsel %vm950, %v955, %v954
        %vm957 = vcmp.lt.s32.totalorder %v773, 0
        %v958 = vsub.s32 0, %v773
        %v959 = vsel %vm957, %v958, %v773
        %v960 = vshrl.u32 %v959, 4
        %v961 = vand.u32 %v959, 15
        %v962 = vsub.s32 0, %v961
        %v963 = vsel %vm957, %v962, %v961
        %vm964 = vcmp.lt.s32.totalorder %v774, 0
        %v965 = vsub.s32 0, %v774
        %v966 = vsel %vm964, %v965, %v774
        %v967 = vshrl.u32 %v966, 4
        %v968 = vand.u32 %v966, 15
        %v969 = vsub.s32 0, %v968
        %v970 = vsel %vm964, %v969, %v968
        %vm971 = vcmp.lt.s32.totalorder %v775, 0
        %v972 = vsub.s32 0, %v775
        %v973 = vsel %vm971, %v972, %v775
        %v974 = vshrl.u32 %v973, 4
        %v975 = vand.u32 %v973, 15
        %v976 = vsub.s32 0, %v975
        %v977 = vsel %vm971, %v976, %v975
        %vm978 = vcmp.lt.s32.totalorder %v776, 0
        %v979 = vsub.s32 0, %v776
        %v980 = vsel %vm978, %v979, %v776
        %v981 = vshrl.u32 %v980, 4
        %v982 = vand.u32 %v980, 15
        %v983 = vsub.s32 0, %v982
        %v984 = vsel %vm978, %v983, %v982
        %vm985 = vcmp.lt.s32.totalorder %v777, 0
        %v986 = vsub.s32 0, %v777
        %v987 = vsel %vm985, %v986, %v777
        %v988 = vshrl.u32 %v987, 4
        %v989 = vand.u32 %v987, 15
        %v990 = vsub.s32 0, %v989
        %v991 = vsel %vm985, %v990, %v989
        %vm992 = vcmp.lt.s32.totalorder %v778, 0
        %v993 = vsub.s32 0, %v778
        %v994 = vsel %vm992, %v993, %v778
        %v995 = vshrl.u32 %v994, 4
        %v996 = vand.u32 %v994, 15
        %v997 = vsub.s32 0, %v996
        %v998 = vsel %vm992, %v997, %v996
        %vm999 = vcmp.lt.s32.totalorder %v779, 0
        %v1000 = vsub.s32 0, %v779
        %v1001 = vsel %vm999, %v1000, %v779
        %v1002 = vshrl.u32 %v1001, 4
        %v1003 = vand.u32 %v1001, 15
        %v1004 = vsub.s32 0, %v1003
        %v1005 = vsel %vm999, %v1004, %v1003
        %vm1006 = vcmp.lt.s32.totalorder %v780, 0
        %v1007 = vsub.s32 0, %v780
        %v1008 = vsel %vm1006, %v1007, %v780
        %v1009 = vshrl.u32 %v1008, 4
        %v1010 = vand.u32 %v1008, 15
        %v1011 = vsub.s32 0, %v1010
        %v1012 = vsel %vm1006, %v1011, %v1010
        %vm1013 = vcmp.lt.s32.totalorder %v781, 0
        %v1014 = vsub.s32 0, %v781
        %v1015 = vsel %vm1013, %v1014, %v781
        %v1016 = vshrl.u32 %v1015, 4
        %v1017 = vand.u32 %v1015, 15
        %v1018 = vsub.s32 0, %v1017
        %v1019 = vsel %vm1013, %v1018, %v1017
        %vm1020 = vcmp.lt.s32.totalorder %v782, 0
        %v1021 = vsub.s32 0, %v782
        %v1022 = vsel %vm1020, %v1021, %v782
        %v1023 = vshrl.u32 %v1022, 4
        %v1024 = vand.u32 %v1022, 15
        %v1025 = vsub.s32 0, %v1024
        %v1026 = vsel %vm1020, %v1025, %v1024
        %vm1027 = vcmp.lt.s32.totalorder %v783, 0
        %v1028 = vsub.s32 0, %v783
        %v1029 = vsel %vm1027, %v1028, %v783
        %v1030 = vshrl.u32 %v1029, 4
        %v1031 = vand.u32 %v1029, 15
        %v1032 = vsub.s32 0, %v1031
        %v1033 = vsel %vm1027, %v1032, %v1031
        %vm1034 = vcmp.lt.s32.totalorder %v784, 0
        %v1035 = vsub.s32 0, %v784
        %v1036 = vsel %vm1034, %v1035, %v784
        %v1037 = vshrl.u32 %v1036, 4
        %v1038 = vand.u32 %v1036, 15
        %v1039 = vsub.s32 0, %v1038
        %v1040 = vsel %vm1034, %v1039, %v1038
        %vm1041 = vcmp.lt.s32.totalorder %v785, 0
        %v1042 = vsub.s32 0, %v785
        %v1043 = vsel %vm1041, %v1042, %v785
        %v1044 = vshrl.u32 %v1043, 4
        %v1045 = vand.u32 %v1043, 15
        %v1046 = vsub.s32 0, %v1045
        %v1047 = vsel %vm1041, %v1046, %v1045
        %vm1048 = vcmp.lt.s32.totalorder %v786, 0
        %v1049 = vsub.s32 0, %v786
        %v1050 = vsel %vm1048, %v1049, %v786
        %v1051 = vshrl.u32 %v1050, 4
        %v1052 = vand.u32 %v1050, 15
        %v1053 = vsub.s32 0, %v1052
        %v1054 = vsel %vm1048, %v1053, %v1052
        %vm1055 = vcmp.lt.s32.totalorder %v787, 0
        %v1056 = vsub.s32 0, %v787
        %v1057 = vsel %vm1055, %v1056, %v787
        %v1058 = vshrl.u32 %v1057, 4
        %v1059 = vand.u32 %v1057, 15
        %v1060 = vsub.s32 0, %v1059
        %v1061 = vsel %vm1055, %v1060, %v1059
        %vm1062 = vcmp.lt.s32.totalorder %v788, 0
        %v1063 = vsub.s32 0, %v788
        %v1064 = vsel %vm1062, %v1063, %v788
        %v1065 = vshrl.u32 %v1064, 4
        %v1066 = vand.u32 %v1064, 15
        %v1067 = vsub.s32 0, %v1066
        %v1068 = vsel %vm1062, %v1067, %v1066
        %vm1069 = vcmp.ne.s32.totalorder %v795, 0
        %vm1070 = vcmp.ne.s32.totalorder %v802, 0
        %vm1071 = vcmp.ne.s32.totalorder %v809, 0
        %vm1072 = vcmp.ne.s32.totalorder %v816, 0
        %vm1073 = vcmp.ne.s32.totalorder %v823, 0
        %vm1074 = vcmp.ne.s32.totalorder %v830, 0
        %vm1075 = vcmp.ne.s32.totalorder %v837, 0
        %vm1076 = vcmp.ne.s32.totalorder %v844, 0
        %vm1077 = vcmp.ne.s32.totalorder %v851, 0
        %vm1078 = vcmp.ne.s32.totalorder %v858, 0
        %vm1079 = vcmp.ne.s32.totalorder %v865, 0
        %vm1080 = vcmp.ne.s32.totalorder %v872, 0
        %vm1081 = vcmp.ne.s32.totalorder %v879, 0
        %vm1082 = vcmp.ne.s32.totalorder %v886, 0
        %vm1083 = vcmp.ne.s32.totalorder %v893, 0
        %vm1084 = vcmp.ne.s32.totalorder %v900, 0
        %vm1085 = vcmp.ne.s32.totalorder %v907, 0
        %vm1086 = vcmp.ne.s32.totalorder %v914, 0
        %vm1087 = vcmp.ne.s32.totalorder %v921, 0
        %vm1088 = vcmp.ne.s32.totalorder %v928, 0
        %vm1089 = vcmp.ne.s32.totalorder %v935, 0
        %vm1090 = vcmp.ne.s32.totalorder %v942, 0
        %vm1091 = vcmp.ne.s32.totalorder %v949, 0
        %vm1092 = vcmp.ne.s32.totalorder %v956, 0
        %vm1093 = vcmp.ne.s32.totalorder %v963, 0
        %vm1094 = vcmp.ne.s32.totalorder %v970, 0
        %vm1095 = vcmp.ne.s32.totalorder %v977, 0
        %vm1096 = vcmp.ne.s32.totalorder %v984, 0
        %vm1097 = vcmp.ne.s32.totalorder %v991, 0
        %vm1098 = vcmp.ne.s32.totalorder %v998, 0
        %vm1099 = vcmp.ne.s32.totalorder %v1005, 0
        %vm1100 = vcmp.ne.s32.totalorder %v1012, 0
        %vm1101 = vcmp.ne.s32.totalorder %v1019, 0
        %vm1102 = vcmp.ne.s32.totalorder %v1026, 0
        %vm1103 = vcmp.ne.s32.totalorder %v1033, 0
        %vm1104 = vcmp.ne.s32.totalorder %v1040, 0
        %vm1105 = vcmp.ne.s32.totalorder %v1047, 0
        %vm1106 = vcmp.ne.s32.totalorder %v1054, 0
        %vm1107 = vcmp.ne.s32.totalorder %v1061, 0
        %vm1108 = vcmp.ne.s32.totalorder %v1068, 0
        %vm1109 = vcmp.lt.s32.totalorder %v795, 0
        %vm1110 = vcmp.lt.s32.totalorder %v802, 0
        %vm1111 = vcmp.lt.s32.totalorder %v809, 0
        %vm1112 = vcmp.lt.s32.totalorder %v816, 0
        %vm1113 = vcmp.lt.s32.totalorder %v823, 0
        %vm1114 = vcmp.lt.s32.totalorder %v830, 0
        %vm1115 = vcmp.lt.s32.totalorder %v837, 0
        %vm1116 = vcmp.lt.s32.totalorder %v844, 0
        %vm1117 = vcmp.lt.s32.totalorder %v851, 0
        %vm1118 = vcmp.lt.s32.totalorder %v858, 0
        %vm1119 = vcmp.lt.s32.totalorder %v865, 0
        %vm1120 = vcmp.lt.s32.totalorder %v872, 0
        %vm1121 = vcmp.lt.s32.totalorder %v879, 0
        %vm1122 = vcmp.lt.s32.totalorder %v886, 0
        %vm1123 = vcmp.lt.s32.totalorder %v893, 0
        %vm1124 = vcmp.lt.s32.totalorder %v900, 0
        %vm1125 = vcmp.lt.s32.totalorder %v907, 0
        %vm1126 = vcmp.lt.s32.totalorder %v914, 0
        %vm1127 = vcmp.lt.s32.totalorder %v921, 0
        %vm1128 = vcmp.lt.s32.totalorder %v928, 0
        %vm1129 = vcmp.lt.s32.totalorder %v935, 0
        %vm1130 = vcmp.lt.s32.totalorder %v942, 0
        %vm1131 = vcmp.lt.s32.totalorder %v949, 0
        %vm1132 = vcmp.lt.s32.totalorder %v956, 0
        %vm1133 = vcmp.lt.s32.totalorder %v963, 0
        %vm1134 = vcmp.lt.s32.totalorder %v970, 0
        %vm1135 = vcmp.lt.s32.totalorder %v977, 0
        %vm1136 = vcmp.lt.s32.totalorder %v984, 0
        %vm1137 = vcmp.lt.s32.totalorder %v991, 0
        %vm1138 = vcmp.lt.s32.totalorder %v998, 0
        %vm1139 = vcmp.lt.s32.totalorder %v1005, 0
        %vm1140 = vcmp.lt.s32.totalorder %v1012, 0
        %vm1141 = vcmp.lt.s32.totalorder %v1019, 0
        %vm1142 = vcmp.lt.s32.totalorder %v1026, 0
        %vm1143 = vcmp.lt.s32.totalorder %v1033, 0
        %vm1144 = vcmp.lt.s32.totalorder %v1040, 0
        %vm1145 = vcmp.lt.s32.totalorder %v1047, 0
        %vm1146 = vcmp.lt.s32.totalorder %v1054, 0
        %vm1147 = vcmp.lt.s32.totalorder %v1061, 0
        %vm1148 = vcmp.lt.s32.totalorder %v1068, 0
        %vm1149 = vmand %vm1109, %vm1069
        %vm1150 = vmand %vm1110, %vm1070
        %vm1151 = vmand %vm1111, %vm1071
        %vm1152 = vmand %vm1112, %vm1072
        %vm1153 = vmand %vm1113, %vm1073
        %vm1154 = vmand %vm1114, %vm1074
        %vm1155 = vmand %vm1115, %vm1075
        %vm1156 = vmand %vm1116, %vm1076
        %vm1157 = vmand %vm1117, %vm1077
        %vm1158 = vmand %vm1118, %vm1078
        %vm1159 = vmand %vm1119, %vm1079
        %vm1160 = vmand %vm1120, %vm1080
        %vm1161 = vmand %vm1121, %vm1081
        %vm1162 = vmand %vm1122, %vm1082
        %vm1163 = vmand %vm1123, %vm1083
        %vm1164 = vmand %vm1124, %vm1084
        %vm1165 = vmand %vm1125, %vm1085
        %vm1166 = vmand %vm1126, %vm1086
        %vm1167 = vmand %vm1127, %vm1087
        %vm1168 = vmand %vm1128, %vm1088
        %vm1169 = vmand %vm1129, %vm1089
        %vm1170 = vmand %vm1130, %vm1090
        %vm1171 = vmand %vm1131, %vm1091
        %vm1172 = vmand %vm1132, %vm1092
        %vm1173 = vmand %vm1133, %vm1093
        %vm1174 = vmand %vm1134, %vm1094
        %vm1175 = vmand %vm1135, %vm1095
        %vm1176 = vmand %vm1136, %vm1096
        %vm1177 = vmand %vm1137, %vm1097
        %vm1178 = vmand %vm1138, %vm1098
        %vm1179 = vmand %vm1139, %vm1099
        %vm1180 = vmand %vm1140, %vm1100
        %vm1181 = vmand %vm1141, %vm1101
        %vm1182 = vmand %vm1142, %vm1102
        %vm1183 = vmand %vm1143, %vm1103
        %vm1184 = vmand %vm1144, %vm1104
        %vm1185 = vmand %vm1145, %vm1105
        %vm1186 = vmand %vm1146, %vm1106
        %vm1187 = vmand %vm1147, %vm1107
        %vm1188 = vmand %vm1148, %vm1108
        %v1189 = vadd.s32 %v795, 16
        %v1190 = vadd.s32 %v802, 16
        %v1191 = vadd.s32 %v809, 16
        %v1192 = vadd.s32 %v816, 16
        %v1193 = vadd.s32 %v823, 16
        %v1194 = vadd.s32 %v830, 16
        %v1195 = vadd.s32 %v837, 16
        %v1196 = vadd.s32 %v844, 16
        %v1197 = vadd.s32 %v851, 16
        %v1198 = vadd.s32 %v858, 16
        %v1199 = vadd.s32 %v865, 16
        %v1200 = vadd.s32 %v872, 16
        %v1201 = vadd.s32 %v879, 16
        %v1202 = vadd.s32 %v886, 16
        %v1203 = vadd.s32 %v893, 16
        %v1204 = vadd.s32 %v900, 16
        %v1205 = vadd.s32 %v907, 16
        %v1206 = vadd.s32 %v914, 16
        %v1207 = vadd.s32 %v921, 16
        %v1208 = vadd.s32 %v928, 16
        %v1209 = vadd.s32 %v935, 16
        %v1210 = vadd.s32 %v942, 16
        %v1211 = vadd.s32 %v949, 16
        %v1212 = vadd.s32 %v956, 16
        %v1213 = vadd.s32 %v963, 16
        %v1214 = vadd.s32 %v970, 16
        %v1215 = vadd.s32 %v977, 16
        %v1216 = vadd.s32 %v984, 16
        %v1217 = vadd.s32 %v991, 16
        %v1218 = vadd.s32 %v998, 16
        %v1219 = vadd.s32 %v1005, 16
        %v1220 = vadd.s32 %v1012, 16
        %v1221 = vadd.s32 %v1019, 16
        %v1222 = vadd.s32 %v1026, 16
        %v1223 = vadd.s32 %v1033, 16
        %v1224 = vadd.s32 %v1040, 16
        %v1225 = vadd.s32 %v1047, 16
        %v1226 = vadd.s32 %v1054, 16
        %v1227 = vadd.s32 %v1061, 16
        %v1228 = vadd.s32 %v1068, 16
        %v1229 = vsel %vm1149, %v1189, %v795
        %v1230 = vsel %vm1150, %v1190, %v802
        %v1231 = vsel %vm1151, %v1191, %v809
        %v1232 = vsel %vm1152, %v1192, %v816
        %v1233 = vsel %vm1153, %v1193, %v823
        %v1234 = vsel %vm1154, %v1194, %v830
        %v1235 = vsel %vm1155, %v1195, %v837
        %v1236 = vsel %vm1156, %v1196, %v844
        %v1237 = vsel %vm1157, %v1197, %v851
        %v1238 = vsel %vm1158, %v1198, %v858
        %v1239 = vsel %vm1159, %v1199, %v865
        %v1240 = vsel %vm1160, %v1200, %v872
        %v1241 = vsel %vm1161, %v1201, %v879
        %v1242 = vsel %vm1162, %v1202, %v886
        %v1243 = vsel %vm1163, %v1203, %v893
        %v1244 = vsel %vm1164, %v1204, %v900
        %v1245 = vsel %vm1165, %v1205, %v907
        %v1246 = vsel %vm1166, %v1206, %v914
        %v1247 = vsel %vm1167, %v1207, %v921
        %v1248 = vsel %vm1168, %v1208, %v928
        %v1249 = vsel %vm1169, %v1209, %v935
        %v1250 = vsel %vm1170, %v1210, %v942
        %v1251 = vsel %vm1171, %v1211, %v949
        %v1252 = vsel %vm1172, %v1212, %v956
        %v1253 = vsel %vm1173, %v1213, %v963
        %v1254 = vsel %vm1174, %v1214, %v970
        %v1255 = vsel %vm1175, %v1215, %v977
        %v1256 = vsel %vm1176, %v1216, %v984
        %v1257 = vsel %vm1177, %v1217, %v991
        %v1258 = vsel %vm1178, %v1218, %v998
        %v1259 = vsel %vm1179, %v1219, %v1005
        %v1260 = vsel %vm1180, %v1220, %v1012
        %v1261 = vsel %vm1181, %v1221, %v1019
        %v1262 = vsel %vm1182, %v1222, %v1026
        %v1263 = vsel %vm1183, %v1223, %v1033
        %v1264 = vsel %vm1184, %v1224, %v1040
        %v1265 = vsel %vm1185, %v1225, %v1047
        %v1266 = vsel %vm1186, %v1226, %v1054
        %v1267 = vsel %vm1187, %v1227, %v1061
        %v1268 = vsel %vm1188, %v1228, %v1068
        %v1269 = vadd.s32 %v1229, 4294967292
        %v1270 = vadd.s32 %v1230, 4294967292
        %v1271 = vadd.s32 %v1231, 4294967292
        %v1272 = vadd.s32 %v1232, 4294967292
        %v1273 = vadd.s32 %v1233, 4294967292
        %v1274 = vadd.s32 %v1234, 4294967292
        %v1275 = vadd.s32 %v1235, 4294967292
        %v1276 = vadd.s32 %v1236, 4294967292
        %v1277 = vadd.s32 %v1237, 4294967292
        %v1278 = vadd.s32 %v1238, 4294967292
        %v1279 = vadd.s32 %v1239, 4294967292
        %v1280 = vadd.s32 %v1240, 4294967292
        %v1281 = vadd.s32 %v1241, 4294967292
        %v1282 = vadd.s32 %v1242, 4294967292
        %v1283 = vadd.s32 %v1243, 4294967292
        %v1284 = vadd.s32 %v1244, 4294967292
        %v1285 = vadd.s32 %v1245, 4294967292
        %v1286 = vadd.s32 %v1246, 4294967292
        %v1287 = vadd.s32 %v1247, 4294967292
        %v1288 = vadd.s32 %v1248, 4294967292
        %v1289 = vadd.s32 %v1249, 4294967292
        %v1290 = vadd.s32 %v1250, 4294967292
        %v1291 = vadd.s32 %v1251, 4294967292
        %v1292 = vadd.s32 %v1252, 4294967292
        %v1293 = vadd.s32 %v1253, 4294967292
        %v1294 = vadd.s32 %v1254, 4294967292
        %v1295 = vadd.s32 %v1255, 4294967292
        %v1296 = vadd.s32 %v1256, 4294967292
        %v1297 = vadd.s32 %v1257, 4294967292
        %v1298 = vadd.s32 %v1258, 4294967292
        %v1299 = vadd.s32 %v1259, 4294967292
        %v1300 = vadd.s32 %v1260, 4294967292
        %v1301 = vadd.s32 %v1261, 4294967292
        %v1302 = vadd.s32 %v1262, 4294967292
        %v1303 = vadd.s32 %v1263, 4294967292
        %v1304 = vadd.s32 %v1264, 4294967292
        %v1305 = vadd.s32 %v1265, 4294967292
        %v1306 = vadd.s32 %v1266, 4294967292
        %v1307 = vadd.s32 %v1267, 4294967292
        %v1308 = vadd.s32 %v1268, 4294967292
        %vm1309 = vcmp.ge.s32.totalorder %v1269, 0
        %vm1310 = vcmp.ge.s32.totalorder %v1270, 0
        %vm1311 = vcmp.ge.s32.totalorder %v1271, 0
        %vm1312 = vcmp.ge.s32.totalorder %v1272, 0
        %vm1313 = vcmp.ge.s32.totalorder %v1273, 0
        %vm1314 = vcmp.ge.s32.totalorder %v1274, 0
        %vm1315 = vcmp.ge.s32.totalorder %v1275, 0
        %vm1316 = vcmp.ge.s32.totalorder %v1276, 0
        %vm1317 = vcmp.ge.s32.totalorder %v1277, 0
        %vm1318 = vcmp.ge.s32.totalorder %v1278, 0
        %vm1319 = vcmp.ge.s32.totalorder %v1279, 0
        %vm1320 = vcmp.ge.s32.totalorder %v1280, 0
        %vm1321 = vcmp.ge.s32.totalorder %v1281, 0
        %vm1322 = vcmp.ge.s32.totalorder %v1282, 0
        %vm1323 = vcmp.ge.s32.totalorder %v1283, 0
        %vm1324 = vcmp.ge.s32.totalorder %v1284, 0
        %vm1325 = vcmp.ge.s32.totalorder %v1285, 0
        %vm1326 = vcmp.ge.s32.totalorder %v1286, 0
        %vm1327 = vcmp.ge.s32.totalorder %v1287, 0
        %vm1328 = vcmp.ge.s32.totalorder %v1288, 0
        %vm1329 = vcmp.ge.s32.totalorder %v1289, 0
        %vm1330 = vcmp.ge.s32.totalorder %v1290, 0
        %vm1331 = vcmp.ge.s32.totalorder %v1291, 0
        %vm1332 = vcmp.ge.s32.totalorder %v1292, 0
        %vm1333 = vcmp.ge.s32.totalorder %v1293, 0
        %vm1334 = vcmp.ge.s32.totalorder %v1294, 0
        %vm1335 = vcmp.ge.s32.totalorder %v1295, 0
        %vm1336 = vcmp.ge.s32.totalorder %v1296, 0
        %vm1337 = vcmp.ge.s32.totalorder %v1297, 0
        %vm1338 = vcmp.ge.s32.totalorder %v1298, 0
        %vm1339 = vcmp.ge.s32.totalorder %v1299, 0
        %vm1340 = vcmp.ge.s32.totalorder %v1300, 0
        %vm1341 = vcmp.ge.s32.totalorder %v1301, 0
        %vm1342 = vcmp.ge.s32.totalorder %v1302, 0
        %vm1343 = vcmp.ge.s32.totalorder %v1303, 0
        %vm1344 = vcmp.ge.s32.totalorder %v1304, 0
        %vm1345 = vcmp.ge.s32.totalorder %v1305, 0
        %vm1346 = vcmp.ge.s32.totalorder %v1306, 0
        %vm1347 = vcmp.ge.s32.totalorder %v1307, 0
        %vm1348 = vcmp.ge.s32.totalorder %v1308, 0
        %vm1349 = vcmp.lt.s32.totalorder %v1269, 16
        %vm1350 = vcmp.lt.s32.totalorder %v1270, 16
        %vm1351 = vcmp.lt.s32.totalorder %v1271, 16
        %vm1352 = vcmp.lt.s32.totalorder %v1272, 16
        %vm1353 = vcmp.lt.s32.totalorder %v1273, 16
        %vm1354 = vcmp.lt.s32.totalorder %v1274, 16
        %vm1355 = vcmp.lt.s32.totalorder %v1275, 16
        %vm1356 = vcmp.lt.s32.totalorder %v1276, 16
        %vm1357 = vcmp.lt.s32.totalorder %v1277, 16
        %vm1358 = vcmp.lt.s32.totalorder %v1278, 16
        %vm1359 = vcmp.lt.s32.totalorder %v1279, 16
        %vm1360 = vcmp.lt.s32.totalorder %v1280, 16
        %vm1361 = vcmp.lt.s32.totalorder %v1281, 16
        %vm1362 = vcmp.lt.s32.totalorder %v1282, 16
        %vm1363 = vcmp.lt.s32.totalorder %v1283, 16
        %vm1364 = vcmp.lt.s32.totalorder %v1284, 16
        %vm1365 = vcmp.lt.s32.totalorder %v1285, 16
        %vm1366 = vcmp.lt.s32.totalorder %v1286, 16
        %vm1367 = vcmp.lt.s32.totalorder %v1287, 16
        %vm1368 = vcmp.lt.s32.totalorder %v1288, 16
        %vm1369 = vcmp.lt.s32.totalorder %v1289, 16
        %vm1370 = vcmp.lt.s32.totalorder %v1290, 16
        %vm1371 = vcmp.lt.s32.totalorder %v1291, 16
        %vm1372 = vcmp.lt.s32.totalorder %v1292, 16
        %vm1373 = vcmp.lt.s32.totalorder %v1293, 16
        %vm1374 = vcmp.lt.s32.totalorder %v1294, 16
        %vm1375 = vcmp.lt.s32.totalorder %v1295, 16
        %vm1376 = vcmp.lt.s32.totalorder %v1296, 16
        %vm1377 = vcmp.lt.s32.totalorder %v1297, 16
        %vm1378 = vcmp.lt.s32.totalorder %v1298, 16
        %vm1379 = vcmp.lt.s32.totalorder %v1299, 16
        %vm1380 = vcmp.lt.s32.totalorder %v1300, 16
        %vm1381 = vcmp.lt.s32.totalorder %v1301, 16
        %vm1382 = vcmp.lt.s32.totalorder %v1302, 16
        %vm1383 = vcmp.lt.s32.totalorder %v1303, 16
        %vm1384 = vcmp.lt.s32.totalorder %v1304, 16
        %vm1385 = vcmp.lt.s32.totalorder %v1305, 16
        %vm1386 = vcmp.lt.s32.totalorder %v1306, 16
        %vm1387 = vcmp.lt.s32.totalorder %v1307, 16
        %vm1388 = vcmp.lt.s32.totalorder %v1308, 16
        %vm1389 = vmand %vm1309, %vm1349
        %vm1390 = vmand %vm1310, %vm1350
        %vm1391 = vmand %vm1311, %vm1351
        %vm1392 = vmand %vm1312, %vm1352
        %vm1393 = vmand %vm1313, %vm1353
        %vm1394 = vmand %vm1314, %vm1354
        %vm1395 = vmand %vm1315, %vm1355
        %vm1396 = vmand %vm1316, %vm1356
        %vm1397 = vmand %vm1317, %vm1357
        %vm1398 = vmand %vm1318, %vm1358
        %vm1399 = vmand %vm1319, %vm1359
        %vm1400 = vmand %vm1320, %vm1360
        %vm1401 = vmand %vm1321, %vm1361
        %vm1402 = vmand %vm1322, %vm1362
        %vm1403 = vmand %vm1323, %vm1363
        %vm1404 = vmand %vm1324, %vm1364
        %vm1405 = vmand %vm1325, %vm1365
        %vm1406 = vmand %vm1326, %vm1366
        %vm1407 = vmand %vm1327, %vm1367
        %vm1408 = vmand %vm1328, %vm1368
        %vm1409 = vmand %vm1329, %vm1369
        %vm1410 = vmand %vm1330, %vm1370
        %vm1411 = vmand %vm1331, %vm1371
        %vm1412 = vmand %vm1332, %vm1372
        %vm1413 = vmand %vm1333, %vm1373
        %vm1414 = vmand %vm1334, %vm1374
        %vm1415 = vmand %vm1335, %vm1375
        %vm1416 = vmand %vm1336, %vm1376
        %vm1417 = vmand %vm1337, %vm1377
        %vm1418 = vmand %vm1338, %vm1378
        %vm1419 = vmand %vm1339, %vm1379
        %vm1420 = vmand %vm1340, %vm1380
        %vm1421 = vmand %vm1341, %vm1381
        %vm1422 = vmand %vm1342, %vm1382
        %vm1423 = vmand %vm1343, %vm1383
        %vm1424 = vmand %vm1344, %vm1384
        %vm1425 = vmand %vm1345, %vm1385
        %vm1426 = vmand %vm1346, %vm1386
        %vm1427 = vmand %vm1347, %vm1387
        %vm1428 = vmand %vm1348, %vm1388
        %v1429 = vsel %vm1389, 1, 0
        %v1430 = vsel %vm1390, 1, 0
        %v1431 = vsel %vm1391, 1, 0
        %v1432 = vsel %vm1392, 1, 0
        %v1433 = vsel %vm1393, 1, 0
        %v1434 = vsel %vm1394, 1, 0
        %v1435 = vsel %vm1395, 1, 0
        %v1436 = vsel %vm1396, 1, 0
        %v1437 = vsel %vm1397, 1, 0
        %v1438 = vsel %vm1398, 1, 0
        %v1439 = vsel %vm1399, 1, 0
        %v1440 = vsel %vm1400, 1, 0
        %v1441 = vsel %vm1401, 1, 0
        %v1442 = vsel %vm1402, 1, 0
        %v1443 = vsel %vm1403, 1, 0
        %v1444 = vsel %vm1404, 1, 0
        %v1445 = vsel %vm1405, 1, 0
        %v1446 = vsel %vm1406, 1, 0
        %v1447 = vsel %vm1407, 1, 0
        %v1448 = vsel %vm1408, 1, 0
        %v1449 = vsel %vm1409, 1, 0
        %v1450 = vsel %vm1410, 1, 0
        %v1451 = vsel %vm1411, 1, 0
        %v1452 = vsel %vm1412, 1, 0
        %v1453 = vsel %vm1413, 1, 0
        %v1454 = vsel %vm1414, 1, 0
        %v1455 = vsel %vm1415, 1, 0
        %v1456 = vsel %vm1416, 1, 0
        %v1457 = vsel %vm1417, 1, 0
        %v1458 = vsel %vm1418, 1, 0
        %v1459 = vsel %vm1419, 1, 0
        %v1460 = vsel %vm1420, 1, 0
        %v1461 = vsel %vm1421, 1, 0
        %v1462 = vsel %vm1422, 1, 0
        %v1463 = vsel %vm1423, 1, 0
        %v1464 = vsel %vm1424, 1, 0
        %v1465 = vsel %vm1425, 1, 0
        %v1466 = vsel %vm1426, 1, 0
        %v1467 = vsel %vm1427, 1, 0
        %v1468 = vsel %vm1428, 1, 0
        %v1469 = vcvt.s32.f32 %v1429
        %v1470 = vcvt.s32.f32 %v1430
        %v1471 = vcvt.s32.f32 %v1431
        %v1472 = vcvt.s32.f32 %v1432
        %v1473 = vcvt.s32.f32 %v1433
        %v1474 = vcvt.s32.f32 %v1434
        %v1475 = vcvt.s32.f32 %v1435
        %v1476 = vcvt.s32.f32 %v1436
        %v1477 = vcvt.s32.f32 %v1437
        %v1478 = vcvt.s32.f32 %v1438
        %v1479 = vcvt.s32.f32 %v1439
        %v1480 = vcvt.s32.f32 %v1440
        %v1481 = vcvt.s32.f32 %v1441
        %v1482 = vcvt.s32.f32 %v1442
        %v1483 = vcvt.s32.f32 %v1443
        %v1484 = vcvt.s32.f32 %v1444
        %v1485 = vcvt.s32.f32 %v1445
        %v1486 = vcvt.s32.f32 %v1446
        %v1487 = vcvt.s32.f32 %v1447
        %v1488 = vcvt.s32.f32 %v1448
        %v1489 = vcvt.s32.f32 %v1449
        %v1490 = vcvt.s32.f32 %v1450
        %v1491 = vcvt.s32.f32 %v1451
        %v1492 = vcvt.s32.f32 %v1452
        %v1493 = vcvt.s32.f32 %v1453
        %v1494 = vcvt.s32.f32 %v1454
        %v1495 = vcvt.s32.f32 %v1455
        %v1496 = vcvt.s32.f32 %v1456
        %v1497 = vcvt.s32.f32 %v1457
        %v1498 = vcvt.s32.f32 %v1458
        %v1499 = vcvt.s32.f32 %v1459
        %v1500 = vcvt.s32.f32 %v1460
        %v1501 = vcvt.s32.f32 %v1461
        %v1502 = vcvt.s32.f32 %v1462
        %v1503 = vcvt.s32.f32 %v1463
        %v1504 = vcvt.s32.f32 %v1464
        %v1505 = vcvt.s32.f32 %v1465
        %v1506 = vcvt.s32.f32 %v1466
        %v1507 = vcvt.s32.f32 %v1467
        %v1508 = vcvt.s32.f32 %v1468
        %v1509 = vadd.s32 %v1229, 4294967293
        %v1510 = vadd.s32 %v1230, 4294967293
        %v1511 = vadd.s32 %v1231, 4294967293
        %v1512 = vadd.s32 %v1232, 4294967293
        %v1513 = vadd.s32 %v1233, 4294967293
        %v1514 = vadd.s32 %v1234, 4294967293
        %v1515 = vadd.s32 %v1235, 4294967293
        %v1516 = vadd.s32 %v1236, 4294967293
        %v1517 = vadd.s32 %v1237, 4294967293
        %v1518 = vadd.s32 %v1238, 4294967293
        %v1519 = vadd.s32 %v1239, 4294967293
        %v1520 = vadd.s32 %v1240, 4294967293
        %v1521 = vadd.s32 %v1241, 4294967293
        %v1522 = vadd.s32 %v1242, 4294967293
        %v1523 = vadd.s32 %v1243, 4294967293
        %v1524 = vadd.s32 %v1244, 4294967293
        %v1525 = vadd.s32 %v1245, 4294967293
        %v1526 = vadd.s32 %v1246, 4294967293
        %v1527 = vadd.s32 %v1247, 4294967293
        %v1528 = vadd.s32 %v1248, 4294967293
        %v1529 = vadd.s32 %v1249, 4294967293
        %v1530 = vadd.s32 %v1250, 4294967293
        %v1531 = vadd.s32 %v1251, 4294967293
        %v1532 = vadd.s32 %v1252, 4294967293
        %v1533 = vadd.s32 %v1253, 4294967293
        %v1534 = vadd.s32 %v1254, 4294967293
        %v1535 = vadd.s32 %v1255, 4294967293
        %v1536 = vadd.s32 %v1256, 4294967293
        %v1537 = vadd.s32 %v1257, 4294967293
        %v1538 = vadd.s32 %v1258, 4294967293
        %v1539 = vadd.s32 %v1259, 4294967293
        %v1540 = vadd.s32 %v1260, 4294967293
        %v1541 = vadd.s32 %v1261, 4294967293
        %v1542 = vadd.s32 %v1262, 4294967293
        %v1543 = vadd.s32 %v1263, 4294967293
        %v1544 = vadd.s32 %v1264, 4294967293
        %v1545 = vadd.s32 %v1265, 4294967293
        %v1546 = vadd.s32 %v1266, 4294967293
        %v1547 = vadd.s32 %v1267, 4294967293
        %v1548 = vadd.s32 %v1268, 4294967293
        %vm1549 = vcmp.ge.s32.totalorder %v1509, 0
        %vm1550 = vcmp.ge.s32.totalorder %v1510, 0
        %vm1551 = vcmp.ge.s32.totalorder %v1511, 0
        %vm1552 = vcmp.ge.s32.totalorder %v1512, 0
        %vm1553 = vcmp.ge.s32.totalorder %v1513, 0
        %vm1554 = vcmp.ge.s32.totalorder %v1514, 0
        %vm1555 = vcmp.ge.s32.totalorder %v1515, 0
        %vm1556 = vcmp.ge.s32.totalorder %v1516, 0
        %vm1557 = vcmp.ge.s32.totalorder %v1517, 0
        %vm1558 = vcmp.ge.s32.totalorder %v1518, 0
        %vm1559 = vcmp.ge.s32.totalorder %v1519, 0
        %vm1560 = vcmp.ge.s32.totalorder %v1520, 0
        %vm1561 = vcmp.ge.s32.totalorder %v1521, 0
        %vm1562 = vcmp.ge.s32.totalorder %v1522, 0
        %vm1563 = vcmp.ge.s32.totalorder %v1523, 0
        %vm1564 = vcmp.ge.s32.totalorder %v1524, 0
        %vm1565 = vcmp.ge.s32.totalorder %v1525, 0
        %vm1566 = vcmp.ge.s32.totalorder %v1526, 0
        %vm1567 = vcmp.ge.s32.totalorder %v1527, 0
        %vm1568 = vcmp.ge.s32.totalorder %v1528, 0
        %vm1569 = vcmp.ge.s32.totalorder %v1529, 0
        %vm1570 = vcmp.ge.s32.totalorder %v1530, 0
        %vm1571 = vcmp.ge.s32.totalorder %v1531, 0
        %vm1572 = vcmp.ge.s32.totalorder %v1532, 0
        %vm1573 = vcmp.ge.s32.totalorder %v1533, 0
        %vm1574 = vcmp.ge.s32.totalorder %v1534, 0
        %vm1575 = vcmp.ge.s32.totalorder %v1535, 0
        %vm1576 = vcmp.ge.s32.totalorder %v1536, 0
        %vm1577 = vcmp.ge.s32.totalorder %v1537, 0
        %vm1578 = vcmp.ge.s32.totalorder %v1538, 0
        %vm1579 = vcmp.ge.s32.totalorder %v1539, 0
        %vm1580 = vcmp.ge.s32.totalorder %v1540, 0
        %vm1581 = vcmp.ge.s32.totalorder %v1541, 0
        %vm1582 = vcmp.ge.s32.totalorder %v1542, 0
        %vm1583 = vcmp.ge.s32.totalorder %v1543, 0
        %vm1584 = vcmp.ge.s32.totalorder %v1544, 0
        %vm1585 = vcmp.ge.s32.totalorder %v1545, 0
        %vm1586 = vcmp.ge.s32.totalorder %v1546, 0
        %vm1587 = vcmp.ge.s32.totalorder %v1547, 0
        %vm1588 = vcmp.ge.s32.totalorder %v1548, 0
        %vm1589 = vcmp.lt.s32.totalorder %v1509, 16
        %vm1590 = vcmp.lt.s32.totalorder %v1510, 16
        %vm1591 = vcmp.lt.s32.totalorder %v1511, 16
        %vm1592 = vcmp.lt.s32.totalorder %v1512, 16
        %vm1593 = vcmp.lt.s32.totalorder %v1513, 16
        %vm1594 = vcmp.lt.s32.totalorder %v1514, 16
        %vm1595 = vcmp.lt.s32.totalorder %v1515, 16
        %vm1596 = vcmp.lt.s32.totalorder %v1516, 16
        %vm1597 = vcmp.lt.s32.totalorder %v1517, 16
        %vm1598 = vcmp.lt.s32.totalorder %v1518, 16
        %vm1599 = vcmp.lt.s32.totalorder %v1519, 16
        %vm1600 = vcmp.lt.s32.totalorder %v1520, 16
        %vm1601 = vcmp.lt.s32.totalorder %v1521, 16
        %vm1602 = vcmp.lt.s32.totalorder %v1522, 16
        %vm1603 = vcmp.lt.s32.totalorder %v1523, 16
        %vm1604 = vcmp.lt.s32.totalorder %v1524, 16
        %vm1605 = vcmp.lt.s32.totalorder %v1525, 16
        %vm1606 = vcmp.lt.s32.totalorder %v1526, 16
        %vm1607 = vcmp.lt.s32.totalorder %v1527, 16
        %vm1608 = vcmp.lt.s32.totalorder %v1528, 16
        %vm1609 = vcmp.lt.s32.totalorder %v1529, 16
        %vm1610 = vcmp.lt.s32.totalorder %v1530, 16
        %vm1611 = vcmp.lt.s32.totalorder %v1531, 16
        %vm1612 = vcmp.lt.s32.totalorder %v1532, 16
        %vm1613 = vcmp.lt.s32.totalorder %v1533, 16
        %vm1614 = vcmp.lt.s32.totalorder %v1534, 16
        %vm1615 = vcmp.lt.s32.totalorder %v1535, 16
        %vm1616 = vcmp.lt.s32.totalorder %v1536, 16
        %vm1617 = vcmp.lt.s32.totalorder %v1537, 16
        %vm1618 = vcmp.lt.s32.totalorder %v1538, 16
        %vm1619 = vcmp.lt.s32.totalorder %v1539, 16
        %vm1620 = vcmp.lt.s32.totalorder %v1540, 16
        %vm1621 = vcmp.lt.s32.totalorder %v1541, 16
        %vm1622 = vcmp.lt.s32.totalorder %v1542, 16
        %vm1623 = vcmp.lt.s32.totalorder %v1543, 16
        %vm1624 = vcmp.lt.s32.totalorder %v1544, 16
        %vm1625 = vcmp.lt.s32.totalorder %v1545, 16
        %vm1626 = vcmp.lt.s32.totalorder %v1546, 16
        %vm1627 = vcmp.lt.s32.totalorder %v1547, 16
        %vm1628 = vcmp.lt.s32.totalorder %v1548, 16
        %vm1629 = vmand %vm1549, %vm1589
        %vm1630 = vmand %vm1550, %vm1590
        %vm1631 = vmand %vm1551, %vm1591
        %vm1632 = vmand %vm1552, %vm1592
        %vm1633 = vmand %vm1553, %vm1593
        %vm1634 = vmand %vm1554, %vm1594
        %vm1635 = vmand %vm1555, %vm1595
        %vm1636 = vmand %vm1556, %vm1596
        %vm1637 = vmand %vm1557, %vm1597
        %vm1638 = vmand %vm1558, %vm1598
        %vm1639 = vmand %vm1559, %vm1599
        %vm1640 = vmand %vm1560, %vm1600
        %vm1641 = vmand %vm1561, %vm1601
        %vm1642 = vmand %vm1562, %vm1602
        %vm1643 = vmand %vm1563, %vm1603
        %vm1644 = vmand %vm1564, %vm1604
        %vm1645 = vmand %vm1565, %vm1605
        %vm1646 = vmand %vm1566, %vm1606
        %vm1647 = vmand %vm1567, %vm1607
        %vm1648 = vmand %vm1568, %vm1608
        %vm1649 = vmand %vm1569, %vm1609
        %vm1650 = vmand %vm1570, %vm1610
        %vm1651 = vmand %vm1571, %vm1611
        %vm1652 = vmand %vm1572, %vm1612
        %vm1653 = vmand %vm1573, %vm1613
        %vm1654 = vmand %vm1574, %vm1614
        %vm1655 = vmand %vm1575, %vm1615
        %vm1656 = vmand %vm1576, %vm1616
        %vm1657 = vmand %vm1577, %vm1617
        %vm1658 = vmand %vm1578, %vm1618
        %vm1659 = vmand %vm1579, %vm1619
        %vm1660 = vmand %vm1580, %vm1620
        %vm1661 = vmand %vm1581, %vm1621
        %vm1662 = vmand %vm1582, %vm1622
        %vm1663 = vmand %vm1583, %vm1623
        %vm1664 = vmand %vm1584, %vm1624
        %vm1665 = vmand %vm1585, %vm1625
        %vm1666 = vmand %vm1586, %vm1626
        %vm1667 = vmand %vm1587, %vm1627
        %vm1668 = vmand %vm1588, %vm1628
        %v1669 = vsel %vm1629, 1, 0
        %v1670 = vsel %vm1630, 1, 0
        %v1671 = vsel %vm1631, 1, 0
        %v1672 = vsel %vm1632, 1, 0
        %v1673 = vsel %vm1633, 1, 0
        %v1674 = vsel %vm1634, 1, 0
        %v1675 = vsel %vm1635, 1, 0
        %v1676 = vsel %vm1636, 1, 0
        %v1677 = vsel %vm1637, 1, 0
        %v1678 = vsel %vm1638, 1, 0
        %v1679 = vsel %vm1639, 1, 0
        %v1680 = vsel %vm1640, 1, 0
        %v1681 = vsel %vm1641, 1, 0
        %v1682 = vsel %vm1642, 1, 0
        %v1683 = vsel %vm1643, 1, 0
        %v1684 = vsel %vm1644, 1, 0
        %v1685 = vsel %vm1645, 1, 0
        %v1686 = vsel %vm1646, 1, 0
        %v1687 = vsel %vm1647, 1, 0
        %v1688 = vsel %vm1648, 1, 0
        %v1689 = vsel %vm1649, 1, 0
        %v1690 = vsel %vm1650, 1, 0
        %v1691 = vsel %vm1651, 1, 0
        %v1692 = vsel %vm1652, 1, 0
        %v1693 = vsel %vm1653, 1, 0
        %v1694 = vsel %vm1654, 1, 0
        %v1695 = vsel %vm1655, 1, 0
        %v1696 = vsel %vm1656, 1, 0
        %v1697 = vsel %vm1657, 1, 0
        %v1698 = vsel %vm1658, 1, 0
        %v1699 = vsel %vm1659, 1, 0
        %v1700 = vsel %vm1660, 1, 0
        %v1701 = vsel %vm1661, 1, 0
        %v1702 = vsel %vm1662, 1, 0
        %v1703 = vsel %vm1663, 1, 0
        %v1704 = vsel %vm1664, 1, 0
        %v1705 = vsel %vm1665, 1, 0
        %v1706 = vsel %vm1666, 1, 0
        %v1707 = vsel %vm1667, 1, 0
        %v1708 = vsel %vm1668, 1, 0
        %v1709 = vcvt.s32.f32 %v1669
        %v1710 = vcvt.s32.f32 %v1670
        %v1711 = vcvt.s32.f32 %v1671
        %v1712 = vcvt.s32.f32 %v1672
        %v1713 = vcvt.s32.f32 %v1673
        %v1714 = vcvt.s32.f32 %v1674
        %v1715 = vcvt.s32.f32 %v1675
        %v1716 = vcvt.s32.f32 %v1676
        %v1717 = vcvt.s32.f32 %v1677
        %v1718 = vcvt.s32.f32 %v1678
        %v1719 = vcvt.s32.f32 %v1679
        %v1720 = vcvt.s32.f32 %v1680
        %v1721 = vcvt.s32.f32 %v1681
        %v1722 = vcvt.s32.f32 %v1682
        %v1723 = vcvt.s32.f32 %v1683
        %v1724 = vcvt.s32.f32 %v1684
        %v1725 = vcvt.s32.f32 %v1685
        %v1726 = vcvt.s32.f32 %v1686
        %v1727 = vcvt.s32.f32 %v1687
        %v1728 = vcvt.s32.f32 %v1688
        %v1729 = vcvt.s32.f32 %v1689
        %v1730 = vcvt.s32.f32 %v1690
        %v1731 = vcvt.s32.f32 %v1691
        %v1732 = vcvt.s32.f32 %v1692
        %v1733 = vcvt.s32.f32 %v1693
        %v1734 = vcvt.s32.f32 %v1694
        %v1735 = vcvt.s32.f32 %v1695
        %v1736 = vcvt.s32.f32 %v1696
        %v1737 = vcvt.s32.f32 %v1697
        %v1738 = vcvt.s32.f32 %v1698
        %v1739 = vcvt.s32.f32 %v1699
        %v1740 = vcvt.s32.f32 %v1700
        %v1741 = vcvt.s32.f32 %v1701
        %v1742 = vcvt.s32.f32 %v1702
        %v1743 = vcvt.s32.f32 %v1703
        %v1744 = vcvt.s32.f32 %v1704
        %v1745 = vcvt.s32.f32 %v1705
        %v1746 = vcvt.s32.f32 %v1706
        %v1747 = vcvt.s32.f32 %v1707
        %v1748 = vcvt.s32.f32 %v1708
        %v1749 = vadd.s32 %v1229, 4294967294
        %v1750 = vadd.s32 %v1230, 4294967294
        %v1751 = vadd.s32 %v1231, 4294967294
        %v1752 = vadd.s32 %v1232, 4294967294
        %v1753 = vadd.s32 %v1233, 4294967294
        %v1754 = vadd.s32 %v1234, 4294967294
        %v1755 = vadd.s32 %v1235, 4294967294
        %v1756 = vadd.s32 %v1236, 4294967294
        %v1757 = vadd.s32 %v1237, 4294967294
        %v1758 = vadd.s32 %v1238, 4294967294
        %v1759 = vadd.s32 %v1239, 4294967294
        %v1760 = vadd.s32 %v1240, 4294967294
        %v1761 = vadd.s32 %v1241, 4294967294
        %v1762 = vadd.s32 %v1242, 4294967294
        %v1763 = vadd.s32 %v1243, 4294967294
        %v1764 = vadd.s32 %v1244, 4294967294
        %v1765 = vadd.s32 %v1245, 4294967294
        %v1766 = vadd.s32 %v1246, 4294967294
        %v1767 = vadd.s32 %v1247, 4294967294
        %v1768 = vadd.s32 %v1248, 4294967294
        %v1769 = vadd.s32 %v1249, 4294967294
        %v1770 = vadd.s32 %v1250, 4294967294
        %v1771 = vadd.s32 %v1251, 4294967294
        %v1772 = vadd.s32 %v1252, 4294967294
        %v1773 = vadd.s32 %v1253, 4294967294
        %v1774 = vadd.s32 %v1254, 4294967294
        %v1775 = vadd.s32 %v1255, 4294967294
        %v1776 = vadd.s32 %v1256, 4294967294
        %v1777 = vadd.s32 %v1257, 4294967294
        %v1778 = vadd.s32 %v1258, 4294967294
        %v1779 = vadd.s32 %v1259, 4294967294
        %v1780 = vadd.s32 %v1260, 4294967294
        %v1781 = vadd.s32 %v1261, 4294967294
        %v1782 = vadd.s32 %v1262, 4294967294
        %v1783 = vadd.s32 %v1263, 4294967294
        %v1784 = vadd.s32 %v1264, 4294967294
        %v1785 = vadd.s32 %v1265, 4294967294
        %v1786 = vadd.s32 %v1266, 4294967294
        %v1787 = vadd.s32 %v1267, 4294967294
        %v1788 = vadd.s32 %v1268, 4294967294
        %vm1789 = vcmp.ge.s32.totalorder %v1749, 0
        %vm1790 = vcmp.ge.s32.totalorder %v1750, 0
        %vm1791 = vcmp.ge.s32.totalorder %v1751, 0
        %vm1792 = vcmp.ge.s32.totalorder %v1752, 0
        %vm1793 = vcmp.ge.s32.totalorder %v1753, 0
        %vm1794 = vcmp.ge.s32.totalorder %v1754, 0
        %vm1795 = vcmp.ge.s32.totalorder %v1755, 0
        %vm1796 = vcmp.ge.s32.totalorder %v1756, 0
        %vm1797 = vcmp.ge.s32.totalorder %v1757, 0
        %vm1798 = vcmp.ge.s32.totalorder %v1758, 0
        %vm1799 = vcmp.ge.s32.totalorder %v1759, 0
        %vm1800 = vcmp.ge.s32.totalorder %v1760, 0
        %vm1801 = vcmp.ge.s32.totalorder %v1761, 0
        %vm1802 = vcmp.ge.s32.totalorder %v1762, 0
        %vm1803 = vcmp.ge.s32.totalorder %v1763, 0
        %vm1804 = vcmp.ge.s32.totalorder %v1764, 0
        %vm1805 = vcmp.ge.s32.totalorder %v1765, 0
        %vm1806 = vcmp.ge.s32.totalorder %v1766, 0
        %vm1807 = vcmp.ge.s32.totalorder %v1767, 0
        %vm1808 = vcmp.ge.s32.totalorder %v1768, 0
        %vm1809 = vcmp.ge.s32.totalorder %v1769, 0
        %vm1810 = vcmp.ge.s32.totalorder %v1770, 0
        %vm1811 = vcmp.ge.s32.totalorder %v1771, 0
        %vm1812 = vcmp.ge.s32.totalorder %v1772, 0
        %vm1813 = vcmp.ge.s32.totalorder %v1773, 0
        %vm1814 = vcmp.ge.s32.totalorder %v1774, 0
        %vm1815 = vcmp.ge.s32.totalorder %v1775, 0
        %vm1816 = vcmp.ge.s32.totalorder %v1776, 0
        %vm1817 = vcmp.ge.s32.totalorder %v1777, 0
        %vm1818 = vcmp.ge.s32.totalorder %v1778, 0
        %vm1819 = vcmp.ge.s32.totalorder %v1779, 0
        %vm1820 = vcmp.ge.s32.totalorder %v1780, 0
        %vm1821 = vcmp.ge.s32.totalorder %v1781, 0
        %vm1822 = vcmp.ge.s32.totalorder %v1782, 0
        %vm1823 = vcmp.ge.s32.totalorder %v1783, 0
        %vm1824 = vcmp.ge.s32.totalorder %v1784, 0
        %vm1825 = vcmp.ge.s32.totalorder %v1785, 0
        %vm1826 = vcmp.ge.s32.totalorder %v1786, 0
        %vm1827 = vcmp.ge.s32.totalorder %v1787, 0
        %vm1828 = vcmp.ge.s32.totalorder %v1788, 0
        %vm1829 = vcmp.lt.s32.totalorder %v1749, 16
        %vm1830 = vcmp.lt.s32.totalorder %v1750, 16
        %vm1831 = vcmp.lt.s32.totalorder %v1751, 16
        %vm1832 = vcmp.lt.s32.totalorder %v1752, 16
        %vm1833 = vcmp.lt.s32.totalorder %v1753, 16
        %vm1834 = vcmp.lt.s32.totalorder %v1754, 16
        %vm1835 = vcmp.lt.s32.totalorder %v1755, 16
        %vm1836 = vcmp.lt.s32.totalorder %v1756, 16
        %vm1837 = vcmp.lt.s32.totalorder %v1757, 16
        %vm1838 = vcmp.lt.s32.totalorder %v1758, 16
        %vm1839 = vcmp.lt.s32.totalorder %v1759, 16
        %vm1840 = vcmp.lt.s32.totalorder %v1760, 16
        %vm1841 = vcmp.lt.s32.totalorder %v1761, 16
        %vm1842 = vcmp.lt.s32.totalorder %v1762, 16
        %vm1843 = vcmp.lt.s32.totalorder %v1763, 16
        %vm1844 = vcmp.lt.s32.totalorder %v1764, 16
        %vm1845 = vcmp.lt.s32.totalorder %v1765, 16
        %vm1846 = vcmp.lt.s32.totalorder %v1766, 16
        %vm1847 = vcmp.lt.s32.totalorder %v1767, 16
        %vm1848 = vcmp.lt.s32.totalorder %v1768, 16
        %vm1849 = vcmp.lt.s32.totalorder %v1769, 16
        %vm1850 = vcmp.lt.s32.totalorder %v1770, 16
        %vm1851 = vcmp.lt.s32.totalorder %v1771, 16
        %vm1852 = vcmp.lt.s32.totalorder %v1772, 16
        %vm1853 = vcmp.lt.s32.totalorder %v1773, 16
        %vm1854 = vcmp.lt.s32.totalorder %v1774, 16
        %vm1855 = vcmp.lt.s32.totalorder %v1775, 16
        %vm1856 = vcmp.lt.s32.totalorder %v1776, 16
        %vm1857 = vcmp.lt.s32.totalorder %v1777, 16
        %vm1858 = vcmp.lt.s32.totalorder %v1778, 16
        %vm1859 = vcmp.lt.s32.totalorder %v1779, 16
        %vm1860 = vcmp.lt.s32.totalorder %v1780, 16
        %vm1861 = vcmp.lt.s32.totalorder %v1781, 16
        %vm1862 = vcmp.lt.s32.totalorder %v1782, 16
        %vm1863 = vcmp.lt.s32.totalorder %v1783, 16
        %vm1864 = vcmp.lt.s32.totalorder %v1784, 16
        %vm1865 = vcmp.lt.s32.totalorder %v1785, 16
        %vm1866 = vcmp.lt.s32.totalorder %v1786, 16
        %vm1867 = vcmp.lt.s32.totalorder %v1787, 16
        %vm1868 = vcmp.lt.s32.totalorder %v1788, 16
        %vm1869 = vmand %vm1789, %vm1829
        %vm1870 = vmand %vm1790, %vm1830
        %vm1871 = vmand %vm1791, %vm1831
        %vm1872 = vmand %vm1792, %vm1832
        %vm1873 = vmand %vm1793, %vm1833
        %vm1874 = vmand %vm1794, %vm1834
        %vm1875 = vmand %vm1795, %vm1835
        %vm1876 = vmand %vm1796, %vm1836
        %vm1877 = vmand %vm1797, %vm1837
        %vm1878 = vmand %vm1798, %vm1838
        %vm1879 = vmand %vm1799, %vm1839
        %vm1880 = vmand %vm1800, %vm1840
        %vm1881 = vmand %vm1801, %vm1841
        %vm1882 = vmand %vm1802, %vm1842
        %vm1883 = vmand %vm1803, %vm1843
        %vm1884 = vmand %vm1804, %vm1844
        %vm1885 = vmand %vm1805, %vm1845
        %vm1886 = vmand %vm1806, %vm1846
        %vm1887 = vmand %vm1807, %vm1847
        %vm1888 = vmand %vm1808, %vm1848
        %vm1889 = vmand %vm1809, %vm1849
        %vm1890 = vmand %vm1810, %vm1850
        %vm1891 = vmand %vm1811, %vm1851
        %vm1892 = vmand %vm1812, %vm1852
        %vm1893 = vmand %vm1813, %vm1853
        %vm1894 = vmand %vm1814, %vm1854
        %vm1895 = vmand %vm1815, %vm1855
        %vm1896 = vmand %vm1816, %vm1856
        %vm1897 = vmand %vm1817, %vm1857
        %vm1898 = vmand %vm1818, %vm1858
        %vm1899 = vmand %vm1819, %vm1859
        %vm1900 = vmand %vm1820, %vm1860
        %vm1901 = vmand %vm1821, %vm1861
        %vm1902 = vmand %vm1822, %vm1862
        %vm1903 = vmand %vm1823, %vm1863
        %vm1904 = vmand %vm1824, %vm1864
        %vm1905 = vmand %vm1825, %vm1865
        %vm1906 = vmand %vm1826, %vm1866
        %vm1907 = vmand %vm1827, %vm1867
        %vm1908 = vmand %vm1828, %vm1868
        %v1909 = vsel %vm1869, 1, 0
        %v1910 = vsel %vm1870, 1, 0
        %v1911 = vsel %vm1871, 1, 0
        %v1912 = vsel %vm1872, 1, 0
        %v1913 = vsel %vm1873, 1, 0
        %v1914 = vsel %vm1874, 1, 0
        %v1915 = vsel %vm1875, 1, 0
        %v1916 = vsel %vm1876, 1, 0
        %v1917 = vsel %vm1877, 1, 0
        %v1918 = vsel %vm1878, 1, 0
        %v1919 = vsel %vm1879, 1, 0
        %v1920 = vsel %vm1880, 1, 0
        %v1921 = vsel %vm1881, 1, 0
        %v1922 = vsel %vm1882, 1, 0
        %v1923 = vsel %vm1883, 1, 0
        %v1924 = vsel %vm1884, 1, 0
        %v1925 = vsel %vm1885, 1, 0
        %v1926 = vsel %vm1886, 1, 0
        %v1927 = vsel %vm1887, 1, 0
        %v1928 = vsel %vm1888, 1, 0
        %v1929 = vsel %vm1889, 1, 0
        %v1930 = vsel %vm1890, 1, 0
        %v1931 = vsel %vm1891, 1, 0
        %v1932 = vsel %vm1892, 1, 0
        %v1933 = vsel %vm1893, 1, 0
        %v1934 = vsel %vm1894, 1, 0
        %v1935 = vsel %vm1895, 1, 0
        %v1936 = vsel %vm1896, 1, 0
        %v1937 = vsel %vm1897, 1, 0
        %v1938 = vsel %vm1898, 1, 0
        %v1939 = vsel %vm1899, 1, 0
        %v1940 = vsel %vm1900, 1, 0
        %v1941 = vsel %vm1901, 1, 0
        %v1942 = vsel %vm1902, 1, 0
        %v1943 = vsel %vm1903, 1, 0
        %v1944 = vsel %vm1904, 1, 0
        %v1945 = vsel %vm1905, 1, 0
        %v1946 = vsel %vm1906, 1, 0
        %v1947 = vsel %vm1907, 1, 0
        %v1948 = vsel %vm1908, 1, 0
        %v1949 = vcvt.s32.f32 %v1909
        %v1950 = vcvt.s32.f32 %v1910
        %v1951 = vcvt.s32.f32 %v1911
        %v1952 = vcvt.s32.f32 %v1912
        %v1953 = vcvt.s32.f32 %v1913
        %v1954 = vcvt.s32.f32 %v1914
        %v1955 = vcvt.s32.f32 %v1915
        %v1956 = vcvt.s32.f32 %v1916
        %v1957 = vcvt.s32.f32 %v1917
        %v1958 = vcvt.s32.f32 %v1918
        %v1959 = vcvt.s32.f32 %v1919
        %v1960 = vcvt.s32.f32 %v1920
        %v1961 = vcvt.s32.f32 %v1921
        %v1962 = vcvt.s32.f32 %v1922
        %v1963 = vcvt.s32.f32 %v1923
        %v1964 = vcvt.s32.f32 %v1924
        %v1965 = vcvt.s32.f32 %v1925
        %v1966 = vcvt.s32.f32 %v1926
        %v1967 = vcvt.s32.f32 %v1927
        %v1968 = vcvt.s32.f32 %v1928
        %v1969 = vcvt.s32.f32 %v1929
        %v1970 = vcvt.s32.f32 %v1930
        %v1971 = vcvt.s32.f32 %v1931
        %v1972 = vcvt.s32.f32 %v1932
        %v1973 = vcvt.s32.f32 %v1933
        %v1974 = vcvt.s32.f32 %v1934
        %v1975 = vcvt.s32.f32 %v1935
        %v1976 = vcvt.s32.f32 %v1936
        %v1977 = vcvt.s32.f32 %v1937
        %v1978 = vcvt.s32.f32 %v1938
        %v1979 = vcvt.s32.f32 %v1939
        %v1980 = vcvt.s32.f32 %v1940
        %v1981 = vcvt.s32.f32 %v1941
        %v1982 = vcvt.s32.f32 %v1942
        %v1983 = vcvt.s32.f32 %v1943
        %v1984 = vcvt.s32.f32 %v1944
        %v1985 = vcvt.s32.f32 %v1945
        %v1986 = vcvt.s32.f32 %v1946
        %v1987 = vcvt.s32.f32 %v1947
        %v1988 = vcvt.s32.f32 %v1948
        %v1989 = vadd.s32 %v1229, 4294967295
        %v1990 = vadd.s32 %v1230, 4294967295
        %v1991 = vadd.s32 %v1231, 4294967295
        %v1992 = vadd.s32 %v1232, 4294967295
        %v1993 = vadd.s32 %v1233, 4294967295
        %v1994 = vadd.s32 %v1234, 4294967295
        %v1995 = vadd.s32 %v1235, 4294967295
        %v1996 = vadd.s32 %v1236, 4294967295
        %v1997 = vadd.s32 %v1237, 4294967295
        %v1998 = vadd.s32 %v1238, 4294967295
        %v1999 = vadd.s32 %v1239, 4294967295
        %v2000 = vadd.s32 %v1240, 4294967295
        %v2001 = vadd.s32 %v1241, 4294967295
        %v2002 = vadd.s32 %v1242, 4294967295
        %v2003 = vadd.s32 %v1243, 4294967295
        %v2004 = vadd.s32 %v1244, 4294967295
        %v2005 = vadd.s32 %v1245, 4294967295
        %v2006 = vadd.s32 %v1246, 4294967295
        %v2007 = vadd.s32 %v1247, 4294967295
        %v2008 = vadd.s32 %v1248, 4294967295
        %v2009 = vadd.s32 %v1249, 4294967295
        %v2010 = vadd.s32 %v1250, 4294967295
        %v2011 = vadd.s32 %v1251, 4294967295
        %v2012 = vadd.s32 %v1252, 4294967295
        %v2013 = vadd.s32 %v1253, 4294967295
        %v2014 = vadd.s32 %v1254, 4294967295
        %v2015 = vadd.s32 %v1255, 4294967295
        %v2016 = vadd.s32 %v1256, 4294967295
        %v2017 = vadd.s32 %v1257, 4294967295
        %v2018 = vadd.s32 %v1258, 4294967295
        %v2019 = vadd.s32 %v1259, 4294967295
        %v2020 = vadd.s32 %v1260, 4294967295
        %v2021 = vadd.s32 %v1261, 4294967295
        %v2022 = vadd.s32 %v1262, 4294967295
        %v2023 = vadd.s32 %v1263, 4294967295
        %v2024 = vadd.s32 %v1264, 4294967295
        %v2025 = vadd.s32 %v1265, 4294967295
        %v2026 = vadd.s32 %v1266, 4294967295
        %v2027 = vadd.s32 %v1267, 4294967295
        %v2028 = vadd.s32 %v1268, 4294967295
        %vm2029 = vcmp.ge.s32.totalorder %v1989, 0
        %vm2030 = vcmp.ge.s32.totalorder %v1990, 0
        %vm2031 = vcmp.ge.s32.totalorder %v1991, 0
        %vm2032 = vcmp.ge.s32.totalorder %v1992, 0
        %vm2033 = vcmp.ge.s32.totalorder %v1993, 0
        %vm2034 = vcmp.ge.s32.totalorder %v1994, 0
        %vm2035 = vcmp.ge.s32.totalorder %v1995, 0
        %vm2036 = vcmp.ge.s32.totalorder %v1996, 0
        %vm2037 = vcmp.ge.s32.totalorder %v1997, 0
        %vm2038 = vcmp.ge.s32.totalorder %v1998, 0
        %vm2039 = vcmp.ge.s32.totalorder %v1999, 0
        %vm2040 = vcmp.ge.s32.totalorder %v2000, 0
        %vm2041 = vcmp.ge.s32.totalorder %v2001, 0
        %vm2042 = vcmp.ge.s32.totalorder %v2002, 0
        %vm2043 = vcmp.ge.s32.totalorder %v2003, 0
        %vm2044 = vcmp.ge.s32.totalorder %v2004, 0
        %vm2045 = vcmp.ge.s32.totalorder %v2005, 0
        %vm2046 = vcmp.ge.s32.totalorder %v2006, 0
        %vm2047 = vcmp.ge.s32.totalorder %v2007, 0
        %vm2048 = vcmp.ge.s32.totalorder %v2008, 0
        %vm2049 = vcmp.ge.s32.totalorder %v2009, 0
        %vm2050 = vcmp.ge.s32.totalorder %v2010, 0
        %vm2051 = vcmp.ge.s32.totalorder %v2011, 0
        %vm2052 = vcmp.ge.s32.totalorder %v2012, 0
        %vm2053 = vcmp.ge.s32.totalorder %v2013, 0
        %vm2054 = vcmp.ge.s32.totalorder %v2014, 0
        %vm2055 = vcmp.ge.s32.totalorder %v2015, 0
        %vm2056 = vcmp.ge.s32.totalorder %v2016, 0
        %vm2057 = vcmp.ge.s32.totalorder %v2017, 0
        %vm2058 = vcmp.ge.s32.totalorder %v2018, 0
        %vm2059 = vcmp.ge.s32.totalorder %v2019, 0
        %vm2060 = vcmp.ge.s32.totalorder %v2020, 0
        %vm2061 = vcmp.ge.s32.totalorder %v2021, 0
        %vm2062 = vcmp.ge.s32.totalorder %v2022, 0
        %vm2063 = vcmp.ge.s32.totalorder %v2023, 0
        %vm2064 = vcmp.ge.s32.totalorder %v2024, 0
        %vm2065 = vcmp.ge.s32.totalorder %v2025, 0
        %vm2066 = vcmp.ge.s32.totalorder %v2026, 0
        %vm2067 = vcmp.ge.s32.totalorder %v2027, 0
        %vm2068 = vcmp.ge.s32.totalorder %v2028, 0
        %vm2069 = vcmp.lt.s32.totalorder %v1989, 16
        %vm2070 = vcmp.lt.s32.totalorder %v1990, 16
        %vm2071 = vcmp.lt.s32.totalorder %v1991, 16
        %vm2072 = vcmp.lt.s32.totalorder %v1992, 16
        %vm2073 = vcmp.lt.s32.totalorder %v1993, 16
        %vm2074 = vcmp.lt.s32.totalorder %v1994, 16
        %vm2075 = vcmp.lt.s32.totalorder %v1995, 16
        %vm2076 = vcmp.lt.s32.totalorder %v1996, 16
        %vm2077 = vcmp.lt.s32.totalorder %v1997, 16
        %vm2078 = vcmp.lt.s32.totalorder %v1998, 16
        %vm2079 = vcmp.lt.s32.totalorder %v1999, 16
        %vm2080 = vcmp.lt.s32.totalorder %v2000, 16
        %vm2081 = vcmp.lt.s32.totalorder %v2001, 16
        %vm2082 = vcmp.lt.s32.totalorder %v2002, 16
        %vm2083 = vcmp.lt.s32.totalorder %v2003, 16
        %vm2084 = vcmp.lt.s32.totalorder %v2004, 16
        %vm2085 = vcmp.lt.s32.totalorder %v2005, 16
        %vm2086 = vcmp.lt.s32.totalorder %v2006, 16
        %vm2087 = vcmp.lt.s32.totalorder %v2007, 16
        %vm2088 = vcmp.lt.s32.totalorder %v2008, 16
        %vm2089 = vcmp.lt.s32.totalorder %v2009, 16
        %vm2090 = vcmp.lt.s32.totalorder %v2010, 16
        %vm2091 = vcmp.lt.s32.totalorder %v2011, 16
        %vm2092 = vcmp.lt.s32.totalorder %v2012, 16
        %vm2093 = vcmp.lt.s32.totalorder %v2013, 16
        %vm2094 = vcmp.lt.s32.totalorder %v2014, 16
        %vm2095 = vcmp.lt.s32.totalorder %v2015, 16
        %vm2096 = vcmp.lt.s32.totalorder %v2016, 16
        %vm2097 = vcmp.lt.s32.totalorder %v2017, 16
        %vm2098 = vcmp.lt.s32.totalorder %v2018, 16
        %vm2099 = vcmp.lt.s32.totalorder %v2019, 16
        %vm2100 = vcmp.lt.s32.totalorder %v2020, 16
        %vm2101 = vcmp.lt.s32.totalorder %v2021, 16
        %vm2102 = vcmp.lt.s32.totalorder %v2022, 16
        %vm2103 = vcmp.lt.s32.totalorder %v2023, 16
        %vm2104 = vcmp.lt.s32.totalorder %v2024, 16
        %vm2105 = vcmp.lt.s32.totalorder %v2025, 16
        %vm2106 = vcmp.lt.s32.totalorder %v2026, 16
        %vm2107 = vcmp.lt.s32.totalorder %v2027, 16
        %vm2108 = vcmp.lt.s32.totalorder %v2028, 16
        %vm2109 = vmand %vm2029, %vm2069
        %vm2110 = vmand %vm2030, %vm2070
        %vm2111 = vmand %vm2031, %vm2071
        %vm2112 = vmand %vm2032, %vm2072
        %vm2113 = vmand %vm2033, %vm2073
        %vm2114 = vmand %vm2034, %vm2074
        %vm2115 = vmand %vm2035, %vm2075
        %vm2116 = vmand %vm2036, %vm2076
        %vm2117 = vmand %vm2037, %vm2077
        %vm2118 = vmand %vm2038, %vm2078
        %vm2119 = vmand %vm2039, %vm2079
        %vm2120 = vmand %vm2040, %vm2080
        %vm2121 = vmand %vm2041, %vm2081
        %vm2122 = vmand %vm2042, %vm2082
        %vm2123 = vmand %vm2043, %vm2083
        %vm2124 = vmand %vm2044, %vm2084
        %vm2125 = vmand %vm2045, %vm2085
        %vm2126 = vmand %vm2046, %vm2086
        %vm2127 = vmand %vm2047, %vm2087
        %vm2128 = vmand %vm2048, %vm2088
        %vm2129 = vmand %vm2049, %vm2089
        %vm2130 = vmand %vm2050, %vm2090
        %vm2131 = vmand %vm2051, %vm2091
        %vm2132 = vmand %vm2052, %vm2092
        %vm2133 = vmand %vm2053, %vm2093
        %vm2134 = vmand %vm2054, %vm2094
        %vm2135 = vmand %vm2055, %vm2095
        %vm2136 = vmand %vm2056, %vm2096
        %vm2137 = vmand %vm2057, %vm2097
        %vm2138 = vmand %vm2058, %vm2098
        %vm2139 = vmand %vm2059, %vm2099
        %vm2140 = vmand %vm2060, %vm2100
        %vm2141 = vmand %vm2061, %vm2101
        %vm2142 = vmand %vm2062, %vm2102
        %vm2143 = vmand %vm2063, %vm2103
        %vm2144 = vmand %vm2064, %vm2104
        %vm2145 = vmand %vm2065, %vm2105
        %vm2146 = vmand %vm2066, %vm2106
        %vm2147 = vmand %vm2067, %vm2107
        %vm2148 = vmand %vm2068, %vm2108
        %v2149 = vsel %vm2109, 1, 0
        %v2150 = vsel %vm2110, 1, 0
        %v2151 = vsel %vm2111, 1, 0
        %v2152 = vsel %vm2112, 1, 0
        %v2153 = vsel %vm2113, 1, 0
        %v2154 = vsel %vm2114, 1, 0
        %v2155 = vsel %vm2115, 1, 0
        %v2156 = vsel %vm2116, 1, 0
        %v2157 = vsel %vm2117, 1, 0
        %v2158 = vsel %vm2118, 1, 0
        %v2159 = vsel %vm2119, 1, 0
        %v2160 = vsel %vm2120, 1, 0
        %v2161 = vsel %vm2121, 1, 0
        %v2162 = vsel %vm2122, 1, 0
        %v2163 = vsel %vm2123, 1, 0
        %v2164 = vsel %vm2124, 1, 0
        %v2165 = vsel %vm2125, 1, 0
        %v2166 = vsel %vm2126, 1, 0
        %v2167 = vsel %vm2127, 1, 0
        %v2168 = vsel %vm2128, 1, 0
        %v2169 = vsel %vm2129, 1, 0
        %v2170 = vsel %vm2130, 1, 0
        %v2171 = vsel %vm2131, 1, 0
        %v2172 = vsel %vm2132, 1, 0
        %v2173 = vsel %vm2133, 1, 0
        %v2174 = vsel %vm2134, 1, 0
        %v2175 = vsel %vm2135, 1, 0
        %v2176 = vsel %vm2136, 1, 0
        %v2177 = vsel %vm2137, 1, 0
        %v2178 = vsel %vm2138, 1, 0
        %v2179 = vsel %vm2139, 1, 0
        %v2180 = vsel %vm2140, 1, 0
        %v2181 = vsel %vm2141, 1, 0
        %v2182 = vsel %vm2142, 1, 0
        %v2183 = vsel %vm2143, 1, 0
        %v2184 = vsel %vm2144, 1, 0
        %v2185 = vsel %vm2145, 1, 0
        %v2186 = vsel %vm2146, 1, 0
        %v2187 = vsel %vm2147, 1, 0
        %v2188 = vsel %vm2148, 1, 0
        %v2189 = vcvt.s32.f32 %v2149
        %v2190 = vcvt.s32.f32 %v2150
        %v2191 = vcvt.s32.f32 %v2151
        %v2192 = vcvt.s32.f32 %v2152
        %v2193 = vcvt.s32.f32 %v2153
        %v2194 = vcvt.s32.f32 %v2154
        %v2195 = vcvt.s32.f32 %v2155
        %v2196 = vcvt.s32.f32 %v2156
        %v2197 = vcvt.s32.f32 %v2157
        %v2198 = vcvt.s32.f32 %v2158
        %v2199 = vcvt.s32.f32 %v2159
        %v2200 = vcvt.s32.f32 %v2160
        %v2201 = vcvt.s32.f32 %v2161
        %v2202 = vcvt.s32.f32 %v2162
        %v2203 = vcvt.s32.f32 %v2163
        %v2204 = vcvt.s32.f32 %v2164
        %v2205 = vcvt.s32.f32 %v2165
        %v2206 = vcvt.s32.f32 %v2166
        %v2207 = vcvt.s32.f32 %v2167
        %v2208 = vcvt.s32.f32 %v2168
        %v2209 = vcvt.s32.f32 %v2169
        %v2210 = vcvt.s32.f32 %v2170
        %v2211 = vcvt.s32.f32 %v2171
        %v2212 = vcvt.s32.f32 %v2172
        %v2213 = vcvt.s32.f32 %v2173
        %v2214 = vcvt.s32.f32 %v2174
        %v2215 = vcvt.s32.f32 %v2175
        %v2216 = vcvt.s32.f32 %v2176
        %v2217 = vcvt.s32.f32 %v2177
        %v2218 = vcvt.s32.f32 %v2178
        %v2219 = vcvt.s32.f32 %v2179
        %v2220 = vcvt.s32.f32 %v2180
        %v2221 = vcvt.s32.f32 %v2181
        %v2222 = vcvt.s32.f32 %v2182
        %v2223 = vcvt.s32.f32 %v2183
        %v2224 = vcvt.s32.f32 %v2184
        %v2225 = vcvt.s32.f32 %v2185
        %v2226 = vcvt.s32.f32 %v2186
        %v2227 = vcvt.s32.f32 %v2187
        %v2228 = vcvt.s32.f32 %v2188
        %v2229 = vadd.s32 %v1229, 1
        %v2230 = vadd.s32 %v1230, 1
        %v2231 = vadd.s32 %v1231, 1
        %v2232 = vadd.s32 %v1232, 1
        %v2233 = vadd.s32 %v1233, 1
        %v2234 = vadd.s32 %v1234, 1
        %v2235 = vadd.s32 %v1235, 1
        %v2236 = vadd.s32 %v1236, 1
        %v2237 = vadd.s32 %v1237, 1
        %v2238 = vadd.s32 %v1238, 1
        %v2239 = vadd.s32 %v1239, 1
        %v2240 = vadd.s32 %v1240, 1
        %v2241 = vadd.s32 %v1241, 1
        %v2242 = vadd.s32 %v1242, 1
        %v2243 = vadd.s32 %v1243, 1
        %v2244 = vadd.s32 %v1244, 1
        %v2245 = vadd.s32 %v1245, 1
        %v2246 = vadd.s32 %v1246, 1
        %v2247 = vadd.s32 %v1247, 1
        %v2248 = vadd.s32 %v1248, 1
        %v2249 = vadd.s32 %v1249, 1
        %v2250 = vadd.s32 %v1250, 1
        %v2251 = vadd.s32 %v1251, 1
        %v2252 = vadd.s32 %v1252, 1
        %v2253 = vadd.s32 %v1253, 1
        %v2254 = vadd.s32 %v1254, 1
        %v2255 = vadd.s32 %v1255, 1
        %v2256 = vadd.s32 %v1256, 1
        %v2257 = vadd.s32 %v1257, 1
        %v2258 = vadd.s32 %v1258, 1
        %v2259 = vadd.s32 %v1259, 1
        %v2260 = vadd.s32 %v1260, 1
        %v2261 = vadd.s32 %v1261, 1
        %v2262 = vadd.s32 %v1262, 1
        %v2263 = vadd.s32 %v1263, 1
        %v2264 = vadd.s32 %v1264, 1
        %v2265 = vadd.s32 %v1265, 1
        %v2266 = vadd.s32 %v1266, 1
        %v2267 = vadd.s32 %v1267, 1
        %v2268 = vadd.s32 %v1268, 1
        %vm2269 = vcmp.ge.s32.totalorder %v2229, 0
        %vm2270 = vcmp.ge.s32.totalorder %v2230, 0
        %vm2271 = vcmp.ge.s32.totalorder %v2231, 0
        %vm2272 = vcmp.ge.s32.totalorder %v2232, 0
        %vm2273 = vcmp.ge.s32.totalorder %v2233, 0
        %vm2274 = vcmp.ge.s32.totalorder %v2234, 0
        %vm2275 = vcmp.ge.s32.totalorder %v2235, 0
        %vm2276 = vcmp.ge.s32.totalorder %v2236, 0
        %vm2277 = vcmp.ge.s32.totalorder %v2237, 0
        %vm2278 = vcmp.ge.s32.totalorder %v2238, 0
        %vm2279 = vcmp.ge.s32.totalorder %v2239, 0
        %vm2280 = vcmp.ge.s32.totalorder %v2240, 0
        %vm2281 = vcmp.ge.s32.totalorder %v2241, 0
        %vm2282 = vcmp.ge.s32.totalorder %v2242, 0
        %vm2283 = vcmp.ge.s32.totalorder %v2243, 0
        %vm2284 = vcmp.ge.s32.totalorder %v2244, 0
        %vm2285 = vcmp.ge.s32.totalorder %v2245, 0
        %vm2286 = vcmp.ge.s32.totalorder %v2246, 0
        %vm2287 = vcmp.ge.s32.totalorder %v2247, 0
        %vm2288 = vcmp.ge.s32.totalorder %v2248, 0
        %vm2289 = vcmp.ge.s32.totalorder %v2249, 0
        %vm2290 = vcmp.ge.s32.totalorder %v2250, 0
        %vm2291 = vcmp.ge.s32.totalorder %v2251, 0
        %vm2292 = vcmp.ge.s32.totalorder %v2252, 0
        %vm2293 = vcmp.ge.s32.totalorder %v2253, 0
        %vm2294 = vcmp.ge.s32.totalorder %v2254, 0
        %vm2295 = vcmp.ge.s32.totalorder %v2255, 0
        %vm2296 = vcmp.ge.s32.totalorder %v2256, 0
        %vm2297 = vcmp.ge.s32.totalorder %v2257, 0
        %vm2298 = vcmp.ge.s32.totalorder %v2258, 0
        %vm2299 = vcmp.ge.s32.totalorder %v2259, 0
        %vm2300 = vcmp.ge.s32.totalorder %v2260, 0
        %vm2301 = vcmp.ge.s32.totalorder %v2261, 0
        %vm2302 = vcmp.ge.s32.totalorder %v2262, 0
        %vm2303 = vcmp.ge.s32.totalorder %v2263, 0
        %vm2304 = vcmp.ge.s32.totalorder %v2264, 0
        %vm2305 = vcmp.ge.s32.totalorder %v2265, 0
        %vm2306 = vcmp.ge.s32.totalorder %v2266, 0
        %vm2307 = vcmp.ge.s32.totalorder %v2267, 0
        %vm2308 = vcmp.ge.s32.totalorder %v2268, 0
        %vm2309 = vcmp.lt.s32.totalorder %v2229, 16
        %vm2310 = vcmp.lt.s32.totalorder %v2230, 16
        %vm2311 = vcmp.lt.s32.totalorder %v2231, 16
        %vm2312 = vcmp.lt.s32.totalorder %v2232, 16
        %vm2313 = vcmp.lt.s32.totalorder %v2233, 16
        %vm2314 = vcmp.lt.s32.totalorder %v2234, 16
        %vm2315 = vcmp.lt.s32.totalorder %v2235, 16
        %vm2316 = vcmp.lt.s32.totalorder %v2236, 16
        %vm2317 = vcmp.lt.s32.totalorder %v2237, 16
        %vm2318 = vcmp.lt.s32.totalorder %v2238, 16
        %vm2319 = vcmp.lt.s32.totalorder %v2239, 16
        %vm2320 = vcmp.lt.s32.totalorder %v2240, 16
        %vm2321 = vcmp.lt.s32.totalorder %v2241, 16
        %vm2322 = vcmp.lt.s32.totalorder %v2242, 16
        %vm2323 = vcmp.lt.s32.totalorder %v2243, 16
        %vm2324 = vcmp.lt.s32.totalorder %v2244, 16
        %vm2325 = vcmp.lt.s32.totalorder %v2245, 16
        %vm2326 = vcmp.lt.s32.totalorder %v2246, 16
        %vm2327 = vcmp.lt.s32.totalorder %v2247, 16
        %vm2328 = vcmp.lt.s32.totalorder %v2248, 16
        %vm2329 = vcmp.lt.s32.totalorder %v2249, 16
        %vm2330 = vcmp.lt.s32.totalorder %v2250, 16
        %vm2331 = vcmp.lt.s32.totalorder %v2251, 16
        %vm2332 = vcmp.lt.s32.totalorder %v2252, 16
        %vm2333 = vcmp.lt.s32.totalorder %v2253, 16
        %vm2334 = vcmp.lt.s32.totalorder %v2254, 16
        %vm2335 = vcmp.lt.s32.totalorder %v2255, 16
        %vm2336 = vcmp.lt.s32.totalorder %v2256, 16
        %vm2337 = vcmp.lt.s32.totalorder %v2257, 16
        %vm2338 = vcmp.lt.s32.totalorder %v2258, 16
        %vm2339 = vcmp.lt.s32.totalorder %v2259, 16
        %vm2340 = vcmp.lt.s32.totalorder %v2260, 16
        %vm2341 = vcmp.lt.s32.totalorder %v2261, 16
        %vm2342 = vcmp.lt.s32.totalorder %v2262, 16
        %vm2343 = vcmp.lt.s32.totalorder %v2263, 16
        %vm2344 = vcmp.lt.s32.totalorder %v2264, 16
        %vm2345 = vcmp.lt.s32.totalorder %v2265, 16
        %vm2346 = vcmp.lt.s32.totalorder %v2266, 16
        %vm2347 = vcmp.lt.s32.totalorder %v2267, 16
        %vm2348 = vcmp.lt.s32.totalorder %v2268, 16
        %vm2349 = vmand %vm2269, %vm2309
        %vm2350 = vmand %vm2270, %vm2310
        %vm2351 = vmand %vm2271, %vm2311
        %vm2352 = vmand %vm2272, %vm2312
        %vm2353 = vmand %vm2273, %vm2313
        %vm2354 = vmand %vm2274, %vm2314
        %vm2355 = vmand %vm2275, %vm2315
        %vm2356 = vmand %vm2276, %vm2316
        %vm2357 = vmand %vm2277, %vm2317
        %vm2358 = vmand %vm2278, %vm2318
        %vm2359 = vmand %vm2279, %vm2319
        %vm2360 = vmand %vm2280, %vm2320
        %vm2361 = vmand %vm2281, %vm2321
        %vm2362 = vmand %vm2282, %vm2322
        %vm2363 = vmand %vm2283, %vm2323
        %vm2364 = vmand %vm2284, %vm2324
        %vm2365 = vmand %vm2285, %vm2325
        %vm2366 = vmand %vm2286, %vm2326
        %vm2367 = vmand %vm2287, %vm2327
        %vm2368 = vmand %vm2288, %vm2328
        %vm2369 = vmand %vm2289, %vm2329
        %vm2370 = vmand %vm2290, %vm2330
        %vm2371 = vmand %vm2291, %vm2331
        %vm2372 = vmand %vm2292, %vm2332
        %vm2373 = vmand %vm2293, %vm2333
        %vm2374 = vmand %vm2294, %vm2334
        %vm2375 = vmand %vm2295, %vm2335
        %vm2376 = vmand %vm2296, %vm2336
        %vm2377 = vmand %vm2297, %vm2337
        %vm2378 = vmand %vm2298, %vm2338
        %vm2379 = vmand %vm2299, %vm2339
        %vm2380 = vmand %vm2300, %vm2340
        %vm2381 = vmand %vm2301, %vm2341
        %vm2382 = vmand %vm2302, %vm2342
        %vm2383 = vmand %vm2303, %vm2343
        %vm2384 = vmand %vm2304, %vm2344
        %vm2385 = vmand %vm2305, %vm2345
        %vm2386 = vmand %vm2306, %vm2346
        %vm2387 = vmand %vm2307, %vm2347
        %vm2388 = vmand %vm2308, %vm2348
        %v2389 = vsel %vm2349, 1, 0
        %v2390 = vsel %vm2350, 1, 0
        %v2391 = vsel %vm2351, 1, 0
        %v2392 = vsel %vm2352, 1, 0
        %v2393 = vsel %vm2353, 1, 0
        %v2394 = vsel %vm2354, 1, 0
        %v2395 = vsel %vm2355, 1, 0
        %v2396 = vsel %vm2356, 1, 0
        %v2397 = vsel %vm2357, 1, 0
        %v2398 = vsel %vm2358, 1, 0
        %v2399 = vsel %vm2359, 1, 0
        %v2400 = vsel %vm2360, 1, 0
        %v2401 = vsel %vm2361, 1, 0
        %v2402 = vsel %vm2362, 1, 0
        %v2403 = vsel %vm2363, 1, 0
        %v2404 = vsel %vm2364, 1, 0
        %v2405 = vsel %vm2365, 1, 0
        %v2406 = vsel %vm2366, 1, 0
        %v2407 = vsel %vm2367, 1, 0
        %v2408 = vsel %vm2368, 1, 0
        %v2409 = vsel %vm2369, 1, 0
        %v2410 = vsel %vm2370, 1, 0
        %v2411 = vsel %vm2371, 1, 0
        %v2412 = vsel %vm2372, 1, 0
        %v2413 = vsel %vm2373, 1, 0
        %v2414 = vsel %vm2374, 1, 0
        %v2415 = vsel %vm2375, 1, 0
        %v2416 = vsel %vm2376, 1, 0
        %v2417 = vsel %vm2377, 1, 0
        %v2418 = vsel %vm2378, 1, 0
        %v2419 = vsel %vm2379, 1, 0
        %v2420 = vsel %vm2380, 1, 0
        %v2421 = vsel %vm2381, 1, 0
        %v2422 = vsel %vm2382, 1, 0
        %v2423 = vsel %vm2383, 1, 0
        %v2424 = vsel %vm2384, 1, 0
        %v2425 = vsel %vm2385, 1, 0
        %v2426 = vsel %vm2386, 1, 0
        %v2427 = vsel %vm2387, 1, 0
        %v2428 = vsel %vm2388, 1, 0
        %v2429 = vcvt.s32.f32 %v2389
        %v2430 = vcvt.s32.f32 %v2390
        %v2431 = vcvt.s32.f32 %v2391
        %v2432 = vcvt.s32.f32 %v2392
        %v2433 = vcvt.s32.f32 %v2393
        %v2434 = vcvt.s32.f32 %v2394
        %v2435 = vcvt.s32.f32 %v2395
        %v2436 = vcvt.s32.f32 %v2396
        %v2437 = vcvt.s32.f32 %v2397
        %v2438 = vcvt.s32.f32 %v2398
        %v2439 = vcvt.s32.f32 %v2399
        %v2440 = vcvt.s32.f32 %v2400
        %v2441 = vcvt.s32.f32 %v2401
        %v2442 = vcvt.s32.f32 %v2402
        %v2443 = vcvt.s32.f32 %v2403
        %v2444 = vcvt.s32.f32 %v2404
        %v2445 = vcvt.s32.f32 %v2405
        %v2446 = vcvt.s32.f32 %v2406
        %v2447 = vcvt.s32.f32 %v2407
        %v2448 = vcvt.s32.f32 %v2408
        %v2449 = vcvt.s32.f32 %v2409
        %v2450 = vcvt.s32.f32 %v2410
        %v2451 = vcvt.s32.f32 %v2411
        %v2452 = vcvt.s32.f32 %v2412
        %v2453 = vcvt.s32.f32 %v2413
        %v2454 = vcvt.s32.f32 %v2414
        %v2455 = vcvt.s32.f32 %v2415
        %v2456 = vcvt.s32.f32 %v2416
        %v2457 = vcvt.s32.f32 %v2417
        %v2458 = vcvt.s32.f32 %v2418
        %v2459 = vcvt.s32.f32 %v2419
        %v2460 = vcvt.s32.f32 %v2420
        %v2461 = vcvt.s32.f32 %v2421
        %v2462 = vcvt.s32.f32 %v2422
        %v2463 = vcvt.s32.f32 %v2423
        %v2464 = vcvt.s32.f32 %v2424
        %v2465 = vcvt.s32.f32 %v2425
        %v2466 = vcvt.s32.f32 %v2426
        %v2467 = vcvt.s32.f32 %v2427
        %v2468 = vcvt.s32.f32 %v2428
        %v2469 = vadd.s32 %v1229, 2
        %v2470 = vadd.s32 %v1230, 2
        %v2471 = vadd.s32 %v1231, 2
        %v2472 = vadd.s32 %v1232, 2
        %v2473 = vadd.s32 %v1233, 2
        %v2474 = vadd.s32 %v1234, 2
        %v2475 = vadd.s32 %v1235, 2
        %v2476 = vadd.s32 %v1236, 2
        %v2477 = vadd.s32 %v1237, 2
        %v2478 = vadd.s32 %v1238, 2
        %v2479 = vadd.s32 %v1239, 2
        %v2480 = vadd.s32 %v1240, 2
        %v2481 = vadd.s32 %v1241, 2
        %v2482 = vadd.s32 %v1242, 2
        %v2483 = vadd.s32 %v1243, 2
        %v2484 = vadd.s32 %v1244, 2
        %v2485 = vadd.s32 %v1245, 2
        %v2486 = vadd.s32 %v1246, 2
        %v2487 = vadd.s32 %v1247, 2
        %v2488 = vadd.s32 %v1248, 2
        %v2489 = vadd.s32 %v1249, 2
        %v2490 = vadd.s32 %v1250, 2
        %v2491 = vadd.s32 %v1251, 2
        %v2492 = vadd.s32 %v1252, 2
        %v2493 = vadd.s32 %v1253, 2
        %v2494 = vadd.s32 %v1254, 2
        %v2495 = vadd.s32 %v1255, 2
        %v2496 = vadd.s32 %v1256, 2
        %v2497 = vadd.s32 %v1257, 2
        %v2498 = vadd.s32 %v1258, 2
        %v2499 = vadd.s32 %v1259, 2
        %v2500 = vadd.s32 %v1260, 2
        %v2501 = vadd.s32 %v1261, 2
        %v2502 = vadd.s32 %v1262, 2
        %v2503 = vadd.s32 %v1263, 2
        %v2504 = vadd.s32 %v1264, 2
        %v2505 = vadd.s32 %v1265, 2
        %v2506 = vadd.s32 %v1266, 2
        %v2507 = vadd.s32 %v1267, 2
        %v2508 = vadd.s32 %v1268, 2
        %vm2509 = vcmp.ge.s32.totalorder %v2469, 0
        %vm2510 = vcmp.ge.s32.totalorder %v2470, 0
        %vm2511 = vcmp.ge.s32.totalorder %v2471, 0
        %vm2512 = vcmp.ge.s32.totalorder %v2472, 0
        %vm2513 = vcmp.ge.s32.totalorder %v2473, 0
        %vm2514 = vcmp.ge.s32.totalorder %v2474, 0
        %vm2515 = vcmp.ge.s32.totalorder %v2475, 0
        %vm2516 = vcmp.ge.s32.totalorder %v2476, 0
        %vm2517 = vcmp.ge.s32.totalorder %v2477, 0
        %vm2518 = vcmp.ge.s32.totalorder %v2478, 0
        %vm2519 = vcmp.ge.s32.totalorder %v2479, 0
        %vm2520 = vcmp.ge.s32.totalorder %v2480, 0
        %vm2521 = vcmp.ge.s32.totalorder %v2481, 0
        %vm2522 = vcmp.ge.s32.totalorder %v2482, 0
        %vm2523 = vcmp.ge.s32.totalorder %v2483, 0
        %vm2524 = vcmp.ge.s32.totalorder %v2484, 0
        %vm2525 = vcmp.ge.s32.totalorder %v2485, 0
        %vm2526 = vcmp.ge.s32.totalorder %v2486, 0
        %vm2527 = vcmp.ge.s32.totalorder %v2487, 0
        %vm2528 = vcmp.ge.s32.totalorder %v2488, 0
        %vm2529 = vcmp.ge.s32.totalorder %v2489, 0
        %vm2530 = vcmp.ge.s32.totalorder %v2490, 0
        %vm2531 = vcmp.ge.s32.totalorder %v2491, 0
        %vm2532 = vcmp.ge.s32.totalorder %v2492, 0
        %vm2533 = vcmp.ge.s32.totalorder %v2493, 0
        %vm2534 = vcmp.ge.s32.totalorder %v2494, 0
        %vm2535 = vcmp.ge.s32.totalorder %v2495, 0
        %vm2536 = vcmp.ge.s32.totalorder %v2496, 0
        %vm2537 = vcmp.ge.s32.totalorder %v2497, 0
        %vm2538 = vcmp.ge.s32.totalorder %v2498, 0
        %vm2539 = vcmp.ge.s32.totalorder %v2499, 0
        %vm2540 = vcmp.ge.s32.totalorder %v2500, 0
        %vm2541 = vcmp.ge.s32.totalorder %v2501, 0
        %vm2542 = vcmp.ge.s32.totalorder %v2502, 0
        %vm2543 = vcmp.ge.s32.totalorder %v2503, 0
        %vm2544 = vcmp.ge.s32.totalorder %v2504, 0
        %vm2545 = vcmp.ge.s32.totalorder %v2505, 0
        %vm2546 = vcmp.ge.s32.totalorder %v2506, 0
        %vm2547 = vcmp.ge.s32.totalorder %v2507, 0
        %vm2548 = vcmp.ge.s32.totalorder %v2508, 0
        %vm2549 = vcmp.lt.s32.totalorder %v2469, 16
        %vm2550 = vcmp.lt.s32.totalorder %v2470, 16
        %vm2551 = vcmp.lt.s32.totalorder %v2471, 16
        %vm2552 = vcmp.lt.s32.totalorder %v2472, 16
        %vm2553 = vcmp.lt.s32.totalorder %v2473, 16
        %vm2554 = vcmp.lt.s32.totalorder %v2474, 16
        %vm2555 = vcmp.lt.s32.totalorder %v2475, 16
        %vm2556 = vcmp.lt.s32.totalorder %v2476, 16
        %vm2557 = vcmp.lt.s32.totalorder %v2477, 16
        %vm2558 = vcmp.lt.s32.totalorder %v2478, 16
        %vm2559 = vcmp.lt.s32.totalorder %v2479, 16
        %vm2560 = vcmp.lt.s32.totalorder %v2480, 16
        %vm2561 = vcmp.lt.s32.totalorder %v2481, 16
        %vm2562 = vcmp.lt.s32.totalorder %v2482, 16
        %vm2563 = vcmp.lt.s32.totalorder %v2483, 16
        %vm2564 = vcmp.lt.s32.totalorder %v2484, 16
        %vm2565 = vcmp.lt.s32.totalorder %v2485, 16
        %vm2566 = vcmp.lt.s32.totalorder %v2486, 16
        %vm2567 = vcmp.lt.s32.totalorder %v2487, 16
        %vm2568 = vcmp.lt.s32.totalorder %v2488, 16
        %vm2569 = vcmp.lt.s32.totalorder %v2489, 16
        %vm2570 = vcmp.lt.s32.totalorder %v2490, 16
        %vm2571 = vcmp.lt.s32.totalorder %v2491, 16
        %vm2572 = vcmp.lt.s32.totalorder %v2492, 16
        %vm2573 = vcmp.lt.s32.totalorder %v2493, 16
        %vm2574 = vcmp.lt.s32.totalorder %v2494, 16
        %vm2575 = vcmp.lt.s32.totalorder %v2495, 16
        %vm2576 = vcmp.lt.s32.totalorder %v2496, 16
        %vm2577 = vcmp.lt.s32.totalorder %v2497, 16
        %vm2578 = vcmp.lt.s32.totalorder %v2498, 16
        %vm2579 = vcmp.lt.s32.totalorder %v2499, 16
        %vm2580 = vcmp.lt.s32.totalorder %v2500, 16
        %vm2581 = vcmp.lt.s32.totalorder %v2501, 16
        %vm2582 = vcmp.lt.s32.totalorder %v2502, 16
        %vm2583 = vcmp.lt.s32.totalorder %v2503, 16
        %vm2584 = vcmp.lt.s32.totalorder %v2504, 16
        %vm2585 = vcmp.lt.s32.totalorder %v2505, 16
        %vm2586 = vcmp.lt.s32.totalorder %v2506, 16
        %vm2587 = vcmp.lt.s32.totalorder %v2507, 16
        %vm2588 = vcmp.lt.s32.totalorder %v2508, 16
        %vm2589 = vmand %vm2509, %vm2549
        %vm2590 = vmand %vm2510, %vm2550
        %vm2591 = vmand %vm2511, %vm2551
        %vm2592 = vmand %vm2512, %vm2552
        %vm2593 = vmand %vm2513, %vm2553
        %vm2594 = vmand %vm2514, %vm2554
        %vm2595 = vmand %vm2515, %vm2555
        %vm2596 = vmand %vm2516, %vm2556
        %vm2597 = vmand %vm2517, %vm2557
        %vm2598 = vmand %vm2518, %vm2558
        %vm2599 = vmand %vm2519, %vm2559
        %vm2600 = vmand %vm2520, %vm2560
        %vm2601 = vmand %vm2521, %vm2561
        %vm2602 = vmand %vm2522, %vm2562
        %vm2603 = vmand %vm2523, %vm2563
        %vm2604 = vmand %vm2524, %vm2564
        %vm2605 = vmand %vm2525, %vm2565
        %vm2606 = vmand %vm2526, %vm2566
        %vm2607 = vmand %vm2527, %vm2567
        %vm2608 = vmand %vm2528, %vm2568
        %vm2609 = vmand %vm2529, %vm2569
        %vm2610 = vmand %vm2530, %vm2570
        %vm2611 = vmand %vm2531, %vm2571
        %vm2612 = vmand %vm2532, %vm2572
        %vm2613 = vmand %vm2533, %vm2573
        %vm2614 = vmand %vm2534, %vm2574
        %vm2615 = vmand %vm2535, %vm2575
        %vm2616 = vmand %vm2536, %vm2576
        %vm2617 = vmand %vm2537, %vm2577
        %vm2618 = vmand %vm2538, %vm2578
        %vm2619 = vmand %vm2539, %vm2579
        %vm2620 = vmand %vm2540, %vm2580
        %vm2621 = vmand %vm2541, %vm2581
        %vm2622 = vmand %vm2542, %vm2582
        %vm2623 = vmand %vm2543, %vm2583
        %vm2624 = vmand %vm2544, %vm2584
        %vm2625 = vmand %vm2545, %vm2585
        %vm2626 = vmand %vm2546, %vm2586
        %vm2627 = vmand %vm2547, %vm2587
        %vm2628 = vmand %vm2548, %vm2588
        %v2629 = vsel %vm2589, 1, 0
        %v2630 = vsel %vm2590, 1, 0
        %v2631 = vsel %vm2591, 1, 0
        %v2632 = vsel %vm2592, 1, 0
        %v2633 = vsel %vm2593, 1, 0
        %v2634 = vsel %vm2594, 1, 0
        %v2635 = vsel %vm2595, 1, 0
        %v2636 = vsel %vm2596, 1, 0
        %v2637 = vsel %vm2597, 1, 0
        %v2638 = vsel %vm2598, 1, 0
        %v2639 = vsel %vm2599, 1, 0
        %v2640 = vsel %vm2600, 1, 0
        %v2641 = vsel %vm2601, 1, 0
        %v2642 = vsel %vm2602, 1, 0
        %v2643 = vsel %vm2603, 1, 0
        %v2644 = vsel %vm2604, 1, 0
        %v2645 = vsel %vm2605, 1, 0
        %v2646 = vsel %vm2606, 1, 0
        %v2647 = vsel %vm2607, 1, 0
        %v2648 = vsel %vm2608, 1, 0
        %v2649 = vsel %vm2609, 1, 0
        %v2650 = vsel %vm2610, 1, 0
        %v2651 = vsel %vm2611, 1, 0
        %v2652 = vsel %vm2612, 1, 0
        %v2653 = vsel %vm2613, 1, 0
        %v2654 = vsel %vm2614, 1, 0
        %v2655 = vsel %vm2615, 1, 0
        %v2656 = vsel %vm2616, 1, 0
        %v2657 = vsel %vm2617, 1, 0
        %v2658 = vsel %vm2618, 1, 0
        %v2659 = vsel %vm2619, 1, 0
        %v2660 = vsel %vm2620, 1, 0
        %v2661 = vsel %vm2621, 1, 0
        %v2662 = vsel %vm2622, 1, 0
        %v2663 = vsel %vm2623, 1, 0
        %v2664 = vsel %vm2624, 1, 0
        %v2665 = vsel %vm2625, 1, 0
        %v2666 = vsel %vm2626, 1, 0
        %v2667 = vsel %vm2627, 1, 0
        %v2668 = vsel %vm2628, 1, 0
        %v2669 = vcvt.s32.f32 %v2629
        %v2670 = vcvt.s32.f32 %v2630
        %v2671 = vcvt.s32.f32 %v2631
        %v2672 = vcvt.s32.f32 %v2632
        %v2673 = vcvt.s32.f32 %v2633
        %v2674 = vcvt.s32.f32 %v2634
        %v2675 = vcvt.s32.f32 %v2635
        %v2676 = vcvt.s32.f32 %v2636
        %v2677 = vcvt.s32.f32 %v2637
        %v2678 = vcvt.s32.f32 %v2638
        %v2679 = vcvt.s32.f32 %v2639
        %v2680 = vcvt.s32.f32 %v2640
        %v2681 = vcvt.s32.f32 %v2641
        %v2682 = vcvt.s32.f32 %v2642
        %v2683 = vcvt.s32.f32 %v2643
        %v2684 = vcvt.s32.f32 %v2644
        %v2685 = vcvt.s32.f32 %v2645
        %v2686 = vcvt.s32.f32 %v2646
        %v2687 = vcvt.s32.f32 %v2647
        %v2688 = vcvt.s32.f32 %v2648
        %v2689 = vcvt.s32.f32 %v2649
        %v2690 = vcvt.s32.f32 %v2650
        %v2691 = vcvt.s32.f32 %v2651
        %v2692 = vcvt.s32.f32 %v2652
        %v2693 = vcvt.s32.f32 %v2653
        %v2694 = vcvt.s32.f32 %v2654
        %v2695 = vcvt.s32.f32 %v2655
        %v2696 = vcvt.s32.f32 %v2656
        %v2697 = vcvt.s32.f32 %v2657
        %v2698 = vcvt.s32.f32 %v2658
        %v2699 = vcvt.s32.f32 %v2659
        %v2700 = vcvt.s32.f32 %v2660
        %v2701 = vcvt.s32.f32 %v2661
        %v2702 = vcvt.s32.f32 %v2662
        %v2703 = vcvt.s32.f32 %v2663
        %v2704 = vcvt.s32.f32 %v2664
        %v2705 = vcvt.s32.f32 %v2665
        %v2706 = vcvt.s32.f32 %v2666
        %v2707 = vcvt.s32.f32 %v2667
        %v2708 = vcvt.s32.f32 %v2668
        %v2709 = vadd.s32 %v1229, 3
        %v2710 = vadd.s32 %v1230, 3
        %v2711 = vadd.s32 %v1231, 3
        %v2712 = vadd.s32 %v1232, 3
        %v2713 = vadd.s32 %v1233, 3
        %v2714 = vadd.s32 %v1234, 3
        %v2715 = vadd.s32 %v1235, 3
        %v2716 = vadd.s32 %v1236, 3
        %v2717 = vadd.s32 %v1237, 3
        %v2718 = vadd.s32 %v1238, 3
        %v2719 = vadd.s32 %v1239, 3
        %v2720 = vadd.s32 %v1240, 3
        %v2721 = vadd.s32 %v1241, 3
        %v2722 = vadd.s32 %v1242, 3
        %v2723 = vadd.s32 %v1243, 3
        %v2724 = vadd.s32 %v1244, 3
        %v2725 = vadd.s32 %v1245, 3
        %v2726 = vadd.s32 %v1246, 3
        %v2727 = vadd.s32 %v1247, 3
        %v2728 = vadd.s32 %v1248, 3
        %v2729 = vadd.s32 %v1249, 3
        %v2730 = vadd.s32 %v1250, 3
        %v2731 = vadd.s32 %v1251, 3
        %v2732 = vadd.s32 %v1252, 3
        %v2733 = vadd.s32 %v1253, 3
        %v2734 = vadd.s32 %v1254, 3
        %v2735 = vadd.s32 %v1255, 3
        %v2736 = vadd.s32 %v1256, 3
        %v2737 = vadd.s32 %v1257, 3
        %v2738 = vadd.s32 %v1258, 3
        %v2739 = vadd.s32 %v1259, 3
        %v2740 = vadd.s32 %v1260, 3
        %v2741 = vadd.s32 %v1261, 3
        %v2742 = vadd.s32 %v1262, 3
        %v2743 = vadd.s32 %v1263, 3
        %v2744 = vadd.s32 %v1264, 3
        %v2745 = vadd.s32 %v1265, 3
        %v2746 = vadd.s32 %v1266, 3
        %v2747 = vadd.s32 %v1267, 3
        %v2748 = vadd.s32 %v1268, 3
        %vm2749 = vcmp.ge.s32.totalorder %v2709, 0
        %vm2750 = vcmp.ge.s32.totalorder %v2710, 0
        %vm2751 = vcmp.ge.s32.totalorder %v2711, 0
        %vm2752 = vcmp.ge.s32.totalorder %v2712, 0
        %vm2753 = vcmp.ge.s32.totalorder %v2713, 0
        %vm2754 = vcmp.ge.s32.totalorder %v2714, 0
        %vm2755 = vcmp.ge.s32.totalorder %v2715, 0
        %vm2756 = vcmp.ge.s32.totalorder %v2716, 0
        %vm2757 = vcmp.ge.s32.totalorder %v2717, 0
        %vm2758 = vcmp.ge.s32.totalorder %v2718, 0
        %vm2759 = vcmp.ge.s32.totalorder %v2719, 0
        %vm2760 = vcmp.ge.s32.totalorder %v2720, 0
        %vm2761 = vcmp.ge.s32.totalorder %v2721, 0
        %vm2762 = vcmp.ge.s32.totalorder %v2722, 0
        %vm2763 = vcmp.ge.s32.totalorder %v2723, 0
        %vm2764 = vcmp.ge.s32.totalorder %v2724, 0
        %vm2765 = vcmp.ge.s32.totalorder %v2725, 0
        %vm2766 = vcmp.ge.s32.totalorder %v2726, 0
        %vm2767 = vcmp.ge.s32.totalorder %v2727, 0
        %vm2768 = vcmp.ge.s32.totalorder %v2728, 0
        %vm2769 = vcmp.ge.s32.totalorder %v2729, 0
        %vm2770 = vcmp.ge.s32.totalorder %v2730, 0
        %vm2771 = vcmp.ge.s32.totalorder %v2731, 0
        %vm2772 = vcmp.ge.s32.totalorder %v2732, 0
        %vm2773 = vcmp.ge.s32.totalorder %v2733, 0
        %vm2774 = vcmp.ge.s32.totalorder %v2734, 0
        %vm2775 = vcmp.ge.s32.totalorder %v2735, 0
        %vm2776 = vcmp.ge.s32.totalorder %v2736, 0
        %vm2777 = vcmp.ge.s32.totalorder %v2737, 0
        %vm2778 = vcmp.ge.s32.totalorder %v2738, 0
        %vm2779 = vcmp.ge.s32.totalorder %v2739, 0
        %vm2780 = vcmp.ge.s32.totalorder %v2740, 0
        %vm2781 = vcmp.ge.s32.totalorder %v2741, 0
        %vm2782 = vcmp.ge.s32.totalorder %v2742, 0
        %vm2783 = vcmp.ge.s32.totalorder %v2743, 0
        %vm2784 = vcmp.ge.s32.totalorder %v2744, 0
        %vm2785 = vcmp.ge.s32.totalorder %v2745, 0
        %vm2786 = vcmp.ge.s32.totalorder %v2746, 0
        %vm2787 = vcmp.ge.s32.totalorder %v2747, 0
        %vm2788 = vcmp.ge.s32.totalorder %v2748, 0
        %vm2789 = vcmp.lt.s32.totalorder %v2709, 16
        %vm2790 = vcmp.lt.s32.totalorder %v2710, 16
        %vm2791 = vcmp.lt.s32.totalorder %v2711, 16
        %vm2792 = vcmp.lt.s32.totalorder %v2712, 16
        %vm2793 = vcmp.lt.s32.totalorder %v2713, 16
        %vm2794 = vcmp.lt.s32.totalorder %v2714, 16
        %vm2795 = vcmp.lt.s32.totalorder %v2715, 16
        %vm2796 = vcmp.lt.s32.totalorder %v2716, 16
        %vm2797 = vcmp.lt.s32.totalorder %v2717, 16
        %vm2798 = vcmp.lt.s32.totalorder %v2718, 16
        %vm2799 = vcmp.lt.s32.totalorder %v2719, 16
        %vm2800 = vcmp.lt.s32.totalorder %v2720, 16
        %vm2801 = vcmp.lt.s32.totalorder %v2721, 16
        %vm2802 = vcmp.lt.s32.totalorder %v2722, 16
        %vm2803 = vcmp.lt.s32.totalorder %v2723, 16
        %vm2804 = vcmp.lt.s32.totalorder %v2724, 16
        %vm2805 = vcmp.lt.s32.totalorder %v2725, 16
        %vm2806 = vcmp.lt.s32.totalorder %v2726, 16
        %vm2807 = vcmp.lt.s32.totalorder %v2727, 16
        %vm2808 = vcmp.lt.s32.totalorder %v2728, 16
        %vm2809 = vcmp.lt.s32.totalorder %v2729, 16
        %vm2810 = vcmp.lt.s32.totalorder %v2730, 16
        %vm2811 = vcmp.lt.s32.totalorder %v2731, 16
        %vm2812 = vcmp.lt.s32.totalorder %v2732, 16
        %vm2813 = vcmp.lt.s32.totalorder %v2733, 16
        %vm2814 = vcmp.lt.s32.totalorder %v2734, 16
        %vm2815 = vcmp.lt.s32.totalorder %v2735, 16
        %vm2816 = vcmp.lt.s32.totalorder %v2736, 16
        %vm2817 = vcmp.lt.s32.totalorder %v2737, 16
        %vm2818 = vcmp.lt.s32.totalorder %v2738, 16
        %vm2819 = vcmp.lt.s32.totalorder %v2739, 16
        %vm2820 = vcmp.lt.s32.totalorder %v2740, 16
        %vm2821 = vcmp.lt.s32.totalorder %v2741, 16
        %vm2822 = vcmp.lt.s32.totalorder %v2742, 16
        %vm2823 = vcmp.lt.s32.totalorder %v2743, 16
        %vm2824 = vcmp.lt.s32.totalorder %v2744, 16
        %vm2825 = vcmp.lt.s32.totalorder %v2745, 16
        %vm2826 = vcmp.lt.s32.totalorder %v2746, 16
        %vm2827 = vcmp.lt.s32.totalorder %v2747, 16
        %vm2828 = vcmp.lt.s32.totalorder %v2748, 16
        %vm2829 = vmand %vm2749, %vm2789
        %vm2830 = vmand %vm2750, %vm2790
        %vm2831 = vmand %vm2751, %vm2791
        %vm2832 = vmand %vm2752, %vm2792
        %vm2833 = vmand %vm2753, %vm2793
        %vm2834 = vmand %vm2754, %vm2794
        %vm2835 = vmand %vm2755, %vm2795
        %vm2836 = vmand %vm2756, %vm2796
        %vm2837 = vmand %vm2757, %vm2797
        %vm2838 = vmand %vm2758, %vm2798
        %vm2839 = vmand %vm2759, %vm2799
        %vm2840 = vmand %vm2760, %vm2800
        %vm2841 = vmand %vm2761, %vm2801
        %vm2842 = vmand %vm2762, %vm2802
        %vm2843 = vmand %vm2763, %vm2803
        %vm2844 = vmand %vm2764, %vm2804
        %vm2845 = vmand %vm2765, %vm2805
        %vm2846 = vmand %vm2766, %vm2806
        %vm2847 = vmand %vm2767, %vm2807
        %vm2848 = vmand %vm2768, %vm2808
        %vm2849 = vmand %vm2769, %vm2809
        %vm2850 = vmand %vm2770, %vm2810
        %vm2851 = vmand %vm2771, %vm2811
        %vm2852 = vmand %vm2772, %vm2812
        %vm2853 = vmand %vm2773, %vm2813
        %vm2854 = vmand %vm2774, %vm2814
        %vm2855 = vmand %vm2775, %vm2815
        %vm2856 = vmand %vm2776, %vm2816
        %vm2857 = vmand %vm2777, %vm2817
        %vm2858 = vmand %vm2778, %vm2818
        %vm2859 = vmand %vm2779, %vm2819
        %vm2860 = vmand %vm2780, %vm2820
        %vm2861 = vmand %vm2781, %vm2821
        %vm2862 = vmand %vm2782, %vm2822
        %vm2863 = vmand %vm2783, %vm2823
        %vm2864 = vmand %vm2784, %vm2824
        %vm2865 = vmand %vm2785, %vm2825
        %vm2866 = vmand %vm2786, %vm2826
        %vm2867 = vmand %vm2787, %vm2827
        %vm2868 = vmand %vm2788, %vm2828
        %v2869 = vsel %vm2829, 1, 0
        %v2870 = vsel %vm2830, 1, 0
        %v2871 = vsel %vm2831, 1, 0
        %v2872 = vsel %vm2832, 1, 0
        %v2873 = vsel %vm2833, 1, 0
        %v2874 = vsel %vm2834, 1, 0
        %v2875 = vsel %vm2835, 1, 0
        %v2876 = vsel %vm2836, 1, 0
        %v2877 = vsel %vm2837, 1, 0
        %v2878 = vsel %vm2838, 1, 0
        %v2879 = vsel %vm2839, 1, 0
        %v2880 = vsel %vm2840, 1, 0
        %v2881 = vsel %vm2841, 1, 0
        %v2882 = vsel %vm2842, 1, 0
        %v2883 = vsel %vm2843, 1, 0
        %v2884 = vsel %vm2844, 1, 0
        %v2885 = vsel %vm2845, 1, 0
        %v2886 = vsel %vm2846, 1, 0
        %v2887 = vsel %vm2847, 1, 0
        %v2888 = vsel %vm2848, 1, 0
        %v2889 = vsel %vm2849, 1, 0
        %v2890 = vsel %vm2850, 1, 0
        %v2891 = vsel %vm2851, 1, 0
        %v2892 = vsel %vm2852, 1, 0
        %v2893 = vsel %vm2853, 1, 0
        %v2894 = vsel %vm2854, 1, 0
        %v2895 = vsel %vm2855, 1, 0
        %v2896 = vsel %vm2856, 1, 0
        %v2897 = vsel %vm2857, 1, 0
        %v2898 = vsel %vm2858, 1, 0
        %v2899 = vsel %vm2859, 1, 0
        %v2900 = vsel %vm2860, 1, 0
        %v2901 = vsel %vm2861, 1, 0
        %v2902 = vsel %vm2862, 1, 0
        %v2903 = vsel %vm2863, 1, 0
        %v2904 = vsel %vm2864, 1, 0
        %v2905 = vsel %vm2865, 1, 0
        %v2906 = vsel %vm2866, 1, 0
        %v2907 = vsel %vm2867, 1, 0
        %v2908 = vsel %vm2868, 1, 0
        %v2909 = vcvt.s32.f32 %v2869
        %v2910 = vcvt.s32.f32 %v2870
        %v2911 = vcvt.s32.f32 %v2871
        %v2912 = vcvt.s32.f32 %v2872
        %v2913 = vcvt.s32.f32 %v2873
        %v2914 = vcvt.s32.f32 %v2874
        %v2915 = vcvt.s32.f32 %v2875
        %v2916 = vcvt.s32.f32 %v2876
        %v2917 = vcvt.s32.f32 %v2877
        %v2918 = vcvt.s32.f32 %v2878
        %v2919 = vcvt.s32.f32 %v2879
        %v2920 = vcvt.s32.f32 %v2880
        %v2921 = vcvt.s32.f32 %v2881
        %v2922 = vcvt.s32.f32 %v2882
        %v2923 = vcvt.s32.f32 %v2883
        %v2924 = vcvt.s32.f32 %v2884
        %v2925 = vcvt.s32.f32 %v2885
        %v2926 = vcvt.s32.f32 %v2886
        %v2927 = vcvt.s32.f32 %v2887
        %v2928 = vcvt.s32.f32 %v2888
        %v2929 = vcvt.s32.f32 %v2889
        %v2930 = vcvt.s32.f32 %v2890
        %v2931 = vcvt.s32.f32 %v2891
        %v2932 = vcvt.s32.f32 %v2892
        %v2933 = vcvt.s32.f32 %v2893
        %v2934 = vcvt.s32.f32 %v2894
        %v2935 = vcvt.s32.f32 %v2895
        %v2936 = vcvt.s32.f32 %v2896
        %v2937 = vcvt.s32.f32 %v2897
        %v2938 = vcvt.s32.f32 %v2898
        %v2939 = vcvt.s32.f32 %v2899
        %v2940 = vcvt.s32.f32 %v2900
        %v2941 = vcvt.s32.f32 %v2901
        %v2942 = vcvt.s32.f32 %v2902
        %v2943 = vcvt.s32.f32 %v2903
        %v2944 = vcvt.s32.f32 %v2904
        %v2945 = vcvt.s32.f32 %v2905
        %v2946 = vcvt.s32.f32 %v2906
        %v2947 = vcvt.s32.f32 %v2907
        %v2948 = vcvt.s32.f32 %v2908
        %v2949 = vadd.s32 %v1229, 4
        %v2950 = vadd.s32 %v1230, 4
        %v2951 = vadd.s32 %v1231, 4
        %v2952 = vadd.s32 %v1232, 4
        %v2953 = vadd.s32 %v1233, 4
        %v2954 = vadd.s32 %v1234, 4
        %v2955 = vadd.s32 %v1235, 4
        %v2956 = vadd.s32 %v1236, 4
        %v2957 = vadd.s32 %v1237, 4
        %v2958 = vadd.s32 %v1238, 4
        %v2959 = vadd.s32 %v1239, 4
        %v2960 = vadd.s32 %v1240, 4
        %v2961 = vadd.s32 %v1241, 4
        %v2962 = vadd.s32 %v1242, 4
        %v2963 = vadd.s32 %v1243, 4
        %v2964 = vadd.s32 %v1244, 4
        %v2965 = vadd.s32 %v1245, 4
        %v2966 = vadd.s32 %v1246, 4
        %v2967 = vadd.s32 %v1247, 4
        %v2968 = vadd.s32 %v1248, 4
        %v2969 = vadd.s32 %v1249, 4
        %v2970 = vadd.s32 %v1250, 4
        %v2971 = vadd.s32 %v1251, 4
        %v2972 = vadd.s32 %v1252, 4
        %v2973 = vadd.s32 %v1253, 4
        %v2974 = vadd.s32 %v1254, 4
        %v2975 = vadd.s32 %v1255, 4
        %v2976 = vadd.s32 %v1256, 4
        %v2977 = vadd.s32 %v1257, 4
        %v2978 = vadd.s32 %v1258, 4
        %v2979 = vadd.s32 %v1259, 4
        %v2980 = vadd.s32 %v1260, 4
        %v2981 = vadd.s32 %v1261, 4
        %v2982 = vadd.s32 %v1262, 4
        %v2983 = vadd.s32 %v1263, 4
        %v2984 = vadd.s32 %v1264, 4
        %v2985 = vadd.s32 %v1265, 4
        %v2986 = vadd.s32 %v1266, 4
        %v2987 = vadd.s32 %v1267, 4
        %v2988 = vadd.s32 %v1268, 4
        %vm2989 = vcmp.ge.s32.totalorder %v2949, 0
        %vm2990 = vcmp.ge.s32.totalorder %v2950, 0
        %vm2991 = vcmp.ge.s32.totalorder %v2951, 0
        %vm2992 = vcmp.ge.s32.totalorder %v2952, 0
        %vm2993 = vcmp.ge.s32.totalorder %v2953, 0
        %vm2994 = vcmp.ge.s32.totalorder %v2954, 0
        %vm2995 = vcmp.ge.s32.totalorder %v2955, 0
        %vm2996 = vcmp.ge.s32.totalorder %v2956, 0
        %vm2997 = vcmp.ge.s32.totalorder %v2957, 0
        %vm2998 = vcmp.ge.s32.totalorder %v2958, 0
        %vm2999 = vcmp.ge.s32.totalorder %v2959, 0
        %vm3000 = vcmp.ge.s32.totalorder %v2960, 0
        %vm3001 = vcmp.ge.s32.totalorder %v2961, 0
        %vm3002 = vcmp.ge.s32.totalorder %v2962, 0
        %vm3003 = vcmp.ge.s32.totalorder %v2963, 0
        %vm3004 = vcmp.ge.s32.totalorder %v2964, 0
        %vm3005 = vcmp.ge.s32.totalorder %v2965, 0
        %vm3006 = vcmp.ge.s32.totalorder %v2966, 0
        %vm3007 = vcmp.ge.s32.totalorder %v2967, 0
        %vm3008 = vcmp.ge.s32.totalorder %v2968, 0
        %vm3009 = vcmp.ge.s32.totalorder %v2969, 0
        %vm3010 = vcmp.ge.s32.totalorder %v2970, 0
        %vm3011 = vcmp.ge.s32.totalorder %v2971, 0
        %vm3012 = vcmp.ge.s32.totalorder %v2972, 0
        %vm3013 = vcmp.ge.s32.totalorder %v2973, 0
        %vm3014 = vcmp.ge.s32.totalorder %v2974, 0
        %vm3015 = vcmp.ge.s32.totalorder %v2975, 0
        %vm3016 = vcmp.ge.s32.totalorder %v2976, 0
        %vm3017 = vcmp.ge.s32.totalorder %v2977, 0
        %vm3018 = vcmp.ge.s32.totalorder %v2978, 0
        %vm3019 = vcmp.ge.s32.totalorder %v2979, 0
        %vm3020 = vcmp.ge.s32.totalorder %v2980, 0
        %vm3021 = vcmp.ge.s32.totalorder %v2981, 0
        %vm3022 = vcmp.ge.s32.totalorder %v2982, 0
        %vm3023 = vcmp.ge.s32.totalorder %v2983, 0
        %vm3024 = vcmp.ge.s32.totalorder %v2984, 0
        %vm3025 = vcmp.ge.s32.totalorder %v2985, 0
        %vm3026 = vcmp.ge.s32.totalorder %v2986, 0
        %vm3027 = vcmp.ge.s32.totalorder %v2987, 0
        %vm3028 = vcmp.ge.s32.totalorder %v2988, 0
        %vm3029 = vcmp.lt.s32.totalorder %v2949, 16
        %vm3030 = vcmp.lt.s32.totalorder %v2950, 16
        %vm3031 = vcmp.lt.s32.totalorder %v2951, 16
        %vm3032 = vcmp.lt.s32.totalorder %v2952, 16
        %vm3033 = vcmp.lt.s32.totalorder %v2953, 16
        %vm3034 = vcmp.lt.s32.totalorder %v2954, 16
        %vm3035 = vcmp.lt.s32.totalorder %v2955, 16
        %vm3036 = vcmp.lt.s32.totalorder %v2956, 16
        %vm3037 = vcmp.lt.s32.totalorder %v2957, 16
        %vm3038 = vcmp.lt.s32.totalorder %v2958, 16
        %vm3039 = vcmp.lt.s32.totalorder %v2959, 16
        %vm3040 = vcmp.lt.s32.totalorder %v2960, 16
        %vm3041 = vcmp.lt.s32.totalorder %v2961, 16
        %vm3042 = vcmp.lt.s32.totalorder %v2962, 16
        %vm3043 = vcmp.lt.s32.totalorder %v2963, 16
        %vm3044 = vcmp.lt.s32.totalorder %v2964, 16
        %vm3045 = vcmp.lt.s32.totalorder %v2965, 16
        %vm3046 = vcmp.lt.s32.totalorder %v2966, 16
        %vm3047 = vcmp.lt.s32.totalorder %v2967, 16
        %vm3048 = vcmp.lt.s32.totalorder %v2968, 16
        %vm3049 = vcmp.lt.s32.totalorder %v2969, 16
        %vm3050 = vcmp.lt.s32.totalorder %v2970, 16
        %vm3051 = vcmp.lt.s32.totalorder %v2971, 16
        %vm3052 = vcmp.lt.s32.totalorder %v2972, 16
        %vm3053 = vcmp.lt.s32.totalorder %v2973, 16
        %vm3054 = vcmp.lt.s32.totalorder %v2974, 16
        %vm3055 = vcmp.lt.s32.totalorder %v2975, 16
        %vm3056 = vcmp.lt.s32.totalorder %v2976, 16
        %vm3057 = vcmp.lt.s32.totalorder %v2977, 16
        %vm3058 = vcmp.lt.s32.totalorder %v2978, 16
        %vm3059 = vcmp.lt.s32.totalorder %v2979, 16
        %vm3060 = vcmp.lt.s32.totalorder %v2980, 16
        %vm3061 = vcmp.lt.s32.totalorder %v2981, 16
        %vm3062 = vcmp.lt.s32.totalorder %v2982, 16
        %vm3063 = vcmp.lt.s32.totalorder %v2983, 16
        %vm3064 = vcmp.lt.s32.totalorder %v2984, 16
        %vm3065 = vcmp.lt.s32.totalorder %v2985, 16
        %vm3066 = vcmp.lt.s32.totalorder %v2986, 16
        %vm3067 = vcmp.lt.s32.totalorder %v2987, 16
        %vm3068 = vcmp.lt.s32.totalorder %v2988, 16
        %vm3069 = vmand %vm2989, %vm3029
        %vm3070 = vmand %vm2990, %vm3030
        %vm3071 = vmand %vm2991, %vm3031
        %vm3072 = vmand %vm2992, %vm3032
        %vm3073 = vmand %vm2993, %vm3033
        %vm3074 = vmand %vm2994, %vm3034
        %vm3075 = vmand %vm2995, %vm3035
        %vm3076 = vmand %vm2996, %vm3036
        %vm3077 = vmand %vm2997, %vm3037
        %vm3078 = vmand %vm2998, %vm3038
        %vm3079 = vmand %vm2999, %vm3039
        %vm3080 = vmand %vm3000, %vm3040
        %vm3081 = vmand %vm3001, %vm3041
        %vm3082 = vmand %vm3002, %vm3042
        %vm3083 = vmand %vm3003, %vm3043
        %vm3084 = vmand %vm3004, %vm3044
        %vm3085 = vmand %vm3005, %vm3045
        %vm3086 = vmand %vm3006, %vm3046
        %vm3087 = vmand %vm3007, %vm3047
        %vm3088 = vmand %vm3008, %vm3048
        %vm3089 = vmand %vm3009, %vm3049
        %vm3090 = vmand %vm3010, %vm3050
        %vm3091 = vmand %vm3011, %vm3051
        %vm3092 = vmand %vm3012, %vm3052
        %vm3093 = vmand %vm3013, %vm3053
        %vm3094 = vmand %vm3014, %vm3054
        %vm3095 = vmand %vm3015, %vm3055
        %vm3096 = vmand %vm3016, %vm3056
        %vm3097 = vmand %vm3017, %vm3057
        %vm3098 = vmand %vm3018, %vm3058
        %vm3099 = vmand %vm3019, %vm3059
        %vm3100 = vmand %vm3020, %vm3060
        %vm3101 = vmand %vm3021, %vm3061
        %vm3102 = vmand %vm3022, %vm3062
        %vm3103 = vmand %vm3023, %vm3063
        %vm3104 = vmand %vm3024, %vm3064
        %vm3105 = vmand %vm3025, %vm3065
        %vm3106 = vmand %vm3026, %vm3066
        %vm3107 = vmand %vm3027, %vm3067
        %vm3108 = vmand %vm3028, %vm3068
        %v3109 = vsel %vm3069, 1, 0
        %v3110 = vsel %vm3070, 1, 0
        %v3111 = vsel %vm3071, 1, 0
        %v3112 = vsel %vm3072, 1, 0
        %v3113 = vsel %vm3073, 1, 0
        %v3114 = vsel %vm3074, 1, 0
        %v3115 = vsel %vm3075, 1, 0
        %v3116 = vsel %vm3076, 1, 0
        %v3117 = vsel %vm3077, 1, 0
        %v3118 = vsel %vm3078, 1, 0
        %v3119 = vsel %vm3079, 1, 0
        %v3120 = vsel %vm3080, 1, 0
        %v3121 = vsel %vm3081, 1, 0
        %v3122 = vsel %vm3082, 1, 0
        %v3123 = vsel %vm3083, 1, 0
        %v3124 = vsel %vm3084, 1, 0
        %v3125 = vsel %vm3085, 1, 0
        %v3126 = vsel %vm3086, 1, 0
        %v3127 = vsel %vm3087, 1, 0
        %v3128 = vsel %vm3088, 1, 0
        %v3129 = vsel %vm3089, 1, 0
        %v3130 = vsel %vm3090, 1, 0
        %v3131 = vsel %vm3091, 1, 0
        %v3132 = vsel %vm3092, 1, 0
        %v3133 = vsel %vm3093, 1, 0
        %v3134 = vsel %vm3094, 1, 0
        %v3135 = vsel %vm3095, 1, 0
        %v3136 = vsel %vm3096, 1, 0
        %v3137 = vsel %vm3097, 1, 0
        %v3138 = vsel %vm3098, 1, 0
        %v3139 = vsel %vm3099, 1, 0
        %v3140 = vsel %vm3100, 1, 0
        %v3141 = vsel %vm3101, 1, 0
        %v3142 = vsel %vm3102, 1, 0
        %v3143 = vsel %vm3103, 1, 0
        %v3144 = vsel %vm3104, 1, 0
        %v3145 = vsel %vm3105, 1, 0
        %v3146 = vsel %vm3106, 1, 0
        %v3147 = vsel %vm3107, 1, 0
        %v3148 = vsel %vm3108, 1, 0
        %v3149 = vcvt.s32.f32 %v3109
        %v3150 = vcvt.s32.f32 %v3110
        %v3151 = vcvt.s32.f32 %v3111
        %v3152 = vcvt.s32.f32 %v3112
        %v3153 = vcvt.s32.f32 %v3113
        %v3154 = vcvt.s32.f32 %v3114
        %v3155 = vcvt.s32.f32 %v3115
        %v3156 = vcvt.s32.f32 %v3116
        %v3157 = vcvt.s32.f32 %v3117
        %v3158 = vcvt.s32.f32 %v3118
        %v3159 = vcvt.s32.f32 %v3119
        %v3160 = vcvt.s32.f32 %v3120
        %v3161 = vcvt.s32.f32 %v3121
        %v3162 = vcvt.s32.f32 %v3122
        %v3163 = vcvt.s32.f32 %v3123
        %v3164 = vcvt.s32.f32 %v3124
        %v3165 = vcvt.s32.f32 %v3125
        %v3166 = vcvt.s32.f32 %v3126
        %v3167 = vcvt.s32.f32 %v3127
        %v3168 = vcvt.s32.f32 %v3128
        %v3169 = vcvt.s32.f32 %v3129
        %v3170 = vcvt.s32.f32 %v3130
        %v3171 = vcvt.s32.f32 %v3131
        %v3172 = vcvt.s32.f32 %v3132
        %v3173 = vcvt.s32.f32 %v3133
        %v3174 = vcvt.s32.f32 %v3134
        %v3175 = vcvt.s32.f32 %v3135
        %v3176 = vcvt.s32.f32 %v3136
        %v3177 = vcvt.s32.f32 %v3137
        %v3178 = vcvt.s32.f32 %v3138
        %v3179 = vcvt.s32.f32 %v3139
        %v3180 = vcvt.s32.f32 %v3140
        %v3181 = vcvt.s32.f32 %v3141
        %v3182 = vcvt.s32.f32 %v3142
        %v3183 = vcvt.s32.f32 %v3143
        %v3184 = vcvt.s32.f32 %v3144
        %v3185 = vcvt.s32.f32 %v3145
        %v3186 = vcvt.s32.f32 %v3146
        %v3187 = vcvt.s32.f32 %v3147
        %v3188 = vcvt.s32.f32 %v3148
        %v3189 = vrot.slane %v708, 4
        %v3190 = vrot.slane %v709, 4
        %v3191 = vrot.slane %v710, 4
        %v3192 = vrot.slane %v711, 4
        %v3193 = vrot.slane %v712, 4
        %v3194 = vrot.slane %v713, 4
        %v3195 = vrot.slane %v714, 4
        %v3196 = vrot.slane %v715, 4
        %v3197 = vrot.slane %v716, 4
        %v3198 = vrot.slane %v717, 4
        %v3199 = vrot.slane %v718, 4
        %v3200 = vrot.slane %v719, 4
        %v3201 = vrot.slane %v720, 4
        %v3202 = vrot.slane %v721, 4
        %v3203 = vrot.slane %v722, 4
        %v3204 = vrot.slane %v723, 4
        %v3205 = vrot.slane %v724, 4
        %v3206 = vrot.slane %v725, 4
        %v3207 = vrot.slane %v726, 4
        %v3208 = vrot.slane %v727, 4
        %v3209 = vrot.slane %v728, 4
        %v3210 = vrot.slane %v729, 4
        %v3211 = vrot.slane %v730, 4
        %v3212 = vrot.slane %v731, 4
        %v3213 = vrot.slane %v732, 4
        %v3214 = vrot.slane %v733, 4
        %v3215 = vrot.slane %v734, 4
        %v3216 = vrot.slane %v735, 4
        %v3217 = vrot.slane %v736, 4
        %v3218 = vrot.slane %v737, 4
        %v3219 = vrot.slane %v738, 4
        %v3220 = vrot.slane %v739, 4
        %v3221 = vrot.slane %v740, 4
        %v3222 = vrot.slane %v741, 4
        %v3223 = vrot.slane %v742, 4
        %v3224 = vrot.slane %v743, 4
        %v3225 = vrot.slane %v744, 4
        %v3226 = vrot.slane %v745, 4
        %v3227 = vrot.slane %v746, 4
        %v3228 = vrot.slane %v747, 4
        %vm3229 = vcmp.lt.s32.totalorder %v749, 4
        %v3230 = vsel %vm3229, %v3227, %v3228
        %v3231 = vsel %vm3229, %v3226, %v3227
        %v3232 = vsel %vm3229, %v3225, %v3226
        %v3233 = vsel %vm3229, %v3224, %v3225
        %v3234 = vsel %vm3229, %v3223, %v3224
        %v3235 = vsel %vm3229, %v3222, %v3223
        %v3236 = vsel %vm3229, %v3221, %v3222
        %v3237 = vsel %vm3229, %v3220, %v3221
        %v3238 = vsel %vm3229, %v3219, %v3220
        %v3239 = vsel %vm3229, %v3218, %v3219
        %v3240 = vsel %vm3229, %v3217, %v3218
        %v3241 = vsel %vm3229, %v3216, %v3217
        %v3242 = vsel %vm3229, %v3215, %v3216
        %v3243 = vsel %vm3229, %v3214, %v3215
        %v3244 = vsel %vm3229, %v3213, %v3214
        %v3245 = vsel %vm3229, %v3212, %v3213
        %v3246 = vsel %vm3229, %v3211, %v3212
        %v3247 = vsel %vm3229, %v3210, %v3211
        %v3248 = vsel %vm3229, %v3209, %v3210
        %v3249 = vsel %vm3229, %v3208, %v3209
        %v3250 = vsel %vm3229, %v3207, %v3208
        %v3251 = vsel %vm3229, %v3206, %v3207
        %v3252 = vsel %vm3229, %v3205, %v3206
        %v3253 = vsel %vm3229, %v3204, %v3205
        %v3254 = vsel %vm3229, %v3203, %v3204
        %v3255 = vsel %vm3229, %v3202, %v3203
        %v3256 = vsel %vm3229, %v3201, %v3202
        %v3257 = vsel %vm3229, %v3200, %v3201
        %v3258 = vsel %vm3229, %v3199, %v3200
        %v3259 = vsel %vm3229, %v3198, %v3199
        %v3260 = vsel %vm3229, %v3197, %v3198
        %v3261 = vsel %vm3229, %v3196, %v3197
        %v3262 = vsel %vm3229, %v3195, %v3196
        %v3263 = vsel %vm3229, %v3194, %v3195
        %v3264 = vsel %vm3229, %v3193, %v3194
        %v3265 = vsel %vm3229, %v3192, %v3193
        %v3266 = vsel %vm3229, %v3191, %v3192
        %v3267 = vsel %vm3229, %v3190, %v3191
        %v3268 = vsel %vm3229, %v3189, %v3190
        %v3269 = vsel %vm3229, %v3228, %v3189
        %v3270 = vmul.f32 %v3269, %v1469
        %v3271 = vmul.f32 %v3268, %v1470
        %v3272 = vmul.f32 %v3267, %v1471
        %v3273 = vmul.f32 %v3266, %v1472
        %v3274 = vmul.f32 %v3265, %v1473
        %v3275 = vmul.f32 %v3264, %v1474
        %v3276 = vmul.f32 %v3263, %v1475
        %v3277 = vmul.f32 %v3262, %v1476
        %v3278 = vmul.f32 %v3261, %v1477
        %v3279 = vmul.f32 %v3260, %v1478
        %v3280 = vmul.f32 %v3259, %v1479
        %v3281 = vmul.f32 %v3258, %v1480
        %v3282 = vmul.f32 %v3257, %v1481
        %v3283 = vmul.f32 %v3256, %v1482
        %v3284 = vmul.f32 %v3255, %v1483
        %v3285 = vmul.f32 %v3254, %v1484
        %v3286 = vmul.f32 %v3253, %v1485
        %v3287 = vmul.f32 %v3252, %v1486
        %v3288 = vmul.f32 %v3251, %v1487
        %v3289 = vmul.f32 %v3250, %v1488
        %v3290 = vmul.f32 %v3249, %v1489
        %v3291 = vmul.f32 %v3248, %v1490
        %v3292 = vmul.f32 %v3247, %v1491
        %v3293 = vmul.f32 %v3246, %v1492
        %v3294 = vmul.f32 %v3245, %v1493
        %v3295 = vmul.f32 %v3244, %v1494
        %v3296 = vmul.f32 %v3243, %v1495
        %v3297 = vmul.f32 %v3242, %v1496
        %v3298 = vmul.f32 %v3241, %v1497
        %v3299 = vmul.f32 %v3240, %v1498
        %v3300 = vmul.f32 %v3239, %v1499
        %v3301 = vmul.f32 %v3238, %v1500
        %v3302 = vmul.f32 %v3237, %v1501
        %v3303 = vmul.f32 %v3236, %v1502
        %v3304 = vmul.f32 %v3235, %v1503
        %v3305 = vmul.f32 %v3234, %v1504
        %v3306 = vmul.f32 %v3233, %v1505
        %v3307 = vmul.f32 %v3232, %v1506
        %v3308 = vmul.f32 %v3231, %v1507
        %v3309 = vmul.f32 %v3230, %v1508
        %v3310 = vpack.c.bf16 %v3270, %v3270
        %v3311 = vpack.c.bf16 %v3271, %v3271
        %v3312 = vpack.c.bf16 %v3272, %v3272
        %v3313 = vpack.c.bf16 %v3273, %v3273
        %v3314 = vpack.c.bf16 %v3274, %v3274
        %v3315 = vpack.c.bf16 %v3275, %v3275
        %v3316 = vpack.c.bf16 %v3276, %v3276
        %v3317 = vpack.c.bf16 %v3277, %v3277
        %v3318 = vpack.c.bf16 %v3278, %v3278
        %v3319 = vpack.c.bf16 %v3279, %v3279
        %v3320 = vpack.c.bf16 %v3280, %v3280
        %v3321 = vpack.c.bf16 %v3281, %v3281
        %v3322 = vpack.c.bf16 %v3282, %v3282
        %v3323 = vpack.c.bf16 %v3283, %v3283
        %v3324 = vpack.c.bf16 %v3284, %v3284
        %v3325 = vpack.c.bf16 %v3285, %v3285
        %v3326 = vpack.c.bf16 %v3286, %v3286
        %v3327 = vpack.c.bf16 %v3287, %v3287
        %v3328 = vpack.c.bf16 %v3288, %v3288
        %v3329 = vpack.c.bf16 %v3289, %v3289
        %v3330 = vpack.c.bf16 %v3290, %v3290
        %v3331 = vpack.c.bf16 %v3291, %v3291
        %v3332 = vpack.c.bf16 %v3292, %v3292
        %v3333 = vpack.c.bf16 %v3293, %v3293
        %v3334 = vpack.c.bf16 %v3294, %v3294
        %v3335 = vpack.c.bf16 %v3295, %v3295
        %v3336 = vpack.c.bf16 %v3296, %v3296
        %v3337 = vpack.c.bf16 %v3297, %v3297
        %v3338 = vpack.c.bf16 %v3298, %v3298
        %v3339 = vpack.c.bf16 %v3299, %v3299
        %v3340 = vpack.c.bf16 %v3300, %v3300
        %v3341 = vpack.c.bf16 %v3301, %v3301
        %v3342 = vpack.c.bf16 %v3302, %v3302
        %v3343 = vpack.c.bf16 %v3303, %v3303
        %v3344 = vpack.c.bf16 %v3304, %v3304
        %v3345 = vpack.c.bf16 %v3305, %v3305
        %v3346 = vpack.c.bf16 %v3306, %v3306
        %v3347 = vpack.c.bf16 %v3307, %v3307
        %v3348 = vpack.c.bf16 %v3308, %v3308
        %v3349 = vpack.c.bf16 %v3309, %v3309
        %v3350 = vrot.slane %v708, 5
        %v3351 = vrot.slane %v709, 5
        %v3352 = vrot.slane %v710, 5
        %v3353 = vrot.slane %v711, 5
        %v3354 = vrot.slane %v712, 5
        %v3355 = vrot.slane %v713, 5
        %v3356 = vrot.slane %v714, 5
        %v3357 = vrot.slane %v715, 5
        %v3358 = vrot.slane %v716, 5
        %v3359 = vrot.slane %v717, 5
        %v3360 = vrot.slane %v718, 5
        %v3361 = vrot.slane %v719, 5
        %v3362 = vrot.slane %v720, 5
        %v3363 = vrot.slane %v721, 5
        %v3364 = vrot.slane %v722, 5
        %v3365 = vrot.slane %v723, 5
        %v3366 = vrot.slane %v724, 5
        %v3367 = vrot.slane %v725, 5
        %v3368 = vrot.slane %v726, 5
        %v3369 = vrot.slane %v727, 5
        %v3370 = vrot.slane %v728, 5
        %v3371 = vrot.slane %v729, 5
        %v3372 = vrot.slane %v730, 5
        %v3373 = vrot.slane %v731, 5
        %v3374 = vrot.slane %v732, 5
        %v3375 = vrot.slane %v733, 5
        %v3376 = vrot.slane %v734, 5
        %v3377 = vrot.slane %v735, 5
        %v3378 = vrot.slane %v736, 5
        %v3379 = vrot.slane %v737, 5
        %v3380 = vrot.slane %v738, 5
        %v3381 = vrot.slane %v739, 5
        %v3382 = vrot.slane %v740, 5
        %v3383 = vrot.slane %v741, 5
        %v3384 = vrot.slane %v742, 5
        %v3385 = vrot.slane %v743, 5
        %v3386 = vrot.slane %v744, 5
        %v3387 = vrot.slane %v745, 5
        %v3388 = vrot.slane %v746, 5
        %v3389 = vrot.slane %v747, 5
        %vm3390 = vcmp.lt.s32.totalorder %v749, 3
        %v3391 = vsel %vm3390, %v3388, %v3389
        %v3392 = vsel %vm3390, %v3387, %v3388
        %v3393 = vsel %vm3390, %v3386, %v3387
        %v3394 = vsel %vm3390, %v3385, %v3386
        %v3395 = vsel %vm3390, %v3384, %v3385
        %v3396 = vsel %vm3390, %v3383, %v3384
        %v3397 = vsel %vm3390, %v3382, %v3383
        %v3398 = vsel %vm3390, %v3381, %v3382
        %v3399 = vsel %vm3390, %v3380, %v3381
        %v3400 = vsel %vm3390, %v3379, %v3380
        %v3401 = vsel %vm3390, %v3378, %v3379
        %v3402 = vsel %vm3390, %v3377, %v3378
        %v3403 = vsel %vm3390, %v3376, %v3377
        %v3404 = vsel %vm3390, %v3375, %v3376
        %v3405 = vsel %vm3390, %v3374, %v3375
        %v3406 = vsel %vm3390, %v3373, %v3374
        %v3407 = vsel %vm3390, %v3372, %v3373
        %v3408 = vsel %vm3390, %v3371, %v3372
        %v3409 = vsel %vm3390, %v3370, %v3371
        %v3410 = vsel %vm3390, %v3369, %v3370
        %v3411 = vsel %vm3390, %v3368, %v3369
        %v3412 = vsel %vm3390, %v3367, %v3368
        %v3413 = vsel %vm3390, %v3366, %v3367
        %v3414 = vsel %vm3390, %v3365, %v3366
        %v3415 = vsel %vm3390, %v3364, %v3365
        %v3416 = vsel %vm3390, %v3363, %v3364
        %v3417 = vsel %vm3390, %v3362, %v3363
        %v3418 = vsel %vm3390, %v3361, %v3362
        %v3419 = vsel %vm3390, %v3360, %v3361
        %v3420 = vsel %vm3390, %v3359, %v3360
        %v3421 = vsel %vm3390, %v3358, %v3359
        %v3422 = vsel %vm3390, %v3357, %v3358
        %v3423 = vsel %vm3390, %v3356, %v3357
        %v3424 = vsel %vm3390, %v3355, %v3356
        %v3425 = vsel %vm3390, %v3354, %v3355
        %v3426 = vsel %vm3390, %v3353, %v3354
        %v3427 = vsel %vm3390, %v3352, %v3353
        %v3428 = vsel %vm3390, %v3351, %v3352
        %v3429 = vsel %vm3390, %v3350, %v3351
        %v3430 = vsel %vm3390, %v3389, %v3350
        %v3431 = vmul.f32 %v3430, %v1709
        %v3432 = vmul.f32 %v3429, %v1710
        %v3433 = vmul.f32 %v3428, %v1711
        %v3434 = vmul.f32 %v3427, %v1712
        %v3435 = vmul.f32 %v3426, %v1713
        %v3436 = vmul.f32 %v3425, %v1714
        %v3437 = vmul.f32 %v3424, %v1715
        %v3438 = vmul.f32 %v3423, %v1716
        %v3439 = vmul.f32 %v3422, %v1717
        %v3440 = vmul.f32 %v3421, %v1718
        %v3441 = vmul.f32 %v3420, %v1719
        %v3442 = vmul.f32 %v3419, %v1720
        %v3443 = vmul.f32 %v3418, %v1721
        %v3444 = vmul.f32 %v3417, %v1722
        %v3445 = vmul.f32 %v3416, %v1723
        %v3446 = vmul.f32 %v3415, %v1724
        %v3447 = vmul.f32 %v3414, %v1725
        %v3448 = vmul.f32 %v3413, %v1726
        %v3449 = vmul.f32 %v3412, %v1727
        %v3450 = vmul.f32 %v3411, %v1728
        %v3451 = vmul.f32 %v3410, %v1729
        %v3452 = vmul.f32 %v3409, %v1730
        %v3453 = vmul.f32 %v3408, %v1731
        %v3454 = vmul.f32 %v3407, %v1732
        %v3455 = vmul.f32 %v3406, %v1733
        %v3456 = vmul.f32 %v3405, %v1734
        %v3457 = vmul.f32 %v3404, %v1735
        %v3458 = vmul.f32 %v3403, %v1736
        %v3459 = vmul.f32 %v3402, %v1737
        %v3460 = vmul.f32 %v3401, %v1738
        %v3461 = vmul.f32 %v3400, %v1739
        %v3462 = vmul.f32 %v3399, %v1740
        %v3463 = vmul.f32 %v3398, %v1741
        %v3464 = vmul.f32 %v3397, %v1742
        %v3465 = vmul.f32 %v3396, %v1743
        %v3466 = vmul.f32 %v3395, %v1744
        %v3467 = vmul.f32 %v3394, %v1745
        %v3468 = vmul.f32 %v3393, %v1746
        %v3469 = vmul.f32 %v3392, %v1747
        %v3470 = vmul.f32 %v3391, %v1748
        %v3471 = vpack.c.bf16 %v3431, %v3431
        %v3472 = vpack.c.bf16 %v3432, %v3432
        %v3473 = vpack.c.bf16 %v3433, %v3433
        %v3474 = vpack.c.bf16 %v3434, %v3434
        %v3475 = vpack.c.bf16 %v3435, %v3435
        %v3476 = vpack.c.bf16 %v3436, %v3436
        %v3477 = vpack.c.bf16 %v3437, %v3437
        %v3478 = vpack.c.bf16 %v3438, %v3438
        %v3479 = vpack.c.bf16 %v3439, %v3439
        %v3480 = vpack.c.bf16 %v3440, %v3440
        %v3481 = vpack.c.bf16 %v3441, %v3441
        %v3482 = vpack.c.bf16 %v3442, %v3442
        %v3483 = vpack.c.bf16 %v3443, %v3443
        %v3484 = vpack.c.bf16 %v3444, %v3444
        %v3485 = vpack.c.bf16 %v3445, %v3445
        %v3486 = vpack.c.bf16 %v3446, %v3446
        %v3487 = vpack.c.bf16 %v3447, %v3447
        %v3488 = vpack.c.bf16 %v3448, %v3448
        %v3489 = vpack.c.bf16 %v3449, %v3449
        %v3490 = vpack.c.bf16 %v3450, %v3450
        %v3491 = vpack.c.bf16 %v3451, %v3451
        %v3492 = vpack.c.bf16 %v3452, %v3452
        %v3493 = vpack.c.bf16 %v3453, %v3453
        %v3494 = vpack.c.bf16 %v3454, %v3454
        %v3495 = vpack.c.bf16 %v3455, %v3455
        %v3496 = vpack.c.bf16 %v3456, %v3456
        %v3497 = vpack.c.bf16 %v3457, %v3457
        %v3498 = vpack.c.bf16 %v3458, %v3458
        %v3499 = vpack.c.bf16 %v3459, %v3459
        %v3500 = vpack.c.bf16 %v3460, %v3460
        %v3501 = vpack.c.bf16 %v3461, %v3461
        %v3502 = vpack.c.bf16 %v3462, %v3462
        %v3503 = vpack.c.bf16 %v3463, %v3463
        %v3504 = vpack.c.bf16 %v3464, %v3464
        %v3505 = vpack.c.bf16 %v3465, %v3465
        %v3506 = vpack.c.bf16 %v3466, %v3466
        %v3507 = vpack.c.bf16 %v3467, %v3467
        %v3508 = vpack.c.bf16 %v3468, %v3468
        %v3509 = vpack.c.bf16 %v3469, %v3469
        %v3510 = vpack.c.bf16 %v3470, %v3470
        %v3511 = vrot.slane %v708, 6
        %v3512 = vrot.slane %v709, 6
        %v3513 = vrot.slane %v710, 6
        %v3514 = vrot.slane %v711, 6
        %v3515 = vrot.slane %v712, 6
        %v3516 = vrot.slane %v713, 6
        %v3517 = vrot.slane %v714, 6
        %v3518 = vrot.slane %v715, 6
        %v3519 = vrot.slane %v716, 6
        %v3520 = vrot.slane %v717, 6
        %v3521 = vrot.slane %v718, 6
        %v3522 = vrot.slane %v719, 6
        %v3523 = vrot.slane %v720, 6
        %v3524 = vrot.slane %v721, 6
        %v3525 = vrot.slane %v722, 6
        %v3526 = vrot.slane %v723, 6
        %v3527 = vrot.slane %v724, 6
        %v3528 = vrot.slane %v725, 6
        %v3529 = vrot.slane %v726, 6
        %v3530 = vrot.slane %v727, 6
        %v3531 = vrot.slane %v728, 6
        %v3532 = vrot.slane %v729, 6
        %v3533 = vrot.slane %v730, 6
        %v3534 = vrot.slane %v731, 6
        %v3535 = vrot.slane %v732, 6
        %v3536 = vrot.slane %v733, 6
        %v3537 = vrot.slane %v734, 6
        %v3538 = vrot.slane %v735, 6
        %v3539 = vrot.slane %v736, 6
        %v3540 = vrot.slane %v737, 6
        %v3541 = vrot.slane %v738, 6
        %v3542 = vrot.slane %v739, 6
        %v3543 = vrot.slane %v740, 6
        %v3544 = vrot.slane %v741, 6
        %v3545 = vrot.slane %v742, 6
        %v3546 = vrot.slane %v743, 6
        %v3547 = vrot.slane %v744, 6
        %v3548 = vrot.slane %v745, 6
        %v3549 = vrot.slane %v746, 6
        %v3550 = vrot.slane %v747, 6
        %vm3551 = vcmp.lt.s32.totalorder %v749, 2
        %v3552 = vsel %vm3551, %v3549, %v3550
        %v3553 = vsel %vm3551, %v3548, %v3549
        %v3554 = vsel %vm3551, %v3547, %v3548
        %v3555 = vsel %vm3551, %v3546, %v3547
        %v3556 = vsel %vm3551, %v3545, %v3546
        %v3557 = vsel %vm3551, %v3544, %v3545
        %v3558 = vsel %vm3551, %v3543, %v3544
        %v3559 = vsel %vm3551, %v3542, %v3543
        %v3560 = vsel %vm3551, %v3541, %v3542
        %v3561 = vsel %vm3551, %v3540, %v3541
        %v3562 = vsel %vm3551, %v3539, %v3540
        %v3563 = vsel %vm3551, %v3538, %v3539
        %v3564 = vsel %vm3551, %v3537, %v3538
        %v3565 = vsel %vm3551, %v3536, %v3537
        %v3566 = vsel %vm3551, %v3535, %v3536
        %v3567 = vsel %vm3551, %v3534, %v3535
        %v3568 = vsel %vm3551, %v3533, %v3534
        %v3569 = vsel %vm3551, %v3532, %v3533
        %v3570 = vsel %vm3551, %v3531, %v3532
        %v3571 = vsel %vm3551, %v3530, %v3531
        %v3572 = vsel %vm3551, %v3529, %v3530
        %v3573 = vsel %vm3551, %v3528, %v3529
        %v3574 = vsel %vm3551, %v3527, %v3528
        %v3575 = vsel %vm3551, %v3526, %v3527
        %v3576 = vsel %vm3551, %v3525, %v3526
        %v3577 = vsel %vm3551, %v3524, %v3525
        %v3578 = vsel %vm3551, %v3523, %v3524
        %v3579 = vsel %vm3551, %v3522, %v3523
        %v3580 = vsel %vm3551, %v3521, %v3522
        %v3581 = vsel %vm3551, %v3520, %v3521
        %v3582 = vsel %vm3551, %v3519, %v3520
        %v3583 = vsel %vm3551, %v3518, %v3519
        %v3584 = vsel %vm3551, %v3517, %v3518
        %v3585 = vsel %vm3551, %v3516, %v3517
        %v3586 = vsel %vm3551, %v3515, %v3516
        %v3587 = vsel %vm3551, %v3514, %v3515
        %v3588 = vsel %vm3551, %v3513, %v3514
        %v3589 = vsel %vm3551, %v3512, %v3513
        %v3590 = vsel %vm3551, %v3511, %v3512
        %v3591 = vsel %vm3551, %v3550, %v3511
        %v3592 = vmul.f32 %v3591, %v1949
        %v3593 = vmul.f32 %v3590, %v1950
        %v3594 = vmul.f32 %v3589, %v1951
        %v3595 = vmul.f32 %v3588, %v1952
        %v3596 = vmul.f32 %v3587, %v1953
        %v3597 = vmul.f32 %v3586, %v1954
        %v3598 = vmul.f32 %v3585, %v1955
        %v3599 = vmul.f32 %v3584, %v1956
        %v3600 = vmul.f32 %v3583, %v1957
        %v3601 = vmul.f32 %v3582, %v1958
        %v3602 = vmul.f32 %v3581, %v1959
        %v3603 = vmul.f32 %v3580, %v1960
        %v3604 = vmul.f32 %v3579, %v1961
        %v3605 = vmul.f32 %v3578, %v1962
        %v3606 = vmul.f32 %v3577, %v1963
        %v3607 = vmul.f32 %v3576, %v1964
        %v3608 = vmul.f32 %v3575, %v1965
        %v3609 = vmul.f32 %v3574, %v1966
        %v3610 = vmul.f32 %v3573, %v1967
        %v3611 = vmul.f32 %v3572, %v1968
        %v3612 = vmul.f32 %v3571, %v1969
        %v3613 = vmul.f32 %v3570, %v1970
        %v3614 = vmul.f32 %v3569, %v1971
        %v3615 = vmul.f32 %v3568, %v1972
        %v3616 = vmul.f32 %v3567, %v1973
        %v3617 = vmul.f32 %v3566, %v1974
        %v3618 = vmul.f32 %v3565, %v1975
        %v3619 = vmul.f32 %v3564, %v1976
        %v3620 = vmul.f32 %v3563, %v1977
        %v3621 = vmul.f32 %v3562, %v1978
        %v3622 = vmul.f32 %v3561, %v1979
        %v3623 = vmul.f32 %v3560, %v1980
        %v3624 = vmul.f32 %v3559, %v1981
        %v3625 = vmul.f32 %v3558, %v1982
        %v3626 = vmul.f32 %v3557, %v1983
        %v3627 = vmul.f32 %v3556, %v1984
        %v3628 = vmul.f32 %v3555, %v1985
        %v3629 = vmul.f32 %v3554, %v1986
        %v3630 = vmul.f32 %v3553, %v1987
        %v3631 = vmul.f32 %v3552, %v1988
        %v3632 = vpack.c.bf16 %v3592, %v3592
        %v3633 = vpack.c.bf16 %v3593, %v3593
        %v3634 = vpack.c.bf16 %v3594, %v3594
        %v3635 = vpack.c.bf16 %v3595, %v3595
        %v3636 = vpack.c.bf16 %v3596, %v3596
        %v3637 = vpack.c.bf16 %v3597, %v3597
        %v3638 = vpack.c.bf16 %v3598, %v3598
        %v3639 = vpack.c.bf16 %v3599, %v3599
        %v3640 = vpack.c.bf16 %v3600, %v3600
        %v3641 = vpack.c.bf16 %v3601, %v3601
        %v3642 = vpack.c.bf16 %v3602, %v3602
        %v3643 = vpack.c.bf16 %v3603, %v3603
        %v3644 = vpack.c.bf16 %v3604, %v3604
        %v3645 = vpack.c.bf16 %v3605, %v3605
        %v3646 = vpack.c.bf16 %v3606, %v3606
        %v3647 = vpack.c.bf16 %v3607, %v3607
        %v3648 = vpack.c.bf16 %v3608, %v3608
        %v3649 = vpack.c.bf16 %v3609, %v3609
        %v3650 = vpack.c.bf16 %v3610, %v3610
        %v3651 = vpack.c.bf16 %v3611, %v3611
        %v3652 = vpack.c.bf16 %v3612, %v3612
        %v3653 = vpack.c.bf16 %v3613, %v3613
        %v3654 = vpack.c.bf16 %v3614, %v3614
        %v3655 = vpack.c.bf16 %v3615, %v3615
        %v3656 = vpack.c.bf16 %v3616, %v3616
        %v3657 = vpack.c.bf16 %v3617, %v3617
        %v3658 = vpack.c.bf16 %v3618, %v3618
        %v3659 = vpack.c.bf16 %v3619, %v3619
        %v3660 = vpack.c.bf16 %v3620, %v3620
        %v3661 = vpack.c.bf16 %v3621, %v3621
        %v3662 = vpack.c.bf16 %v3622, %v3622
        %v3663 = vpack.c.bf16 %v3623, %v3623
        %v3664 = vpack.c.bf16 %v3624, %v3624
        %v3665 = vpack.c.bf16 %v3625, %v3625
        %v3666 = vpack.c.bf16 %v3626, %v3626
        %v3667 = vpack.c.bf16 %v3627, %v3627
        %v3668 = vpack.c.bf16 %v3628, %v3628
        %v3669 = vpack.c.bf16 %v3629, %v3629
        %v3670 = vpack.c.bf16 %v3630, %v3630
        %v3671 = vpack.c.bf16 %v3631, %v3631
        %v3672 = vrot.slane %v708, 7
        %v3673 = vrot.slane %v709, 7
        %v3674 = vrot.slane %v710, 7
        %v3675 = vrot.slane %v711, 7
        %v3676 = vrot.slane %v712, 7
        %v3677 = vrot.slane %v713, 7
        %v3678 = vrot.slane %v714, 7
        %v3679 = vrot.slane %v715, 7
        %v3680 = vrot.slane %v716, 7
        %v3681 = vrot.slane %v717, 7
        %v3682 = vrot.slane %v718, 7
        %v3683 = vrot.slane %v719, 7
        %v3684 = vrot.slane %v720, 7
        %v3685 = vrot.slane %v721, 7
        %v3686 = vrot.slane %v722, 7
        %v3687 = vrot.slane %v723, 7
        %v3688 = vrot.slane %v724, 7
        %v3689 = vrot.slane %v725, 7
        %v3690 = vrot.slane %v726, 7
        %v3691 = vrot.slane %v727, 7
        %v3692 = vrot.slane %v728, 7
        %v3693 = vrot.slane %v729, 7
        %v3694 = vrot.slane %v730, 7
        %v3695 = vrot.slane %v731, 7
        %v3696 = vrot.slane %v732, 7
        %v3697 = vrot.slane %v733, 7
        %v3698 = vrot.slane %v734, 7
        %v3699 = vrot.slane %v735, 7
        %v3700 = vrot.slane %v736, 7
        %v3701 = vrot.slane %v737, 7
        %v3702 = vrot.slane %v738, 7
        %v3703 = vrot.slane %v739, 7
        %v3704 = vrot.slane %v740, 7
        %v3705 = vrot.slane %v741, 7
        %v3706 = vrot.slane %v742, 7
        %v3707 = vrot.slane %v743, 7
        %v3708 = vrot.slane %v744, 7
        %v3709 = vrot.slane %v745, 7
        %v3710 = vrot.slane %v746, 7
        %v3711 = vrot.slane %v747, 7
        %vm3712 = vcmp.lt.s32.totalorder %v749, 1
        %v3713 = vsel %vm3712, %v3710, %v3711
        %v3714 = vsel %vm3712, %v3709, %v3710
        %v3715 = vsel %vm3712, %v3708, %v3709
        %v3716 = vsel %vm3712, %v3707, %v3708
        %v3717 = vsel %vm3712, %v3706, %v3707
        %v3718 = vsel %vm3712, %v3705, %v3706
        %v3719 = vsel %vm3712, %v3704, %v3705
        %v3720 = vsel %vm3712, %v3703, %v3704
        %v3721 = vsel %vm3712, %v3702, %v3703
        %v3722 = vsel %vm3712, %v3701, %v3702
        %v3723 = vsel %vm3712, %v3700, %v3701
        %v3724 = vsel %vm3712, %v3699, %v3700
        %v3725 = vsel %vm3712, %v3698, %v3699
        %v3726 = vsel %vm3712, %v3697, %v3698
        %v3727 = vsel %vm3712, %v3696, %v3697
        %v3728 = vsel %vm3712, %v3695, %v3696
        %v3729 = vsel %vm3712, %v3694, %v3695
        %v3730 = vsel %vm3712, %v3693, %v3694
        %v3731 = vsel %vm3712, %v3692, %v3693
        %v3732 = vsel %vm3712, %v3691, %v3692
        %v3733 = vsel %vm3712, %v3690, %v3691
        %v3734 = vsel %vm3712, %v3689, %v3690
        %v3735 = vsel %vm3712, %v3688, %v3689
        %v3736 = vsel %vm3712, %v3687, %v3688
        %v3737 = vsel %vm3712, %v3686, %v3687
        %v3738 = vsel %vm3712, %v3685, %v3686
        %v3739 = vsel %vm3712, %v3684, %v3685
        %v3740 = vsel %vm3712, %v3683, %v3684
        %v3741 = vsel %vm3712, %v3682, %v3683
        %v3742 = vsel %vm3712, %v3681, %v3682
        %v3743 = vsel %vm3712, %v3680, %v3681
        %v3744 = vsel %vm3712, %v3679, %v3680
        %v3745 = vsel %vm3712, %v3678, %v3679
        %v3746 = vsel %vm3712, %v3677, %v3678
        %v3747 = vsel %vm3712, %v3676, %v3677
        %v3748 = vsel %vm3712, %v3675, %v3676
        %v3749 = vsel %vm3712, %v3674, %v3675
        %v3750 = vsel %vm3712, %v3673, %v3674
        %v3751 = vsel %vm3712, %v3672, %v3673
        %v3752 = vsel %vm3712, %v3711, %v3672
        %v3753 = vmul.f32 %v3752, %v2189
        %v3754 = vmul.f32 %v3751, %v2190
        %v3755 = vmul.f32 %v3750, %v2191
        %v3756 = vmul.f32 %v3749, %v2192
        %v3757 = vmul.f32 %v3748, %v2193
        %v3758 = vmul.f32 %v3747, %v2194
        %v3759 = vmul.f32 %v3746, %v2195
        %v3760 = vmul.f32 %v3745, %v2196
        %v3761 = vmul.f32 %v3744, %v2197
        %v3762 = vmul.f32 %v3743, %v2198
        %v3763 = vmul.f32 %v3742, %v2199
        %v3764 = vmul.f32 %v3741, %v2200
        %v3765 = vmul.f32 %v3740, %v2201
        %v3766 = vmul.f32 %v3739, %v2202
        %v3767 = vmul.f32 %v3738, %v2203
        %v3768 = vmul.f32 %v3737, %v2204
        %v3769 = vmul.f32 %v3736, %v2205
        %v3770 = vmul.f32 %v3735, %v2206
        %v3771 = vmul.f32 %v3734, %v2207
        %v3772 = vmul.f32 %v3733, %v2208
        %v3773 = vmul.f32 %v3732, %v2209
        %v3774 = vmul.f32 %v3731, %v2210
        %v3775 = vmul.f32 %v3730, %v2211
        %v3776 = vmul.f32 %v3729, %v2212
        %v3777 = vmul.f32 %v3728, %v2213
        %v3778 = vmul.f32 %v3727, %v2214
        %v3779 = vmul.f32 %v3726, %v2215
        %v3780 = vmul.f32 %v3725, %v2216
        %v3781 = vmul.f32 %v3724, %v2217
        %v3782 = vmul.f32 %v3723, %v2218
        %v3783 = vmul.f32 %v3722, %v2219
        %v3784 = vmul.f32 %v3721, %v2220
        %v3785 = vmul.f32 %v3720, %v2221
        %v3786 = vmul.f32 %v3719, %v2222
        %v3787 = vmul.f32 %v3718, %v2223
        %v3788 = vmul.f32 %v3717, %v2224
        %v3789 = vmul.f32 %v3716, %v2225
        %v3790 = vmul.f32 %v3715, %v2226
        %v3791 = vmul.f32 %v3714, %v2227
        %v3792 = vmul.f32 %v3713, %v2228
        %v3793 = vpack.c.bf16 %v3753, %v3753
        %v3794 = vpack.c.bf16 %v3754, %v3754
        %v3795 = vpack.c.bf16 %v3755, %v3755
        %v3796 = vpack.c.bf16 %v3756, %v3756
        %v3797 = vpack.c.bf16 %v3757, %v3757
        %v3798 = vpack.c.bf16 %v3758, %v3758
        %v3799 = vpack.c.bf16 %v3759, %v3759
        %v3800 = vpack.c.bf16 %v3760, %v3760
        %v3801 = vpack.c.bf16 %v3761, %v3761
        %v3802 = vpack.c.bf16 %v3762, %v3762
        %v3803 = vpack.c.bf16 %v3763, %v3763
        %v3804 = vpack.c.bf16 %v3764, %v3764
        %v3805 = vpack.c.bf16 %v3765, %v3765
        %v3806 = vpack.c.bf16 %v3766, %v3766
        %v3807 = vpack.c.bf16 %v3767, %v3767
        %v3808 = vpack.c.bf16 %v3768, %v3768
        %v3809 = vpack.c.bf16 %v3769, %v3769
        %v3810 = vpack.c.bf16 %v3770, %v3770
        %v3811 = vpack.c.bf16 %v3771, %v3771
        %v3812 = vpack.c.bf16 %v3772, %v3772
        %v3813 = vpack.c.bf16 %v3773, %v3773
        %v3814 = vpack.c.bf16 %v3774, %v3774
        %v3815 = vpack.c.bf16 %v3775, %v3775
        %v3816 = vpack.c.bf16 %v3776, %v3776
        %v3817 = vpack.c.bf16 %v3777, %v3777
        %v3818 = vpack.c.bf16 %v3778, %v3778
        %v3819 = vpack.c.bf16 %v3779, %v3779
        %v3820 = vpack.c.bf16 %v3780, %v3780
        %v3821 = vpack.c.bf16 %v3781, %v3781
        %v3822 = vpack.c.bf16 %v3782, %v3782
        %v3823 = vpack.c.bf16 %v3783, %v3783
        %v3824 = vpack.c.bf16 %v3784, %v3784
        %v3825 = vpack.c.bf16 %v3785, %v3785
        %v3826 = vpack.c.bf16 %v3786, %v3786
        %v3827 = vpack.c.bf16 %v3787, %v3787
        %v3828 = vpack.c.bf16 %v3788, %v3788
        %v3829 = vpack.c.bf16 %v3789, %v3789
        %v3830 = vpack.c.bf16 %v3790, %v3790
        %v3831 = vpack.c.bf16 %v3791, %v3791
        %v3832 = vpack.c.bf16 %v3792, %v3792
        %v3833 = vpack.c.bf16 %v708, %v708
        %v3834 = vpack.c.bf16 %v709, %v709
        %v3835 = vpack.c.bf16 %v710, %v710
        %v3836 = vpack.c.bf16 %v711, %v711
        %v3837 = vpack.c.bf16 %v712, %v712
        %v3838 = vpack.c.bf16 %v713, %v713
        %v3839 = vpack.c.bf16 %v714, %v714
        %v3840 = vpack.c.bf16 %v715, %v715
        %v3841 = vpack.c.bf16 %v716, %v716
        %v3842 = vpack.c.bf16 %v717, %v717
        %v3843 = vpack.c.bf16 %v718, %v718
        %v3844 = vpack.c.bf16 %v719, %v719
        %v3845 = vpack.c.bf16 %v720, %v720
        %v3846 = vpack.c.bf16 %v721, %v721
        %v3847 = vpack.c.bf16 %v722, %v722
        %v3848 = vpack.c.bf16 %v723, %v723
        %v3849 = vpack.c.bf16 %v724, %v724
        %v3850 = vpack.c.bf16 %v725, %v725
        %v3851 = vpack.c.bf16 %v726, %v726
        %v3852 = vpack.c.bf16 %v727, %v727
        %v3853 = vpack.c.bf16 %v728, %v728
        %v3854 = vpack.c.bf16 %v729, %v729
        %v3855 = vpack.c.bf16 %v730, %v730
        %v3856 = vpack.c.bf16 %v731, %v731
        %v3857 = vpack.c.bf16 %v732, %v732
        %v3858 = vpack.c.bf16 %v733, %v733
        %v3859 = vpack.c.bf16 %v734, %v734
        %v3860 = vpack.c.bf16 %v735, %v735
        %v3861 = vpack.c.bf16 %v736, %v736
        %v3862 = vpack.c.bf16 %v737, %v737
        %v3863 = vpack.c.bf16 %v738, %v738
        %v3864 = vpack.c.bf16 %v739, %v739
        %v3865 = vpack.c.bf16 %v740, %v740
        %v3866 = vpack.c.bf16 %v741, %v741
        %v3867 = vpack.c.bf16 %v742, %v742
        %v3868 = vpack.c.bf16 %v743, %v743
        %v3869 = vpack.c.bf16 %v744, %v744
        %v3870 = vpack.c.bf16 %v745, %v745
        %v3871 = vpack.c.bf16 %v746, %v746
        %v3872 = vpack.c.bf16 %v747, %v747
        %v3873 = vrot.slane %v708, 1
        %v3874 = vrot.slane %v709, 1
        %v3875 = vrot.slane %v710, 1
        %v3876 = vrot.slane %v711, 1
        %v3877 = vrot.slane %v712, 1
        %v3878 = vrot.slane %v713, 1
        %v3879 = vrot.slane %v714, 1
        %v3880 = vrot.slane %v715, 1
        %v3881 = vrot.slane %v716, 1
        %v3882 = vrot.slane %v717, 1
        %v3883 = vrot.slane %v718, 1
        %v3884 = vrot.slane %v719, 1
        %v3885 = vrot.slane %v720, 1
        %v3886 = vrot.slane %v721, 1
        %v3887 = vrot.slane %v722, 1
        %v3888 = vrot.slane %v723, 1
        %v3889 = vrot.slane %v724, 1
        %v3890 = vrot.slane %v725, 1
        %v3891 = vrot.slane %v726, 1
        %v3892 = vrot.slane %v727, 1
        %v3893 = vrot.slane %v728, 1
        %v3894 = vrot.slane %v729, 1
        %v3895 = vrot.slane %v730, 1
        %v3896 = vrot.slane %v731, 1
        %v3897 = vrot.slane %v732, 1
        %v3898 = vrot.slane %v733, 1
        %v3899 = vrot.slane %v734, 1
        %v3900 = vrot.slane %v735, 1
        %v3901 = vrot.slane %v736, 1
        %v3902 = vrot.slane %v737, 1
        %v3903 = vrot.slane %v738, 1
        %v3904 = vrot.slane %v739, 1
        %v3905 = vrot.slane %v740, 1
        %v3906 = vrot.slane %v741, 1
        %v3907 = vrot.slane %v742, 1
        %v3908 = vrot.slane %v743, 1
        %v3909 = vrot.slane %v744, 1
        %v3910 = vrot.slane %v745, 1
        %v3911 = vrot.slane %v746, 1
        %v3912 = vrot.slane %v747, 1
        %vm3913 = vcmp.lt.s32.totalorder %v749, 7
        %v3914 = vsel %vm3913, %v3911, %v3912
        %v3915 = vsel %vm3913, %v3910, %v3911
        %v3916 = vsel %vm3913, %v3909, %v3910
        %v3917 = vsel %vm3913, %v3908, %v3909
        %v3918 = vsel %vm3913, %v3907, %v3908
        %v3919 = vsel %vm3913, %v3906, %v3907
        %v3920 = vsel %vm3913, %v3905, %v3906
        %v3921 = vsel %vm3913, %v3904, %v3905
        %v3922 = vsel %vm3913, %v3903, %v3904
        %v3923 = vsel %vm3913, %v3902, %v3903
        %v3924 = vsel %vm3913, %v3901, %v3902
        %v3925 = vsel %vm3913, %v3900, %v3901
        %v3926 = vsel %vm3913, %v3899, %v3900
        %v3927 = vsel %vm3913, %v3898, %v3899
        %v3928 = vsel %vm3913, %v3897, %v3898
        %v3929 = vsel %vm3913, %v3896, %v3897
        %v3930 = vsel %vm3913, %v3895, %v3896
        %v3931 = vsel %vm3913, %v3894, %v3895
        %v3932 = vsel %vm3913, %v3893, %v3894
        %v3933 = vsel %vm3913, %v3892, %v3893
        %v3934 = vsel %vm3913, %v3891, %v3892
        %v3935 = vsel %vm3913, %v3890, %v3891
        %v3936 = vsel %vm3913, %v3889, %v3890
        %v3937 = vsel %vm3913, %v3888, %v3889
        %v3938 = vsel %vm3913, %v3887, %v3888
        %v3939 = vsel %vm3913, %v3886, %v3887
        %v3940 = vsel %vm3913, %v3885, %v3886
        %v3941 = vsel %vm3913, %v3884, %v3885
        %v3942 = vsel %vm3913, %v3883, %v3884
        %v3943 = vsel %vm3913, %v3882, %v3883
        %v3944 = vsel %vm3913, %v3881, %v3882
        %v3945 = vsel %vm3913, %v3880, %v3881
        %v3946 = vsel %vm3913, %v3879, %v3880
        %v3947 = vsel %vm3913, %v3878, %v3879
        %v3948 = vsel %vm3913, %v3877, %v3878
        %v3949 = vsel %vm3913, %v3876, %v3877
        %v3950 = vsel %vm3913, %v3875, %v3876
        %v3951 = vsel %vm3913, %v3874, %v3875
        %v3952 = vsel %vm3913, %v3873, %v3874
        %v3953 = vsel %vm3913, %v3912, %v3873
        %v3954 = vmul.f32 %v3952, %v2429
        %v3955 = vmul.f32 %v3951, %v2430
        %v3956 = vmul.f32 %v3950, %v2431
        %v3957 = vmul.f32 %v3949, %v2432
        %v3958 = vmul.f32 %v3948, %v2433
        %v3959 = vmul.f32 %v3947, %v2434
        %v3960 = vmul.f32 %v3946, %v2435
        %v3961 = vmul.f32 %v3945, %v2436
        %v3962 = vmul.f32 %v3944, %v2437
        %v3963 = vmul.f32 %v3943, %v2438
        %v3964 = vmul.f32 %v3942, %v2439
        %v3965 = vmul.f32 %v3941, %v2440
        %v3966 = vmul.f32 %v3940, %v2441
        %v3967 = vmul.f32 %v3939, %v2442
        %v3968 = vmul.f32 %v3938, %v2443
        %v3969 = vmul.f32 %v3937, %v2444
        %v3970 = vmul.f32 %v3936, %v2445
        %v3971 = vmul.f32 %v3935, %v2446
        %v3972 = vmul.f32 %v3934, %v2447
        %v3973 = vmul.f32 %v3933, %v2448
        %v3974 = vmul.f32 %v3932, %v2449
        %v3975 = vmul.f32 %v3931, %v2450
        %v3976 = vmul.f32 %v3930, %v2451
        %v3977 = vmul.f32 %v3929, %v2452
        %v3978 = vmul.f32 %v3928, %v2453
        %v3979 = vmul.f32 %v3927, %v2454
        %v3980 = vmul.f32 %v3926, %v2455
        %v3981 = vmul.f32 %v3925, %v2456
        %v3982 = vmul.f32 %v3924, %v2457
        %v3983 = vmul.f32 %v3923, %v2458
        %v3984 = vmul.f32 %v3922, %v2459
        %v3985 = vmul.f32 %v3921, %v2460
        %v3986 = vmul.f32 %v3920, %v2461
        %v3987 = vmul.f32 %v3919, %v2462
        %v3988 = vmul.f32 %v3918, %v2463
        %v3989 = vmul.f32 %v3917, %v2464
        %v3990 = vmul.f32 %v3916, %v2465
        %v3991 = vmul.f32 %v3915, %v2466
        %v3992 = vmul.f32 %v3914, %v2467
        %v3993 = vmul.f32 %v3953, %v2468
        %v3994 = vpack.c.bf16 %v3954, %v3954
        %v3995 = vpack.c.bf16 %v3955, %v3955
        %v3996 = vpack.c.bf16 %v3956, %v3956
        %v3997 = vpack.c.bf16 %v3957, %v3957
        %v3998 = vpack.c.bf16 %v3958, %v3958
        %v3999 = vpack.c.bf16 %v3959, %v3959
        %v4000 = vpack.c.bf16 %v3960, %v3960
        %v4001 = vpack.c.bf16 %v3961, %v3961
        %v4002 = vpack.c.bf16 %v3962, %v3962
        %v4003 = vpack.c.bf16 %v3963, %v3963
        %v4004 = vpack.c.bf16 %v3964, %v3964
        %v4005 = vpack.c.bf16 %v3965, %v3965
        %v4006 = vpack.c.bf16 %v3966, %v3966
        %v4007 = vpack.c.bf16 %v3967, %v3967
        %v4008 = vpack.c.bf16 %v3968, %v3968
        %v4009 = vpack.c.bf16 %v3969, %v3969
        %v4010 = vpack.c.bf16 %v3970, %v3970
        %v4011 = vpack.c.bf16 %v3971, %v3971
        %v4012 = vpack.c.bf16 %v3972, %v3972
        %v4013 = vpack.c.bf16 %v3973, %v3973
        %v4014 = vpack.c.bf16 %v3974, %v3974
        %v4015 = vpack.c.bf16 %v3975, %v3975
        %v4016 = vpack.c.bf16 %v3976, %v3976
        %v4017 = vpack.c.bf16 %v3977, %v3977
        %v4018 = vpack.c.bf16 %v3978, %v3978
        %v4019 = vpack.c.bf16 %v3979, %v3979
        %v4020 = vpack.c.bf16 %v3980, %v3980
        %v4021 = vpack.c.bf16 %v3981, %v3981
        %v4022 = vpack.c.bf16 %v3982, %v3982
        %v4023 = vpack.c.bf16 %v3983, %v3983
        %v4024 = vpack.c.bf16 %v3984, %v3984
        %v4025 = vpack.c.bf16 %v3985, %v3985
        %v4026 = vpack.c.bf16 %v3986, %v3986
        %v4027 = vpack.c.bf16 %v3987, %v3987
        %v4028 = vpack.c.bf16 %v3988, %v3988
        %v4029 = vpack.c.bf16 %v3989, %v3989
        %v4030 = vpack.c.bf16 %v3990, %v3990
        %v4031 = vpack.c.bf16 %v3991, %v3991
        %v4032 = vpack.c.bf16 %v3992, %v3992
        %v4033 = vpack.c.bf16 %v3993, %v3993
        %v4034 = vrot.slane %v708, 2
        %v4035 = vrot.slane %v709, 2
        %v4036 = vrot.slane %v710, 2
        %v4037 = vrot.slane %v711, 2
        %v4038 = vrot.slane %v712, 2
        %v4039 = vrot.slane %v713, 2
        %v4040 = vrot.slane %v714, 2
        %v4041 = vrot.slane %v715, 2
        %v4042 = vrot.slane %v716, 2
        %v4043 = vrot.slane %v717, 2
        %v4044 = vrot.slane %v718, 2
        %v4045 = vrot.slane %v719, 2
        %v4046 = vrot.slane %v720, 2
        %v4047 = vrot.slane %v721, 2
        %v4048 = vrot.slane %v722, 2
        %v4049 = vrot.slane %v723, 2
        %v4050 = vrot.slane %v724, 2
        %v4051 = vrot.slane %v725, 2
        %v4052 = vrot.slane %v726, 2
        %v4053 = vrot.slane %v727, 2
        %v4054 = vrot.slane %v728, 2
        %v4055 = vrot.slane %v729, 2
        %v4056 = vrot.slane %v730, 2
        %v4057 = vrot.slane %v731, 2
        %v4058 = vrot.slane %v732, 2
        %v4059 = vrot.slane %v733, 2
        %v4060 = vrot.slane %v734, 2
        %v4061 = vrot.slane %v735, 2
        %v4062 = vrot.slane %v736, 2
        %v4063 = vrot.slane %v737, 2
        %v4064 = vrot.slane %v738, 2
        %v4065 = vrot.slane %v739, 2
        %v4066 = vrot.slane %v740, 2
        %v4067 = vrot.slane %v741, 2
        %v4068 = vrot.slane %v742, 2
        %v4069 = vrot.slane %v743, 2
        %v4070 = vrot.slane %v744, 2
        %v4071 = vrot.slane %v745, 2
        %v4072 = vrot.slane %v746, 2
        %v4073 = vrot.slane %v747, 2
        %vm4074 = vcmp.lt.s32.totalorder %v749, 6
        %v4075 = vsel %vm4074, %v4072, %v4073
        %v4076 = vsel %vm4074, %v4071, %v4072
        %v4077 = vsel %vm4074, %v4070, %v4071
        %v4078 = vsel %vm4074, %v4069, %v4070
        %v4079 = vsel %vm4074, %v4068, %v4069
        %v4080 = vsel %vm4074, %v4067, %v4068
        %v4081 = vsel %vm4074, %v4066, %v4067
        %v4082 = vsel %vm4074, %v4065, %v4066
        %v4083 = vsel %vm4074, %v4064, %v4065
        %v4084 = vsel %vm4074, %v4063, %v4064
        %v4085 = vsel %vm4074, %v4062, %v4063
        %v4086 = vsel %vm4074, %v4061, %v4062
        %v4087 = vsel %vm4074, %v4060, %v4061
        %v4088 = vsel %vm4074, %v4059, %v4060
        %v4089 = vsel %vm4074, %v4058, %v4059
        %v4090 = vsel %vm4074, %v4057, %v4058
        %v4091 = vsel %vm4074, %v4056, %v4057
        %v4092 = vsel %vm4074, %v4055, %v4056
        %v4093 = vsel %vm4074, %v4054, %v4055
        %v4094 = vsel %vm4074, %v4053, %v4054
        %v4095 = vsel %vm4074, %v4052, %v4053
        %v4096 = vsel %vm4074, %v4051, %v4052
        %v4097 = vsel %vm4074, %v4050, %v4051
        %v4098 = vsel %vm4074, %v4049, %v4050
        %v4099 = vsel %vm4074, %v4048, %v4049
        %v4100 = vsel %vm4074, %v4047, %v4048
        %v4101 = vsel %vm4074, %v4046, %v4047
        %v4102 = vsel %vm4074, %v4045, %v4046
        %v4103 = vsel %vm4074, %v4044, %v4045
        %v4104 = vsel %vm4074, %v4043, %v4044
        %v4105 = vsel %vm4074, %v4042, %v4043
        %v4106 = vsel %vm4074, %v4041, %v4042
        %v4107 = vsel %vm4074, %v4040, %v4041
        %v4108 = vsel %vm4074, %v4039, %v4040
        %v4109 = vsel %vm4074, %v4038, %v4039
        %v4110 = vsel %vm4074, %v4037, %v4038
        %v4111 = vsel %vm4074, %v4036, %v4037
        %v4112 = vsel %vm4074, %v4035, %v4036
        %v4113 = vsel %vm4074, %v4034, %v4035
        %v4114 = vsel %vm4074, %v4073, %v4034
        %v4115 = vmul.f32 %v4113, %v2669
        %v4116 = vmul.f32 %v4112, %v2670
        %v4117 = vmul.f32 %v4111, %v2671
        %v4118 = vmul.f32 %v4110, %v2672
        %v4119 = vmul.f32 %v4109, %v2673
        %v4120 = vmul.f32 %v4108, %v2674
        %v4121 = vmul.f32 %v4107, %v2675
        %v4122 = vmul.f32 %v4106, %v2676
        %v4123 = vmul.f32 %v4105, %v2677
        %v4124 = vmul.f32 %v4104, %v2678
        %v4125 = vmul.f32 %v4103, %v2679
        %v4126 = vmul.f32 %v4102, %v2680
        %v4127 = vmul.f32 %v4101, %v2681
        %v4128 = vmul.f32 %v4100, %v2682
        %v4129 = vmul.f32 %v4099, %v2683
        %v4130 = vmul.f32 %v4098, %v2684
        %v4131 = vmul.f32 %v4097, %v2685
        %v4132 = vmul.f32 %v4096, %v2686
        %v4133 = vmul.f32 %v4095, %v2687
        %v4134 = vmul.f32 %v4094, %v2688
        %v4135 = vmul.f32 %v4093, %v2689
        %v4136 = vmul.f32 %v4092, %v2690
        %v4137 = vmul.f32 %v4091, %v2691
        %v4138 = vmul.f32 %v4090, %v2692
        %v4139 = vmul.f32 %v4089, %v2693
        %v4140 = vmul.f32 %v4088, %v2694
        %v4141 = vmul.f32 %v4087, %v2695
        %v4142 = vmul.f32 %v4086, %v2696
        %v4143 = vmul.f32 %v4085, %v2697
        %v4144 = vmul.f32 %v4084, %v2698
        %v4145 = vmul.f32 %v4083, %v2699
        %v4146 = vmul.f32 %v4082, %v2700
        %v4147 = vmul.f32 %v4081, %v2701
        %v4148 = vmul.f32 %v4080, %v2702
        %v4149 = vmul.f32 %v4079, %v2703
        %v4150 = vmul.f32 %v4078, %v2704
        %v4151 = vmul.f32 %v4077, %v2705
        %v4152 = vmul.f32 %v4076, %v2706
        %v4153 = vmul.f32 %v4075, %v2707
        %v4154 = vmul.f32 %v4114, %v2708
        %v4155 = vpack.c.bf16 %v4115, %v4115
        %v4156 = vpack.c.bf16 %v4116, %v4116
        %v4157 = vpack.c.bf16 %v4117, %v4117
        %v4158 = vpack.c.bf16 %v4118, %v4118
        %v4159 = vpack.c.bf16 %v4119, %v4119
        %v4160 = vpack.c.bf16 %v4120, %v4120
        %v4161 = vpack.c.bf16 %v4121, %v4121
        %v4162 = vpack.c.bf16 %v4122, %v4122
        %v4163 = vpack.c.bf16 %v4123, %v4123
        %v4164 = vpack.c.bf16 %v4124, %v4124
        %v4165 = vpack.c.bf16 %v4125, %v4125
        %v4166 = vpack.c.bf16 %v4126, %v4126
        %v4167 = vpack.c.bf16 %v4127, %v4127
        %v4168 = vpack.c.bf16 %v4128, %v4128
        %v4169 = vpack.c.bf16 %v4129, %v4129
        %v4170 = vpack.c.bf16 %v4130, %v4130
        %v4171 = vpack.c.bf16 %v4131, %v4131
        %v4172 = vpack.c.bf16 %v4132, %v4132
        %v4173 = vpack.c.bf16 %v4133, %v4133
        %v4174 = vpack.c.bf16 %v4134, %v4134
        %v4175 = vpack.c.bf16 %v4135, %v4135
        %v4176 = vpack.c.bf16 %v4136, %v4136
        %v4177 = vpack.c.bf16 %v4137, %v4137
        %v4178 = vpack.c.bf16 %v4138, %v4138
        %v4179 = vpack.c.bf16 %v4139, %v4139
        %v4180 = vpack.c.bf16 %v4140, %v4140
        %v4181 = vpack.c.bf16 %v4141, %v4141
        %v4182 = vpack.c.bf16 %v4142, %v4142
        %v4183 = vpack.c.bf16 %v4143, %v4143
        %v4184 = vpack.c.bf16 %v4144, %v4144
        %v4185 = vpack.c.bf16 %v4145, %v4145
        %v4186 = vpack.c.bf16 %v4146, %v4146
        %v4187 = vpack.c.bf16 %v4147, %v4147
        %v4188 = vpack.c.bf16 %v4148, %v4148
        %v4189 = vpack.c.bf16 %v4149, %v4149
        %v4190 = vpack.c.bf16 %v4150, %v4150
        %v4191 = vpack.c.bf16 %v4151, %v4151
        %v4192 = vpack.c.bf16 %v4152, %v4152
        %v4193 = vpack.c.bf16 %v4153, %v4153
        %v4194 = vpack.c.bf16 %v4154, %v4154
        %v4195 = vrot.slane %v708, 3
        %v4196 = vrot.slane %v709, 3
        %v4197 = vrot.slane %v710, 3
        %v4198 = vrot.slane %v711, 3
        %v4199 = vrot.slane %v712, 3
        %v4200 = vrot.slane %v713, 3
        %v4201 = vrot.slane %v714, 3
        %v4202 = vrot.slane %v715, 3
        %v4203 = vrot.slane %v716, 3
        %v4204 = vrot.slane %v717, 3
        %v4205 = vrot.slane %v718, 3
        %v4206 = vrot.slane %v719, 3
        %v4207 = vrot.slane %v720, 3
        %v4208 = vrot.slane %v721, 3
        %v4209 = vrot.slane %v722, 3
        %v4210 = vrot.slane %v723, 3
        %v4211 = vrot.slane %v724, 3
        %v4212 = vrot.slane %v725, 3
        %v4213 = vrot.slane %v726, 3
        %v4214 = vrot.slane %v727, 3
        %v4215 = vrot.slane %v728, 3
        %v4216 = vrot.slane %v729, 3
        %v4217 = vrot.slane %v730, 3
        %v4218 = vrot.slane %v731, 3
        %v4219 = vrot.slane %v732, 3
        %v4220 = vrot.slane %v733, 3
        %v4221 = vrot.slane %v734, 3
        %v4222 = vrot.slane %v735, 3
        %v4223 = vrot.slane %v736, 3
        %v4224 = vrot.slane %v737, 3
        %v4225 = vrot.slane %v738, 3
        %v4226 = vrot.slane %v739, 3
        %v4227 = vrot.slane %v740, 3
        %v4228 = vrot.slane %v741, 3
        %v4229 = vrot.slane %v742, 3
        %v4230 = vrot.slane %v743, 3
        %v4231 = vrot.slane %v744, 3
        %v4232 = vrot.slane %v745, 3
        %v4233 = vrot.slane %v746, 3
        %v4234 = vrot.slane %v747, 3
        %vm4235 = vcmp.lt.s32.totalorder %v749, 5
        %v4236 = vsel %vm4235, %v4233, %v4234
        %v4237 = vsel %vm4235, %v4232, %v4233
        %v4238 = vsel %vm4235, %v4231, %v4232
        %v4239 = vsel %vm4235, %v4230, %v4231
        %v4240 = vsel %vm4235, %v4229, %v4230
        %v4241 = vsel %vm4235, %v4228, %v4229
        %v4242 = vsel %vm4235, %v4227, %v4228
        %v4243 = vsel %vm4235, %v4226, %v4227
        %v4244 = vsel %vm4235, %v4225, %v4226
        %v4245 = vsel %vm4235, %v4224, %v4225
        %v4246 = vsel %vm4235, %v4223, %v4224
        %v4247 = vsel %vm4235, %v4222, %v4223
        %v4248 = vsel %vm4235, %v4221, %v4222
        %v4249 = vsel %vm4235, %v4220, %v4221
        %v4250 = vsel %vm4235, %v4219, %v4220
        %v4251 = vsel %vm4235, %v4218, %v4219
        %v4252 = vsel %vm4235, %v4217, %v4218
        %v4253 = vsel %vm4235, %v4216, %v4217
        %v4254 = vsel %vm4235, %v4215, %v4216
        %v4255 = vsel %vm4235, %v4214, %v4215
        %v4256 = vsel %vm4235, %v4213, %v4214
        %v4257 = vsel %vm4235, %v4212, %v4213
        %v4258 = vsel %vm4235, %v4211, %v4212
        %v4259 = vsel %vm4235, %v4210, %v4211
        %v4260 = vsel %vm4235, %v4209, %v4210
        %v4261 = vsel %vm4235, %v4208, %v4209
        %v4262 = vsel %vm4235, %v4207, %v4208
        %v4263 = vsel %vm4235, %v4206, %v4207
        %v4264 = vsel %vm4235, %v4205, %v4206
        %v4265 = vsel %vm4235, %v4204, %v4205
        %v4266 = vsel %vm4235, %v4203, %v4204
        %v4267 = vsel %vm4235, %v4202, %v4203
        %v4268 = vsel %vm4235, %v4201, %v4202
        %v4269 = vsel %vm4235, %v4200, %v4201
        %v4270 = vsel %vm4235, %v4199, %v4200
        %v4271 = vsel %vm4235, %v4198, %v4199
        %v4272 = vsel %vm4235, %v4197, %v4198
        %v4273 = vsel %vm4235, %v4196, %v4197
        %v4274 = vsel %vm4235, %v4195, %v4196
        %v4275 = vsel %vm4235, %v4234, %v4195
        %v4276 = vmul.f32 %v4274, %v2909
        %v4277 = vmul.f32 %v4273, %v2910
        %v4278 = vmul.f32 %v4272, %v2911
        %v4279 = vmul.f32 %v4271, %v2912
        %v4280 = vmul.f32 %v4270, %v2913
        %v4281 = vmul.f32 %v4269, %v2914
        %v4282 = vmul.f32 %v4268, %v2915
        %v4283 = vmul.f32 %v4267, %v2916
        %v4284 = vmul.f32 %v4266, %v2917
        %v4285 = vmul.f32 %v4265, %v2918
        %v4286 = vmul.f32 %v4264, %v2919
        %v4287 = vmul.f32 %v4263, %v2920
        %v4288 = vmul.f32 %v4262, %v2921
        %v4289 = vmul.f32 %v4261, %v2922
        %v4290 = vmul.f32 %v4260, %v2923
        %v4291 = vmul.f32 %v4259, %v2924
        %v4292 = vmul.f32 %v4258, %v2925
        %v4293 = vmul.f32 %v4257, %v2926
        %v4294 = vmul.f32 %v4256, %v2927
        %v4295 = vmul.f32 %v4255, %v2928
        %v4296 = vmul.f32 %v4254, %v2929
        %v4297 = vmul.f32 %v4253, %v2930
        %v4298 = vmul.f32 %v4252, %v2931
        %v4299 = vmul.f32 %v4251, %v2932
        %v4300 = vmul.f32 %v4250, %v2933
        %v4301 = vmul.f32 %v4249, %v2934
        %v4302 = vmul.f32 %v4248, %v2935
        %v4303 = vmul.f32 %v4247, %v2936
        %v4304 = vmul.f32 %v4246, %v2937
        %v4305 = vmul.f32 %v4245, %v2938
        %v4306 = vmul.f32 %v4244, %v2939
        %v4307 = vmul.f32 %v4243, %v2940
        %v4308 = vmul.f32 %v4242, %v2941
        %v4309 = vmul.f32 %v4241, %v2942
        %v4310 = vmul.f32 %v4240, %v2943
        %v4311 = vmul.f32 %v4239, %v2944
        %v4312 = vmul.f32 %v4238, %v2945
        %v4313 = vmul.f32 %v4237, %v2946
        %v4314 = vmul.f32 %v4236, %v2947
        %v4315 = vmul.f32 %v4275, %v2948
        %v4316 = vpack.c.bf16 %v4276, %v4276
        %v4317 = vpack.c.bf16 %v4277, %v4277
        %v4318 = vpack.c.bf16 %v4278, %v4278
        %v4319 = vpack.c.bf16 %v4279, %v4279
        %v4320 = vpack.c.bf16 %v4280, %v4280
        %v4321 = vpack.c.bf16 %v4281, %v4281
        %v4322 = vpack.c.bf16 %v4282, %v4282
        %v4323 = vpack.c.bf16 %v4283, %v4283
        %v4324 = vpack.c.bf16 %v4284, %v4284
        %v4325 = vpack.c.bf16 %v4285, %v4285
        %v4326 = vpack.c.bf16 %v4286, %v4286
        %v4327 = vpack.c.bf16 %v4287, %v4287
        %v4328 = vpack.c.bf16 %v4288, %v4288
        %v4329 = vpack.c.bf16 %v4289, %v4289
        %v4330 = vpack.c.bf16 %v4290, %v4290
        %v4331 = vpack.c.bf16 %v4291, %v4291
        %v4332 = vpack.c.bf16 %v4292, %v4292
        %v4333 = vpack.c.bf16 %v4293, %v4293
        %v4334 = vpack.c.bf16 %v4294, %v4294
        %v4335 = vpack.c.bf16 %v4295, %v4295
        %v4336 = vpack.c.bf16 %v4296, %v4296
        %v4337 = vpack.c.bf16 %v4297, %v4297
        %v4338 = vpack.c.bf16 %v4298, %v4298
        %v4339 = vpack.c.bf16 %v4299, %v4299
        %v4340 = vpack.c.bf16 %v4300, %v4300
        %v4341 = vpack.c.bf16 %v4301, %v4301
        %v4342 = vpack.c.bf16 %v4302, %v4302
        %v4343 = vpack.c.bf16 %v4303, %v4303
        %v4344 = vpack.c.bf16 %v4304, %v4304
        %v4345 = vpack.c.bf16 %v4305, %v4305
        %v4346 = vpack.c.bf16 %v4306, %v4306
        %v4347 = vpack.c.bf16 %v4307, %v4307
        %v4348 = vpack.c.bf16 %v4308, %v4308
        %v4349 = vpack.c.bf16 %v4309, %v4309
        %v4350 = vpack.c.bf16 %v4310, %v4310
        %v4351 = vpack.c.bf16 %v4311, %v4311
        %v4352 = vpack.c.bf16 %v4312, %v4312
        %v4353 = vpack.c.bf16 %v4313, %v4313
        %v4354 = vpack.c.bf16 %v4314, %v4314
        %v4355 = vpack.c.bf16 %v4315, %v4315
        %v4356 = vmul.f32 %v3268, %v3149
        %v4357 = vmul.f32 %v3267, %v3150
        %v4358 = vmul.f32 %v3266, %v3151
        %v4359 = vmul.f32 %v3265, %v3152
        %v4360 = vmul.f32 %v3264, %v3153
        %v4361 = vmul.f32 %v3263, %v3154
        %v4362 = vmul.f32 %v3262, %v3155
        %v4363 = vmul.f32 %v3261, %v3156
        %v4364 = vmul.f32 %v3260, %v3157
        %v4365 = vmul.f32 %v3259, %v3158
        %v4366 = vmul.f32 %v3258, %v3159
        %v4367 = vmul.f32 %v3257, %v3160
        %v4368 = vmul.f32 %v3256, %v3161
        %v4369 = vmul.f32 %v3255, %v3162
        %v4370 = vmul.f32 %v3254, %v3163
        %v4371 = vmul.f32 %v3253, %v3164
        %v4372 = vmul.f32 %v3252, %v3165
        %v4373 = vmul.f32 %v3251, %v3166
        %v4374 = vmul.f32 %v3250, %v3167
        %v4375 = vmul.f32 %v3249, %v3168
        %v4376 = vmul.f32 %v3248, %v3169
        %v4377 = vmul.f32 %v3247, %v3170
        %v4378 = vmul.f32 %v3246, %v3171
        %v4379 = vmul.f32 %v3245, %v3172
        %v4380 = vmul.f32 %v3244, %v3173
        %v4381 = vmul.f32 %v3243, %v3174
        %v4382 = vmul.f32 %v3242, %v3175
        %v4383 = vmul.f32 %v3241, %v3176
        %v4384 = vmul.f32 %v3240, %v3177
        %v4385 = vmul.f32 %v3239, %v3178
        %v4386 = vmul.f32 %v3238, %v3179
        %v4387 = vmul.f32 %v3237, %v3180
        %v4388 = vmul.f32 %v3236, %v3181
        %v4389 = vmul.f32 %v3235, %v3182
        %v4390 = vmul.f32 %v3234, %v3183
        %v4391 = vmul.f32 %v3233, %v3184
        %v4392 = vmul.f32 %v3232, %v3185
        %v4393 = vmul.f32 %v3231, %v3186
        %v4394 = vmul.f32 %v3230, %v3187
        %v4395 = vmul.f32 %v3269, %v3188
        %v4396 = vpack.c.bf16 %v4356, %v4356
        %v4397 = vpack.c.bf16 %v4357, %v4357
        %v4398 = vpack.c.bf16 %v4358, %v4358
        %v4399 = vpack.c.bf16 %v4359, %v4359
        %v4400 = vpack.c.bf16 %v4360, %v4360
        %v4401 = vpack.c.bf16 %v4361, %v4361
        %v4402 = vpack.c.bf16 %v4362, %v4362
        %v4403 = vpack.c.bf16 %v4363, %v4363
        %v4404 = vpack.c.bf16 %v4364, %v4364
        %v4405 = vpack.c.bf16 %v4365, %v4365
        %v4406 = vpack.c.bf16 %v4366, %v4366
        %v4407 = vpack.c.bf16 %v4367, %v4367
        %v4408 = vpack.c.bf16 %v4368, %v4368
        %v4409 = vpack.c.bf16 %v4369, %v4369
        %v4410 = vpack.c.bf16 %v4370, %v4370
        %v4411 = vpack.c.bf16 %v4371, %v4371
        %v4412 = vpack.c.bf16 %v4372, %v4372
        %v4413 = vpack.c.bf16 %v4373, %v4373
        %v4414 = vpack.c.bf16 %v4374, %v4374
        %v4415 = vpack.c.bf16 %v4375, %v4375
        %v4416 = vpack.c.bf16 %v4376, %v4376
        %v4417 = vpack.c.bf16 %v4377, %v4377
        %v4418 = vpack.c.bf16 %v4378, %v4378
        %v4419 = vpack.c.bf16 %v4379, %v4379
        %v4420 = vpack.c.bf16 %v4380, %v4380
        %v4421 = vpack.c.bf16 %v4381, %v4381
        %v4422 = vpack.c.bf16 %v4382, %v4382
        %v4423 = vpack.c.bf16 %v4383, %v4383
        %v4424 = vpack.c.bf16 %v4384, %v4384
        %v4425 = vpack.c.bf16 %v4385, %v4385
        %v4426 = vpack.c.bf16 %v4386, %v4386
        %v4427 = vpack.c.bf16 %v4387, %v4387
        %v4428 = vpack.c.bf16 %v4388, %v4388
        %v4429 = vpack.c.bf16 %v4389, %v4389
        %v4430 = vpack.c.bf16 %v4390, %v4390
        %v4431 = vpack.c.bf16 %v4391, %v4391
        %v4432 = vpack.c.bf16 %v4392, %v4392
        %v4433 = vpack.c.bf16 %v4393, %v4393
        %v4434 = vpack.c.bf16 %v4394, %v4394
        %v4435 = vpack.c.bf16 %v4395, %v4395
        %v4476 = vunpack.c.l.b16 %v3310
        %v4477 = vunpack.c.l.b16 %v3311
        %v4478 = vunpack.c.l.b16 %v3312
        %v4479 = vunpack.c.l.b16 %v3313
        %v4480 = vunpack.c.l.b16 %v3314
        %v4481 = vunpack.c.l.b16 %v3315
        %v4482 = vunpack.c.l.b16 %v3316
        %v4483 = vunpack.c.l.b16 %v3317
        %v4484 = vunpack.c.l.b16 %v3318
        %v4485 = vunpack.c.l.b16 %v3319
        %v4486 = vunpack.c.l.b16 %v3320
        %v4487 = vunpack.c.l.b16 %v3321
        %v4488 = vunpack.c.l.b16 %v3322
        %v4489 = vunpack.c.l.b16 %v3323
        %v4490 = vunpack.c.l.b16 %v3324
        %v4491 = vunpack.c.l.b16 %v3325
        %v4492 = vunpack.c.l.b16 %v3326
        %v4493 = vunpack.c.l.b16 %v3327
        %v4494 = vunpack.c.l.b16 %v3328
        %v4495 = vunpack.c.l.b16 %v3329
        %v4496 = vunpack.c.l.b16 %v3330
        %v4497 = vunpack.c.l.b16 %v3331
        %v4498 = vunpack.c.l.b16 %v3332
        %v4499 = vunpack.c.l.b16 %v3333
        %v4500 = vunpack.c.l.b16 %v3334
        %v4501 = vunpack.c.l.b16 %v3335
        %v4502 = vunpack.c.l.b16 %v3336
        %v4503 = vunpack.c.l.b16 %v3337
        %v4504 = vunpack.c.l.b16 %v3338
        %v4505 = vunpack.c.l.b16 %v3339
        %v4506 = vunpack.c.l.b16 %v3340
        %v4507 = vunpack.c.l.b16 %v3341
        %v4508 = vunpack.c.l.b16 %v3342
        %v4509 = vunpack.c.l.b16 %v3343
        %v4510 = vunpack.c.l.b16 %v3344
        %v4511 = vunpack.c.l.b16 %v3345
        %v4512 = vunpack.c.l.b16 %v3346
        %v4513 = vunpack.c.l.b16 %v3347
        %v4514 = vunpack.c.l.b16 %v3348
        %v4515 = vunpack.c.l.b16 %v3349
        %v4516 = vpack.c.b16 %v4477, %v4476
        %v4517 = vpack.c.b16 %v4479, %v4478
        %v4518 = vpack.c.b16 %v4481, %v4480
        %v4519 = vpack.c.b16 %v4483, %v4482
        %v4520 = vpack.c.b16 %v4485, %v4484
        %v4521 = vpack.c.b16 %v4487, %v4486
        %v4522 = vpack.c.b16 %v4489, %v4488
        %v4523 = vpack.c.b16 %v4491, %v4490
        %v4524 = vpack.c.b16 %v4493, %v4492
        %v4525 = vpack.c.b16 %v4495, %v4494
        %v4526 = vpack.c.b16 %v4497, %v4496
        %v4527 = vpack.c.b16 %v4499, %v4498
        %v4528 = vpack.c.b16 %v4501, %v4500
        %v4529 = vpack.c.b16 %v4503, %v4502
        %v4530 = vpack.c.b16 %v4505, %v4504
        %v4531 = vpack.c.b16 %v4507, %v4506
        %v4532 = vpack.c.b16 %v4509, %v4508
        %v4533 = vpack.c.b16 %v4511, %v4510
        %v4534 = vpack.c.b16 %v4513, %v4512
        %v4535 = vpack.c.b16 %v4515, %v4514
        %v4596 = vunpack.c.l.b16 %v3471
        %v4597 = vunpack.c.l.b16 %v3472
        %v4598 = vunpack.c.l.b16 %v3473
        %v4599 = vunpack.c.l.b16 %v3474
        %v4600 = vunpack.c.l.b16 %v3475
        %v4601 = vunpack.c.l.b16 %v3476
        %v4602 = vunpack.c.l.b16 %v3477
        %v4603 = vunpack.c.l.b16 %v3478
        %v4604 = vunpack.c.l.b16 %v3479
        %v4605 = vunpack.c.l.b16 %v3480
        %v4606 = vunpack.c.l.b16 %v3481
        %v4607 = vunpack.c.l.b16 %v3482
        %v4608 = vunpack.c.l.b16 %v3483
        %v4609 = vunpack.c.l.b16 %v3484
        %v4610 = vunpack.c.l.b16 %v3485
        %v4611 = vunpack.c.l.b16 %v3486
        %v4612 = vunpack.c.l.b16 %v3487
        %v4613 = vunpack.c.l.b16 %v3488
        %v4614 = vunpack.c.l.b16 %v3489
        %v4615 = vunpack.c.l.b16 %v3490
        %v4616 = vunpack.c.l.b16 %v3491
        %v4617 = vunpack.c.l.b16 %v3492
        %v4618 = vunpack.c.l.b16 %v3493
        %v4619 = vunpack.c.l.b16 %v3494
        %v4620 = vunpack.c.l.b16 %v3495
        %v4621 = vunpack.c.l.b16 %v3496
        %v4622 = vunpack.c.l.b16 %v3497
        %v4623 = vunpack.c.l.b16 %v3498
        %v4624 = vunpack.c.l.b16 %v3499
        %v4625 = vunpack.c.l.b16 %v3500
        %v4626 = vunpack.c.l.b16 %v3501
        %v4627 = vunpack.c.l.b16 %v3502
        %v4628 = vunpack.c.l.b16 %v3503
        %v4629 = vunpack.c.l.b16 %v3504
        %v4630 = vunpack.c.l.b16 %v3505
        %v4631 = vunpack.c.l.b16 %v3506
        %v4632 = vunpack.c.l.b16 %v3507
        %v4633 = vunpack.c.l.b16 %v3508
        %v4634 = vunpack.c.l.b16 %v3509
        %v4635 = vunpack.c.l.b16 %v3510
        %v4636 = vpack.c.b16 %v4597, %v4596
        %v4637 = vpack.c.b16 %v4599, %v4598
        %v4638 = vpack.c.b16 %v4601, %v4600
        %v4639 = vpack.c.b16 %v4603, %v4602
        %v4640 = vpack.c.b16 %v4605, %v4604
        %v4641 = vpack.c.b16 %v4607, %v4606
        %v4642 = vpack.c.b16 %v4609, %v4608
        %v4643 = vpack.c.b16 %v4611, %v4610
        %v4644 = vpack.c.b16 %v4613, %v4612
        %v4645 = vpack.c.b16 %v4615, %v4614
        %v4646 = vpack.c.b16 %v4617, %v4616
        %v4647 = vpack.c.b16 %v4619, %v4618
        %v4648 = vpack.c.b16 %v4621, %v4620
        %v4649 = vpack.c.b16 %v4623, %v4622
        %v4650 = vpack.c.b16 %v4625, %v4624
        %v4651 = vpack.c.b16 %v4627, %v4626
        %v4652 = vpack.c.b16 %v4629, %v4628
        %v4653 = vpack.c.b16 %v4631, %v4630
        %v4654 = vpack.c.b16 %v4633, %v4632
        %v4655 = vpack.c.b16 %v4635, %v4634
        %v4716 = vunpack.c.l.b16 %v3632
        %v4717 = vunpack.c.l.b16 %v3633
        %v4718 = vunpack.c.l.b16 %v3634
        %v4719 = vunpack.c.l.b16 %v3635
        %v4720 = vunpack.c.l.b16 %v3636
        %v4721 = vunpack.c.l.b16 %v3637
        %v4722 = vunpack.c.l.b16 %v3638
        %v4723 = vunpack.c.l.b16 %v3639
        %v4724 = vunpack.c.l.b16 %v3640
        %v4725 = vunpack.c.l.b16 %v3641
        %v4726 = vunpack.c.l.b16 %v3642
        %v4727 = vunpack.c.l.b16 %v3643
        %v4728 = vunpack.c.l.b16 %v3644
        %v4729 = vunpack.c.l.b16 %v3645
        %v4730 = vunpack.c.l.b16 %v3646
        %v4731 = vunpack.c.l.b16 %v3647
        %v4732 = vunpack.c.l.b16 %v3648
        %v4733 = vunpack.c.l.b16 %v3649
        %v4734 = vunpack.c.l.b16 %v3650
        %v4735 = vunpack.c.l.b16 %v3651
        %v4736 = vunpack.c.l.b16 %v3652
        %v4737 = vunpack.c.l.b16 %v3653
        %v4738 = vunpack.c.l.b16 %v3654
        %v4739 = vunpack.c.l.b16 %v3655
        %v4740 = vunpack.c.l.b16 %v3656
        %v4741 = vunpack.c.l.b16 %v3657
        %v4742 = vunpack.c.l.b16 %v3658
        %v4743 = vunpack.c.l.b16 %v3659
        %v4744 = vunpack.c.l.b16 %v3660
        %v4745 = vunpack.c.l.b16 %v3661
        %v4746 = vunpack.c.l.b16 %v3662
        %v4747 = vunpack.c.l.b16 %v3663
        %v4748 = vunpack.c.l.b16 %v3664
        %v4749 = vunpack.c.l.b16 %v3665
        %v4750 = vunpack.c.l.b16 %v3666
        %v4751 = vunpack.c.l.b16 %v3667
        %v4752 = vunpack.c.l.b16 %v3668
        %v4753 = vunpack.c.l.b16 %v3669
        %v4754 = vunpack.c.l.b16 %v3670
        %v4755 = vunpack.c.l.b16 %v3671
        %v4756 = vpack.c.b16 %v4717, %v4716
        %v4757 = vpack.c.b16 %v4719, %v4718
        %v4758 = vpack.c.b16 %v4721, %v4720
        %v4759 = vpack.c.b16 %v4723, %v4722
        %v4760 = vpack.c.b16 %v4725, %v4724
        %v4761 = vpack.c.b16 %v4727, %v4726
        %v4762 = vpack.c.b16 %v4729, %v4728
        %v4763 = vpack.c.b16 %v4731, %v4730
        %v4764 = vpack.c.b16 %v4733, %v4732
        %v4765 = vpack.c.b16 %v4735, %v4734
        %v4766 = vpack.c.b16 %v4737, %v4736
        %v4767 = vpack.c.b16 %v4739, %v4738
        %v4768 = vpack.c.b16 %v4741, %v4740
        %v4769 = vpack.c.b16 %v4743, %v4742
        %v4770 = vpack.c.b16 %v4745, %v4744
        %v4771 = vpack.c.b16 %v4747, %v4746
        %v4772 = vpack.c.b16 %v4749, %v4748
        %v4773 = vpack.c.b16 %v4751, %v4750
        %v4774 = vpack.c.b16 %v4753, %v4752
        %v4775 = vpack.c.b16 %v4755, %v4754
        %v4836 = vunpack.c.l.b16 %v3793
        %v4837 = vunpack.c.l.b16 %v3794
        %v4838 = vunpack.c.l.b16 %v3795
        %v4839 = vunpack.c.l.b16 %v3796
        %v4840 = vunpack.c.l.b16 %v3797
        %v4841 = vunpack.c.l.b16 %v3798
        %v4842 = vunpack.c.l.b16 %v3799
        %v4843 = vunpack.c.l.b16 %v3800
        %v4844 = vunpack.c.l.b16 %v3801
        %v4845 = vunpack.c.l.b16 %v3802
        %v4846 = vunpack.c.l.b16 %v3803
        %v4847 = vunpack.c.l.b16 %v3804
        %v4848 = vunpack.c.l.b16 %v3805
        %v4849 = vunpack.c.l.b16 %v3806
        %v4850 = vunpack.c.l.b16 %v3807
        %v4851 = vunpack.c.l.b16 %v3808
        %v4852 = vunpack.c.l.b16 %v3809
        %v4853 = vunpack.c.l.b16 %v3810
        %v4854 = vunpack.c.l.b16 %v3811
        %v4855 = vunpack.c.l.b16 %v3812
        %v4856 = vunpack.c.l.b16 %v3813
        %v4857 = vunpack.c.l.b16 %v3814
        %v4858 = vunpack.c.l.b16 %v3815
        %v4859 = vunpack.c.l.b16 %v3816
        %v4860 = vunpack.c.l.b16 %v3817
        %v4861 = vunpack.c.l.b16 %v3818
        %v4862 = vunpack.c.l.b16 %v3819
        %v4863 = vunpack.c.l.b16 %v3820
        %v4864 = vunpack.c.l.b16 %v3821
        %v4865 = vunpack.c.l.b16 %v3822
        %v4866 = vunpack.c.l.b16 %v3823
        %v4867 = vunpack.c.l.b16 %v3824
        %v4868 = vunpack.c.l.b16 %v3825
        %v4869 = vunpack.c.l.b16 %v3826
        %v4870 = vunpack.c.l.b16 %v3827
        %v4871 = vunpack.c.l.b16 %v3828
        %v4872 = vunpack.c.l.b16 %v3829
        %v4873 = vunpack.c.l.b16 %v3830
        %v4874 = vunpack.c.l.b16 %v3831
        %v4875 = vunpack.c.l.b16 %v3832
        %v4876 = vpack.c.b16 %v4837, %v4836
        %v4877 = vpack.c.b16 %v4839, %v4838
        %v4878 = vpack.c.b16 %v4841, %v4840
        %v4879 = vpack.c.b16 %v4843, %v4842
        %v4880 = vpack.c.b16 %v4845, %v4844
        %v4881 = vpack.c.b16 %v4847, %v4846
        %v4882 = vpack.c.b16 %v4849, %v4848
        %v4883 = vpack.c.b16 %v4851, %v4850
        %v4884 = vpack.c.b16 %v4853, %v4852
        %v4885 = vpack.c.b16 %v4855, %v4854
        %v4886 = vpack.c.b16 %v4857, %v4856
        %v4887 = vpack.c.b16 %v4859, %v4858
        %v4888 = vpack.c.b16 %v4861, %v4860
        %v4889 = vpack.c.b16 %v4863, %v4862
        %v4890 = vpack.c.b16 %v4865, %v4864
        %v4891 = vpack.c.b16 %v4867, %v4866
        %v4892 = vpack.c.b16 %v4869, %v4868
        %v4893 = vpack.c.b16 %v4871, %v4870
        %v4894 = vpack.c.b16 %v4873, %v4872
        %v4895 = vpack.c.b16 %v4875, %v4874
        %v4956 = vunpack.c.l.b16 %v3833
        %v4957 = vunpack.c.l.b16 %v3834
        %v4958 = vunpack.c.l.b16 %v3835
        %v4959 = vunpack.c.l.b16 %v3836
        %v4960 = vunpack.c.l.b16 %v3837
        %v4961 = vunpack.c.l.b16 %v3838
        %v4962 = vunpack.c.l.b16 %v3839
        %v4963 = vunpack.c.l.b16 %v3840
        %v4964 = vunpack.c.l.b16 %v3841
        %v4965 = vunpack.c.l.b16 %v3842
        %v4966 = vunpack.c.l.b16 %v3843
        %v4967 = vunpack.c.l.b16 %v3844
        %v4968 = vunpack.c.l.b16 %v3845
        %v4969 = vunpack.c.l.b16 %v3846
        %v4970 = vunpack.c.l.b16 %v3847
        %v4971 = vunpack.c.l.b16 %v3848
        %v4972 = vunpack.c.l.b16 %v3849
        %v4973 = vunpack.c.l.b16 %v3850
        %v4974 = vunpack.c.l.b16 %v3851
        %v4975 = vunpack.c.l.b16 %v3852
        %v4976 = vunpack.c.l.b16 %v3853
        %v4977 = vunpack.c.l.b16 %v3854
        %v4978 = vunpack.c.l.b16 %v3855
        %v4979 = vunpack.c.l.b16 %v3856
        %v4980 = vunpack.c.l.b16 %v3857
        %v4981 = vunpack.c.l.b16 %v3858
        %v4982 = vunpack.c.l.b16 %v3859
        %v4983 = vunpack.c.l.b16 %v3860
        %v4984 = vunpack.c.l.b16 %v3861
        %v4985 = vunpack.c.l.b16 %v3862
        %v4986 = vunpack.c.l.b16 %v3863
        %v4987 = vunpack.c.l.b16 %v3864
        %v4988 = vunpack.c.l.b16 %v3865
        %v4989 = vunpack.c.l.b16 %v3866
        %v4990 = vunpack.c.l.b16 %v3867
        %v4991 = vunpack.c.l.b16 %v3868
        %v4992 = vunpack.c.l.b16 %v3869
        %v4993 = vunpack.c.l.b16 %v3870
        %v4994 = vunpack.c.l.b16 %v3871
        %v4995 = vunpack.c.l.b16 %v3872
        %v4996 = vpack.c.b16 %v4957, %v4956
        %v4997 = vpack.c.b16 %v4959, %v4958
        %v4998 = vpack.c.b16 %v4961, %v4960
        %v4999 = vpack.c.b16 %v4963, %v4962
        %v5000 = vpack.c.b16 %v4965, %v4964
        %v5001 = vpack.c.b16 %v4967, %v4966
        %v5002 = vpack.c.b16 %v4969, %v4968
        %v5003 = vpack.c.b16 %v4971, %v4970
        %v5004 = vpack.c.b16 %v4973, %v4972
        %v5005 = vpack.c.b16 %v4975, %v4974
        %v5006 = vpack.c.b16 %v4977, %v4976
        %v5007 = vpack.c.b16 %v4979, %v4978
        %v5008 = vpack.c.b16 %v4981, %v4980
        %v5009 = vpack.c.b16 %v4983, %v4982
        %v5010 = vpack.c.b16 %v4985, %v4984
        %v5011 = vpack.c.b16 %v4987, %v4986
        %v5012 = vpack.c.b16 %v4989, %v4988
        %v5013 = vpack.c.b16 %v4991, %v4990
        %v5014 = vpack.c.b16 %v4993, %v4992
        %v5015 = vpack.c.b16 %v4995, %v4994
        %v5076 = vunpack.c.l.b16 %v3994
        %v5077 = vunpack.c.l.b16 %v3995
        %v5078 = vunpack.c.l.b16 %v3996
        %v5079 = vunpack.c.l.b16 %v3997
        %v5080 = vunpack.c.l.b16 %v3998
        %v5081 = vunpack.c.l.b16 %v3999
        %v5082 = vunpack.c.l.b16 %v4000
        %v5083 = vunpack.c.l.b16 %v4001
        %v5084 = vunpack.c.l.b16 %v4002
        %v5085 = vunpack.c.l.b16 %v4003
        %v5086 = vunpack.c.l.b16 %v4004
        %v5087 = vunpack.c.l.b16 %v4005
        %v5088 = vunpack.c.l.b16 %v4006
        %v5089 = vunpack.c.l.b16 %v4007
        %v5090 = vunpack.c.l.b16 %v4008
        %v5091 = vunpack.c.l.b16 %v4009
        %v5092 = vunpack.c.l.b16 %v4010
        %v5093 = vunpack.c.l.b16 %v4011
        %v5094 = vunpack.c.l.b16 %v4012
        %v5095 = vunpack.c.l.b16 %v4013
        %v5096 = vunpack.c.l.b16 %v4014
        %v5097 = vunpack.c.l.b16 %v4015
        %v5098 = vunpack.c.l.b16 %v4016
        %v5099 = vunpack.c.l.b16 %v4017
        %v5100 = vunpack.c.l.b16 %v4018
        %v5101 = vunpack.c.l.b16 %v4019
        %v5102 = vunpack.c.l.b16 %v4020
        %v5103 = vunpack.c.l.b16 %v4021
        %v5104 = vunpack.c.l.b16 %v4022
        %v5105 = vunpack.c.l.b16 %v4023
        %v5106 = vunpack.c.l.b16 %v4024
        %v5107 = vunpack.c.l.b16 %v4025
        %v5108 = vunpack.c.l.b16 %v4026
        %v5109 = vunpack.c.l.b16 %v4027
        %v5110 = vunpack.c.l.b16 %v4028
        %v5111 = vunpack.c.l.b16 %v4029
        %v5112 = vunpack.c.l.b16 %v4030
        %v5113 = vunpack.c.l.b16 %v4031
        %v5114 = vunpack.c.l.b16 %v4032
        %v5115 = vunpack.c.l.b16 %v4033
        %v5116 = vpack.c.b16 %v5077, %v5076
        %v5117 = vpack.c.b16 %v5079, %v5078
        %v5118 = vpack.c.b16 %v5081, %v5080
        %v5119 = vpack.c.b16 %v5083, %v5082
        %v5120 = vpack.c.b16 %v5085, %v5084
        %v5121 = vpack.c.b16 %v5087, %v5086
        %v5122 = vpack.c.b16 %v5089, %v5088
        %v5123 = vpack.c.b16 %v5091, %v5090
        %v5124 = vpack.c.b16 %v5093, %v5092
        %v5125 = vpack.c.b16 %v5095, %v5094
        %v5126 = vpack.c.b16 %v5097, %v5096
        %v5127 = vpack.c.b16 %v5099, %v5098
        %v5128 = vpack.c.b16 %v5101, %v5100
        %v5129 = vpack.c.b16 %v5103, %v5102
        %v5130 = vpack.c.b16 %v5105, %v5104
        %v5131 = vpack.c.b16 %v5107, %v5106
        %v5132 = vpack.c.b16 %v5109, %v5108
        %v5133 = vpack.c.b16 %v5111, %v5110
        %v5134 = vpack.c.b16 %v5113, %v5112
        %v5135 = vpack.c.b16 %v5115, %v5114
        %v5196 = vunpack.c.l.b16 %v4155
        %v5197 = vunpack.c.l.b16 %v4156
        %v5198 = vunpack.c.l.b16 %v4157
        %v5199 = vunpack.c.l.b16 %v4158
        %v5200 = vunpack.c.l.b16 %v4159
        %v5201 = vunpack.c.l.b16 %v4160
        %v5202 = vunpack.c.l.b16 %v4161
        %v5203 = vunpack.c.l.b16 %v4162
        %v5204 = vunpack.c.l.b16 %v4163
        %v5205 = vunpack.c.l.b16 %v4164
        %v5206 = vunpack.c.l.b16 %v4165
        %v5207 = vunpack.c.l.b16 %v4166
        %v5208 = vunpack.c.l.b16 %v4167
        %v5209 = vunpack.c.l.b16 %v4168
        %v5210 = vunpack.c.l.b16 %v4169
        %v5211 = vunpack.c.l.b16 %v4170
        %v5212 = vunpack.c.l.b16 %v4171
        %v5213 = vunpack.c.l.b16 %v4172
        %v5214 = vunpack.c.l.b16 %v4173
        %v5215 = vunpack.c.l.b16 %v4174
        %v5216 = vunpack.c.l.b16 %v4175
        %v5217 = vunpack.c.l.b16 %v4176
        %v5218 = vunpack.c.l.b16 %v4177
        %v5219 = vunpack.c.l.b16 %v4178
        %v5220 = vunpack.c.l.b16 %v4179
        %v5221 = vunpack.c.l.b16 %v4180
        %v5222 = vunpack.c.l.b16 %v4181
        %v5223 = vunpack.c.l.b16 %v4182
        %v5224 = vunpack.c.l.b16 %v4183
        %v5225 = vunpack.c.l.b16 %v4184
        %v5226 = vunpack.c.l.b16 %v4185
        %v5227 = vunpack.c.l.b16 %v4186
        %v5228 = vunpack.c.l.b16 %v4187
        %v5229 = vunpack.c.l.b16 %v4188
        %v5230 = vunpack.c.l.b16 %v4189
        %v5231 = vunpack.c.l.b16 %v4190
        %v5232 = vunpack.c.l.b16 %v4191
        %v5233 = vunpack.c.l.b16 %v4192
        %v5234 = vunpack.c.l.b16 %v4193
        %v5235 = vunpack.c.l.b16 %v4194
        %v5236 = vpack.c.b16 %v5197, %v5196
        %v5237 = vpack.c.b16 %v5199, %v5198
        %v5238 = vpack.c.b16 %v5201, %v5200
        %v5239 = vpack.c.b16 %v5203, %v5202
        %v5240 = vpack.c.b16 %v5205, %v5204
        %v5241 = vpack.c.b16 %v5207, %v5206
        %v5242 = vpack.c.b16 %v5209, %v5208
        %v5243 = vpack.c.b16 %v5211, %v5210
        %v5244 = vpack.c.b16 %v5213, %v5212
        %v5245 = vpack.c.b16 %v5215, %v5214
        %v5246 = vpack.c.b16 %v5217, %v5216
        %v5247 = vpack.c.b16 %v5219, %v5218
        %v5248 = vpack.c.b16 %v5221, %v5220
        %v5249 = vpack.c.b16 %v5223, %v5222
        %v5250 = vpack.c.b16 %v5225, %v5224
        %v5251 = vpack.c.b16 %v5227, %v5226
        %v5252 = vpack.c.b16 %v5229, %v5228
        %v5253 = vpack.c.b16 %v5231, %v5230
        %v5254 = vpack.c.b16 %v5233, %v5232
        %v5255 = vpack.c.b16 %v5235, %v5234
        %v5316 = vunpack.c.l.b16 %v4316
        %v5317 = vunpack.c.l.b16 %v4317
        %v5318 = vunpack.c.l.b16 %v4318
        %v5319 = vunpack.c.l.b16 %v4319
        %v5320 = vunpack.c.l.b16 %v4320
        %v5321 = vunpack.c.l.b16 %v4321
        %v5322 = vunpack.c.l.b16 %v4322
        %v5323 = vunpack.c.l.b16 %v4323
        %v5324 = vunpack.c.l.b16 %v4324
        %v5325 = vunpack.c.l.b16 %v4325
        %v5326 = vunpack.c.l.b16 %v4326
        %v5327 = vunpack.c.l.b16 %v4327
        %v5328 = vunpack.c.l.b16 %v4328
        %v5329 = vunpack.c.l.b16 %v4329
        %v5330 = vunpack.c.l.b16 %v4330
        %v5331 = vunpack.c.l.b16 %v4331
        %v5332 = vunpack.c.l.b16 %v4332
        %v5333 = vunpack.c.l.b16 %v4333
        %v5334 = vunpack.c.l.b16 %v4334
        %v5335 = vunpack.c.l.b16 %v4335
        %v5336 = vunpack.c.l.b16 %v4336
        %v5337 = vunpack.c.l.b16 %v4337
        %v5338 = vunpack.c.l.b16 %v4338
        %v5339 = vunpack.c.l.b16 %v4339
        %v5340 = vunpack.c.l.b16 %v4340
        %v5341 = vunpack.c.l.b16 %v4341
        %v5342 = vunpack.c.l.b16 %v4342
        %v5343 = vunpack.c.l.b16 %v4343
        %v5344 = vunpack.c.l.b16 %v4344
        %v5345 = vunpack.c.l.b16 %v4345
        %v5346 = vunpack.c.l.b16 %v4346
        %v5347 = vunpack.c.l.b16 %v4347
        %v5348 = vunpack.c.l.b16 %v4348
        %v5349 = vunpack.c.l.b16 %v4349
        %v5350 = vunpack.c.l.b16 %v4350
        %v5351 = vunpack.c.l.b16 %v4351
        %v5352 = vunpack.c.l.b16 %v4352
        %v5353 = vunpack.c.l.b16 %v4353
        %v5354 = vunpack.c.l.b16 %v4354
        %v5355 = vunpack.c.l.b16 %v4355
        %v5356 = vpack.c.b16 %v5317, %v5316
        %v5357 = vpack.c.b16 %v5319, %v5318
        %v5358 = vpack.c.b16 %v5321, %v5320
        %v5359 = vpack.c.b16 %v5323, %v5322
        %v5360 = vpack.c.b16 %v5325, %v5324
        %v5361 = vpack.c.b16 %v5327, %v5326
        %v5362 = vpack.c.b16 %v5329, %v5328
        %v5363 = vpack.c.b16 %v5331, %v5330
        %v5364 = vpack.c.b16 %v5333, %v5332
        %v5365 = vpack.c.b16 %v5335, %v5334
        %v5366 = vpack.c.b16 %v5337, %v5336
        %v5367 = vpack.c.b16 %v5339, %v5338
        %v5368 = vpack.c.b16 %v5341, %v5340
        %v5369 = vpack.c.b16 %v5343, %v5342
        %v5370 = vpack.c.b16 %v5345, %v5344
        %v5371 = vpack.c.b16 %v5347, %v5346
        %v5372 = vpack.c.b16 %v5349, %v5348
        %v5373 = vpack.c.b16 %v5351, %v5350
        %v5374 = vpack.c.b16 %v5353, %v5352
        %v5375 = vpack.c.b16 %v5355, %v5354
        %v5436 = vunpack.c.l.b16 %v4396
        %v5437 = vunpack.c.l.b16 %v4397
        %v5438 = vunpack.c.l.b16 %v4398
        %v5439 = vunpack.c.l.b16 %v4399
        %v5440 = vunpack.c.l.b16 %v4400
        %v5441 = vunpack.c.l.b16 %v4401
        %v5442 = vunpack.c.l.b16 %v4402
        %v5443 = vunpack.c.l.b16 %v4403
        %v5444 = vunpack.c.l.b16 %v4404
        %v5445 = vunpack.c.l.b16 %v4405
        %v5446 = vunpack.c.l.b16 %v4406
        %v5447 = vunpack.c.l.b16 %v4407
        %v5448 = vunpack.c.l.b16 %v4408
        %v5449 = vunpack.c.l.b16 %v4409
        %v5450 = vunpack.c.l.b16 %v4410
        %v5451 = vunpack.c.l.b16 %v4411
        %v5452 = vunpack.c.l.b16 %v4412
        %v5453 = vunpack.c.l.b16 %v4413
        %v5454 = vunpack.c.l.b16 %v4414
        %v5455 = vunpack.c.l.b16 %v4415
        %v5456 = vunpack.c.l.b16 %v4416
        %v5457 = vunpack.c.l.b16 %v4417
        %v5458 = vunpack.c.l.b16 %v4418
        %v5459 = vunpack.c.l.b16 %v4419
        %v5460 = vunpack.c.l.b16 %v4420
        %v5461 = vunpack.c.l.b16 %v4421
        %v5462 = vunpack.c.l.b16 %v4422
        %v5463 = vunpack.c.l.b16 %v4423
        %v5464 = vunpack.c.l.b16 %v4424
        %v5465 = vunpack.c.l.b16 %v4425
        %v5466 = vunpack.c.l.b16 %v4426
        %v5467 = vunpack.c.l.b16 %v4427
        %v5468 = vunpack.c.l.b16 %v4428
        %v5469 = vunpack.c.l.b16 %v4429
        %v5470 = vunpack.c.l.b16 %v4430
        %v5471 = vunpack.c.l.b16 %v4431
        %v5472 = vunpack.c.l.b16 %v4432
        %v5473 = vunpack.c.l.b16 %v4433
        %v5474 = vunpack.c.l.b16 %v4434
        %v5475 = vunpack.c.l.b16 %v4435
        %v5476 = vpack.c.b16 %v5437, %v5436
        %v5477 = vpack.c.b16 %v5439, %v5438
        %v5478 = vpack.c.b16 %v5441, %v5440
        %v5479 = vpack.c.b16 %v5443, %v5442
        %v5480 = vpack.c.b16 %v5445, %v5444
        %v5481 = vpack.c.b16 %v5447, %v5446
        %v5482 = vpack.c.b16 %v5449, %v5448
        %v5483 = vpack.c.b16 %v5451, %v5450
        %v5484 = vpack.c.b16 %v5453, %v5452
        %v5485 = vpack.c.b16 %v5455, %v5454
        %v5486 = vpack.c.b16 %v5457, %v5456
        %v5487 = vpack.c.b16 %v5459, %v5458
        %v5488 = vpack.c.b16 %v5461, %v5460
        %v5489 = vpack.c.b16 %v5463, %v5462
        %v5490 = vpack.c.b16 %v5465, %v5464
        %v5491 = vpack.c.b16 %v5467, %v5466
        %v5492 = vpack.c.b16 %v5469, %v5468
        %v5493 = vpack.c.b16 %v5471, %v5470
        %v5494 = vpack.c.b16 %v5473, %v5472
        %v5495 = vpack.c.b16 %v5475, %v5474
        %v5516 = vld [vmem:[%s3] sm:$0xf]
        %v5517 = vld [vmem:[%s3 + $0x4] sm:$0xf]
        %v5518 = vld [vmem:[%s3 + $0x8] sm:$0xf]
        %v5519 = vld [vmem:[%s3 + $0xc] sm:$0xf]
        %v5520 = vld [vmem:[%s3 + $0x10] sm:$0xf]
        %v5521 = vld [vmem:[%s3 + $0x14] sm:$0xf]
        %v5522 = vld [vmem:[%s3 + $0x18] sm:$0xf]
        %v5523 = vld [vmem:[%s3 + $0x1c] sm:$0xf]
        %v5524 = vld [vmem:[%s3 + $0x20] sm:$0xf]
        %v5525 = vld [vmem:[%s3 + $0x24] sm:$0xf]
        %v5526 = vld [vmem:[%s3 + $0x28] sm:$0xf]
        %v5527 = vld [vmem:[%s3 + $0x2c] sm:$0xf]
        %v5528 = vld [vmem:[%s3 + $0x30] sm:$0xf]
        %v5529 = vld [vmem:[%s3 + $0x34] sm:$0xf]
        %v5530 = vld [vmem:[%s3 + $0x38] sm:$0xf]
        %v5531 = vld [vmem:[%s3 + $0x3c] sm:$0xf]
        %v5532 = vld [vmem:[%s3 + $0x40] sm:$0xf]
        %v5533 = vld [vmem:[%s3 + $0x44] sm:$0xf]
        %v5534 = vld [vmem:[%s3 + $0x48] sm:$0xf]
        %v5535 = vld [vmem:[%s3 + $0x4c] sm:$0xf]
        %v5536 = vld [vmem:[%s3 + $0x50] sm:$0xf]
        %v5537 = vld [vmem:[%s3 + $0x54] sm:$0xf]
        %v5538 = vld [vmem:[%s3 + $0x58] sm:$0xf]
        %v5539 = vld [vmem:[%s3 + $0x5c] sm:$0xf]
        %v5540 = vld [vmem:[%s3 + $0x60] sm:$0xf]
        %v5541 = vld [vmem:[%s3 + $0x64] sm:$0xf]
        %v5542 = vld [vmem:[%s3 + $0x68] sm:$0xf]
        %v5543 = vld [vmem:[%s3 + $0x6c] sm:$0xf]
        %v5544 = vld [vmem:[%s3 + $0x70] sm:$0xf]
        %v5545 = vld [vmem:[%s3 + $0x74] sm:$0xf]
        %v5546 = vld [vmem:[%s3 + $0x78] sm:$0xf]
        %v5547 = vld [vmem:[%s3 + $0x7c] sm:$0xf]
        %v5548 = vld [vmem:[%s3 + $0x80] sm:$0xf]
        %v5549 = vld [vmem:[%s3 + $0x84] sm:$0xf]
        %v5550 = vld [vmem:[%s3 + $0x88] sm:$0xf]
        %v5551 = vld [vmem:[%s3 + $0x8c] sm:$0xf]
        %v5552 = vld [vmem:[%s3 + $0x90] sm:$0xf]
        %v5553 = vld [vmem:[%s3 + $0x94] sm:$0xf]
        %v5554 = vld [vmem:[%s3 + $0x98] sm:$0xf]
        %v5555 = vld [vmem:[%s3 + $0x9c] sm:$0xf]
        %v5556 = vld [vmem:[%s3 + $0xa0] sm:$0xf]
        %v5557 = vld [vmem:[%s3 + $0xa4] sm:$0xf]
        %v5558 = vld [vmem:[%s3 + $0xa8] sm:$0xf]
        %v5559 = vld [vmem:[%s3 + $0xac] sm:$0xf]
        %v5560 = vld [vmem:[%s3 + $0xb0] sm:$0xf]
        %v5561 = vld [vmem:[%s3 + $0xb4] sm:$0xf]
        %v5562 = vld [vmem:[%s3 + $0xb8] sm:$0xf]
        %v5563 = vld [vmem:[%s3 + $0xbc] sm:$0xf]
        %v5564 = vld [vmem:[%s3 + $0xc0] sm:$0xf]
        %v5565 = vld [vmem:[%s3 + $0xc4] sm:$0xf]
        %v5566 = vld [vmem:[%s3 + $0xc8] sm:$0xf]
        %v5567 = vld [vmem:[%s3 + $0xcc] sm:$0xf]
        %v5568 = vld [vmem:[%s3 + $0xd0] sm:$0xf]
        %v5569 = vld [vmem:[%s3 + $0xd4] sm:$0xf]
        %v5570 = vld [vmem:[%s3 + $0xd8] sm:$0xf]
        %v5571 = vld [vmem:[%s3 + $0xdc] sm:$0xf]
        %v5572 = vld [vmem:[%s3 + $0xe0] sm:$0xf]
        %v5573 = vld [vmem:[%s3 + $0xe4] sm:$0xf]
        %v5574 = vld [vmem:[%s3 + $0xe8] sm:$0xf]
        %v5575 = vld [vmem:[%s3 + $0xec] sm:$0xf]
        %v5576 = vld [vmem:[%s3 + $0xf0] sm:$0xf]
        %v5577 = vld [vmem:[%s3 + $0xf4] sm:$0xf]
        %v5578 = vld [vmem:[%s3 + $0xf8] sm:$0xf]
        %v5579 = vld [vmem:[%s3 + $0xfc] sm:$0xf]
        %v5580 = vld [vmem:[%s3 + $0x100] sm:$0xf]
        %v5581 = vld [vmem:[%s3 + $0x104] sm:$0xf]
        %v5582 = vld [vmem:[%s3 + $0x108] sm:$0xf]
        %v5583 = vld [vmem:[%s3 + $0x10c] sm:$0xf]
        %v5584 = vld [vmem:[%s3 + $0x110] sm:$0xf]
        %v5585 = vld [vmem:[%s3 + $0x114] sm:$0xf]
        %v5586 = vld [vmem:[%s3 + $0x118] sm:$0xf]
        %v5587 = vld [vmem:[%s3 + $0x11c] sm:$0xf]
        %v5588 = vld [vmem:[%s3 + $0x120] sm:$0xf]
        %v5589 = vld [vmem:[%s3 + $0x124] sm:$0xf]
        %v5590 = vld [vmem:[%s3 + $0x128] sm:$0xf]
        %v5591 = vld [vmem:[%s3 + $0x12c] sm:$0xf]
        %v5592 = vld [vmem:[%s3 + $0x130] sm:$0xf]
        %v5593 = vld [vmem:[%s3 + $0x134] sm:$0xf]
        %v5594 = vld [vmem:[%s3 + $0x138] sm:$0xf]
        %v5595 = vld [vmem:[%s3 + $0x13c] sm:$0xf]
        %v5596 = vld [vmem:[%s3 + $0x140] sm:$0xf]
        %v5597 = vld [vmem:[%s3 + $0x144] sm:$0xf]
        %v5598 = vld [vmem:[%s3 + $0x148] sm:$0xf]
        %v5599 = vld [vmem:[%s3 + $0x14c] sm:$0xf]
        %v5600 = vld [vmem:[%s3 + $0x150] sm:$0xf]
        %v5601 = vld [vmem:[%s3 + $0x154] sm:$0xf]
        %v5602 = vld [vmem:[%s3 + $0x158] sm:$0xf]
        %v5603 = vld [vmem:[%s3 + $0x15c] sm:$0xf]
        %v5604 = vld [vmem:[%s3 + $0x160] sm:$0xf]
        %v5605 = vld [vmem:[%s3 + $0x164] sm:$0xf]
        %v5606 = vld [vmem:[%s3 + $0x168] sm:$0xf]
        %v5607 = vld [vmem:[%s3 + $0x16c] sm:$0xf]
        %v5608 = vld [vmem:[%s3 + $0x170] sm:$0xf]
        %v5609 = vld [vmem:[%s3 + $0x174] sm:$0xf]
        %v5610 = vld [vmem:[%s3 + $0x178] sm:$0xf]
        %v5611 = vld [vmem:[%s3 + $0x17c] sm:$0xf]
        %v5612 = vld [vmem:[%s3 + $0x180] sm:$0xf]
        %v5613 = vld [vmem:[%s3 + $0x184] sm:$0xf]
        %v5614 = vld [vmem:[%s3 + $0x188] sm:$0xf]
        %v5615 = vld [vmem:[%s3 + $0x18c] sm:$0xf]
        %v5616 = vld [vmem:[%s3 + $0x190] sm:$0xf]
        %v5617 = vld [vmem:[%s3 + $0x194] sm:$0xf]
        %v5618 = vld [vmem:[%s3 + $0x198] sm:$0xf]
        %v5619 = vld [vmem:[%s3 + $0x19c] sm:$0xf]
        %v5620 = vld [vmem:[%s3 + $0x1a0] sm:$0xf]
        %v5621 = vld [vmem:[%s3 + $0x1a4] sm:$0xf]
        %v5622 = vld [vmem:[%s3 + $0x1a8] sm:$0xf]
        %v5623 = vld [vmem:[%s3 + $0x1ac] sm:$0xf]
        %v5624 = vld [vmem:[%s3 + $0x1b0] sm:$0xf]
        %v5625 = vld [vmem:[%s3 + $0x1b4] sm:$0xf]
        %v5626 = vld [vmem:[%s3 + $0x1b8] sm:$0xf]
        %v5627 = vld [vmem:[%s3 + $0x1bc] sm:$0xf]
        %v5628 = vld [vmem:[%s3 + $0x1c0] sm:$0xf]
        %v5629 = vld [vmem:[%s3 + $0x1c4] sm:$0xf]
        %v5630 = vld [vmem:[%s3 + $0x1c8] sm:$0xf]
        %v5631 = vld [vmem:[%s3 + $0x1cc] sm:$0xf]
        %v5632 = vld [vmem:[%s3 + $0x1d0] sm:$0xf]
        %v5633 = vld [vmem:[%s3 + $0x1d4] sm:$0xf]
        %v5634 = vld [vmem:[%s3 + $0x1d8] sm:$0xf]
        %v5635 = vld [vmem:[%s3 + $0x1dc] sm:$0xf]
        %v5636 = vld [vmem:[%s3 + $0x1e0] sm:$0xf]
        %v5637 = vld [vmem:[%s3 + $0x1e4] sm:$0xf]
        %v5638 = vld [vmem:[%s3 + $0x1e8] sm:$0xf]
        %v5639 = vld [vmem:[%s3 + $0x1ec] sm:$0xf]
        %v5640 = vld [vmem:[%s3 + $0x1f0] sm:$0xf]
        %v5641 = vld [vmem:[%s3 + $0x1f4] sm:$0xf]
        %v5642 = vld [vmem:[%s3 + $0x1f8] sm:$0xf]
        %v5643 = vld [vmem:[%s3 + $0x1fc] sm:$0xf]
        %v5644 = vld [vmem:[%s3 + $0x200] sm:$0xf]
        %v5645 = vld [vmem:[%s3 + $0x204] sm:$0xf]
        %v5646 = vld [vmem:[%s3 + $0x208] sm:$0xf]
        %v5647 = vld [vmem:[%s3 + $0x20c] sm:$0xf]
        %v5648 = vld [vmem:[%s3 + $0x210] sm:$0xf]
        %v5649 = vld [vmem:[%s3 + $0x214] sm:$0xf]
        %v5650 = vld [vmem:[%s3 + $0x218] sm:$0xf]
        %v5651 = vld [vmem:[%s3 + $0x21c] sm:$0xf]
        %v5652 = vld [vmem:[%s3 + $0x220] sm:$0xf]
        %v5653 = vld [vmem:[%s3 + $0x224] sm:$0xf]
        %v5654 = vld [vmem:[%s3 + $0x228] sm:$0xf]
        %v5655 = vld [vmem:[%s3 + $0x22c] sm:$0xf]
        %v5656 = vld [vmem:[%s3 + $0x230] sm:$0xf]
        %v5657 = vld [vmem:[%s3 + $0x234] sm:$0xf]
        %v5658 = vld [vmem:[%s3 + $0x238] sm:$0xf]
        %v5659 = vld [vmem:[%s3 + $0x23c] sm:$0xf]
        %v5660 = vld [vmem:[%s4] sm:$0x1]
        %v5662 = vperm.slane %v5660, 0
        %v5808 = vunpack.c.l.b16 %v5516
        %v5809 = vunpack.c.l.b16 %v5517
        %v5810 = vunpack.c.l.b16 %v5518
        %v5811 = vunpack.c.l.b16 %v5519
        %v5812 = vunpack.c.l.b16 %v5520
        %v5813 = vunpack.c.l.b16 %v5521
        %v5814 = vunpack.c.l.b16 %v5522
        %v5815 = vunpack.c.l.b16 %v5523
        %v5816 = vunpack.c.l.b16 %v5524
        %v5817 = vunpack.c.l.b16 %v5525
        %v5818 = vunpack.c.l.b16 %v5526
        %v5819 = vunpack.c.l.b16 %v5527
        %v5820 = vunpack.c.l.b16 %v5528
        %v5821 = vunpack.c.l.b16 %v5529
        %v5822 = vunpack.c.l.b16 %v5530
        %v5823 = vunpack.c.l.b16 %v5531
        %v5824 = vunpack.c.l.b16 %v5532
        %v5825 = vunpack.c.l.b16 %v5533
        %v5826 = vunpack.c.l.b16 %v5534
        %v5827 = vunpack.c.l.b16 %v5535
        %v5828 = vunpack.c.l.b16 %v5536
        %v5829 = vunpack.c.l.b16 %v5537
        %v5830 = vunpack.c.l.b16 %v5538
        %v5831 = vunpack.c.l.b16 %v5539
        %v5832 = vunpack.c.l.b16 %v5540
        %v5833 = vunpack.c.l.b16 %v5541
        %v5834 = vunpack.c.l.b16 %v5542
        %v5835 = vunpack.c.l.b16 %v5543
        %v5836 = vunpack.c.l.b16 %v5544
        %v5837 = vunpack.c.l.b16 %v5545
        %v5838 = vunpack.c.l.b16 %v5546
        %v5839 = vunpack.c.l.b16 %v5547
        %v5840 = vunpack.c.l.b16 %v5548
        %v5841 = vunpack.c.l.b16 %v5549
        %v5842 = vunpack.c.l.b16 %v5550
        %v5843 = vunpack.c.l.b16 %v5551
        %v5844 = vunpack.c.l.b16 %v5552
        %v5845 = vunpack.c.l.b16 %v5553
        %v5846 = vunpack.c.l.b16 %v5554
        %v5847 = vunpack.c.l.b16 %v5555
        %v5848 = vunpack.c.l.b16 %v5556
        %v5849 = vunpack.c.l.b16 %v5557
        %v5850 = vunpack.c.l.b16 %v5558
        %v5851 = vunpack.c.l.b16 %v5559
        %v5852 = vunpack.c.l.b16 %v5560
        %v5853 = vunpack.c.l.b16 %v5561
        %v5854 = vunpack.c.l.b16 %v5562
        %v5855 = vunpack.c.l.b16 %v5563
        %v5856 = vunpack.c.l.b16 %v5564
        %v5857 = vunpack.c.l.b16 %v5565
        %v5858 = vunpack.c.l.b16 %v5566
        %v5859 = vunpack.c.l.b16 %v5567
        %v5860 = vunpack.c.l.b16 %v5568
        %v5861 = vunpack.c.l.b16 %v5569
        %v5862 = vunpack.c.l.b16 %v5570
        %v5863 = vunpack.c.l.b16 %v5571
        %v5864 = vunpack.c.l.b16 %v5572
        %v5865 = vunpack.c.l.b16 %v5573
        %v5866 = vunpack.c.l.b16 %v5574
        %v5867 = vunpack.c.l.b16 %v5575
        %v5868 = vunpack.c.l.b16 %v5576
        %v5869 = vunpack.c.l.b16 %v5577
        %v5870 = vunpack.c.l.b16 %v5578
        %v5871 = vunpack.c.l.b16 %v5579
        %v5872 = vunpack.c.l.b16 %v5580
        %v5873 = vunpack.c.l.b16 %v5581
        %v5874 = vunpack.c.l.b16 %v5582
        %v5875 = vunpack.c.l.b16 %v5583
        %v5876 = vunpack.c.l.b16 %v5584
        %v5877 = vunpack.c.l.b16 %v5585
        %v5878 = vunpack.c.l.b16 %v5586
        %v5879 = vunpack.c.l.b16 %v5587
        %v5880 = vunpack.c.l.b16 %v5588
        %v5881 = vunpack.c.l.b16 %v5589
        %v5882 = vunpack.c.l.b16 %v5590
        %v5883 = vunpack.c.l.b16 %v5591
        %v5884 = vunpack.c.l.b16 %v5592
        %v5885 = vunpack.c.l.b16 %v5593
        %v5886 = vunpack.c.l.b16 %v5594
        %v5887 = vunpack.c.l.b16 %v5595
        %v5888 = vunpack.c.l.b16 %v5596
        %v5889 = vunpack.c.l.b16 %v5597
        %v5890 = vunpack.c.l.b16 %v5598
        %v5891 = vunpack.c.l.b16 %v5599
        %v5892 = vunpack.c.l.b16 %v5600
        %v5893 = vunpack.c.l.b16 %v5601
        %v5894 = vunpack.c.l.b16 %v5602
        %v5895 = vunpack.c.l.b16 %v5603
        %v5896 = vunpack.c.l.b16 %v5604
        %v5897 = vunpack.c.l.b16 %v5605
        %v5898 = vunpack.c.l.b16 %v5606
        %v5899 = vunpack.c.l.b16 %v5607
        %v5900 = vunpack.c.l.b16 %v5608
        %v5901 = vunpack.c.l.b16 %v5609
        %v5902 = vunpack.c.l.b16 %v5610
        %v5903 = vunpack.c.l.b16 %v5611
        %v5904 = vunpack.c.l.b16 %v5612
        %v5905 = vunpack.c.l.b16 %v5613
        %v5906 = vunpack.c.l.b16 %v5614
        %v5907 = vunpack.c.l.b16 %v5615
        %v5908 = vunpack.c.l.b16 %v5616
        %v5909 = vunpack.c.l.b16 %v5617
        %v5910 = vunpack.c.l.b16 %v5618
        %v5911 = vunpack.c.l.b16 %v5619
        %v5912 = vunpack.c.l.b16 %v5620
        %v5913 = vunpack.c.l.b16 %v5621
        %v5914 = vunpack.c.l.b16 %v5622
        %v5915 = vunpack.c.l.b16 %v5623
        %v5916 = vunpack.c.l.b16 %v5624
        %v5917 = vunpack.c.l.b16 %v5625
        %v5918 = vunpack.c.l.b16 %v5626
        %v5919 = vunpack.c.l.b16 %v5627
        %v5920 = vunpack.c.l.b16 %v5628
        %v5921 = vunpack.c.l.b16 %v5629
        %v5922 = vunpack.c.l.b16 %v5630
        %v5923 = vunpack.c.l.b16 %v5631
        %v5924 = vunpack.c.l.b16 %v5632
        %v5925 = vunpack.c.l.b16 %v5633
        %v5926 = vunpack.c.l.b16 %v5634
        %v5927 = vunpack.c.l.b16 %v5635
        %v5928 = vunpack.c.l.b16 %v5636
        %v5929 = vunpack.c.l.b16 %v5637
        %v5930 = vunpack.c.l.b16 %v5638
        %v5931 = vunpack.c.l.b16 %v5639
        %v5932 = vunpack.c.l.b16 %v5640
        %v5933 = vunpack.c.l.b16 %v5641
        %v5934 = vunpack.c.l.b16 %v5642
        %v5935 = vunpack.c.l.b16 %v5643
        %v5936 = vunpack.c.l.b16 %v5644
        %v5937 = vunpack.c.l.b16 %v5645
        %v5938 = vunpack.c.l.b16 %v5646
        %v5939 = vunpack.c.l.b16 %v5647
        %v5940 = vunpack.c.l.b16 %v5648
        %v5941 = vunpack.c.l.b16 %v5649
        %v5942 = vunpack.c.l.b16 %v5650
        %v5943 = vunpack.c.l.b16 %v5651
        %v5944 = vunpack.c.l.b16 %v5652
        %v5945 = vunpack.c.l.b16 %v5653
        %v5946 = vunpack.c.l.b16 %v5654
        %v5947 = vunpack.c.l.b16 %v5655
        %v5948 = vunpack.c.l.b16 %v5656
        %v5949 = vunpack.c.l.b16 %v5657
        %v5950 = vunpack.c.l.b16 %v5658
        %v5951 = vunpack.c.l.b16 %v5659
        %v5952 = vpack.c.b16 %v5809, %v5808
        %v5953 = vpack.c.b16 %v5811, %v5810
        %v5954 = vpack.c.b16 %v5813, %v5812
        %v5955 = vpack.c.b16 %v5815, %v5814
        %v5956 = vpack.c.b16 %v5817, %v5816
        %v5957 = vpack.c.b16 %v5819, %v5818
        %v5958 = vpack.c.b16 %v5821, %v5820
        %v5959 = vpack.c.b16 %v5823, %v5822
        %v5960 = vpack.c.b16 %v5825, %v5824
        %v5961 = vpack.c.b16 %v5827, %v5826
        %v5962 = vpack.c.b16 %v5829, %v5828
        %v5963 = vpack.c.b16 %v5831, %v5830
        %v5964 = vpack.c.b16 %v5833, %v5832
        %v5965 = vpack.c.b16 %v5835, %v5834
        %v5966 = vpack.c.b16 %v5837, %v5836
        %v5967 = vpack.c.b16 %v5839, %v5838
        %v5968 = vpack.c.b16 %v5841, %v5840
        %v5969 = vpack.c.b16 %v5843, %v5842
        %v5970 = vpack.c.b16 %v5845, %v5844
        %v5971 = vpack.c.b16 %v5847, %v5846
        %v5972 = vpack.c.b16 %v5849, %v5848
        %v5973 = vpack.c.b16 %v5851, %v5850
        %v5974 = vpack.c.b16 %v5853, %v5852
        %v5975 = vpack.c.b16 %v5855, %v5854
        %v5976 = vpack.c.b16 %v5857, %v5856
        %v5977 = vpack.c.b16 %v5859, %v5858
        %v5978 = vpack.c.b16 %v5861, %v5860
        %v5979 = vpack.c.b16 %v5863, %v5862
        %v5980 = vpack.c.b16 %v5865, %v5864
        %v5981 = vpack.c.b16 %v5867, %v5866
        %v5982 = vpack.c.b16 %v5869, %v5868
        %v5983 = vpack.c.b16 %v5871, %v5870
        %v5984 = vpack.c.b16 %v5873, %v5872
        %v5985 = vpack.c.b16 %v5875, %v5874
        %v5986 = vpack.c.b16 %v5877, %v5876
        %v5987 = vpack.c.b16 %v5879, %v5878
        %v5988 = vpack.c.b16 %v5881, %v5880
        %v5989 = vpack.c.b16 %v5883, %v5882
        %v5990 = vpack.c.b16 %v5885, %v5884
        %v5991 = vpack.c.b16 %v5887, %v5886
        %v5992 = vpack.c.b16 %v5889, %v5888
        %v5993 = vpack.c.b16 %v5891, %v5890
        %v5994 = vpack.c.b16 %v5893, %v5892
        %v5995 = vpack.c.b16 %v5895, %v5894
        %v5996 = vpack.c.b16 %v5897, %v5896
        %v5997 = vpack.c.b16 %v5899, %v5898
        %v5998 = vpack.c.b16 %v5901, %v5900
        %v5999 = vpack.c.b16 %v5903, %v5902
        %v6000 = vpack.c.b16 %v5905, %v5904
        %v6001 = vpack.c.b16 %v5907, %v5906
        %v6002 = vpack.c.b16 %v5909, %v5908
        %v6003 = vpack.c.b16 %v5911, %v5910
        %v6004 = vpack.c.b16 %v5913, %v5912
        %v6005 = vpack.c.b16 %v5915, %v5914
        %v6006 = vpack.c.b16 %v5917, %v5916
        %v6007 = vpack.c.b16 %v5919, %v5918
        %v6008 = vpack.c.b16 %v5921, %v5920
        %v6009 = vpack.c.b16 %v5923, %v5922
        %v6010 = vpack.c.b16 %v5925, %v5924
        %v6011 = vpack.c.b16 %v5927, %v5926
        %v6012 = vpack.c.b16 %v5929, %v5928
        %v6013 = vpack.c.b16 %v5931, %v5930
        %v6014 = vpack.c.b16 %v5933, %v5932
        %v6015 = vpack.c.b16 %v5935, %v5934
        %v6016 = vpack.c.b16 %v5937, %v5936
        %v6017 = vpack.c.b16 %v5939, %v5938
        %v6018 = vpack.c.b16 %v5941, %v5940
        %v6019 = vpack.c.b16 %v5943, %v5942
        %v6020 = vpack.c.b16 %v5945, %v5944
        %v6021 = vpack.c.b16 %v5947, %v5946
        %v6022 = vpack.c.b16 %v5949, %v5948
        %v6023 = vpack.c.b16 %v5951, %v5950
        %6096 = vmatpush.bf16.msra.mxu0 %v5959
        %6097 = vmatpush.bf16.msra.mxu0 %v5958
        %6098 = vmatpush.bf16.msra.mxu0 %v5957
        %6099 = vmatpush.bf16.msra.mxu0 %v5956
        %6100 = vmatpush.bf16.msra.mxu0 %v5955
        %6101 = vmatpush.bf16.msra.mxu0 %v5954
        %6102 = vmatpush.bf16.msra.mxu0 %v5953
        %6103 = vmatpush.bf16.msra.mxu0 %v5952
        %6104 = vmatmul.bf16.gmra.mxu0 %v4516
        %v6105 = vpop.f32.mrf.mxu0
        %v6106 = vadd.f32 %v5662, %v6105
        %v6107 = vpop.f32.mrf.mxu0
        %v6108 = vadd.f32 %v5662, %v6107
        %6109 = vmatmul.bf16.gmra.mxu0 %v4517
        %v6110 = vpop.f32.mrf.mxu0
        %v6111 = vadd.f32 %v5662, %v6110
        %v6112 = vpop.f32.mrf.mxu0
        %v6113 = vadd.f32 %v5662, %v6112
        %6114 = vmatmul.bf16.gmra.mxu0 %v4518
        %v6115 = vpop.f32.mrf.mxu0
        %v6116 = vadd.f32 %v5662, %v6115
        %v6117 = vpop.f32.mrf.mxu0
        %v6118 = vadd.f32 %v5662, %v6117
        %6119 = vmatmul.bf16.gmra.mxu0 %v4519
        %v6120 = vpop.f32.mrf.mxu0
        %v6121 = vadd.f32 %v5662, %v6120
        %v6122 = vpop.f32.mrf.mxu0
        %v6123 = vadd.f32 %v5662, %v6122
        %6124 = vmatmul.bf16.gmra.mxu0 %v4520
        %v6125 = vpop.f32.mrf.mxu0
        %v6126 = vadd.f32 %v5662, %v6125
        %v6127 = vpop.f32.mrf.mxu0
        %v6128 = vadd.f32 %v5662, %v6127
        %6129 = vmatmul.bf16.gmra.mxu0 %v4521
        %v6130 = vpop.f32.mrf.mxu0
        %v6131 = vadd.f32 %v5662, %v6130
        %v6132 = vpop.f32.mrf.mxu0
        %v6133 = vadd.f32 %v5662, %v6132
        %6134 = vmatmul.bf16.gmra.mxu0 %v4522
        %v6135 = vpop.f32.mrf.mxu0
        %v6136 = vadd.f32 %v5662, %v6135
        %v6137 = vpop.f32.mrf.mxu0
        %v6138 = vadd.f32 %v5662, %v6137
        %6139 = vmatmul.bf16.gmra.mxu0 %v4523
        %v6140 = vpop.f32.mrf.mxu0
        %v6141 = vadd.f32 %v5662, %v6140
        %v6142 = vpop.f32.mrf.mxu0
        %v6143 = vadd.f32 %v5662, %v6142
        %6144 = vmatmul.bf16.gmra.mxu0 %v4524
        %v6145 = vpop.f32.mrf.mxu0
        %v6146 = vadd.f32 %v5662, %v6145
        %v6147 = vpop.f32.mrf.mxu0
        %v6148 = vadd.f32 %v5662, %v6147
        %6149 = vmatmul.bf16.gmra.mxu0 %v4525
        %v6150 = vpop.f32.mrf.mxu0
        %v6151 = vadd.f32 %v5662, %v6150
        %v6152 = vpop.f32.mrf.mxu0
        %v6153 = vadd.f32 %v5662, %v6152
        %6154 = vmatmul.bf16.gmra.mxu0 %v4526
        %v6155 = vpop.f32.mrf.mxu0
        %v6156 = vadd.f32 %v5662, %v6155
        %v6157 = vpop.f32.mrf.mxu0
        %v6158 = vadd.f32 %v5662, %v6157
        %6159 = vmatmul.bf16.gmra.mxu0 %v4527
        %v6160 = vpop.f32.mrf.mxu0
        %v6161 = vadd.f32 %v5662, %v6160
        %v6162 = vpop.f32.mrf.mxu0
        %v6163 = vadd.f32 %v5662, %v6162
        %6164 = vmatmul.bf16.gmra.mxu0 %v4528
        %v6165 = vpop.f32.mrf.mxu0
        %v6166 = vadd.f32 %v5662, %v6165
        %v6167 = vpop.f32.mrf.mxu0
        %v6168 = vadd.f32 %v5662, %v6167
        %6169 = vmatmul.bf16.gmra.mxu0 %v4529
        %v6170 = vpop.f32.mrf.mxu0
        %v6171 = vadd.f32 %v5662, %v6170
        %v6172 = vpop.f32.mrf.mxu0
        %v6173 = vadd.f32 %v5662, %v6172
        %6174 = vmatmul.bf16.gmra.mxu0 %v4530
        %v6175 = vpop.f32.mrf.mxu0
        %v6176 = vadd.f32 %v5662, %v6175
        %v6177 = vpop.f32.mrf.mxu0
        %v6178 = vadd.f32 %v5662, %v6177
        %6179 = vmatmul.bf16.gmra.mxu0 %v4531
        %v6180 = vpop.f32.mrf.mxu0
        %v6181 = vadd.f32 %v5662, %v6180
        %v6182 = vpop.f32.mrf.mxu0
        %v6183 = vadd.f32 %v5662, %v6182
        %6184 = vmatmul.bf16.gmra.mxu0 %v4532
        %v6185 = vpop.f32.mrf.mxu0
        %v6186 = vadd.f32 %v5662, %v6185
        %v6187 = vpop.f32.mrf.mxu0
        %v6188 = vadd.f32 %v5662, %v6187
        %6189 = vmatmul.bf16.gmra.mxu0 %v4533
        %v6190 = vpop.f32.mrf.mxu0
        %v6191 = vadd.f32 %v5662, %v6190
        %v6192 = vpop.f32.mrf.mxu0
        %v6193 = vadd.f32 %v5662, %v6192
        %6194 = vmatmul.bf16.gmra.mxu0 %v4534
        %v6195 = vpop.f32.mrf.mxu0
        %v6196 = vadd.f32 %v5662, %v6195
        %v6197 = vpop.f32.mrf.mxu0
        %v6198 = vadd.f32 %v5662, %v6197
        %6199 = vmatmul.bf16.gmra.mxu0 %v4535
        %v6200 = vpop.f32.mrf.mxu0
        %v6201 = vadd.f32 %v5662, %v6200
        %v6202 = vpop.f32.mrf.mxu0
        %v6203 = vadd.f32 %v5662, %v6202
        %6204 = vdwg.mxu0
        %6205 = vmatpush.bf16.msra.mxu0 %v5967
        %6206 = vmatpush.bf16.msra.mxu0 %v5966
        %6207 = vmatpush.bf16.msra.mxu0 %v5965
        %6208 = vmatpush.bf16.msra.mxu0 %v5964
        %6209 = vmatpush.bf16.msra.mxu0 %v5963
        %6210 = vmatpush.bf16.msra.mxu0 %v5962
        %6211 = vmatpush.bf16.msra.mxu0 %v5961
        %6212 = vmatpush.bf16.msra.mxu0 %v5960
        %6213 = vmatmul.bf16.gmra.mxu0 %v4636
        %v6214 = vpop.f32.mrf.mxu0
        %v6215 = vadd.f32 %v6106, %v6214
        %v6216 = vpop.f32.mrf.mxu0
        %v6217 = vadd.f32 %v6108, %v6216
        %6218 = vmatmul.bf16.gmra.mxu0 %v4637
        %v6219 = vpop.f32.mrf.mxu0
        %v6220 = vadd.f32 %v6111, %v6219
        %v6221 = vpop.f32.mrf.mxu0
        %v6222 = vadd.f32 %v6113, %v6221
        %6223 = vmatmul.bf16.gmra.mxu0 %v4638
        %v6224 = vpop.f32.mrf.mxu0
        %v6225 = vadd.f32 %v6116, %v6224
        %v6226 = vpop.f32.mrf.mxu0
        %v6227 = vadd.f32 %v6118, %v6226
        %6228 = vmatmul.bf16.gmra.mxu0 %v4639
        %v6229 = vpop.f32.mrf.mxu0
        %v6230 = vadd.f32 %v6121, %v6229
        %v6231 = vpop.f32.mrf.mxu0
        %v6232 = vadd.f32 %v6123, %v6231
        %6233 = vmatmul.bf16.gmra.mxu0 %v4640
        %v6234 = vpop.f32.mrf.mxu0
        %v6235 = vadd.f32 %v6126, %v6234
        %v6236 = vpop.f32.mrf.mxu0
        %v6237 = vadd.f32 %v6128, %v6236
        %6238 = vmatmul.bf16.gmra.mxu0 %v4641
        %v6239 = vpop.f32.mrf.mxu0
        %v6240 = vadd.f32 %v6131, %v6239
        %v6241 = vpop.f32.mrf.mxu0
        %v6242 = vadd.f32 %v6133, %v6241
        %6243 = vmatmul.bf16.gmra.mxu0 %v4642
        %v6244 = vpop.f32.mrf.mxu0
        %v6245 = vadd.f32 %v6136, %v6244
        %v6246 = vpop.f32.mrf.mxu0
        %v6247 = vadd.f32 %v6138, %v6246
        %6248 = vmatmul.bf16.gmra.mxu0 %v4643
        %v6249 = vpop.f32.mrf.mxu0
        %v6250 = vadd.f32 %v6141, %v6249
        %v6251 = vpop.f32.mrf.mxu0
        %v6252 = vadd.f32 %v6143, %v6251
        %6253 = vmatmul.bf16.gmra.mxu0 %v4644
        %v6254 = vpop.f32.mrf.mxu0
        %v6255 = vadd.f32 %v6146, %v6254
        %v6256 = vpop.f32.mrf.mxu0
        %v6257 = vadd.f32 %v6148, %v6256
        %6258 = vmatmul.bf16.gmra.mxu0 %v4645
        %v6259 = vpop.f32.mrf.mxu0
        %v6260 = vadd.f32 %v6151, %v6259
        %v6261 = vpop.f32.mrf.mxu0
        %v6262 = vadd.f32 %v6153, %v6261
        %6263 = vmatmul.bf16.gmra.mxu0 %v4646
        %v6264 = vpop.f32.mrf.mxu0
        %v6265 = vadd.f32 %v6156, %v6264
        %v6266 = vpop.f32.mrf.mxu0
        %v6267 = vadd.f32 %v6158, %v6266
        %6268 = vmatmul.bf16.gmra.mxu0 %v4647
        %v6269 = vpop.f32.mrf.mxu0
        %v6270 = vadd.f32 %v6161, %v6269
        %v6271 = vpop.f32.mrf.mxu0
        %v6272 = vadd.f32 %v6163, %v6271
        %6273 = vmatmul.bf16.gmra.mxu0 %v4648
        %v6274 = vpop.f32.mrf.mxu0
        %v6275 = vadd.f32 %v6166, %v6274
        %v6276 = vpop.f32.mrf.mxu0
        %v6277 = vadd.f32 %v6168, %v6276
        %6278 = vmatmul.bf16.gmra.mxu0 %v4649
        %v6279 = vpop.f32.mrf.mxu0
        %v6280 = vadd.f32 %v6171, %v6279
        %v6281 = vpop.f32.mrf.mxu0
        %v6282 = vadd.f32 %v6173, %v6281
        %6283 = vmatmul.bf16.gmra.mxu0 %v4650
        %v6284 = vpop.f32.mrf.mxu0
        %v6285 = vadd.f32 %v6176, %v6284
        %v6286 = vpop.f32.mrf.mxu0
        %v6287 = vadd.f32 %v6178, %v6286
        %6288 = vmatmul.bf16.gmra.mxu0 %v4651
        %v6289 = vpop.f32.mrf.mxu0
        %v6290 = vadd.f32 %v6181, %v6289
        %v6291 = vpop.f32.mrf.mxu0
        %v6292 = vadd.f32 %v6183, %v6291
        %6293 = vmatmul.bf16.gmra.mxu0 %v4652
        %v6294 = vpop.f32.mrf.mxu0
        %v6295 = vadd.f32 %v6186, %v6294
        %v6296 = vpop.f32.mrf.mxu0
        %v6297 = vadd.f32 %v6188, %v6296
        %6298 = vmatmul.bf16.gmra.mxu0 %v4653
        %v6299 = vpop.f32.mrf.mxu0
        %v6300 = vadd.f32 %v6191, %v6299
        %v6301 = vpop.f32.mrf.mxu0
        %v6302 = vadd.f32 %v6193, %v6301
        %6303 = vmatmul.bf16.gmra.mxu0 %v4654
        %v6304 = vpop.f32.mrf.mxu0
        %v6305 = vadd.f32 %v6196, %v6304
        %v6306 = vpop.f32.mrf.mxu0
        %v6307 = vadd.f32 %v6198, %v6306
        %6308 = vmatmul.bf16.gmra.mxu0 %v4655
        %v6309 = vpop.f32.mrf.mxu0
        %v6310 = vadd.f32 %v6201, %v6309
        %v6311 = vpop.f32.mrf.mxu0
        %v6312 = vadd.f32 %v6203, %v6311
        %6313 = vdwg.mxu0
        %6314 = vmatpush.bf16.msra.mxu0 %v5975
        %6315 = vmatpush.bf16.msra.mxu0 %v5974
        %6316 = vmatpush.bf16.msra.mxu0 %v5973
        %6317 = vmatpush.bf16.msra.mxu0 %v5972
        %6318 = vmatpush.bf16.msra.mxu0 %v5971
        %6319 = vmatpush.bf16.msra.mxu0 %v5970
        %6320 = vmatpush.bf16.msra.mxu0 %v5969
        %6321 = vmatpush.bf16.msra.mxu0 %v5968
        %6322 = vmatmul.bf16.gmra.mxu0 %v4756
        %v6323 = vpop.f32.mrf.mxu0
        %v6324 = vadd.f32 %v6215, %v6323
        %v6325 = vpop.f32.mrf.mxu0
        %v6326 = vadd.f32 %v6217, %v6325
        %6327 = vmatmul.bf16.gmra.mxu0 %v4757
        %v6328 = vpop.f32.mrf.mxu0
        %v6329 = vadd.f32 %v6220, %v6328
        %v6330 = vpop.f32.mrf.mxu0
        %v6331 = vadd.f32 %v6222, %v6330
        %6332 = vmatmul.bf16.gmra.mxu0 %v4758
        %v6333 = vpop.f32.mrf.mxu0
        %v6334 = vadd.f32 %v6225, %v6333
        %v6335 = vpop.f32.mrf.mxu0
        %v6336 = vadd.f32 %v6227, %v6335
        %6337 = vmatmul.bf16.gmra.mxu0 %v4759
        %v6338 = vpop.f32.mrf.mxu0
        %v6339 = vadd.f32 %v6230, %v6338
        %v6340 = vpop.f32.mrf.mxu0
        %v6341 = vadd.f32 %v6232, %v6340
        %6342 = vmatmul.bf16.gmra.mxu0 %v4760
        %v6343 = vpop.f32.mrf.mxu0
        %v6344 = vadd.f32 %v6235, %v6343
        %v6345 = vpop.f32.mrf.mxu0
        %v6346 = vadd.f32 %v6237, %v6345
        %6347 = vmatmul.bf16.gmra.mxu0 %v4761
        %v6348 = vpop.f32.mrf.mxu0
        %v6349 = vadd.f32 %v6240, %v6348
        %v6350 = vpop.f32.mrf.mxu0
        %v6351 = vadd.f32 %v6242, %v6350
        %6352 = vmatmul.bf16.gmra.mxu0 %v4762
        %v6353 = vpop.f32.mrf.mxu0
        %v6354 = vadd.f32 %v6245, %v6353
        %v6355 = vpop.f32.mrf.mxu0
        %v6356 = vadd.f32 %v6247, %v6355
        %6357 = vmatmul.bf16.gmra.mxu0 %v4763
        %v6358 = vpop.f32.mrf.mxu0
        %v6359 = vadd.f32 %v6250, %v6358
        %v6360 = vpop.f32.mrf.mxu0
        %v6361 = vadd.f32 %v6252, %v6360
        %6362 = vmatmul.bf16.gmra.mxu0 %v4764
        %v6363 = vpop.f32.mrf.mxu0
        %v6364 = vadd.f32 %v6255, %v6363
        %v6365 = vpop.f32.mrf.mxu0
        %v6366 = vadd.f32 %v6257, %v6365
        %6367 = vmatmul.bf16.gmra.mxu0 %v4765
        %v6368 = vpop.f32.mrf.mxu0
        %v6369 = vadd.f32 %v6260, %v6368
        %v6370 = vpop.f32.mrf.mxu0
        %v6371 = vadd.f32 %v6262, %v6370
        %6372 = vmatmul.bf16.gmra.mxu0 %v4766
        %v6373 = vpop.f32.mrf.mxu0
        %v6374 = vadd.f32 %v6265, %v6373
        %v6375 = vpop.f32.mrf.mxu0
        %v6376 = vadd.f32 %v6267, %v6375
        %6377 = vmatmul.bf16.gmra.mxu0 %v4767
        %v6378 = vpop.f32.mrf.mxu0
        %v6379 = vadd.f32 %v6270, %v6378
        %v6380 = vpop.f32.mrf.mxu0
        %v6381 = vadd.f32 %v6272, %v6380
        %6382 = vmatmul.bf16.gmra.mxu0 %v4768
        %v6383 = vpop.f32.mrf.mxu0
        %v6384 = vadd.f32 %v6275, %v6383
        %v6385 = vpop.f32.mrf.mxu0
        %v6386 = vadd.f32 %v6277, %v6385
        %6387 = vmatmul.bf16.gmra.mxu0 %v4769
        %v6388 = vpop.f32.mrf.mxu0
        %v6389 = vadd.f32 %v6280, %v6388
        %v6390 = vpop.f32.mrf.mxu0
        %v6391 = vadd.f32 %v6282, %v6390
        %6392 = vmatmul.bf16.gmra.mxu0 %v4770
        %v6393 = vpop.f32.mrf.mxu0
        %v6394 = vadd.f32 %v6285, %v6393
        %v6395 = vpop.f32.mrf.mxu0
        %v6396 = vadd.f32 %v6287, %v6395
        %6397 = vmatmul.bf16.gmra.mxu0 %v4771
        %v6398 = vpop.f32.mrf.mxu0
        %v6399 = vadd.f32 %v6290, %v6398
        %v6400 = vpop.f32.mrf.mxu0
        %v6401 = vadd.f32 %v6292, %v6400
        %6402 = vmatmul.bf16.gmra.mxu0 %v4772
        %v6403 = vpop.f32.mrf.mxu0
        %v6404 = vadd.f32 %v6295, %v6403
        %v6405 = vpop.f32.mrf.mxu0
        %v6406 = vadd.f32 %v6297, %v6405
        %6407 = vmatmul.bf16.gmra.mxu0 %v4773
        %v6408 = vpop.f32.mrf.mxu0
        %v6409 = vadd.f32 %v6300, %v6408
        %v6410 = vpop.f32.mrf.mxu0
        %v6411 = vadd.f32 %v6302, %v6410
        %6412 = vmatmul.bf16.gmra.mxu0 %v4774
        %v6413 = vpop.f32.mrf.mxu0
        %v6414 = vadd.f32 %v6305, %v6413
        %v6415 = vpop.f32.mrf.mxu0
        %v6416 = vadd.f32 %v6307, %v6415
        %6417 = vmatmul.bf16.gmra.mxu0 %v4775
        %v6418 = vpop.f32.mrf.mxu0
        %v6419 = vadd.f32 %v6310, %v6418
        %v6420 = vpop.f32.mrf.mxu0
        %v6421 = vadd.f32 %v6312, %v6420
        %6422 = vdwg.mxu0
        %6423 = vmatpush.bf16.msra.mxu0 %v5983
        %6424 = vmatpush.bf16.msra.mxu0 %v5982
        %6425 = vmatpush.bf16.msra.mxu0 %v5981
        %6426 = vmatpush.bf16.msra.mxu0 %v5980
        %6427 = vmatpush.bf16.msra.mxu0 %v5979
        %6428 = vmatpush.bf16.msra.mxu0 %v5978
        %6429 = vmatpush.bf16.msra.mxu0 %v5977
        %6430 = vmatpush.bf16.msra.mxu0 %v5976
        %6431 = vmatmul.bf16.gmra.mxu0 %v4876
        %v6432 = vpop.f32.mrf.mxu0
        %v6433 = vadd.f32 %v6324, %v6432
        %v6434 = vpop.f32.mrf.mxu0
        %v6435 = vadd.f32 %v6326, %v6434
        %6436 = vmatmul.bf16.gmra.mxu0 %v4877
        %v6437 = vpop.f32.mrf.mxu0
        %v6438 = vadd.f32 %v6329, %v6437
        %v6439 = vpop.f32.mrf.mxu0
        %v6440 = vadd.f32 %v6331, %v6439
        %6441 = vmatmul.bf16.gmra.mxu0 %v4878
        %v6442 = vpop.f32.mrf.mxu0
        %v6443 = vadd.f32 %v6334, %v6442
        %v6444 = vpop.f32.mrf.mxu0
        %v6445 = vadd.f32 %v6336, %v6444
        %6446 = vmatmul.bf16.gmra.mxu0 %v4879
        %v6447 = vpop.f32.mrf.mxu0
        %v6448 = vadd.f32 %v6339, %v6447
        %v6449 = vpop.f32.mrf.mxu0
        %v6450 = vadd.f32 %v6341, %v6449
        %6451 = vmatmul.bf16.gmra.mxu0 %v4880
        %v6452 = vpop.f32.mrf.mxu0
        %v6453 = vadd.f32 %v6344, %v6452
        %v6454 = vpop.f32.mrf.mxu0
        %v6455 = vadd.f32 %v6346, %v6454
        %6456 = vmatmul.bf16.gmra.mxu0 %v4881
        %v6457 = vpop.f32.mrf.mxu0
        %v6458 = vadd.f32 %v6349, %v6457
        %v6459 = vpop.f32.mrf.mxu0
        %v6460 = vadd.f32 %v6351, %v6459
        %6461 = vmatmul.bf16.gmra.mxu0 %v4882
        %v6462 = vpop.f32.mrf.mxu0
        %v6463 = vadd.f32 %v6354, %v6462
        %v6464 = vpop.f32.mrf.mxu0
        %v6465 = vadd.f32 %v6356, %v6464
        %6466 = vmatmul.bf16.gmra.mxu0 %v4883
        %v6467 = vpop.f32.mrf.mxu0
        %v6468 = vadd.f32 %v6359, %v6467
        %v6469 = vpop.f32.mrf.mxu0
        %v6470 = vadd.f32 %v6361, %v6469
        %6471 = vmatmul.bf16.gmra.mxu0 %v4884
        %v6472 = vpop.f32.mrf.mxu0
        %v6473 = vadd.f32 %v6364, %v6472
        %v6474 = vpop.f32.mrf.mxu0
        %v6475 = vadd.f32 %v6366, %v6474
        %6476 = vmatmul.bf16.gmra.mxu0 %v4885
        %v6477 = vpop.f32.mrf.mxu0
        %v6478 = vadd.f32 %v6369, %v6477
        %v6479 = vpop.f32.mrf.mxu0
        %v6480 = vadd.f32 %v6371, %v6479
        %6481 = vmatmul.bf16.gmra.mxu0 %v4886
        %v6482 = vpop.f32.mrf.mxu0
        %v6483 = vadd.f32 %v6374, %v6482
        %v6484 = vpop.f32.mrf.mxu0
        %v6485 = vadd.f32 %v6376, %v6484
        %6486 = vmatmul.bf16.gmra.mxu0 %v4887
        %v6487 = vpop.f32.mrf.mxu0
        %v6488 = vadd.f32 %v6379, %v6487
        %v6489 = vpop.f32.mrf.mxu0
        %v6490 = vadd.f32 %v6381, %v6489
        %6491 = vmatmul.bf16.gmra.mxu0 %v4888
        %v6492 = vpop.f32.mrf.mxu0
        %v6493 = vadd.f32 %v6384, %v6492
        %v6494 = vpop.f32.mrf.mxu0
        %v6495 = vadd.f32 %v6386, %v6494
        %6496 = vmatmul.bf16.gmra.mxu0 %v4889
        %v6497 = vpop.f32.mrf.mxu0
        %v6498 = vadd.f32 %v6389, %v6497
        %v6499 = vpop.f32.mrf.mxu0
        %v6500 = vadd.f32 %v6391, %v6499
        %6501 = vmatmul.bf16.gmra.mxu0 %v4890
        %v6502 = vpop.f32.mrf.mxu0
        %v6503 = vadd.f32 %v6394, %v6502
        %v6504 = vpop.f32.mrf.mxu0
        %v6505 = vadd.f32 %v6396, %v6504
        %6506 = vmatmul.bf16.gmra.mxu0 %v4891
        %v6507 = vpop.f32.mrf.mxu0
        %v6508 = vadd.f32 %v6399, %v6507
        %v6509 = vpop.f32.mrf.mxu0
        %v6510 = vadd.f32 %v6401, %v6509
        %6511 = vmatmul.bf16.gmra.mxu0 %v4892
        %v6512 = vpop.f32.mrf.mxu0
        %v6513 = vadd.f32 %v6404, %v6512
        %v6514 = vpop.f32.mrf.mxu0
        %v6515 = vadd.f32 %v6406, %v6514
        %6516 = vmatmul.bf16.gmra.mxu0 %v4893
        %v6517 = vpop.f32.mrf.mxu0
        %v6518 = vadd.f32 %v6409, %v6517
        %v6519 = vpop.f32.mrf.mxu0
        %v6520 = vadd.f32 %v6411, %v6519
        %6521 = vmatmul.bf16.gmra.mxu0 %v4894
        %v6522 = vpop.f32.mrf.mxu0
        %v6523 = vadd.f32 %v6414, %v6522
        %v6524 = vpop.f32.mrf.mxu0
        %v6525 = vadd.f32 %v6416, %v6524
        %6526 = vmatmul.bf16.gmra.mxu0 %v4895
        %v6527 = vpop.f32.mrf.mxu0
        %v6528 = vadd.f32 %v6419, %v6527
        %v6529 = vpop.f32.mrf.mxu0
        %v6530 = vadd.f32 %v6421, %v6529
        %6531 = vdwg.mxu0
        %6532 = vmatpush.bf16.msra.mxu0 %v5991
        %6533 = vmatpush.bf16.msra.mxu0 %v5990
        %6534 = vmatpush.bf16.msra.mxu0 %v5989
        %6535 = vmatpush.bf16.msra.mxu0 %v5988
        %6536 = vmatpush.bf16.msra.mxu0 %v5987
        %6537 = vmatpush.bf16.msra.mxu0 %v5986
        %6538 = vmatpush.bf16.msra.mxu0 %v5985
        %6539 = vmatpush.bf16.msra.mxu0 %v5984
        %6540 = vmatmul.bf16.gmra.mxu0 %v4996
        %v6541 = vpop.f32.mrf.mxu0
        %v6542 = vadd.f32 %v6433, %v6541
        %v6543 = vpop.f32.mrf.mxu0
        %v6544 = vadd.f32 %v6435, %v6543
        %6545 = vmatmul.bf16.gmra.mxu0 %v4997
        %v6546 = vpop.f32.mrf.mxu0
        %v6547 = vadd.f32 %v6438, %v6546
        %v6548 = vpop.f32.mrf.mxu0
        %v6549 = vadd.f32 %v6440, %v6548
        %6550 = vmatmul.bf16.gmra.mxu0 %v4998
        %v6551 = vpop.f32.mrf.mxu0
        %v6552 = vadd.f32 %v6443, %v6551
        %v6553 = vpop.f32.mrf.mxu0
        %v6554 = vadd.f32 %v6445, %v6553
        %6555 = vmatmul.bf16.gmra.mxu0 %v4999
        %v6556 = vpop.f32.mrf.mxu0
        %v6557 = vadd.f32 %v6448, %v6556
        %v6558 = vpop.f32.mrf.mxu0
        %v6559 = vadd.f32 %v6450, %v6558
        %6560 = vmatmul.bf16.gmra.mxu0 %v5000
        %v6561 = vpop.f32.mrf.mxu0
        %v6562 = vadd.f32 %v6453, %v6561
        %v6563 = vpop.f32.mrf.mxu0
        %v6564 = vadd.f32 %v6455, %v6563
        %6565 = vmatmul.bf16.gmra.mxu0 %v5001
        %v6566 = vpop.f32.mrf.mxu0
        %v6567 = vadd.f32 %v6458, %v6566
        %v6568 = vpop.f32.mrf.mxu0
        %v6569 = vadd.f32 %v6460, %v6568
        %6570 = vmatmul.bf16.gmra.mxu0 %v5002
        %v6571 = vpop.f32.mrf.mxu0
        %v6572 = vadd.f32 %v6463, %v6571
        %v6573 = vpop.f32.mrf.mxu0
        %v6574 = vadd.f32 %v6465, %v6573
        %6575 = vmatmul.bf16.gmra.mxu0 %v5003
        %v6576 = vpop.f32.mrf.mxu0
        %v6577 = vadd.f32 %v6468, %v6576
        %v6578 = vpop.f32.mrf.mxu0
        %v6579 = vadd.f32 %v6470, %v6578
        %6580 = vmatmul.bf16.gmra.mxu0 %v5004
        %v6581 = vpop.f32.mrf.mxu0
        %v6582 = vadd.f32 %v6473, %v6581
        %v6583 = vpop.f32.mrf.mxu0
        %v6584 = vadd.f32 %v6475, %v6583
        %6585 = vmatmul.bf16.gmra.mxu0 %v5005
        %v6586 = vpop.f32.mrf.mxu0
        %v6587 = vadd.f32 %v6478, %v6586
        %v6588 = vpop.f32.mrf.mxu0
        %v6589 = vadd.f32 %v6480, %v6588
        %6590 = vmatmul.bf16.gmra.mxu0 %v5006
        %v6591 = vpop.f32.mrf.mxu0
        %v6592 = vadd.f32 %v6483, %v6591
        %v6593 = vpop.f32.mrf.mxu0
        %v6594 = vadd.f32 %v6485, %v6593
        %6595 = vmatmul.bf16.gmra.mxu0 %v5007
        %v6596 = vpop.f32.mrf.mxu0
        %v6597 = vadd.f32 %v6488, %v6596
        %v6598 = vpop.f32.mrf.mxu0
        %v6599 = vadd.f32 %v6490, %v6598
        %6600 = vmatmul.bf16.gmra.mxu0 %v5008
        %v6601 = vpop.f32.mrf.mxu0
        %v6602 = vadd.f32 %v6493, %v6601
        %v6603 = vpop.f32.mrf.mxu0
        %v6604 = vadd.f32 %v6495, %v6603
        %6605 = vmatmul.bf16.gmra.mxu0 %v5009
        %v6606 = vpop.f32.mrf.mxu0
        %v6607 = vadd.f32 %v6498, %v6606
        %v6608 = vpop.f32.mrf.mxu0
        %v6609 = vadd.f32 %v6500, %v6608
        %6610 = vmatmul.bf16.gmra.mxu0 %v5010
        %v6611 = vpop.f32.mrf.mxu0
        %v6612 = vadd.f32 %v6503, %v6611
        %v6613 = vpop.f32.mrf.mxu0
        %v6614 = vadd.f32 %v6505, %v6613
        %6615 = vmatmul.bf16.gmra.mxu0 %v5011
        %v6616 = vpop.f32.mrf.mxu0
        %v6617 = vadd.f32 %v6508, %v6616
        %v6618 = vpop.f32.mrf.mxu0
        %v6619 = vadd.f32 %v6510, %v6618
        %6620 = vmatmul.bf16.gmra.mxu0 %v5012
        %v6621 = vpop.f32.mrf.mxu0
        %v6622 = vadd.f32 %v6513, %v6621
        %v6623 = vpop.f32.mrf.mxu0
        %v6624 = vadd.f32 %v6515, %v6623
        %6625 = vmatmul.bf16.gmra.mxu0 %v5013
        %v6626 = vpop.f32.mrf.mxu0
        %v6627 = vadd.f32 %v6518, %v6626
        %v6628 = vpop.f32.mrf.mxu0
        %v6629 = vadd.f32 %v6520, %v6628
        %6630 = vmatmul.bf16.gmra.mxu0 %v5014
        %v6631 = vpop.f32.mrf.mxu0
        %v6632 = vadd.f32 %v6523, %v6631
        %v6633 = vpop.f32.mrf.mxu0
        %v6634 = vadd.f32 %v6525, %v6633
        %6635 = vmatmul.bf16.gmra.mxu0 %v5015
        %v6636 = vpop.f32.mrf.mxu0
        %v6637 = vadd.f32 %v6528, %v6636
        %v6638 = vpop.f32.mrf.mxu0
        %v6639 = vadd.f32 %v6530, %v6638
        %6640 = vdwg.mxu0
        %6641 = vmatpush.bf16.msra.mxu0 %v5999
        %6642 = vmatpush.bf16.msra.mxu0 %v5998
        %6643 = vmatpush.bf16.msra.mxu0 %v5997
        %6644 = vmatpush.bf16.msra.mxu0 %v5996
        %6645 = vmatpush.bf16.msra.mxu0 %v5995
        %6646 = vmatpush.bf16.msra.mxu0 %v5994
        %6647 = vmatpush.bf16.msra.mxu0 %v5993
        %6648 = vmatpush.bf16.msra.mxu0 %v5992
        %6649 = vmatmul.bf16.gmra.mxu0 %v5116
        %v6650 = vpop.f32.mrf.mxu0
        %v6651 = vadd.f32 %v6542, %v6650
        %v6652 = vpop.f32.mrf.mxu0
        %v6653 = vadd.f32 %v6544, %v6652
        %6654 = vmatmul.bf16.gmra.mxu0 %v5117
        %v6655 = vpop.f32.mrf.mxu0
        %v6656 = vadd.f32 %v6547, %v6655
        %v6657 = vpop.f32.mrf.mxu0
        %v6658 = vadd.f32 %v6549, %v6657
        %6659 = vmatmul.bf16.gmra.mxu0 %v5118
        %v6660 = vpop.f32.mrf.mxu0
        %v6661 = vadd.f32 %v6552, %v6660
        %v6662 = vpop.f32.mrf.mxu0
        %v6663 = vadd.f32 %v6554, %v6662
        %6664 = vmatmul.bf16.gmra.mxu0 %v5119
        %v6665 = vpop.f32.mrf.mxu0
        %v6666 = vadd.f32 %v6557, %v6665
        %v6667 = vpop.f32.mrf.mxu0
        %v6668 = vadd.f32 %v6559, %v6667
        %6669 = vmatmul.bf16.gmra.mxu0 %v5120
        %v6670 = vpop.f32.mrf.mxu0
        %v6671 = vadd.f32 %v6562, %v6670
        %v6672 = vpop.f32.mrf.mxu0
        %v6673 = vadd.f32 %v6564, %v6672
        %6674 = vmatmul.bf16.gmra.mxu0 %v5121
        %v6675 = vpop.f32.mrf.mxu0
        %v6676 = vadd.f32 %v6567, %v6675
        %v6677 = vpop.f32.mrf.mxu0
        %v6678 = vadd.f32 %v6569, %v6677
        %6679 = vmatmul.bf16.gmra.mxu0 %v5122
        %v6680 = vpop.f32.mrf.mxu0
        %v6681 = vadd.f32 %v6572, %v6680
        %v6682 = vpop.f32.mrf.mxu0
        %v6683 = vadd.f32 %v6574, %v6682
        %6684 = vmatmul.bf16.gmra.mxu0 %v5123
        %v6685 = vpop.f32.mrf.mxu0
        %v6686 = vadd.f32 %v6577, %v6685
        %v6687 = vpop.f32.mrf.mxu0
        %v6688 = vadd.f32 %v6579, %v6687
        %6689 = vmatmul.bf16.gmra.mxu0 %v5124
        %v6690 = vpop.f32.mrf.mxu0
        %v6691 = vadd.f32 %v6582, %v6690
        %v6692 = vpop.f32.mrf.mxu0
        %v6693 = vadd.f32 %v6584, %v6692
        %6694 = vmatmul.bf16.gmra.mxu0 %v5125
        %v6695 = vpop.f32.mrf.mxu0
        %v6696 = vadd.f32 %v6587, %v6695
        %v6697 = vpop.f32.mrf.mxu0
        %v6698 = vadd.f32 %v6589, %v6697
        %6699 = vmatmul.bf16.gmra.mxu0 %v5126
        %v6700 = vpop.f32.mrf.mxu0
        %v6701 = vadd.f32 %v6592, %v6700
        %v6702 = vpop.f32.mrf.mxu0
        %v6703 = vadd.f32 %v6594, %v6702
        %6704 = vmatmul.bf16.gmra.mxu0 %v5127
        %v6705 = vpop.f32.mrf.mxu0
        %v6706 = vadd.f32 %v6597, %v6705
        %v6707 = vpop.f32.mrf.mxu0
        %v6708 = vadd.f32 %v6599, %v6707
        %6709 = vmatmul.bf16.gmra.mxu0 %v5128
        %v6710 = vpop.f32.mrf.mxu0
        %v6711 = vadd.f32 %v6602, %v6710
        %v6712 = vpop.f32.mrf.mxu0
        %v6713 = vadd.f32 %v6604, %v6712
        %6714 = vmatmul.bf16.gmra.mxu0 %v5129
        %v6715 = vpop.f32.mrf.mxu0
        %v6716 = vadd.f32 %v6607, %v6715
        %v6717 = vpop.f32.mrf.mxu0
        %v6718 = vadd.f32 %v6609, %v6717
        %6719 = vmatmul.bf16.gmra.mxu0 %v5130
        %v6720 = vpop.f32.mrf.mxu0
        %v6721 = vadd.f32 %v6612, %v6720
        %v6722 = vpop.f32.mrf.mxu0
        %v6723 = vadd.f32 %v6614, %v6722
        %6724 = vmatmul.bf16.gmra.mxu0 %v5131
        %v6725 = vpop.f32.mrf.mxu0
        %v6726 = vadd.f32 %v6617, %v6725
        %v6727 = vpop.f32.mrf.mxu0
        %v6728 = vadd.f32 %v6619, %v6727
        %6729 = vmatmul.bf16.gmra.mxu0 %v5132
        %v6730 = vpop.f32.mrf.mxu0
        %v6731 = vadd.f32 %v6622, %v6730
        %v6732 = vpop.f32.mrf.mxu0
        %v6733 = vadd.f32 %v6624, %v6732
        %6734 = vmatmul.bf16.gmra.mxu0 %v5133
        %v6735 = vpop.f32.mrf.mxu0
        %v6736 = vadd.f32 %v6627, %v6735
        %v6737 = vpop.f32.mrf.mxu0
        %v6738 = vadd.f32 %v6629, %v6737
        %6739 = vmatmul.bf16.gmra.mxu0 %v5134
        %v6740 = vpop.f32.mrf.mxu0
        %v6741 = vadd.f32 %v6632, %v6740
        %v6742 = vpop.f32.mrf.mxu0
        %v6743 = vadd.f32 %v6634, %v6742
        %6744 = vmatmul.bf16.gmra.mxu0 %v5135
        %v6745 = vpop.f32.mrf.mxu0
        %v6746 = vadd.f32 %v6637, %v6745
        %v6747 = vpop.f32.mrf.mxu0
        %v6748 = vadd.f32 %v6639, %v6747
        %6749 = vdwg.mxu0
        %6750 = vmatpush.bf16.msra.mxu0 %v6007
        %6751 = vmatpush.bf16.msra.mxu0 %v6006
        %6752 = vmatpush.bf16.msra.mxu0 %v6005
        %6753 = vmatpush.bf16.msra.mxu0 %v6004
        %6754 = vmatpush.bf16.msra.mxu0 %v6003
        %6755 = vmatpush.bf16.msra.mxu0 %v6002
        %6756 = vmatpush.bf16.msra.mxu0 %v6001
        %6757 = vmatpush.bf16.msra.mxu0 %v6000
        %6758 = vmatmul.bf16.gmra.mxu0 %v5236
        %v6759 = vpop.f32.mrf.mxu0
        %v6760 = vadd.f32 %v6651, %v6759
        %v6761 = vpop.f32.mrf.mxu0
        %v6762 = vadd.f32 %v6653, %v6761
        %6763 = vmatmul.bf16.gmra.mxu0 %v5237
        %v6764 = vpop.f32.mrf.mxu0
        %v6765 = vadd.f32 %v6656, %v6764
        %v6766 = vpop.f32.mrf.mxu0
        %v6767 = vadd.f32 %v6658, %v6766
        %6768 = vmatmul.bf16.gmra.mxu0 %v5238
        %v6769 = vpop.f32.mrf.mxu0
        %v6770 = vadd.f32 %v6661, %v6769
        %v6771 = vpop.f32.mrf.mxu0
        %v6772 = vadd.f32 %v6663, %v6771
        %6773 = vmatmul.bf16.gmra.mxu0 %v5239
        %v6774 = vpop.f32.mrf.mxu0
        %v6775 = vadd.f32 %v6666, %v6774
        %v6776 = vpop.f32.mrf.mxu0
        %v6777 = vadd.f32 %v6668, %v6776
        %6778 = vmatmul.bf16.gmra.mxu0 %v5240
        %v6779 = vpop.f32.mrf.mxu0
        %v6780 = vadd.f32 %v6671, %v6779
        %v6781 = vpop.f32.mrf.mxu0
        %v6782 = vadd.f32 %v6673, %v6781
        %6783 = vmatmul.bf16.gmra.mxu0 %v5241
        %v6784 = vpop.f32.mrf.mxu0
        %v6785 = vadd.f32 %v6676, %v6784
        %v6786 = vpop.f32.mrf.mxu0
        %v6787 = vadd.f32 %v6678, %v6786
        %6788 = vmatmul.bf16.gmra.mxu0 %v5242
        %v6789 = vpop.f32.mrf.mxu0
        %v6790 = vadd.f32 %v6681, %v6789
        %v6791 = vpop.f32.mrf.mxu0
        %v6792 = vadd.f32 %v6683, %v6791
        %6793 = vmatmul.bf16.gmra.mxu0 %v5243
        %v6794 = vpop.f32.mrf.mxu0
        %v6795 = vadd.f32 %v6686, %v6794
        %v6796 = vpop.f32.mrf.mxu0
        %v6797 = vadd.f32 %v6688, %v6796
        %6798 = vmatmul.bf16.gmra.mxu0 %v5244
        %v6799 = vpop.f32.mrf.mxu0
        %v6800 = vadd.f32 %v6691, %v6799
        %v6801 = vpop.f32.mrf.mxu0
        %v6802 = vadd.f32 %v6693, %v6801
        %6803 = vmatmul.bf16.gmra.mxu0 %v5245
        %v6804 = vpop.f32.mrf.mxu0
        %v6805 = vadd.f32 %v6696, %v6804
        %v6806 = vpop.f32.mrf.mxu0
        %v6807 = vadd.f32 %v6698, %v6806
        %6808 = vmatmul.bf16.gmra.mxu0 %v5246
        %v6809 = vpop.f32.mrf.mxu0
        %v6810 = vadd.f32 %v6701, %v6809
        %v6811 = vpop.f32.mrf.mxu0
        %v6812 = vadd.f32 %v6703, %v6811
        %6813 = vmatmul.bf16.gmra.mxu0 %v5247
        %v6814 = vpop.f32.mrf.mxu0
        %v6815 = vadd.f32 %v6706, %v6814
        %v6816 = vpop.f32.mrf.mxu0
        %v6817 = vadd.f32 %v6708, %v6816
        %6818 = vmatmul.bf16.gmra.mxu0 %v5248
        %v6819 = vpop.f32.mrf.mxu0
        %v6820 = vadd.f32 %v6711, %v6819
        %v6821 = vpop.f32.mrf.mxu0
        %v6822 = vadd.f32 %v6713, %v6821
        %6823 = vmatmul.bf16.gmra.mxu0 %v5249
        %v6824 = vpop.f32.mrf.mxu0
        %v6825 = vadd.f32 %v6716, %v6824
        %v6826 = vpop.f32.mrf.mxu0
        %v6827 = vadd.f32 %v6718, %v6826
        %6828 = vmatmul.bf16.gmra.mxu0 %v5250
        %v6829 = vpop.f32.mrf.mxu0
        %v6830 = vadd.f32 %v6721, %v6829
        %v6831 = vpop.f32.mrf.mxu0
        %v6832 = vadd.f32 %v6723, %v6831
        %6833 = vmatmul.bf16.gmra.mxu0 %v5251
        %v6834 = vpop.f32.mrf.mxu0
        %v6835 = vadd.f32 %v6726, %v6834
        %v6836 = vpop.f32.mrf.mxu0
        %v6837 = vadd.f32 %v6728, %v6836
        %6838 = vmatmul.bf16.gmra.mxu0 %v5252
        %v6839 = vpop.f32.mrf.mxu0
        %v6840 = vadd.f32 %v6731, %v6839
        %v6841 = vpop.f32.mrf.mxu0
        %v6842 = vadd.f32 %v6733, %v6841
        %6843 = vmatmul.bf16.gmra.mxu0 %v5253
        %v6844 = vpop.f32.mrf.mxu0
        %v6845 = vadd.f32 %v6736, %v6844
        %v6846 = vpop.f32.mrf.mxu0
        %v6847 = vadd.f32 %v6738, %v6846
        %6848 = vmatmul.bf16.gmra.mxu0 %v5254
        %v6849 = vpop.f32.mrf.mxu0
        %v6850 = vadd.f32 %v6741, %v6849
        %v6851 = vpop.f32.mrf.mxu0
        %v6852 = vadd.f32 %v6743, %v6851
        %6853 = vmatmul.bf16.gmra.mxu0 %v5255
        %v6854 = vpop.f32.mrf.mxu0
        %v6855 = vadd.f32 %v6746, %v6854
        %v6856 = vpop.f32.mrf.mxu0
        %v6857 = vadd.f32 %v6748, %v6856
        %6858 = vdwg.mxu0
        %6859 = vmatpush.bf16.msra.mxu0 %v6015
        %6860 = vmatpush.bf16.msra.mxu0 %v6014
        %6861 = vmatpush.bf16.msra.mxu0 %v6013
        %6862 = vmatpush.bf16.msra.mxu0 %v6012
        %6863 = vmatpush.bf16.msra.mxu0 %v6011
        %6864 = vmatpush.bf16.msra.mxu0 %v6010
        %6865 = vmatpush.bf16.msra.mxu0 %v6009
        %6866 = vmatpush.bf16.msra.mxu0 %v6008
        %6867 = vmatmul.bf16.gmra.mxu0 %v5356
        %v6868 = vpop.f32.mrf.mxu0
        %v6869 = vadd.f32 %v6760, %v6868
        %v6870 = vpop.f32.mrf.mxu0
        %v6871 = vadd.f32 %v6762, %v6870
        %6872 = vmatmul.bf16.gmra.mxu0 %v5357
        %v6873 = vpop.f32.mrf.mxu0
        %v6874 = vadd.f32 %v6765, %v6873
        %v6875 = vpop.f32.mrf.mxu0
        %v6876 = vadd.f32 %v6767, %v6875
        %6877 = vmatmul.bf16.gmra.mxu0 %v5358
        %v6878 = vpop.f32.mrf.mxu0
        %v6879 = vadd.f32 %v6770, %v6878
        %v6880 = vpop.f32.mrf.mxu0
        %v6881 = vadd.f32 %v6772, %v6880
        %6882 = vmatmul.bf16.gmra.mxu0 %v5359
        %v6883 = vpop.f32.mrf.mxu0
        %v6884 = vadd.f32 %v6775, %v6883
        %v6885 = vpop.f32.mrf.mxu0
        %v6886 = vadd.f32 %v6777, %v6885
        %6887 = vmatmul.bf16.gmra.mxu0 %v5360
        %v6888 = vpop.f32.mrf.mxu0
        %v6889 = vadd.f32 %v6780, %v6888
        %v6890 = vpop.f32.mrf.mxu0
        %v6891 = vadd.f32 %v6782, %v6890
        %6892 = vmatmul.bf16.gmra.mxu0 %v5361
        %v6893 = vpop.f32.mrf.mxu0
        %v6894 = vadd.f32 %v6785, %v6893
        %v6895 = vpop.f32.mrf.mxu0
        %v6896 = vadd.f32 %v6787, %v6895
        %6897 = vmatmul.bf16.gmra.mxu0 %v5362
        %v6898 = vpop.f32.mrf.mxu0
        %v6899 = vadd.f32 %v6790, %v6898
        %v6900 = vpop.f32.mrf.mxu0
        %v6901 = vadd.f32 %v6792, %v6900
        %6902 = vmatmul.bf16.gmra.mxu0 %v5363
        %v6903 = vpop.f32.mrf.mxu0
        %v6904 = vadd.f32 %v6795, %v6903
        %v6905 = vpop.f32.mrf.mxu0
        %v6906 = vadd.f32 %v6797, %v6905
        %6907 = vmatmul.bf16.gmra.mxu0 %v5364
        %v6908 = vpop.f32.mrf.mxu0
        %v6909 = vadd.f32 %v6800, %v6908
        %v6910 = vpop.f32.mrf.mxu0
        %v6911 = vadd.f32 %v6802, %v6910
        %6912 = vmatmul.bf16.gmra.mxu0 %v5365
        %v6913 = vpop.f32.mrf.mxu0
        %v6914 = vadd.f32 %v6805, %v6913
        %v6915 = vpop.f32.mrf.mxu0
        %v6916 = vadd.f32 %v6807, %v6915
        %6917 = vmatmul.bf16.gmra.mxu0 %v5366
        %v6918 = vpop.f32.mrf.mxu0
        %v6919 = vadd.f32 %v6810, %v6918
        %v6920 = vpop.f32.mrf.mxu0
        %v6921 = vadd.f32 %v6812, %v6920
        %6922 = vmatmul.bf16.gmra.mxu0 %v5367
        %v6923 = vpop.f32.mrf.mxu0
        %v6924 = vadd.f32 %v6815, %v6923
        %v6925 = vpop.f32.mrf.mxu0
        %v6926 = vadd.f32 %v6817, %v6925
        %6927 = vmatmul.bf16.gmra.mxu0 %v5368
        %v6928 = vpop.f32.mrf.mxu0
        %v6929 = vadd.f32 %v6820, %v6928
        %v6930 = vpop.f32.mrf.mxu0
        %v6931 = vadd.f32 %v6822, %v6930
        %6932 = vmatmul.bf16.gmra.mxu0 %v5369
        %v6933 = vpop.f32.mrf.mxu0
        %v6934 = vadd.f32 %v6825, %v6933
        %v6935 = vpop.f32.mrf.mxu0
        %v6936 = vadd.f32 %v6827, %v6935
        %6937 = vmatmul.bf16.gmra.mxu0 %v5370
        %v6938 = vpop.f32.mrf.mxu0
        %v6939 = vadd.f32 %v6830, %v6938
        %v6940 = vpop.f32.mrf.mxu0
        %v6941 = vadd.f32 %v6832, %v6940
        %6942 = vmatmul.bf16.gmra.mxu0 %v5371
        %v6943 = vpop.f32.mrf.mxu0
        %v6944 = vadd.f32 %v6835, %v6943
        %v6945 = vpop.f32.mrf.mxu0
        %v6946 = vadd.f32 %v6837, %v6945
        %6947 = vmatmul.bf16.gmra.mxu0 %v5372
        %v6948 = vpop.f32.mrf.mxu0
        %v6949 = vadd.f32 %v6840, %v6948
        %v6950 = vpop.f32.mrf.mxu0
        %v6951 = vadd.f32 %v6842, %v6950
        %6952 = vmatmul.bf16.gmra.mxu0 %v5373
        %v6953 = vpop.f32.mrf.mxu0
        %v6954 = vadd.f32 %v6845, %v6953
        %v6955 = vpop.f32.mrf.mxu0
        %v6956 = vadd.f32 %v6847, %v6955
        %6957 = vmatmul.bf16.gmra.mxu0 %v5374
        %v6958 = vpop.f32.mrf.mxu0
        %v6959 = vadd.f32 %v6850, %v6958
        %v6960 = vpop.f32.mrf.mxu0
        %v6961 = vadd.f32 %v6852, %v6960
        %6962 = vmatmul.bf16.gmra.mxu0 %v5375
        %v6963 = vpop.f32.mrf.mxu0
        %v6964 = vadd.f32 %v6855, %v6963
        %v6965 = vpop.f32.mrf.mxu0
        %v6966 = vadd.f32 %v6857, %v6965
        %6967 = vdwg.mxu0
        %6968 = vmatpush.bf16.msra.mxu0 %v6023
        %6969 = vmatpush.bf16.msra.mxu0 %v6022
        %6970 = vmatpush.bf16.msra.mxu0 %v6021
        %6971 = vmatpush.bf16.msra.mxu0 %v6020
        %6972 = vmatpush.bf16.msra.mxu0 %v6019
        %6973 = vmatpush.bf16.msra.mxu0 %v6018
        %6974 = vmatpush.bf16.msra.mxu0 %v6017
        %6975 = vmatpush.bf16.msra.mxu0 %v6016
        %6976 = vmatmul.bf16.gmra.mxu0 %v5476
        %v6977 = vpop.f32.mrf.mxu0
        %v6978 = vadd.f32 %v6869, %v6977
        %v6979 = vpop.f32.mrf.mxu0
        %v6980 = vadd.f32 %v6871, %v6979
        %6981 = vmatmul.bf16.gmra.mxu0 %v5477
        %v6982 = vpop.f32.mrf.mxu0
        %v6983 = vadd.f32 %v6874, %v6982
        %v6984 = vpop.f32.mrf.mxu0
        %v6985 = vadd.f32 %v6876, %v6984
        %6986 = vmatmul.bf16.gmra.mxu0 %v5478
        %v6987 = vpop.f32.mrf.mxu0
        %v6988 = vadd.f32 %v6879, %v6987
        %v6989 = vpop.f32.mrf.mxu0
        %v6990 = vadd.f32 %v6881, %v6989
        %6991 = vmatmul.bf16.gmra.mxu0 %v5479
        %v6992 = vpop.f32.mrf.mxu0
        %v6993 = vadd.f32 %v6884, %v6992
        %v6994 = vpop.f32.mrf.mxu0
        %v6995 = vadd.f32 %v6886, %v6994
        %6996 = vmatmul.bf16.gmra.mxu0 %v5480
        %v6997 = vpop.f32.mrf.mxu0
        %v6998 = vadd.f32 %v6889, %v6997
        %v6999 = vpop.f32.mrf.mxu0
        %v7000 = vadd.f32 %v6891, %v6999
        %7001 = vmatmul.bf16.gmra.mxu0 %v5481
        %v7002 = vpop.f32.mrf.mxu0
        %v7003 = vadd.f32 %v6894, %v7002
        %v7004 = vpop.f32.mrf.mxu0
        %v7005 = vadd.f32 %v6896, %v7004
        %7006 = vmatmul.bf16.gmra.mxu0 %v5482
        %v7007 = vpop.f32.mrf.mxu0
        %v7008 = vadd.f32 %v6899, %v7007
        %v7009 = vpop.f32.mrf.mxu0
        %v7010 = vadd.f32 %v6901, %v7009
        %7011 = vmatmul.bf16.gmra.mxu0 %v5483
        %v7012 = vpop.f32.mrf.mxu0
        %v7013 = vadd.f32 %v6904, %v7012
        %v7014 = vpop.f32.mrf.mxu0
        %v7015 = vadd.f32 %v6906, %v7014
        %7016 = vmatmul.bf16.gmra.mxu0 %v5484
        %v7017 = vpop.f32.mrf.mxu0
        %v7018 = vadd.f32 %v6909, %v7017
        %v7019 = vpop.f32.mrf.mxu0
        %v7020 = vadd.f32 %v6911, %v7019
        %7021 = vmatmul.bf16.gmra.mxu0 %v5485
        %v7022 = vpop.f32.mrf.mxu0
        %v7023 = vadd.f32 %v6914, %v7022
        %v7024 = vpop.f32.mrf.mxu0
        %v7025 = vadd.f32 %v6916, %v7024
        %7026 = vmatmul.bf16.gmra.mxu0 %v5486
        %v7027 = vpop.f32.mrf.mxu0
        %v7028 = vadd.f32 %v6919, %v7027
        %v7029 = vpop.f32.mrf.mxu0
        %v7030 = vadd.f32 %v6921, %v7029
        %7031 = vmatmul.bf16.gmra.mxu0 %v5487
        %v7032 = vpop.f32.mrf.mxu0
        %v7033 = vadd.f32 %v6924, %v7032
        %v7034 = vpop.f32.mrf.mxu0
        %v7035 = vadd.f32 %v6926, %v7034
        %7036 = vmatmul.bf16.gmra.mxu0 %v5488
        %v7037 = vpop.f32.mrf.mxu0
        %v7038 = vadd.f32 %v6929, %v7037
        %v7039 = vpop.f32.mrf.mxu0
        %v7040 = vadd.f32 %v6931, %v7039
        %7041 = vmatmul.bf16.gmra.mxu0 %v5489
        %v7042 = vpop.f32.mrf.mxu0
        %v7043 = vadd.f32 %v6934, %v7042
        %v7044 = vpop.f32.mrf.mxu0
        %v7045 = vadd.f32 %v6936, %v7044
        %7046 = vmatmul.bf16.gmra.mxu0 %v5490
        %v7047 = vpop.f32.mrf.mxu0
        %v7048 = vadd.f32 %v6939, %v7047
        %v7049 = vpop.f32.mrf.mxu0
        %v7050 = vadd.f32 %v6941, %v7049
        %7051 = vmatmul.bf16.gmra.mxu0 %v5491
        %v7052 = vpop.f32.mrf.mxu0
        %v7053 = vadd.f32 %v6944, %v7052
        %v7054 = vpop.f32.mrf.mxu0
        %v7055 = vadd.f32 %v6946, %v7054
        %7056 = vmatmul.bf16.gmra.mxu0 %v5492
        %v7057 = vpop.f32.mrf.mxu0
        %v7058 = vadd.f32 %v6949, %v7057
        %v7059 = vpop.f32.mrf.mxu0
        %v7060 = vadd.f32 %v6951, %v7059
        %7061 = vmatmul.bf16.gmra.mxu0 %v5493
        %v7062 = vpop.f32.mrf.mxu0
        %v7063 = vadd.f32 %v6954, %v7062
        %v7064 = vpop.f32.mrf.mxu0
        %v7065 = vadd.f32 %v6956, %v7064
        %7066 = vmatmul.bf16.gmra.mxu0 %v5494
        %v7067 = vpop.f32.mrf.mxu0
        %v7068 = vadd.f32 %v6959, %v7067
        %v7069 = vpop.f32.mrf.mxu0
        %v7070 = vadd.f32 %v6961, %v7069
        %7071 = vmatmul.bf16.gmra.mxu0 %v5495
        %v7072 = vpop.f32.mrf.mxu0
        %v7073 = vadd.f32 %v6964, %v7072
        %v7074 = vpop.f32.mrf.mxu0
        %v7075 = vadd.f32 %v6966, %v7074
        %7076 = vdwg.mxu0
        %v7077 = vrot.slane %v6978, 7
        %v7078 = vrot.slane %v6980, 7
        %v7079 = vrot.slane %v6983, 7
        %v7080 = vrot.slane %v6985, 7
        %v7081 = vrot.slane %v6988, 7
        %v7082 = vrot.slane %v6990, 7
        %v7083 = vrot.slane %v6993, 7
        %v7084 = vrot.slane %v6995, 7
        %v7085 = vrot.slane %v6998, 7
        %v7086 = vrot.slane %v7000, 7
        %v7087 = vrot.slane %v7003, 7
        %v7088 = vrot.slane %v7005, 7
        %v7089 = vrot.slane %v7008, 7
        %v7090 = vrot.slane %v7010, 7
        %v7091 = vrot.slane %v7013, 7
        %v7092 = vrot.slane %v7015, 7
        %v7093 = vrot.slane %v7018, 7
        %v7094 = vrot.slane %v7020, 7
        %v7095 = vrot.slane %v7023, 7
        %v7096 = vrot.slane %v7025, 7
        %v7097 = vrot.slane %v7028, 7
        %v7098 = vrot.slane %v7030, 7
        %v7099 = vrot.slane %v7033, 7
        %v7100 = vrot.slane %v7035, 7
        %v7101 = vrot.slane %v7038, 7
        %v7102 = vrot.slane %v7040, 7
        %v7103 = vrot.slane %v7043, 7
        %v7104 = vrot.slane %v7045, 7
        %v7105 = vrot.slane %v7048, 7
        %v7106 = vrot.slane %v7050, 7
        %v7107 = vrot.slane %v7053, 7
        %v7108 = vrot.slane %v7055, 7
        %v7109 = vrot.slane %v7058, 7
        %v7110 = vrot.slane %v7060, 7
        %v7111 = vrot.slane %v7063, 7
        %v7112 = vrot.slane %v7065, 7
        %v7113 = vrot.slane %v7068, 7
        %v7114 = vrot.slane %v7070, 7
        %v7115 = vrot.slane %v7073, 7
        %v7116 = vrot.slane %v7075, 7
        %v7117 = vsel %vm3712, %v7115, %v7116
        %v7118 = vsel %vm3712, %v7114, %v7115
        %v7119 = vsel %vm3712, %v7113, %v7114
        %v7120 = vsel %vm3712, %v7112, %v7113
        %v7121 = vsel %vm3712, %v7111, %v7112
        %v7122 = vsel %vm3712, %v7110, %v7111
        %v7123 = vsel %vm3712, %v7109, %v7110
        %v7124 = vsel %vm3712, %v7108, %v7109
        %v7125 = vsel %vm3712, %v7107, %v7108
        %v7126 = vsel %vm3712, %v7106, %v7107
        %v7127 = vsel %vm3712, %v7105, %v7106
        %v7128 = vsel %vm3712, %v7104, %v7105
        %v7129 = vsel %vm3712, %v7103, %v7104
        %v7130 = vsel %vm3712, %v7102, %v7103
        %v7131 = vsel %vm3712, %v7101, %v7102
        %v7132 = vsel %vm3712, %v7100, %v7101
        %v7133 = vsel %vm3712, %v7099, %v7100
        %v7134 = vsel %vm3712, %v7098, %v7099
        %v7135 = vsel %vm3712, %v7097, %v7098
        %v7136 = vsel %vm3712, %v7096, %v7097
        %v7137 = vsel %vm3712, %v7095, %v7096
        %v7138 = vsel %vm3712, %v7094, %v7095
        %v7139 = vsel %vm3712, %v7093, %v7094
        %v7140 = vsel %vm3712, %v7092, %v7093
        %v7141 = vsel %vm3712, %v7091, %v7092
        %v7142 = vsel %vm3712, %v7090, %v7091
        %v7143 = vsel %vm3712, %v7089, %v7090
        %v7144 = vsel %vm3712, %v7088, %v7089
        %v7145 = vsel %vm3712, %v7087, %v7088
        %v7146 = vsel %vm3712, %v7086, %v7087
        %v7147 = vsel %vm3712, %v7085, %v7086
        %v7148 = vsel %vm3712, %v7084, %v7085
        %v7149 = vsel %vm3712, %v7083, %v7084
        %v7150 = vsel %vm3712, %v7082, %v7083
        %v7151 = vsel %vm3712, %v7081, %v7082
        %v7152 = vsel %vm3712, %v7080, %v7081
        %v7153 = vsel %vm3712, %v7079, %v7080
        %v7154 = vsel %vm3712, %v7078, %v7079
        %v7155 = vsel %vm3712, %v7077, %v7078
        %v7156 = vsel %vm3712, %v7116, %v7077
        %v7157 = vmul.f32 %v7156, %v2189
        %v7158 = vmul.f32 %v7155, %v2190
        %v7159 = vmul.f32 %v7154, %v2191
        %v7160 = vmul.f32 %v7153, %v2192
        %v7161 = vmul.f32 %v7152, %v2193
        %v7162 = vmul.f32 %v7151, %v2194
        %v7163 = vmul.f32 %v7150, %v2195
        %v7164 = vmul.f32 %v7149, %v2196
        %v7165 = vmul.f32 %v7148, %v2197
        %v7166 = vmul.f32 %v7147, %v2198
        %v7167 = vmul.f32 %v7146, %v2199
        %v7168 = vmul.f32 %v7145, %v2200
        %v7169 = vmul.f32 %v7144, %v2201
        %v7170 = vmul.f32 %v7143, %v2202
        %v7171 = vmul.f32 %v7142, %v2203
        %v7172 = vmul.f32 %v7141, %v2204
        %v7173 = vmul.f32 %v7140, %v2205
        %v7174 = vmul.f32 %v7139, %v2206
        %v7175 = vmul.f32 %v7138, %v2207
        %v7176 = vmul.f32 %v7137, %v2208
        %v7177 = vmul.f32 %v7136, %v2209
        %v7178 = vmul.f32 %v7135, %v2210
        %v7179 = vmul.f32 %v7134, %v2211
        %v7180 = vmul.f32 %v7133, %v2212
        %v7181 = vmul.f32 %v7132, %v2213
        %v7182 = vmul.f32 %v7131, %v2214
        %v7183 = vmul.f32 %v7130, %v2215
        %v7184 = vmul.f32 %v7129, %v2216
        %v7185 = vmul.f32 %v7128, %v2217
        %v7186 = vmul.f32 %v7127, %v2218
        %v7187 = vmul.f32 %v7126, %v2219
        %v7188 = vmul.f32 %v7125, %v2220
        %v7189 = vmul.f32 %v7124, %v2221
        %v7190 = vmul.f32 %v7123, %v2222
        %v7191 = vmul.f32 %v7122, %v2223
        %v7192 = vmul.f32 %v7121, %v2224
        %v7193 = vmul.f32 %v7120, %v2225
        %v7194 = vmul.f32 %v7119, %v2226
        %v7195 = vmul.f32 %v7118, %v2227
        %v7196 = vmul.f32 %v7117, %v2228
        %v7197 = vpack.c.bf16 %v7157, %v7157
        %v7198 = vpack.c.bf16 %v7158, %v7158
        %v7199 = vpack.c.bf16 %v7159, %v7159
        %v7200 = vpack.c.bf16 %v7160, %v7160
        %v7201 = vpack.c.bf16 %v7161, %v7161
        %v7202 = vpack.c.bf16 %v7162, %v7162
        %v7203 = vpack.c.bf16 %v7163, %v7163
        %v7204 = vpack.c.bf16 %v7164, %v7164
        %v7205 = vpack.c.bf16 %v7165, %v7165
        %v7206 = vpack.c.bf16 %v7166, %v7166
        %v7207 = vpack.c.bf16 %v7167, %v7167
        %v7208 = vpack.c.bf16 %v7168, %v7168
        %v7209 = vpack.c.bf16 %v7169, %v7169
        %v7210 = vpack.c.bf16 %v7170, %v7170
        %v7211 = vpack.c.bf16 %v7171, %v7171
        %v7212 = vpack.c.bf16 %v7172, %v7172
        %v7213 = vpack.c.bf16 %v7173, %v7173
        %v7214 = vpack.c.bf16 %v7174, %v7174
        %v7215 = vpack.c.bf16 %v7175, %v7175
        %v7216 = vpack.c.bf16 %v7176, %v7176
        %v7217 = vpack.c.bf16 %v7177, %v7177
        %v7218 = vpack.c.bf16 %v7178, %v7178
        %v7219 = vpack.c.bf16 %v7179, %v7179
        %v7220 = vpack.c.bf16 %v7180, %v7180
        %v7221 = vpack.c.bf16 %v7181, %v7181
        %v7222 = vpack.c.bf16 %v7182, %v7182
        %v7223 = vpack.c.bf16 %v7183, %v7183
        %v7224 = vpack.c.bf16 %v7184, %v7184
        %v7225 = vpack.c.bf16 %v7185, %v7185
        %v7226 = vpack.c.bf16 %v7186, %v7186
        %v7227 = vpack.c.bf16 %v7187, %v7187
        %v7228 = vpack.c.bf16 %v7188, %v7188
        %v7229 = vpack.c.bf16 %v7189, %v7189
        %v7230 = vpack.c.bf16 %v7190, %v7190
        %v7231 = vpack.c.bf16 %v7191, %v7191
        %v7232 = vpack.c.bf16 %v7192, %v7192
        %v7233 = vpack.c.bf16 %v7193, %v7193
        %v7234 = vpack.c.bf16 %v7194, %v7194
        %v7235 = vpack.c.bf16 %v7195, %v7195
        %v7236 = vpack.c.bf16 %v7196, %v7196
        %v7237 = vpack.c.bf16 %v6978, %v6978
        %v7238 = vpack.c.bf16 %v6980, %v6980
        %v7239 = vpack.c.bf16 %v6983, %v6983
        %v7240 = vpack.c.bf16 %v6985, %v6985
        %v7241 = vpack.c.bf16 %v6988, %v6988
        %v7242 = vpack.c.bf16 %v6990, %v6990
        %v7243 = vpack.c.bf16 %v6993, %v6993
        %v7244 = vpack.c.bf16 %v6995, %v6995
        %v7245 = vpack.c.bf16 %v6998, %v6998
        %v7246 = vpack.c.bf16 %v7000, %v7000
        %v7247 = vpack.c.bf16 %v7003, %v7003
        %v7248 = vpack.c.bf16 %v7005, %v7005
        %v7249 = vpack.c.bf16 %v7008, %v7008
        %v7250 = vpack.c.bf16 %v7010, %v7010
        %v7251 = vpack.c.bf16 %v7013, %v7013
        %v7252 = vpack.c.bf16 %v7015, %v7015
        %v7253 = vpack.c.bf16 %v7018, %v7018
        %v7254 = vpack.c.bf16 %v7020, %v7020
        %v7255 = vpack.c.bf16 %v7023, %v7023
        %v7256 = vpack.c.bf16 %v7025, %v7025
        %v7257 = vpack.c.bf16 %v7028, %v7028
        %v7258 = vpack.c.bf16 %v7030, %v7030
        %v7259 = vpack.c.bf16 %v7033, %v7033
        %v7260 = vpack.c.bf16 %v7035, %v7035
        %v7261 = vpack.c.bf16 %v7038, %v7038
        %v7262 = vpack.c.bf16 %v7040, %v7040
        %v7263 = vpack.c.bf16 %v7043, %v7043
        %v7264 = vpack.c.bf16 %v7045, %v7045
        %v7265 = vpack.c.bf16 %v7048, %v7048
        %v7266 = vpack.c.bf16 %v7050, %v7050
        %v7267 = vpack.c.bf16 %v7053, %v7053
        %v7268 = vpack.c.bf16 %v7055, %v7055
        %v7269 = vpack.c.bf16 %v7058, %v7058
        %v7270 = vpack.c.bf16 %v7060, %v7060
        %v7271 = vpack.c.bf16 %v7063, %v7063
        %v7272 = vpack.c.bf16 %v7065, %v7065
        %v7273 = vpack.c.bf16 %v7068, %v7068
        %v7274 = vpack.c.bf16 %v7070, %v7070
        %v7275 = vpack.c.bf16 %v7073, %v7073
        %v7276 = vpack.c.bf16 %v7075, %v7075
        %v7277 = vrot.slane %v6978, 1
        %v7278 = vrot.slane %v6980, 1
        %v7279 = vrot.slane %v6983, 1
        %v7280 = vrot.slane %v6985, 1
        %v7281 = vrot.slane %v6988, 1
        %v7282 = vrot.slane %v6990, 1
        %v7283 = vrot.slane %v6993, 1
        %v7284 = vrot.slane %v6995, 1
        %v7285 = vrot.slane %v6998, 1
        %v7286 = vrot.slane %v7000, 1
        %v7287 = vrot.slane %v7003, 1
        %v7288 = vrot.slane %v7005, 1
        %v7289 = vrot.slane %v7008, 1
        %v7290 = vrot.slane %v7010, 1
        %v7291 = vrot.slane %v7013, 1
        %v7292 = vrot.slane %v7015, 1
        %v7293 = vrot.slane %v7018, 1
        %v7294 = vrot.slane %v7020, 1
        %v7295 = vrot.slane %v7023, 1
        %v7296 = vrot.slane %v7025, 1
        %v7297 = vrot.slane %v7028, 1
        %v7298 = vrot.slane %v7030, 1
        %v7299 = vrot.slane %v7033, 1
        %v7300 = vrot.slane %v7035, 1
        %v7301 = vrot.slane %v7038, 1
        %v7302 = vrot.slane %v7040, 1
        %v7303 = vrot.slane %v7043, 1
        %v7304 = vrot.slane %v7045, 1
        %v7305 = vrot.slane %v7048, 1
        %v7306 = vrot.slane %v7050, 1
        %v7307 = vrot.slane %v7053, 1
        %v7308 = vrot.slane %v7055, 1
        %v7309 = vrot.slane %v7058, 1
        %v7310 = vrot.slane %v7060, 1
        %v7311 = vrot.slane %v7063, 1
        %v7312 = vrot.slane %v7065, 1
        %v7313 = vrot.slane %v7068, 1
        %v7314 = vrot.slane %v7070, 1
        %v7315 = vrot.slane %v7073, 1
        %v7316 = vrot.slane %v7075, 1
        %v7317 = vsel %vm3913, %v7315, %v7316
        %v7318 = vsel %vm3913, %v7314, %v7315
        %v7319 = vsel %vm3913, %v7313, %v7314
        %v7320 = vsel %vm3913, %v7312, %v7313
        %v7321 = vsel %vm3913, %v7311, %v7312
        %v7322 = vsel %vm3913, %v7310, %v7311
        %v7323 = vsel %vm3913, %v7309, %v7310
        %v7324 = vsel %vm3913, %v7308, %v7309
        %v7325 = vsel %vm3913, %v7307, %v7308
        %v7326 = vsel %vm3913, %v7306, %v7307
        %v7327 = vsel %vm3913, %v7305, %v7306
        %v7328 = vsel %vm3913, %v7304, %v7305
        %v7329 = vsel %vm3913, %v7303, %v7304
        %v7330 = vsel %vm3913, %v7302, %v7303
        %v7331 = vsel %vm3913, %v7301, %v7302
        %v7332 = vsel %vm3913, %v7300, %v7301
        %v7333 = vsel %vm3913, %v7299, %v7300
        %v7334 = vsel %vm3913, %v7298, %v7299
        %v7335 = vsel %vm3913, %v7297, %v7298
        %v7336 = vsel %vm3913, %v7296, %v7297
        %v7337 = vsel %vm3913, %v7295, %v7296
        %v7338 = vsel %vm3913, %v7294, %v7295
        %v7339 = vsel %vm3913, %v7293, %v7294
        %v7340 = vsel %vm3913, %v7292, %v7293
        %v7341 = vsel %vm3913, %v7291, %v7292
        %v7342 = vsel %vm3913, %v7290, %v7291
        %v7343 = vsel %vm3913, %v7289, %v7290
        %v7344 = vsel %vm3913, %v7288, %v7289
        %v7345 = vsel %vm3913, %v7287, %v7288
        %v7346 = vsel %vm3913, %v7286, %v7287
        %v7347 = vsel %vm3913, %v7285, %v7286
        %v7348 = vsel %vm3913, %v7284, %v7285
        %v7349 = vsel %vm3913, %v7283, %v7284
        %v7350 = vsel %vm3913, %v7282, %v7283
        %v7351 = vsel %vm3913, %v7281, %v7282
        %v7352 = vsel %vm3913, %v7280, %v7281
        %v7353 = vsel %vm3913, %v7279, %v7280
        %v7354 = vsel %vm3913, %v7278, %v7279
        %v7355 = vsel %vm3913, %v7277, %v7278
        %v7356 = vsel %vm3913, %v7316, %v7277
        %v7357 = vmul.f32 %v7355, %v2429
        %v7358 = vmul.f32 %v7354, %v2430
        %v7359 = vmul.f32 %v7353, %v2431
        %v7360 = vmul.f32 %v7352, %v2432
        %v7361 = vmul.f32 %v7351, %v2433
        %v7362 = vmul.f32 %v7350, %v2434
        %v7363 = vmul.f32 %v7349, %v2435
        %v7364 = vmul.f32 %v7348, %v2436
        %v7365 = vmul.f32 %v7347, %v2437
        %v7366 = vmul.f32 %v7346, %v2438
        %v7367 = vmul.f32 %v7345, %v2439
        %v7368 = vmul.f32 %v7344, %v2440
        %v7369 = vmul.f32 %v7343, %v2441
        %v7370 = vmul.f32 %v7342, %v2442
        %v7371 = vmul.f32 %v7341, %v2443
        %v7372 = vmul.f32 %v7340, %v2444
        %v7373 = vmul.f32 %v7339, %v2445
        %v7374 = vmul.f32 %v7338, %v2446
        %v7375 = vmul.f32 %v7337, %v2447
        %v7376 = vmul.f32 %v7336, %v2448
        %v7377 = vmul.f32 %v7335, %v2449
        %v7378 = vmul.f32 %v7334, %v2450
        %v7379 = vmul.f32 %v7333, %v2451
        %v7380 = vmul.f32 %v7332, %v2452
        %v7381 = vmul.f32 %v7331, %v2453
        %v7382 = vmul.f32 %v7330, %v2454
        %v7383 = vmul.f32 %v7329, %v2455
        %v7384 = vmul.f32 %v7328, %v2456
        %v7385 = vmul.f32 %v7327, %v2457
        %v7386 = vmul.f32 %v7326, %v2458
        %v7387 = vmul.f32 %v7325, %v2459
        %v7388 = vmul.f32 %v7324, %v2460
        %v7389 = vmul.f32 %v7323, %v2461
        %v7390 = vmul.f32 %v7322, %v2462
        %v7391 = vmul.f32 %v7321, %v2463
        %v7392 = vmul.f32 %v7320, %v2464
        %v7393 = vmul.f32 %v7319, %v2465
        %v7394 = vmul.f32 %v7318, %v2466
        %v7395 = vmul.f32 %v7317, %v2467
        %v7396 = vmul.f32 %v7356, %v2468
        %v7397 = vpack.c.bf16 %v7357, %v7357
        %v7398 = vpack.c.bf16 %v7358, %v7358
        %v7399 = vpack.c.bf16 %v7359, %v7359
        %v7400 = vpack.c.bf16 %v7360, %v7360
        %v7401 = vpack.c.bf16 %v7361, %v7361
        %v7402 = vpack.c.bf16 %v7362, %v7362
        %v7403 = vpack.c.bf16 %v7363, %v7363
        %v7404 = vpack.c.bf16 %v7364, %v7364
        %v7405 = vpack.c.bf16 %v7365, %v7365
        %v7406 = vpack.c.bf16 %v7366, %v7366
        %v7407 = vpack.c.bf16 %v7367, %v7367
        %v7408 = vpack.c.bf16 %v7368, %v7368
        %v7409 = vpack.c.bf16 %v7369, %v7369
        %v7410 = vpack.c.bf16 %v7370, %v7370
        %v7411 = vpack.c.bf16 %v7371, %v7371
        %v7412 = vpack.c.bf16 %v7372, %v7372
        %v7413 = vpack.c.bf16 %v7373, %v7373
        %v7414 = vpack.c.bf16 %v7374, %v7374
        %v7415 = vpack.c.bf16 %v7375, %v7375
        %v7416 = vpack.c.bf16 %v7376, %v7376
        %v7417 = vpack.c.bf16 %v7377, %v7377
        %v7418 = vpack.c.bf16 %v7378, %v7378
        %v7419 = vpack.c.bf16 %v7379, %v7379
        %v7420 = vpack.c.bf16 %v7380, %v7380
        %v7421 = vpack.c.bf16 %v7381, %v7381
        %v7422 = vpack.c.bf16 %v7382, %v7382
        %v7423 = vpack.c.bf16 %v7383, %v7383
        %v7424 = vpack.c.bf16 %v7384, %v7384
        %v7425 = vpack.c.bf16 %v7385, %v7385
        %v7426 = vpack.c.bf16 %v7386, %v7386
        %v7427 = vpack.c.bf16 %v7387, %v7387
        %v7428 = vpack.c.bf16 %v7388, %v7388
        %v7429 = vpack.c.bf16 %v7389, %v7389
        %v7430 = vpack.c.bf16 %v7390, %v7390
        %v7431 = vpack.c.bf16 %v7391, %v7391
        %v7432 = vpack.c.bf16 %v7392, %v7392
        %v7433 = vpack.c.bf16 %v7393, %v7393
        %v7434 = vpack.c.bf16 %v7394, %v7394
        %v7435 = vpack.c.bf16 %v7395, %v7395
        %v7436 = vpack.c.bf16 %v7396, %v7396
        %v7477 = vunpack.c.l.b16 %v7197
        %v7478 = vunpack.c.l.b16 %v7198
        %v7479 = vunpack.c.l.b16 %v7199
        %v7480 = vunpack.c.l.b16 %v7200
        %v7481 = vunpack.c.l.b16 %v7201
        %v7482 = vunpack.c.l.b16 %v7202
        %v7483 = vunpack.c.l.b16 %v7203
        %v7484 = vunpack.c.l.b16 %v7204
        %v7485 = vunpack.c.l.b16 %v7205
        %v7486 = vunpack.c.l.b16 %v7206
        %v7487 = vunpack.c.l.b16 %v7207
        %v7488 = vunpack.c.l.b16 %v7208
        %v7489 = vunpack.c.l.b16 %v7209
        %v7490 = vunpack.c.l.b16 %v7210
        %v7491 = vunpack.c.l.b16 %v7211
        %v7492 = vunpack.c.l.b16 %v7212
        %v7493 = vunpack.c.l.b16 %v7213
        %v7494 = vunpack.c.l.b16 %v7214
        %v7495 = vunpack.c.l.b16 %v7215
        %v7496 = vunpack.c.l.b16 %v7216
        %v7497 = vunpack.c.l.b16 %v7217
        %v7498 = vunpack.c.l.b16 %v7218
        %v7499 = vunpack.c.l.b16 %v7219
        %v7500 = vunpack.c.l.b16 %v7220
        %v7501 = vunpack.c.l.b16 %v7221
        %v7502 = vunpack.c.l.b16 %v7222
        %v7503 = vunpack.c.l.b16 %v7223
        %v7504 = vunpack.c.l.b16 %v7224
        %v7505 = vunpack.c.l.b16 %v7225
        %v7506 = vunpack.c.l.b16 %v7226
        %v7507 = vunpack.c.l.b16 %v7227
        %v7508 = vunpack.c.l.b16 %v7228
        %v7509 = vunpack.c.l.b16 %v7229
        %v7510 = vunpack.c.l.b16 %v7230
        %v7511 = vunpack.c.l.b16 %v7231
        %v7512 = vunpack.c.l.b16 %v7232
        %v7513 = vunpack.c.l.b16 %v7233
        %v7514 = vunpack.c.l.b16 %v7234
        %v7515 = vunpack.c.l.b16 %v7235
        %v7516 = vunpack.c.l.b16 %v7236
        %v7517 = vpack.c.b16 %v7478, %v7477
        %v7518 = vpack.c.b16 %v7480, %v7479
        %v7519 = vpack.c.b16 %v7482, %v7481
        %v7520 = vpack.c.b16 %v7484, %v7483
        %v7521 = vpack.c.b16 %v7486, %v7485
        %v7522 = vpack.c.b16 %v7488, %v7487
        %v7523 = vpack.c.b16 %v7490, %v7489
        %v7524 = vpack.c.b16 %v7492, %v7491
        %v7525 = vpack.c.b16 %v7494, %v7493
        %v7526 = vpack.c.b16 %v7496, %v7495
        %v7527 = vpack.c.b16 %v7498, %v7497
        %v7528 = vpack.c.b16 %v7500, %v7499
        %v7529 = vpack.c.b16 %v7502, %v7501
        %v7530 = vpack.c.b16 %v7504, %v7503
        %v7531 = vpack.c.b16 %v7506, %v7505
        %v7532 = vpack.c.b16 %v7508, %v7507
        %v7533 = vpack.c.b16 %v7510, %v7509
        %v7534 = vpack.c.b16 %v7512, %v7511
        %v7535 = vpack.c.b16 %v7514, %v7513
        %v7536 = vpack.c.b16 %v7516, %v7515
        %v7597 = vunpack.c.l.b16 %v7237
        %v7598 = vunpack.c.l.b16 %v7238
        %v7599 = vunpack.c.l.b16 %v7239
        %v7600 = vunpack.c.l.b16 %v7240
        %v7601 = vunpack.c.l.b16 %v7241
        %v7602 = vunpack.c.l.b16 %v7242
        %v7603 = vunpack.c.l.b16 %v7243
        %v7604 = vunpack.c.l.b16 %v7244
        %v7605 = vunpack.c.l.b16 %v7245
        %v7606 = vunpack.c.l.b16 %v7246
        %v7607 = vunpack.c.l.b16 %v7247
        %v7608 = vunpack.c.l.b16 %v7248
        %v7609 = vunpack.c.l.b16 %v7249
        %v7610 = vunpack.c.l.b16 %v7250
        %v7611 = vunpack.c.l.b16 %v7251
        %v7612 = vunpack.c.l.b16 %v7252
        %v7613 = vunpack.c.l.b16 %v7253
        %v7614 = vunpack.c.l.b16 %v7254
        %v7615 = vunpack.c.l.b16 %v7255
        %v7616 = vunpack.c.l.b16 %v7256
        %v7617 = vunpack.c.l.b16 %v7257
        %v7618 = vunpack.c.l.b16 %v7258
        %v7619 = vunpack.c.l.b16 %v7259
        %v7620 = vunpack.c.l.b16 %v7260
        %v7621 = vunpack.c.l.b16 %v7261
        %v7622 = vunpack.c.l.b16 %v7262
        %v7623 = vunpack.c.l.b16 %v7263
        %v7624 = vunpack.c.l.b16 %v7264
        %v7625 = vunpack.c.l.b16 %v7265
        %v7626 = vunpack.c.l.b16 %v7266
        %v7627 = vunpack.c.l.b16 %v7267
        %v7628 = vunpack.c.l.b16 %v7268
        %v7629 = vunpack.c.l.b16 %v7269
        %v7630 = vunpack.c.l.b16 %v7270
        %v7631 = vunpack.c.l.b16 %v7271
        %v7632 = vunpack.c.l.b16 %v7272
        %v7633 = vunpack.c.l.b16 %v7273
        %v7634 = vunpack.c.l.b16 %v7274
        %v7635 = vunpack.c.l.b16 %v7275
        %v7636 = vunpack.c.l.b16 %v7276
        %v7637 = vpack.c.b16 %v7598, %v7597
        %v7638 = vpack.c.b16 %v7600, %v7599
        %v7639 = vpack.c.b16 %v7602, %v7601
        %v7640 = vpack.c.b16 %v7604, %v7603
        %v7641 = vpack.c.b16 %v7606, %v7605
        %v7642 = vpack.c.b16 %v7608, %v7607
        %v7643 = vpack.c.b16 %v7610, %v7609
        %v7644 = vpack.c.b16 %v7612, %v7611
        %v7645 = vpack.c.b16 %v7614, %v7613
        %v7646 = vpack.c.b16 %v7616, %v7615
        %v7647 = vpack.c.b16 %v7618, %v7617
        %v7648 = vpack.c.b16 %v7620, %v7619
        %v7649 = vpack.c.b16 %v7622, %v7621
        %v7650 = vpack.c.b16 %v7624, %v7623
        %v7651 = vpack.c.b16 %v7626, %v7625
        %v7652 = vpack.c.b16 %v7628, %v7627
        %v7653 = vpack.c.b16 %v7630, %v7629
        %v7654 = vpack.c.b16 %v7632, %v7631
        %v7655 = vpack.c.b16 %v7634, %v7633
        %v7656 = vpack.c.b16 %v7636, %v7635
        %v7717 = vunpack.c.l.b16 %v7397
        %v7718 = vunpack.c.l.b16 %v7398
        %v7719 = vunpack.c.l.b16 %v7399
        %v7720 = vunpack.c.l.b16 %v7400
        %v7721 = vunpack.c.l.b16 %v7401
        %v7722 = vunpack.c.l.b16 %v7402
        %v7723 = vunpack.c.l.b16 %v7403
        %v7724 = vunpack.c.l.b16 %v7404
        %v7725 = vunpack.c.l.b16 %v7405
        %v7726 = vunpack.c.l.b16 %v7406
        %v7727 = vunpack.c.l.b16 %v7407
        %v7728 = vunpack.c.l.b16 %v7408
        %v7729 = vunpack.c.l.b16 %v7409
        %v7730 = vunpack.c.l.b16 %v7410
        %v7731 = vunpack.c.l.b16 %v7411
        %v7732 = vunpack.c.l.b16 %v7412
        %v7733 = vunpack.c.l.b16 %v7413
        %v7734 = vunpack.c.l.b16 %v7414
        %v7735 = vunpack.c.l.b16 %v7415
        %v7736 = vunpack.c.l.b16 %v7416
        %v7737 = vunpack.c.l.b16 %v7417
        %v7738 = vunpack.c.l.b16 %v7418
        %v7739 = vunpack.c.l.b16 %v7419
        %v7740 = vunpack.c.l.b16 %v7420
        %v7741 = vunpack.c.l.b16 %v7421
        %v7742 = vunpack.c.l.b16 %v7422
        %v7743 = vunpack.c.l.b16 %v7423
        %v7744 = vunpack.c.l.b16 %v7424
        %v7745 = vunpack.c.l.b16 %v7425
        %v7746 = vunpack.c.l.b16 %v7426
        %v7747 = vunpack.c.l.b16 %v7427
        %v7748 = vunpack.c.l.b16 %v7428
        %v7749 = vunpack.c.l.b16 %v7429
        %v7750 = vunpack.c.l.b16 %v7430
        %v7751 = vunpack.c.l.b16 %v7431
        %v7752 = vunpack.c.l.b16 %v7432
        %v7753 = vunpack.c.l.b16 %v7433
        %v7754 = vunpack.c.l.b16 %v7434
        %v7755 = vunpack.c.l.b16 %v7435
        %v7756 = vunpack.c.l.b16 %v7436
        %v7757 = vpack.c.b16 %v7718, %v7717
        %v7758 = vpack.c.b16 %v7720, %v7719
        %v7759 = vpack.c.b16 %v7722, %v7721
        %v7760 = vpack.c.b16 %v7724, %v7723
        %v7761 = vpack.c.b16 %v7726, %v7725
        %v7762 = vpack.c.b16 %v7728, %v7727
        %v7763 = vpack.c.b16 %v7730, %v7729
        %v7764 = vpack.c.b16 %v7732, %v7731
        %v7765 = vpack.c.b16 %v7734, %v7733
        %v7766 = vpack.c.b16 %v7736, %v7735
        %v7767 = vpack.c.b16 %v7738, %v7737
        %v7768 = vpack.c.b16 %v7740, %v7739
        %v7769 = vpack.c.b16 %v7742, %v7741
        %v7770 = vpack.c.b16 %v7744, %v7743
        %v7771 = vpack.c.b16 %v7746, %v7745
        %v7772 = vpack.c.b16 %v7748, %v7747
        %v7773 = vpack.c.b16 %v7750, %v7749
        %v7774 = vpack.c.b16 %v7752, %v7751
        %v7775 = vpack.c.b16 %v7754, %v7753
        %v7776 = vpack.c.b16 %v7756, %v7755
        %v7797 = vld [vmem:[#allocation3] sm:$0xf]
        %v7798 = vld [vmem:[#allocation3 + $0x4] sm:$0xf]
        %v7799 = vld [vmem:[#allocation3 + $0x8] sm:$0xf]
        %v7800 = vld [vmem:[#allocation3 + $0xc] sm:$0xf]
        %v7801 = vld [vmem:[#allocation3 + $0x10] sm:$0xf]
        %v7802 = vld [vmem:[#allocation3 + $0x14] sm:$0xf]
        %v7803 = vld [vmem:[#allocation3 + $0x18] sm:$0xf]
        %v7804 = vld [vmem:[#allocation3 + $0x1c] sm:$0xf]
        %v7805 = vld [vmem:[#allocation3 + $0x20] sm:$0xf]
        %v7806 = vld [vmem:[#allocation3 + $0x24] sm:$0xf]
        %v7807 = vld [vmem:[#allocation3 + $0x28] sm:$0xf]
        %v7808 = vld [vmem:[#allocation3 + $0x2c] sm:$0xf]
        %v7809 = vld [vmem:[#allocation3 + $0x30] sm:$0xf]
        %v7810 = vld [vmem:[#allocation3 + $0x34] sm:$0xf]
        %v7811 = vld [vmem:[#allocation3 + $0x38] sm:$0xf]
        %v7812 = vld [vmem:[#allocation3 + $0x3c] sm:$0xf]
        %v7813 = vld [vmem:[#allocation3 + $0x40] sm:$0xf]
        %v7814 = vld [vmem:[#allocation3 + $0x44] sm:$0xf]
        %v7815 = vld [vmem:[#allocation3 + $0x48] sm:$0xf]
        %v7816 = vld [vmem:[#allocation3 + $0x4c] sm:$0xf]
        %v7817 = vld [vmem:[#allocation3 + $0x50] sm:$0xf]
        %v7818 = vld [vmem:[#allocation3 + $0x54] sm:$0xf]
        %v7819 = vld [vmem:[#allocation3 + $0x58] sm:$0xf]
        %v7820 = vld [vmem:[#allocation3 + $0x5c] sm:$0xf]
        %v7821 = vld [vmem:[#allocation3 + $0x60] sm:$0xf]
        %v7822 = vld [vmem:[#allocation3 + $0x64] sm:$0xf]
        %v7823 = vld [vmem:[#allocation3 + $0x68] sm:$0xf]
        %v7824 = vld [vmem:[#allocation3 + $0x6c] sm:$0xf]
        %v7825 = vld [vmem:[#allocation3 + $0x70] sm:$0xf]
        %v7826 = vld [vmem:[#allocation3 + $0x74] sm:$0xf]
        %v7827 = vld [vmem:[#allocation3 + $0x78] sm:$0xf]
        %v7828 = vld [vmem:[#allocation3 + $0x7c] sm:$0xf]
        %v7829 = vld [vmem:[#allocation3 + $0x80] sm:$0xf]
        %v7830 = vld [vmem:[#allocation3 + $0x84] sm:$0xf]
        %v7831 = vld [vmem:[#allocation3 + $0x88] sm:$0xf]
        %v7832 = vld [vmem:[#allocation3 + $0x8c] sm:$0xf]
        %v7833 = vld [vmem:[#allocation3 + $0x90] sm:$0xf]
        %v7834 = vld [vmem:[#allocation3 + $0x94] sm:$0xf]
        %v7835 = vld [vmem:[#allocation3 + $0x98] sm:$0xf]
        %v7836 = vld [vmem:[#allocation3 + $0x9c] sm:$0xf]
        %v7837 = vld [vmem:[#allocation3 + $0xa0] sm:$0xf]
        %v7838 = vld [vmem:[#allocation3 + $0xa4] sm:$0xf]
        %v7839 = vld [vmem:[#allocation3 + $0xa8] sm:$0xf]
        %v7840 = vld [vmem:[#allocation3 + $0xac] sm:$0xf]
        %v7841 = vld [vmem:[#allocation3 + $0xb0] sm:$0xf]
        %v7842 = vld [vmem:[#allocation3 + $0xb4] sm:$0xf]
        %v7843 = vld [vmem:[#allocation3 + $0xb8] sm:$0xf]
        %v7844 = vld [vmem:[#allocation3 + $0xbc] sm:$0xf]
        %v7845 = vld [vmem:[%s6] sm:$0x1]
        %v7847 = vperm.slane %v7845, 0
        %v7897 = vunpack.c.l.b16 %v7797
        %v7898 = vunpack.c.l.b16 %v7798
        %v7899 = vunpack.c.l.b16 %v7799
        %v7900 = vunpack.c.l.b16 %v7800
        %v7901 = vunpack.c.l.b16 %v7801
        %v7902 = vunpack.c.l.b16 %v7802
        %v7903 = vunpack.c.l.b16 %v7803
        %v7904 = vunpack.c.l.b16 %v7804
        %v7905 = vunpack.c.l.b16 %v7805
        %v7906 = vunpack.c.l.b16 %v7806
        %v7907 = vunpack.c.l.b16 %v7807
        %v7908 = vunpack.c.l.b16 %v7808
        %v7909 = vunpack.c.l.b16 %v7809
        %v7910 = vunpack.c.l.b16 %v7810
        %v7911 = vunpack.c.l.b16 %v7811
        %v7912 = vunpack.c.l.b16 %v7812
        %v7913 = vunpack.c.l.b16 %v7813
        %v7914 = vunpack.c.l.b16 %v7814
        %v7915 = vunpack.c.l.b16 %v7815
        %v7916 = vunpack.c.l.b16 %v7816
        %v7917 = vunpack.c.l.b16 %v7817
        %v7918 = vunpack.c.l.b16 %v7818
        %v7919 = vunpack.c.l.b16 %v7819
        %v7920 = vunpack.c.l.b16 %v7820
        %v7921 = vunpack.c.l.b16 %v7821
        %v7922 = vunpack.c.l.b16 %v7822
        %v7923 = vunpack.c.l.b16 %v7823
        %v7924 = vunpack.c.l.b16 %v7824
        %v7925 = vunpack.c.l.b16 %v7825
        %v7926 = vunpack.c.l.b16 %v7826
        %v7927 = vunpack.c.l.b16 %v7827
        %v7928 = vunpack.c.l.b16 %v7828
        %v7929 = vunpack.c.l.b16 %v7829
        %v7930 = vunpack.c.l.b16 %v7830
        %v7931 = vunpack.c.l.b16 %v7831
        %v7932 = vunpack.c.l.b16 %v7832
        %v7933 = vunpack.c.l.b16 %v7833
        %v7934 = vunpack.c.l.b16 %v7834
        %v7935 = vunpack.c.l.b16 %v7835
        %v7936 = vunpack.c.l.b16 %v7836
        %v7937 = vunpack.c.l.b16 %v7837
        %v7938 = vunpack.c.l.b16 %v7838
        %v7939 = vunpack.c.l.b16 %v7839
        %v7940 = vunpack.c.l.b16 %v7840
        %v7941 = vunpack.c.l.b16 %v7841
        %v7942 = vunpack.c.l.b16 %v7842
        %v7943 = vunpack.c.l.b16 %v7843
        %v7944 = vunpack.c.l.b16 %v7844
        %v7945 = vpack.c.b16 %v7898, %v7897
        %v7946 = vpack.c.b16 %v7900, %v7899
        %v7947 = vpack.c.b16 %v7902, %v7901
        %v7948 = vpack.c.b16 %v7904, %v7903
        %v7949 = vpack.c.b16 %v7906, %v7905
        %v7950 = vpack.c.b16 %v7908, %v7907
        %v7951 = vpack.c.b16 %v7910, %v7909
        %v7952 = vpack.c.b16 %v7912, %v7911
        %v7953 = vpack.c.b16 %v7914, %v7913
        %v7954 = vpack.c.b16 %v7916, %v7915
        %v7955 = vpack.c.b16 %v7918, %v7917
        %v7956 = vpack.c.b16 %v7920, %v7919
        %v7957 = vpack.c.b16 %v7922, %v7921
        %v7958 = vpack.c.b16 %v7924, %v7923
        %v7959 = vpack.c.b16 %v7926, %v7925
        %v7960 = vpack.c.b16 %v7928, %v7927
        %v7961 = vpack.c.b16 %v7930, %v7929
        %v7962 = vpack.c.b16 %v7932, %v7931
        %v7963 = vpack.c.b16 %v7934, %v7933
        %v7964 = vpack.c.b16 %v7936, %v7935
        %v7965 = vpack.c.b16 %v7938, %v7937
        %v7966 = vpack.c.b16 %v7940, %v7939
        %v7967 = vpack.c.b16 %v7942, %v7941
        %v7968 = vpack.c.b16 %v7944, %v7943
        %7993 = vmatpush.bf16.msra.mxu0 %v7952
        %7994 = vmatpush.bf16.msra.mxu0 %v7951
        %7995 = vmatpush.bf16.msra.mxu0 %v7950
        %7996 = vmatpush.bf16.msra.mxu0 %v7949
        %7997 = vmatpush.bf16.msra.mxu0 %v7948
        %7998 = vmatpush.bf16.msra.mxu0 %v7947
        %7999 = vmatpush.bf16.msra.mxu0 %v7946
        %8000 = vmatpush.bf16.msra.mxu0 %v7945
        %8001 = vmatmul.bf16.gmra.mxu0 %v7517
        %v8002 = vpop.f32.mrf.mxu0
        %v8003 = vadd.f32 %v7847, %v8002
        %v8004 = vpop.f32.mrf.mxu0
        %v8005 = vadd.f32 %v7847, %v8004
        %8006 = vmatmul.bf16.gmra.mxu0 %v7518
        %v8007 = vpop.f32.mrf.mxu0
        %v8008 = vadd.f32 %v7847, %v8007
        %v8009 = vpop.f32.mrf.mxu0
        %v8010 = vadd.f32 %v7847, %v8009
        %8011 = vmatmul.bf16.gmra.mxu0 %v7519
        %v8012 = vpop.f32.mrf.mxu0
        %v8013 = vadd.f32 %v7847, %v8012
        %v8014 = vpop.f32.mrf.mxu0
        %v8015 = vadd.f32 %v7847, %v8014
        %8016 = vmatmul.bf16.gmra.mxu0 %v7520
        %v8017 = vpop.f32.mrf.mxu0
        %v8018 = vadd.f32 %v7847, %v8017
        %v8019 = vpop.f32.mrf.mxu0
        %v8020 = vadd.f32 %v7847, %v8019
        %8021 = vmatmul.bf16.gmra.mxu0 %v7521
        %v8022 = vpop.f32.mrf.mxu0
        %v8023 = vadd.f32 %v7847, %v8022
        %v8024 = vpop.f32.mrf.mxu0
        %v8025 = vadd.f32 %v7847, %v8024
        %8026 = vmatmul.bf16.gmra.mxu0 %v7522
        %v8027 = vpop.f32.mrf.mxu0
        %v8028 = vadd.f32 %v7847, %v8027
        %v8029 = vpop.f32.mrf.mxu0
        %v8030 = vadd.f32 %v7847, %v8029
        %8031 = vmatmul.bf16.gmra.mxu0 %v7523
        %v8032 = vpop.f32.mrf.mxu0
        %v8033 = vadd.f32 %v7847, %v8032
        %v8034 = vpop.f32.mrf.mxu0
        %v8035 = vadd.f32 %v7847, %v8034
        %8036 = vmatmul.bf16.gmra.mxu0 %v7524
        %v8037 = vpop.f32.mrf.mxu0
        %v8038 = vadd.f32 %v7847, %v8037
        %v8039 = vpop.f32.mrf.mxu0
        %v8040 = vadd.f32 %v7847, %v8039
        %8041 = vmatmul.bf16.gmra.mxu0 %v7525
        %v8042 = vpop.f32.mrf.mxu0
        %v8043 = vadd.f32 %v7847, %v8042
        %v8044 = vpop.f32.mrf.mxu0
        %v8045 = vadd.f32 %v7847, %v8044
        %8046 = vmatmul.bf16.gmra.mxu0 %v7526
        %v8047 = vpop.f32.mrf.mxu0
        %v8048 = vadd.f32 %v7847, %v8047
        %v8049 = vpop.f32.mrf.mxu0
        %v8050 = vadd.f32 %v7847, %v8049
        %8051 = vmatmul.bf16.gmra.mxu0 %v7527
        %v8052 = vpop.f32.mrf.mxu0
        %v8053 = vadd.f32 %v7847, %v8052
        %v8054 = vpop.f32.mrf.mxu0
        %v8055 = vadd.f32 %v7847, %v8054
        %8056 = vmatmul.bf16.gmra.mxu0 %v7528
        %v8057 = vpop.f32.mrf.mxu0
        %v8058 = vadd.f32 %v7847, %v8057
        %v8059 = vpop.f32.mrf.mxu0
        %v8060 = vadd.f32 %v7847, %v8059
        %8061 = vmatmul.bf16.gmra.mxu0 %v7529
        %v8062 = vpop.f32.mrf.mxu0
        %v8063 = vadd.f32 %v7847, %v8062
        %v8064 = vpop.f32.mrf.mxu0
        %v8065 = vadd.f32 %v7847, %v8064
        %8066 = vmatmul.bf16.gmra.mxu0 %v7530
        %v8067 = vpop.f32.mrf.mxu0
        %v8068 = vadd.f32 %v7847, %v8067
        %v8069 = vpop.f32.mrf.mxu0
        %v8070 = vadd.f32 %v7847, %v8069
        %8071 = vmatmul.bf16.gmra.mxu0 %v7531
        %v8072 = vpop.f32.mrf.mxu0
        %v8073 = vadd.f32 %v7847, %v8072
        %v8074 = vpop.f32.mrf.mxu0
        %v8075 = vadd.f32 %v7847, %v8074
        %8076 = vmatmul.bf16.gmra.mxu0 %v7532
        %v8077 = vpop.f32.mrf.mxu0
        %v8078 = vadd.f32 %v7847, %v8077
        %v8079 = vpop.f32.mrf.mxu0
        %v8080 = vadd.f32 %v7847, %v8079
        %8081 = vmatmul.bf16.gmra.mxu0 %v7533
        %v8082 = vpop.f32.mrf.mxu0
        %v8083 = vadd.f32 %v7847, %v8082
        %v8084 = vpop.f32.mrf.mxu0
        %v8085 = vadd.f32 %v7847, %v8084
        %8086 = vmatmul.bf16.gmra.mxu0 %v7534
        %v8087 = vpop.f32.mrf.mxu0
        %v8088 = vadd.f32 %v7847, %v8087
        %v8089 = vpop.f32.mrf.mxu0
        %v8090 = vadd.f32 %v7847, %v8089
        %8091 = vmatmul.bf16.gmra.mxu0 %v7535
        %v8092 = vpop.f32.mrf.mxu0
        %v8093 = vadd.f32 %v7847, %v8092
        %v8094 = vpop.f32.mrf.mxu0
        %v8095 = vadd.f32 %v7847, %v8094
        %8096 = vmatmul.bf16.gmra.mxu0 %v7536
        %v8097 = vpop.f32.mrf.mxu0
        %v8098 = vadd.f32 %v7847, %v8097
        %v8099 = vpop.f32.mrf.mxu0
        %v8100 = vadd.f32 %v7847, %v8099
        %8101 = vdwg.mxu0
        %8102 = vmatpush.bf16.msra.mxu0 %v7960
        %8103 = vmatpush.bf16.msra.mxu0 %v7959
        %8104 = vmatpush.bf16.msra.mxu0 %v7958
        %8105 = vmatpush.bf16.msra.mxu0 %v7957
        %8106 = vmatpush.bf16.msra.mxu0 %v7956
        %8107 = vmatpush.bf16.msra.mxu0 %v7955
        %8108 = vmatpush.bf16.msra.mxu0 %v7954
        %8109 = vmatpush.bf16.msra.mxu0 %v7953
        %8110 = vmatmul.bf16.gmra.mxu0 %v7637
        %v8111 = vpop.f32.mrf.mxu0
        %v8112 = vadd.f32 %v8003, %v8111
        %v8113 = vpop.f32.mrf.mxu0
        %v8114 = vadd.f32 %v8005, %v8113
        %8115 = vmatmul.bf16.gmra.mxu0 %v7638
        %v8116 = vpop.f32.mrf.mxu0
        %v8117 = vadd.f32 %v8008, %v8116
        %v8118 = vpop.f32.mrf.mxu0
        %v8119 = vadd.f32 %v8010, %v8118
        %8120 = vmatmul.bf16.gmra.mxu0 %v7639
        %v8121 = vpop.f32.mrf.mxu0
        %v8122 = vadd.f32 %v8013, %v8121
        %v8123 = vpop.f32.mrf.mxu0
        %v8124 = vadd.f32 %v8015, %v8123
        %8125 = vmatmul.bf16.gmra.mxu0 %v7640
        %v8126 = vpop.f32.mrf.mxu0
        %v8127 = vadd.f32 %v8018, %v8126
        %v8128 = vpop.f32.mrf.mxu0
        %v8129 = vadd.f32 %v8020, %v8128
        %8130 = vmatmul.bf16.gmra.mxu0 %v7641
        %v8131 = vpop.f32.mrf.mxu0
        %v8132 = vadd.f32 %v8023, %v8131
        %v8133 = vpop.f32.mrf.mxu0
        %v8134 = vadd.f32 %v8025, %v8133
        %8135 = vmatmul.bf16.gmra.mxu0 %v7642
        %v8136 = vpop.f32.mrf.mxu0
        %v8137 = vadd.f32 %v8028, %v8136
        %v8138 = vpop.f32.mrf.mxu0
        %v8139 = vadd.f32 %v8030, %v8138
        %8140 = vmatmul.bf16.gmra.mxu0 %v7643
        %v8141 = vpop.f32.mrf.mxu0
        %v8142 = vadd.f32 %v8033, %v8141
        %v8143 = vpop.f32.mrf.mxu0
        %v8144 = vadd.f32 %v8035, %v8143
        %8145 = vmatmul.bf16.gmra.mxu0 %v7644
        %v8146 = vpop.f32.mrf.mxu0
        %v8147 = vadd.f32 %v8038, %v8146
        %v8148 = vpop.f32.mrf.mxu0
        %v8149 = vadd.f32 %v8040, %v8148
        %8150 = vmatmul.bf16.gmra.mxu0 %v7645
        %v8151 = vpop.f32.mrf.mxu0
        %v8152 = vadd.f32 %v8043, %v8151
        %v8153 = vpop.f32.mrf.mxu0
        %v8154 = vadd.f32 %v8045, %v8153
        %8155 = vmatmul.bf16.gmra.mxu0 %v7646
        %v8156 = vpop.f32.mrf.mxu0
        %v8157 = vadd.f32 %v8048, %v8156
        %v8158 = vpop.f32.mrf.mxu0
        %v8159 = vadd.f32 %v8050, %v8158
        %8160 = vmatmul.bf16.gmra.mxu0 %v7647
        %v8161 = vpop.f32.mrf.mxu0
        %v8162 = vadd.f32 %v8053, %v8161
        %v8163 = vpop.f32.mrf.mxu0
        %v8164 = vadd.f32 %v8055, %v8163
        %8165 = vmatmul.bf16.gmra.mxu0 %v7648
        %v8166 = vpop.f32.mrf.mxu0
        %v8167 = vadd.f32 %v8058, %v8166
        %v8168 = vpop.f32.mrf.mxu0
        %v8169 = vadd.f32 %v8060, %v8168
        %8170 = vmatmul.bf16.gmra.mxu0 %v7649
        %v8171 = vpop.f32.mrf.mxu0
        %v8172 = vadd.f32 %v8063, %v8171
        %v8173 = vpop.f32.mrf.mxu0
        %v8174 = vadd.f32 %v8065, %v8173
        %8175 = vmatmul.bf16.gmra.mxu0 %v7650
        %v8176 = vpop.f32.mrf.mxu0
        %v8177 = vadd.f32 %v8068, %v8176
        %v8178 = vpop.f32.mrf.mxu0
        %v8179 = vadd.f32 %v8070, %v8178
        %8180 = vmatmul.bf16.gmra.mxu0 %v7651
        %v8181 = vpop.f32.mrf.mxu0
        %v8182 = vadd.f32 %v8073, %v8181
        %v8183 = vpop.f32.mrf.mxu0
        %v8184 = vadd.f32 %v8075, %v8183
        %8185 = vmatmul.bf16.gmra.mxu0 %v7652
        %v8186 = vpop.f32.mrf.mxu0
        %v8187 = vadd.f32 %v8078, %v8186
        %v8188 = vpop.f32.mrf.mxu0
        %v8189 = vadd.f32 %v8080, %v8188
        %8190 = vmatmul.bf16.gmra.mxu0 %v7653
        %v8191 = vpop.f32.mrf.mxu0
        %v8192 = vadd.f32 %v8083, %v8191
        %v8193 = vpop.f32.mrf.mxu0
        %v8194 = vadd.f32 %v8085, %v8193
        %8195 = vmatmul.bf16.gmra.mxu0 %v7654
        %v8196 = vpop.f32.mrf.mxu0
        %v8197 = vadd.f32 %v8088, %v8196
        %v8198 = vpop.f32.mrf.mxu0
        %v8199 = vadd.f32 %v8090, %v8198
        %8200 = vmatmul.bf16.gmra.mxu0 %v7655
        %v8201 = vpop.f32.mrf.mxu0
        %v8202 = vadd.f32 %v8093, %v8201
        %v8203 = vpop.f32.mrf.mxu0
        %v8204 = vadd.f32 %v8095, %v8203
        %8205 = vmatmul.bf16.gmra.mxu0 %v7656
        %v8206 = vpop.f32.mrf.mxu0
        %v8207 = vadd.f32 %v8098, %v8206
        %v8208 = vpop.f32.mrf.mxu0
        %v8209 = vadd.f32 %v8100, %v8208
        %8210 = vdwg.mxu0
        %8211 = vmatpush.bf16.msra.mxu0 %v7968
        %8212 = vmatpush.bf16.msra.mxu0 %v7967
        %8213 = vmatpush.bf16.msra.mxu0 %v7966
        %8214 = vmatpush.bf16.msra.mxu0 %v7965
        %8215 = vmatpush.bf16.msra.mxu0 %v7964
        %8216 = vmatpush.bf16.msra.mxu0 %v7963
        %8217 = vmatpush.bf16.msra.mxu0 %v7962
        %8218 = vmatpush.bf16.msra.mxu0 %v7961
        %8219 = vmatmul.bf16.gmra.mxu0 %v7757
        %v8220 = vpop.f32.mrf.mxu0
        %v8221 = vadd.f32 %v8112, %v8220
        %v8222 = vpop.f32.mrf.mxu0
        %v8223 = vadd.f32 %v8114, %v8222
        %8224 = vmatmul.bf16.gmra.mxu0 %v7758
        %v8225 = vpop.f32.mrf.mxu0
        %v8226 = vadd.f32 %v8117, %v8225
        %v8227 = vpop.f32.mrf.mxu0
        %v8228 = vadd.f32 %v8119, %v8227
        %8229 = vmatmul.bf16.gmra.mxu0 %v7759
        %v8230 = vpop.f32.mrf.mxu0
        %v8231 = vadd.f32 %v8122, %v8230
        %v8232 = vpop.f32.mrf.mxu0
        %v8233 = vadd.f32 %v8124, %v8232
        %8234 = vmatmul.bf16.gmra.mxu0 %v7760
        %v8235 = vpop.f32.mrf.mxu0
        %v8236 = vadd.f32 %v8127, %v8235
        %v8237 = vpop.f32.mrf.mxu0
        %v8238 = vadd.f32 %v8129, %v8237
        %8239 = vmatmul.bf16.gmra.mxu0 %v7761
        %v8240 = vpop.f32.mrf.mxu0
        %v8241 = vadd.f32 %v8132, %v8240
        %v8242 = vpop.f32.mrf.mxu0
        %v8243 = vadd.f32 %v8134, %v8242
        %8244 = vmatmul.bf16.gmra.mxu0 %v7762
        %v8245 = vpop.f32.mrf.mxu0
        %v8246 = vadd.f32 %v8137, %v8245
        %v8247 = vpop.f32.mrf.mxu0
        %v8248 = vadd.f32 %v8139, %v8247
        %8249 = vmatmul.bf16.gmra.mxu0 %v7763
        %v8250 = vpop.f32.mrf.mxu0
        %v8251 = vadd.f32 %v8142, %v8250
        %v8252 = vpop.f32.mrf.mxu0
        %v8253 = vadd.f32 %v8144, %v8252
        %8254 = vmatmul.bf16.gmra.mxu0 %v7764
        %v8255 = vpop.f32.mrf.mxu0
        %v8256 = vadd.f32 %v8147, %v8255
        %v8257 = vpop.f32.mrf.mxu0
        %v8258 = vadd.f32 %v8149, %v8257
        %8259 = vmatmul.bf16.gmra.mxu0 %v7765
        %v8260 = vpop.f32.mrf.mxu0
        %v8261 = vadd.f32 %v8152, %v8260
        %v8262 = vpop.f32.mrf.mxu0
        %v8263 = vadd.f32 %v8154, %v8262
        %8264 = vmatmul.bf16.gmra.mxu0 %v7766
        %v8265 = vpop.f32.mrf.mxu0
        %v8266 = vadd.f32 %v8157, %v8265
        %v8267 = vpop.f32.mrf.mxu0
        %v8268 = vadd.f32 %v8159, %v8267
        %8269 = vmatmul.bf16.gmra.mxu0 %v7767
        %v8270 = vpop.f32.mrf.mxu0
        %v8271 = vadd.f32 %v8162, %v8270
        %v8272 = vpop.f32.mrf.mxu0
        %v8273 = vadd.f32 %v8164, %v8272
        %8274 = vmatmul.bf16.gmra.mxu0 %v7768
        %v8275 = vpop.f32.mrf.mxu0
        %v8276 = vadd.f32 %v8167, %v8275
        %v8277 = vpop.f32.mrf.mxu0
        %v8278 = vadd.f32 %v8169, %v8277
        %8279 = vmatmul.bf16.gmra.mxu0 %v7769
        %v8280 = vpop.f32.mrf.mxu0
        %v8281 = vadd.f32 %v8172, %v8280
        %v8282 = vpop.f32.mrf.mxu0
        %v8283 = vadd.f32 %v8174, %v8282
        %8284 = vmatmul.bf16.gmra.mxu0 %v7770
        %v8285 = vpop.f32.mrf.mxu0
        %v8286 = vadd.f32 %v8177, %v8285
        %v8287 = vpop.f32.mrf.mxu0
        %v8288 = vadd.f32 %v8179, %v8287
        %8289 = vmatmul.bf16.gmra.mxu0 %v7771
        %v8290 = vpop.f32.mrf.mxu0
        %v8291 = vadd.f32 %v8182, %v8290
        %v8292 = vpop.f32.mrf.mxu0
        %v8293 = vadd.f32 %v8184, %v8292
        %8294 = vmatmul.bf16.gmra.mxu0 %v7772
        %v8295 = vpop.f32.mrf.mxu0
        %v8296 = vadd.f32 %v8187, %v8295
        %v8297 = vpop.f32.mrf.mxu0
        %v8298 = vadd.f32 %v8189, %v8297
        %8299 = vmatmul.bf16.gmra.mxu0 %v7773
        %v8300 = vpop.f32.mrf.mxu0
        %v8301 = vadd.f32 %v8192, %v8300
        %v8302 = vpop.f32.mrf.mxu0
        %v8303 = vadd.f32 %v8194, %v8302
        %8304 = vmatmul.bf16.gmra.mxu0 %v7774
        %v8305 = vpop.f32.mrf.mxu0
        %v8306 = vadd.f32 %v8197, %v8305
        %v8307 = vpop.f32.mrf.mxu0
        %v8308 = vadd.f32 %v8199, %v8307
        %8309 = vmatmul.bf16.gmra.mxu0 %v7775
        %v8310 = vpop.f32.mrf.mxu0
        %v8311 = vadd.f32 %v8202, %v8310
        %v8312 = vpop.f32.mrf.mxu0
        %v8313 = vadd.f32 %v8204, %v8312
        %8314 = vmatmul.bf16.gmra.mxu0 %v7776
        %v8315 = vpop.f32.mrf.mxu0
        %v8316 = vadd.f32 %v8207, %v8315
        %v8317 = vpop.f32.mrf.mxu0
        %v8318 = vadd.f32 %v8209, %v8317
        %8319 = vdwg.mxu0
        %v8320 = vmax.f32 %v8221, 0.0
        %v8321 = vmax.f32 %v8223, 0.0
        %v8322 = vmax.f32 %v8226, 0.0
        %v8323 = vmax.f32 %v8228, 0.0
        %v8324 = vmax.f32 %v8231, 0.0
        %v8325 = vmax.f32 %v8233, 0.0
        %v8326 = vmax.f32 %v8236, 0.0
        %v8327 = vmax.f32 %v8238, 0.0
        %v8328 = vmax.f32 %v8241, 0.0
        %v8329 = vmax.f32 %v8243, 0.0
        %v8330 = vmax.f32 %v8246, 0.0
        %v8331 = vmax.f32 %v8248, 0.0
        %v8332 = vmax.f32 %v8251, 0.0
        %v8333 = vmax.f32 %v8253, 0.0
        %v8334 = vmax.f32 %v8256, 0.0
        %v8335 = vmax.f32 %v8258, 0.0
        %v8336 = vmax.f32 %v8261, 0.0
        %v8337 = vmax.f32 %v8263, 0.0
        %v8338 = vmax.f32 %v8266, 0.0
        %v8339 = vmax.f32 %v8268, 0.0
        %v8340 = vmax.f32 %v8271, 0.0
        %v8341 = vmax.f32 %v8273, 0.0
        %v8342 = vmax.f32 %v8276, 0.0
        %v8343 = vmax.f32 %v8278, 0.0
        %v8344 = vmax.f32 %v8281, 0.0
        %v8345 = vmax.f32 %v8283, 0.0
        %v8346 = vmax.f32 %v8286, 0.0
        %v8347 = vmax.f32 %v8288, 0.0
        %v8348 = vmax.f32 %v8291, 0.0
        %v8349 = vmax.f32 %v8293, 0.0
        %v8350 = vmax.f32 %v8296, 0.0
        %v8351 = vmax.f32 %v8298, 0.0
        %v8352 = vmax.f32 %v8301, 0.0
        %v8353 = vmax.f32 %v8303, 0.0
        %v8354 = vmax.f32 %v8306, 0.0
        %v8355 = vmax.f32 %v8308, 0.0
        %v8356 = vmax.f32 %v8311, 0.0
        %v8357 = vmax.f32 %v8313, 0.0
        %v8358 = vmax.f32 %v8316, 0.0
        %v8359 = vmax.f32 %v8318, 0.0
        %v8360 = vadd.f32 %v8320, %v6978
        %v8361 = vadd.f32 %v8321, %v6980
        %v8362 = vadd.f32 %v8322, %v6983
        %v8363 = vadd.f32 %v8323, %v6985
        %v8364 = vadd.f32 %v8324, %v6988
        %v8365 = vadd.f32 %v8325, %v6990
        %v8366 = vadd.f32 %v8326, %v6993
        %v8367 = vadd.f32 %v8327, %v6995
        %v8368 = vadd.f32 %v8328, %v6998
        %v8369 = vadd.f32 %v8329, %v7000
        %v8370 = vadd.f32 %v8330, %v7003
        %v8371 = vadd.f32 %v8331, %v7005
        %v8372 = vadd.f32 %v8332, %v7008
        %v8373 = vadd.f32 %v8333, %v7010
        %v8374 = vadd.f32 %v8334, %v7013
        %v8375 = vadd.f32 %v8335, %v7015
        %v8376 = vadd.f32 %v8336, %v7018
        %v8377 = vadd.f32 %v8337, %v7020
        %v8378 = vadd.f32 %v8338, %v7023
        %v8379 = vadd.f32 %v8339, %v7025
        %v8380 = vadd.f32 %v8340, %v7028
        %v8381 = vadd.f32 %v8341, %v7030
        %v8382 = vadd.f32 %v8342, %v7033
        %v8383 = vadd.f32 %v8343, %v7035
        %v8384 = vadd.f32 %v8344, %v7038
        %v8385 = vadd.f32 %v8345, %v7040
        %v8386 = vadd.f32 %v8346, %v7043
        %v8387 = vadd.f32 %v8347, %v7045
        %v8388 = vadd.f32 %v8348, %v7048
        %v8389 = vadd.f32 %v8349, %v7050
        %v8390 = vadd.f32 %v8350, %v7053
        %v8391 = vadd.f32 %v8351, %v7055
        %v8392 = vadd.f32 %v8352, %v7058
        %v8393 = vadd.f32 %v8353, %v7060
        %v8394 = vadd.f32 %v8354, %v7063
        %v8395 = vadd.f32 %v8355, %v7065
        %v8396 = vadd.f32 %v8356, %v7068
        %v8397 = vadd.f32 %v8357, %v7070
        %v8398 = vadd.f32 %v8358, %v7073
        %v8399 = vadd.f32 %v8359, %v7075
        %v8400 = vpack.c.bf16 %v8361, %v8360
        %v8401 = vpack.c.bf16 %v8363, %v8362
        %v8402 = vpack.c.bf16 %v8365, %v8364
        %v8403 = vpack.c.bf16 %v8367, %v8366
        %v8404 = vpack.c.bf16 %v8369, %v8368
        %v8405 = vpack.c.bf16 %v8371, %v8370
        %v8406 = vpack.c.bf16 %v8373, %v8372
        %v8407 = vpack.c.bf16 %v8375, %v8374
        %v8408 = vpack.c.bf16 %v8377, %v8376
        %v8409 = vpack.c.bf16 %v8379, %v8378
        %v8410 = vpack.c.bf16 %v8381, %v8380
        %v8411 = vpack.c.bf16 %v8383, %v8382
        %v8412 = vpack.c.bf16 %v8385, %v8384
        %v8413 = vpack.c.bf16 %v8387, %v8386
        %v8414 = vpack.c.bf16 %v8389, %v8388
        %v8415 = vpack.c.bf16 %v8391, %v8390
        %v8416 = vpack.c.bf16 %v8393, %v8392
        %v8417 = vpack.c.bf16 %v8395, %v8394
        %v8418 = vpack.c.bf16 %v8397, %v8396
        %v8419 = vpack.c.bf16 %v8399, %v8398
        %v8420 = vld [vmem:[%s7] sm:$0xf]
        %v8421 = vld [vmem:[%s7 + $0x4] sm:$0xf]
        %v8422 = vld [vmem:[%s7 + $0x8] sm:$0xf]
        %v8423 = vld [vmem:[%s7 + $0xc] sm:$0xf]
        %v8424 = vld [vmem:[%s7 + $0x10] sm:$0xf]
        %v8425 = vld [vmem:[%s7 + $0x14] sm:$0xf]
        %v8426 = vld [vmem:[%s7 + $0x18] sm:$0xf]
        %v8427 = vld [vmem:[%s7 + $0x1c] sm:$0xf]
        %v8428 = vld [vmem:[%s7 + $0x20] sm:$0xf]
        %v8429 = vld [vmem:[%s7 + $0x24] sm:$0xf]
        %v8430 = vld [vmem:[%s7 + $0x28] sm:$0xf]
        %v8431 = vld [vmem:[%s7 + $0x2c] sm:$0xf]
        %v8432 = vld [vmem:[%s7 + $0x30] sm:$0xf]
        %v8433 = vld [vmem:[%s7 + $0x34] sm:$0xf]
        %v8434 = vld [vmem:[%s7 + $0x38] sm:$0xf]
        %v8435 = vld [vmem:[%s7 + $0x3c] sm:$0xf]
        %v8436 = vld [vmem:[%s8] sm:$0x1]
        %v8438 = vperm.slane %v8436, 0
        %v8456 = vunpack.c.l.b16 %v8420
        %v8457 = vunpack.c.l.b16 %v8421
        %v8458 = vunpack.c.l.b16 %v8422
        %v8459 = vunpack.c.l.b16 %v8423
        %v8460 = vunpack.c.l.b16 %v8424
        %v8461 = vunpack.c.l.b16 %v8425
        %v8462 = vunpack.c.l.b16 %v8426
        %v8463 = vunpack.c.l.b16 %v8427
        %v8464 = vunpack.c.l.b16 %v8428
        %v8465 = vunpack.c.l.b16 %v8429
        %v8466 = vunpack.c.l.b16 %v8430
        %v8467 = vunpack.c.l.b16 %v8431
        %v8468 = vunpack.c.l.b16 %v8432
        %v8469 = vunpack.c.l.b16 %v8433
        %v8470 = vunpack.c.l.b16 %v8434
        %v8471 = vunpack.c.l.b16 %v8435
        %v8472 = vpack.c.b16 %v8457, %v8456
        %v8473 = vpack.c.b16 %v8459, %v8458
        %v8474 = vpack.c.b16 %v8461, %v8460
        %v8475 = vpack.c.b16 %v8463, %v8462
        %v8476 = vpack.c.b16 %v8465, %v8464
        %v8477 = vpack.c.b16 %v8467, %v8466
        %v8478 = vpack.c.b16 %v8469, %v8468
        %v8479 = vpack.c.b16 %v8471, %v8470
        %8488 = vmatpush.bf16.msra.mxu0 %v8479
        %8489 = vmatpush.bf16.msra.mxu0 %v8478
        %8490 = vmatpush.bf16.msra.mxu0 %v8477
        %8491 = vmatpush.bf16.msra.mxu0 %v8476
        %8492 = vmatpush.bf16.msra.mxu0 %v8475
        %8493 = vmatpush.bf16.msra.mxu0 %v8474
        %8494 = vmatpush.bf16.msra.mxu0 %v8473
        %8495 = vmatpush.bf16.msra.mxu0 %v8472
        %8496 = vmatmul.bf16.gmra.mxu0 %v8400
        %v8497 = vpop.f32.mrf.mxu0
        %v8498 = vadd.f32 %v8438, %v8497
        %v8499 = vpop.f32.mrf.mxu0
        %v8500 = vadd.f32 %v8438, %v8499
        %8501 = vmatmul.bf16.gmra.mxu0 %v8401
        %v8502 = vpop.f32.mrf.mxu0
        %v8503 = vadd.f32 %v8438, %v8502
        %v8504 = vpop.f32.mrf.mxu0
        %v8505 = vadd.f32 %v8438, %v8504
        %8506 = vmatmul.bf16.gmra.mxu0 %v8402
        %v8507 = vpop.f32.mrf.mxu0
        %v8508 = vadd.f32 %v8438, %v8507
        %v8509 = vpop.f32.mrf.mxu0
        %v8510 = vadd.f32 %v8438, %v8509
        %8511 = vmatmul.bf16.gmra.mxu0 %v8403
        %v8512 = vpop.f32.mrf.mxu0
        %v8513 = vadd.f32 %v8438, %v8512
        %v8514 = vpop.f32.mrf.mxu0
        %v8515 = vadd.f32 %v8438, %v8514
        %8516 = vmatmul.bf16.gmra.mxu0 %v8404
        %v8517 = vpop.f32.mrf.mxu0
        %v8518 = vadd.f32 %v8438, %v8517
        %v8519 = vpop.f32.mrf.mxu0
        %v8520 = vadd.f32 %v8438, %v8519
        %8521 = vmatmul.bf16.gmra.mxu0 %v8405
        %v8522 = vpop.f32.mrf.mxu0
        %v8523 = vadd.f32 %v8438, %v8522
        %v8524 = vpop.f32.mrf.mxu0
        %v8525 = vadd.f32 %v8438, %v8524
        %8526 = vmatmul.bf16.gmra.mxu0 %v8406
        %v8527 = vpop.f32.mrf.mxu0
        %v8528 = vadd.f32 %v8438, %v8527
        %v8529 = vpop.f32.mrf.mxu0
        %v8530 = vadd.f32 %v8438, %v8529
        %8531 = vmatmul.bf16.gmra.mxu0 %v8407
        %v8532 = vpop.f32.mrf.mxu0
        %v8533 = vadd.f32 %v8438, %v8532
        %v8534 = vpop.f32.mrf.mxu0
        %v8535 = vadd.f32 %v8438, %v8534
        %8536 = vmatmul.bf16.gmra.mxu0 %v8408
        %v8537 = vpop.f32.mrf.mxu0
        %v8538 = vadd.f32 %v8438, %v8537
        %v8539 = vpop.f32.mrf.mxu0
        %v8540 = vadd.f32 %v8438, %v8539
        %8541 = vmatmul.bf16.gmra.mxu0 %v8409
        %v8542 = vpop.f32.mrf.mxu0
        %v8543 = vadd.f32 %v8438, %v8542
        %v8544 = vpop.f32.mrf.mxu0
        %v8545 = vadd.f32 %v8438, %v8544
        %8546 = vmatmul.bf16.gmra.mxu0 %v8410
        %v8547 = vpop.f32.mrf.mxu0
        %v8548 = vadd.f32 %v8438, %v8547
        %v8549 = vpop.f32.mrf.mxu0
        %v8550 = vadd.f32 %v8438, %v8549
        %8551 = vmatmul.bf16.gmra.mxu0 %v8411
        %v8552 = vpop.f32.mrf.mxu0
        %v8553 = vadd.f32 %v8438, %v8552
        %v8554 = vpop.f32.mrf.mxu0
        %v8555 = vadd.f32 %v8438, %v8554
        %8556 = vmatmul.bf16.gmra.mxu0 %v8412
        %v8557 = vpop.f32.mrf.mxu0
        %v8558 = vadd.f32 %v8438, %v8557
        %v8559 = vpop.f32.mrf.mxu0
        %v8560 = vadd.f32 %v8438, %v8559
        %8561 = vmatmul.bf16.gmra.mxu0 %v8413
        %v8562 = vpop.f32.mrf.mxu0
        %v8563 = vadd.f32 %v8438, %v8562
        %v8564 = vpop.f32.mrf.mxu0
        %v8565 = vadd.f32 %v8438, %v8564
        %8566 = vmatmul.bf16.gmra.mxu0 %v8414
        %v8567 = vpop.f32.mrf.mxu0
        %v8568 = vadd.f32 %v8438, %v8567
        %v8569 = vpop.f32.mrf.mxu0
        %v8570 = vadd.f32 %v8438, %v8569
        %8571 = vmatmul.bf16.gmra.mxu0 %v8415
        %v8572 = vpop.f32.mrf.mxu0
        %v8573 = vadd.f32 %v8438, %v8572
        %v8574 = vpop.f32.mrf.mxu0
        %v8575 = vadd.f32 %v8438, %v8574
        %8576 = vmatmul.bf16.gmra.mxu0 %v8416
        %v8577 = vpop.f32.mrf.mxu0
        %v8578 = vadd.f32 %v8438, %v8577
        %v8579 = vpop.f32.mrf.mxu0
        %v8580 = vadd.f32 %v8438, %v8579
        %8581 = vmatmul.bf16.gmra.mxu0 %v8417
        %v8582 = vpop.f32.mrf.mxu0
        %v8583 = vadd.f32 %v8438, %v8582
        %v8584 = vpop.f32.mrf.mxu0
        %v8585 = vadd.f32 %v8438, %v8584
        %8586 = vmatmul.bf16.gmra.mxu0 %v8418
        %v8587 = vpop.f32.mrf.mxu0
        %v8588 = vadd.f32 %v8438, %v8587
        %v8589 = vpop.f32.mrf.mxu0
        %v8590 = vadd.f32 %v8438, %v8589
        %8591 = vmatmul.bf16.gmra.mxu0 %v8419
        %v8592 = vpop.f32.mrf.mxu0
        %v8593 = vadd.f32 %v8438, %v8592
        %v8594 = vpop.f32.mrf.mxu0
        %v8595 = vadd.f32 %v8438, %v8594
        %8596 = vdwg.mxu0
        %v8597 = vmax.f32 %v8498, 0.0
        %v8598 = vmax.f32 %v8500, 0.0
        %v8599 = vmax.f32 %v8503, 0.0
        %v8600 = vmax.f32 %v8505, 0.0
        %v8601 = vmax.f32 %v8508, 0.0
        %v8602 = vmax.f32 %v8510, 0.0
        %v8603 = vmax.f32 %v8513, 0.0
        %v8604 = vmax.f32 %v8515, 0.0
        %v8605 = vmax.f32 %v8518, 0.0
        %v8606 = vmax.f32 %v8520, 0.0
        %v8607 = vmax.f32 %v8523, 0.0
        %v8608 = vmax.f32 %v8525, 0.0
        %v8609 = vmax.f32 %v8528, 0.0
        %v8610 = vmax.f32 %v8530, 0.0
        %v8611 = vmax.f32 %v8533, 0.0
        %v8612 = vmax.f32 %v8535, 0.0
        %v8613 = vmax.f32 %v8538, 0.0
        %v8614 = vmax.f32 %v8540, 0.0
        %v8615 = vmax.f32 %v8543, 0.0
        %v8616 = vmax.f32 %v8545, 0.0
        %v8617 = vmax.f32 %v8548, 0.0
        %v8618 = vmax.f32 %v8550, 0.0
        %v8619 = vmax.f32 %v8553, 0.0
        %v8620 = vmax.f32 %v8555, 0.0
        %v8621 = vmax.f32 %v8558, 0.0
        %v8622 = vmax.f32 %v8560, 0.0
        %v8623 = vmax.f32 %v8563, 0.0
        %v8624 = vmax.f32 %v8565, 0.0
        %v8625 = vmax.f32 %v8568, 0.0
        %v8626 = vmax.f32 %v8570, 0.0
        %v8627 = vmax.f32 %v8573, 0.0
        %v8628 = vmax.f32 %v8575, 0.0
        %v8629 = vmax.f32 %v8578, 0.0
        %v8630 = vmax.f32 %v8580, 0.0
        %v8631 = vmax.f32 %v8583, 0.0
        %v8632 = vmax.f32 %v8585, 0.0
        %v8633 = vmax.f32 %v8588, 0.0
        %v8634 = vmax.f32 %v8590, 0.0
        %v8635 = vmax.f32 %v8593, 0.0
        %v8636 = vmax.f32 %v8595, 0.0
        %v8637 = vld [vmem:[%s9] sm:$0x1]
        %v8639 = vperm.slane %v8637, 0
        %v8641 = vmul.f32 %v8597, %v8639
        %v8642 = vmul.f32 %v8598, %v8639
        %v8643 = vmul.f32 %v8599, %v8639
        %v8644 = vmul.f32 %v8600, %v8639
        %v8645 = vmul.f32 %v8601, %v8639
        %v8646 = vmul.f32 %v8602, %v8639
        %v8647 = vmul.f32 %v8603, %v8639
        %v8648 = vmul.f32 %v8604, %v8639
        %v8649 = vmul.f32 %v8605, %v8639
        %v8650 = vmul.f32 %v8606, %v8639
        %v8651 = vmul.f32 %v8607, %v8639
        %v8652 = vmul.f32 %v8608, %v8639
        %v8653 = vmul.f32 %v8609, %v8639
        %v8654 = vmul.f32 %v8610, %v8639
        %v8655 = vmul.f32 %v8611, %v8639
        %v8656 = vmul.f32 %v8612, %v8639
        %v8657 = vmul.f32 %v8613, %v8639
        %v8658 = vmul.f32 %v8614, %v8639
        %v8659 = vmul.f32 %v8615, %v8639
        %v8660 = vmul.f32 %v8616, %v8639
        %v8661 = vmul.f32 %v8617, %v8639
        %v8662 = vmul.f32 %v8618, %v8639
        %v8663 = vmul.f32 %v8619, %v8639
        %v8664 = vmul.f32 %v8620, %v8639
        %v8665 = vmul.f32 %v8621, %v8639
        %v8666 = vmul.f32 %v8622, %v8639
        %v8667 = vmul.f32 %v8623, %v8639
        %v8668 = vmul.f32 %v8624, %v8639
        %v8669 = vmul.f32 %v8625, %v8639
        %v8670 = vmul.f32 %v8626, %v8639
        %v8671 = vmul.f32 %v8627, %v8639
        %v8672 = vmul.f32 %v8628, %v8639
        %v8673 = vmul.f32 %v8629, %v8639
        %v8674 = vmul.f32 %v8630, %v8639
        %v8675 = vmul.f32 %v8631, %v8639
        %v8676 = vmul.f32 %v8632, %v8639
        %v8677 = vmul.f32 %v8633, %v8639
        %v8678 = vmul.f32 %v8634, %v8639
        %v8679 = vmul.f32 %v8635, %v8639
        %v8680 = vmul.f32 %v8636, %v8639
        %vm8681 = vcmask 523264
        %v8682 = vsel %vm8681, %v8641, 0.0
        %8683 = vadd.xlane.f32.xlu0 %v8682
        %v8684 = vpop.xlane.xlu0 %8683
        %v8685 = vsel %vm8681, %v8642, 0.0
        %8686 = vadd.xlane.f32.xlu0 %v8685
        %v8687 = vpop.xlane.xlu0 %8686
        %v8688 = vsel %vm8681, %v8643, 0.0
        %8689 = vadd.xlane.f32.xlu0 %v8688
        %v8690 = vpop.xlane.xlu0 %8689
        %v8691 = vsel %vm8681, %v8644, 0.0
        %8692 = vadd.xlane.f32.xlu0 %v8691
        %v8693 = vpop.xlane.xlu0 %8692
        %v8694 = vsel %vm8681, %v8645, 0.0
        %8695 = vadd.xlane.f32.xlu0 %v8694
        %v8696 = vpop.xlane.xlu0 %8695
        %v8697 = vsel %vm8681, %v8646, 0.0
        %8698 = vadd.xlane.f32.xlu0 %v8697
        %v8699 = vpop.xlane.xlu0 %8698
        %v8700 = vsel %vm8681, %v8647, 0.0
        %8701 = vadd.xlane.f32.xlu0 %v8700
        %v8702 = vpop.xlane.xlu0 %8701
        %v8703 = vsel %vm8681, %v8648, 0.0
        %8704 = vadd.xlane.f32.xlu0 %v8703
        %v8705 = vpop.xlane.xlu0 %8704
        %v8706 = vsel %vm8681, %v8649, 0.0
        %8707 = vadd.xlane.f32.xlu0 %v8706
        %v8708 = vpop.xlane.xlu0 %8707
        %v8709 = vsel %vm8681, %v8650, 0.0
        %8710 = vadd.xlane.f32.xlu0 %v8709
        %v8711 = vpop.xlane.xlu0 %8710
        %v8712 = vsel %vm8681, %v8651, 0.0
        %8713 = vadd.xlane.f32.xlu0 %v8712
        %v8714 = vpop.xlane.xlu0 %8713
        %v8715 = vsel %vm8681, %v8652, 0.0
        %8716 = vadd.xlane.f32.xlu0 %v8715
        %v8717 = vpop.xlane.xlu0 %8716
        %v8718 = vsel %vm8681, %v8653, 0.0
        %8719 = vadd.xlane.f32.xlu0 %v8718
        %v8720 = vpop.xlane.xlu0 %8719
        %v8721 = vsel %vm8681, %v8654, 0.0
        %8722 = vadd.xlane.f32.xlu0 %v8721
        %v8723 = vpop.xlane.xlu0 %8722
        %v8724 = vsel %vm8681, %v8655, 0.0
        %8725 = vadd.xlane.f32.xlu0 %v8724
        %v8726 = vpop.xlane.xlu0 %8725
        %v8727 = vsel %vm8681, %v8656, 0.0
        %8728 = vadd.xlane.f32.xlu0 %v8727
        %v8729 = vpop.xlane.xlu0 %8728
        %v8730 = vsel %vm8681, %v8657, 0.0
        %8731 = vadd.xlane.f32.xlu0 %v8730
        %v8732 = vpop.xlane.xlu0 %8731
        %v8733 = vsel %vm8681, %v8658, 0.0
        %8734 = vadd.xlane.f32.xlu0 %v8733
        %v8735 = vpop.xlane.xlu0 %8734
        %v8736 = vsel %vm8681, %v8659, 0.0
        %8737 = vadd.xlane.f32.xlu0 %v8736
        %v8738 = vpop.xlane.xlu0 %8737
        %v8739 = vsel %vm8681, %v8660, 0.0
        %8740 = vadd.xlane.f32.xlu0 %v8739
        %v8741 = vpop.xlane.xlu0 %8740
        %v8742 = vsel %vm8681, %v8661, 0.0
        %8743 = vadd.xlane.f32.xlu0 %v8742
        %v8744 = vpop.xlane.xlu0 %8743
        %v8745 = vsel %vm8681, %v8662, 0.0
        %8746 = vadd.xlane.f32.xlu0 %v8745
        %v8747 = vpop.xlane.xlu0 %8746
        %v8748 = vsel %vm8681, %v8663, 0.0
        %8749 = vadd.xlane.f32.xlu0 %v8748
        %v8750 = vpop.xlane.xlu0 %8749
        %v8751 = vsel %vm8681, %v8664, 0.0
        %8752 = vadd.xlane.f32.xlu0 %v8751
        %v8753 = vpop.xlane.xlu0 %8752
        %v8754 = vsel %vm8681, %v8665, 0.0
        %8755 = vadd.xlane.f32.xlu0 %v8754
        %v8756 = vpop.xlane.xlu0 %8755
        %v8757 = vsel %vm8681, %v8666, 0.0
        %8758 = vadd.xlane.f32.xlu0 %v8757
        %v8759 = vpop.xlane.xlu0 %8758
        %v8760 = vsel %vm8681, %v8667, 0.0
        %8761 = vadd.xlane.f32.xlu0 %v8760
        %v8762 = vpop.xlane.xlu0 %8761
        %v8763 = vsel %vm8681, %v8668, 0.0
        %8764 = vadd.xlane.f32.xlu0 %v8763
        %v8765 = vpop.xlane.xlu0 %8764
        %v8766 = vsel %vm8681, %v8669, 0.0
        %8767 = vadd.xlane.f32.xlu0 %v8766
        %v8768 = vpop.xlane.xlu0 %8767
        %v8769 = vsel %vm8681, %v8670, 0.0
        %8770 = vadd.xlane.f32.xlu0 %v8769
        %v8771 = vpop.xlane.xlu0 %8770
        %v8772 = vsel %vm8681, %v8671, 0.0
        %8773 = vadd.xlane.f32.xlu0 %v8772
        %v8774 = vpop.xlane.xlu0 %8773
        %v8775 = vsel %vm8681, %v8672, 0.0
        %8776 = vadd.xlane.f32.xlu0 %v8775
        %v8777 = vpop.xlane.xlu0 %8776
        %v8778 = vsel %vm8681, %v8673, 0.0
        %8779 = vadd.xlane.f32.xlu0 %v8778
        %v8780 = vpop.xlane.xlu0 %8779
        %v8781 = vsel %vm8681, %v8674, 0.0
        %8782 = vadd.xlane.f32.xlu0 %v8781
        %v8783 = vpop.xlane.xlu0 %8782
        %v8784 = vsel %vm8681, %v8675, 0.0
        %8785 = vadd.xlane.f32.xlu0 %v8784
        %v8786 = vpop.xlane.xlu0 %8785
        %v8787 = vsel %vm8681, %v8676, 0.0
        %8788 = vadd.xlane.f32.xlu0 %v8787
        %v8789 = vpop.xlane.xlu0 %8788
        %v8790 = vsel %vm8681, %v8677, 0.0
        %8791 = vadd.xlane.f32.xlu0 %v8790
        %v8792 = vpop.xlane.xlu0 %8791
        %v8793 = vsel %vm8681, %v8678, 0.0
        %8794 = vadd.xlane.f32.xlu0 %v8793
        %v8795 = vpop.xlane.xlu0 %8794
        %v8796 = vsel %vm8681, %v8679, 0.0
        %8797 = vadd.xlane.f32.xlu0 %v8796
        %v8798 = vpop.xlane.xlu0 %8797
        %v8799 = vsel %vm8681, %v8680, 0.0
        %8800 = vadd.xlane.f32.xlu0 %v8799
        %v8801 = vpop.xlane.xlu0 %8800
        %v8802 = vld [vmem:[#allocation2] sm:$0x1]
        %v8804 = vperm.slane %v8802, 0
        %v8806 = vadd.f32 %v8684, %v8804
        %v8807 = vadd.f32 %v8687, %v8804
        %v8808 = vadd.f32 %v8690, %v8804
        %v8809 = vadd.f32 %v8693, %v8804
        %v8810 = vadd.f32 %v8696, %v8804
        %v8811 = vadd.f32 %v8699, %v8804
        %v8812 = vadd.f32 %v8702, %v8804
        %v8813 = vadd.f32 %v8705, %v8804
        %v8814 = vadd.f32 %v8708, %v8804
        %v8815 = vadd.f32 %v8711, %v8804
        %v8816 = vadd.f32 %v8714, %v8804
        %v8817 = vadd.f32 %v8717, %v8804
        %v8818 = vadd.f32 %v8720, %v8804
        %v8819 = vadd.f32 %v8723, %v8804
        %v8820 = vadd.f32 %v8726, %v8804
        %v8821 = vadd.f32 %v8729, %v8804
        %v8822 = vadd.f32 %v8732, %v8804
        %v8823 = vadd.f32 %v8735, %v8804
        %v8824 = vadd.f32 %v8738, %v8804
        %v8825 = vadd.f32 %v8741, %v8804
        %v8826 = vadd.f32 %v8744, %v8804
        %v8827 = vadd.f32 %v8747, %v8804
        %v8828 = vadd.f32 %v8750, %v8804
        %v8829 = vadd.f32 %v8753, %v8804
        %v8830 = vadd.f32 %v8756, %v8804
        %v8831 = vadd.f32 %v8759, %v8804
        %v8832 = vadd.f32 %v8762, %v8804
        %v8833 = vadd.f32 %v8765, %v8804
        %v8834 = vadd.f32 %v8768, %v8804
        %v8835 = vadd.f32 %v8771, %v8804
        %v8836 = vadd.f32 %v8774, %v8804
        %v8837 = vadd.f32 %v8777, %v8804
        %v8838 = vadd.f32 %v8780, %v8804
        %v8839 = vadd.f32 %v8783, %v8804
        %v8840 = vadd.f32 %v8786, %v8804
        %v8841 = vadd.f32 %v8789, %v8804
        %v8842 = vadd.f32 %v8792, %v8804
        %v8843 = vadd.f32 %v8795, %v8804
        %v8844 = vadd.f32 %v8798, %v8804
        %v8845 = vadd.f32 %v8801, %v8804
        %v8846 = vxor.u32 %v8806, 2147483648
        %v8847 = vxor.u32 %v8807, 2147483648
        %v8848 = vxor.u32 %v8808, 2147483648
        %v8849 = vxor.u32 %v8809, 2147483648
        %v8850 = vxor.u32 %v8810, 2147483648
        %v8851 = vxor.u32 %v8811, 2147483648
        %v8852 = vxor.u32 %v8812, 2147483648
        %v8853 = vxor.u32 %v8813, 2147483648
        %v8854 = vxor.u32 %v8814, 2147483648
        %v8855 = vxor.u32 %v8815, 2147483648
        %v8856 = vxor.u32 %v8816, 2147483648
        %v8857 = vxor.u32 %v8817, 2147483648
        %v8858 = vxor.u32 %v8818, 2147483648
        %v8859 = vxor.u32 %v8819, 2147483648
        %v8860 = vxor.u32 %v8820, 2147483648
        %v8861 = vxor.u32 %v8821, 2147483648
        %v8862 = vxor.u32 %v8822, 2147483648
        %v8863 = vxor.u32 %v8823, 2147483648
        %v8864 = vxor.u32 %v8824, 2147483648
        %v8865 = vxor.u32 %v8825, 2147483648
        %v8866 = vxor.u32 %v8826, 2147483648
        %v8867 = vxor.u32 %v8827, 2147483648
        %v8868 = vxor.u32 %v8828, 2147483648
        %v8869 = vxor.u32 %v8829, 2147483648
        %v8870 = vxor.u32 %v8830, 2147483648
        %v8871 = vxor.u32 %v8831, 2147483648
        %v8872 = vxor.u32 %v8832, 2147483648
        %v8873 = vxor.u32 %v8833, 2147483648
        %v8874 = vxor.u32 %v8834, 2147483648
        %v8875 = vxor.u32 %v8835, 2147483648
        %v8876 = vxor.u32 %v8836, 2147483648
        %v8877 = vxor.u32 %v8837, 2147483648
        %v8878 = vxor.u32 %v8838, 2147483648
        %v8879 = vxor.u32 %v8839, 2147483648
        %v8880 = vxor.u32 %v8840, 2147483648
        %v8881 = vxor.u32 %v8841, 2147483648
        %v8882 = vxor.u32 %v8842, 2147483648
        %v8883 = vxor.u32 %v8843, 2147483648
        %v8884 = vxor.u32 %v8844, 2147483648
        %v8885 = vxor.u32 %v8845, 2147483648
        %v8886 = vmul.f32 %v8846, 1.442695
        %v8887 = vpow.pop %v8886
        %v8888 = vmul.f32 %v8847, 1.442695
        %v8889 = vpow.pop %v8888
        %v8890 = vmul.f32 %v8848, 1.442695
        %v8891 = vpow.pop %v8890
        %v8892 = vmul.f32 %v8849, 1.442695
        %v8893 = vpow.pop %v8892
        %v8894 = vmul.f32 %v8850, 1.442695
        %v8895 = vpow.pop %v8894
        %v8896 = vmul.f32 %v8851, 1.442695
        %v8897 = vpow.pop %v8896
        %v8898 = vmul.f32 %v8852, 1.442695
        %v8899 = vpow.pop %v8898
        %v8900 = vmul.f32 %v8853, 1.442695
        %v8901 = vpow.pop %v8900
        %v8902 = vmul.f32 %v8854, 1.442695
        %v8903 = vpow.pop %v8902
        %v8904 = vmul.f32 %v8855, 1.442695
        %v8905 = vpow.pop %v8904
        %v8906 = vmul.f32 %v8856, 1.442695
        %v8907 = vpow.pop %v8906
        %v8908 = vmul.f32 %v8857, 1.442695
        %v8909 = vpow.pop %v8908
        %v8910 = vmul.f32 %v8858, 1.442695
        %v8911 = vpow.pop %v8910
        %v8912 = vmul.f32 %v8859, 1.442695
        %v8913 = vpow.pop %v8912
        %v8914 = vmul.f32 %v8860, 1.442695
        %v8915 = vpow.pop %v8914
        %v8916 = vmul.f32 %v8861, 1.442695
        %v8917 = vpow.pop %v8916
        %v8918 = vmul.f32 %v8862, 1.442695
        %v8919 = vpow.pop %v8918
        %v8920 = vmul.f32 %v8863, 1.442695
        %v8921 = vpow.pop %v8920
        %v8922 = vmul.f32 %v8864, 1.442695
        %v8923 = vpow.pop %v8922
        %v8924 = vmul.f32 %v8865, 1.442695
        %v8925 = vpow.pop %v8924
        %v8926 = vmul.f32 %v8866, 1.442695
        %v8927 = vpow.pop %v8926
        %v8928 = vmul.f32 %v8867, 1.442695
        %v8929 = vpow.pop %v8928
        %v8930 = vmul.f32 %v8868, 1.442695
        %v8931 = vpow.pop %v8930
        %v8932 = vmul.f32 %v8869, 1.442695
        %v8933 = vpow.pop %v8932
        %v8934 = vmul.f32 %v8870, 1.442695
        %v8935 = vpow.pop %v8934
        %v8936 = vmul.f32 %v8871, 1.442695
        %v8937 = vpow.pop %v8936
        %v8938 = vmul.f32 %v8872, 1.442695
        %v8939 = vpow.pop %v8938
        %v8940 = vmul.f32 %v8873, 1.442695
        %v8941 = vpow.pop %v8940
        %v8942 = vmul.f32 %v8874, 1.442695
        %v8943 = vpow.pop %v8942
        %v8944 = vmul.f32 %v8875, 1.442695
        %v8945 = vpow.pop %v8944
        %v8946 = vmul.f32 %v8876, 1.442695
        %v8947 = vpow.pop %v8946
        %v8948 = vmul.f32 %v8877, 1.442695
        %v8949 = vpow.pop %v8948
        %v8950 = vmul.f32 %v8878, 1.442695
        %v8951 = vpow.pop %v8950
        %v8952 = vmul.f32 %v8879, 1.442695
        %v8953 = vpow.pop %v8952
        %v8954 = vmul.f32 %v8880, 1.442695
        %v8955 = vpow.pop %v8954
        %v8956 = vmul.f32 %v8881, 1.442695
        %v8957 = vpow.pop %v8956
        %v8958 = vmul.f32 %v8882, 1.442695
        %v8959 = vpow.pop %v8958
        %v8960 = vmul.f32 %v8883, 1.442695
        %v8961 = vpow.pop %v8960
        %v8962 = vmul.f32 %v8884, 1.442695
        %v8963 = vpow.pop %v8962
        %v8964 = vmul.f32 %v8885, 1.442695
        %v8965 = vpow.pop %v8964
        %v8966 = vadd.f32 %v8887, 1.0
        %v8967 = vadd.f32 %v8889, 1.0
        %v8968 = vadd.f32 %v8891, 1.0
        %v8969 = vadd.f32 %v8893, 1.0
        %v8970 = vadd.f32 %v8895, 1.0
        %v8971 = vadd.f32 %v8897, 1.0
        %v8972 = vadd.f32 %v8899, 1.0
        %v8973 = vadd.f32 %v8901, 1.0
        %v8974 = vadd.f32 %v8903, 1.0
        %v8975 = vadd.f32 %v8905, 1.0
        %v8976 = vadd.f32 %v8907, 1.0
        %v8977 = vadd.f32 %v8909, 1.0
        %v8978 = vadd.f32 %v8911, 1.0
        %v8979 = vadd.f32 %v8913, 1.0
        %v8980 = vadd.f32 %v8915, 1.0
        %v8981 = vadd.f32 %v8917, 1.0
        %v8982 = vadd.f32 %v8919, 1.0
        %v8983 = vadd.f32 %v8921, 1.0
        %v8984 = vadd.f32 %v8923, 1.0
        %v8985 = vadd.f32 %v8925, 1.0
        %v8986 = vadd.f32 %v8927, 1.0
        %v8987 = vadd.f32 %v8929, 1.0
        %v8988 = vadd.f32 %v8931, 1.0
        %v8989 = vadd.f32 %v8933, 1.0
        %v8990 = vadd.f32 %v8935, 1.0
        %v8991 = vadd.f32 %v8937, 1.0
        %v8992 = vadd.f32 %v8939, 1.0
        %v8993 = vadd.f32 %v8941, 1.0
        %v8994 = vadd.f32 %v8943, 1.0
        %v8995 = vadd.f32 %v8945, 1.0
        %v8996 = vadd.f32 %v8947, 1.0
        %v8997 = vadd.f32 %v8949, 1.0
        %v8998 = vadd.f32 %v8951, 1.0
        %v8999 = vadd.f32 %v8953, 1.0
        %v9000 = vadd.f32 %v8955, 1.0
        %v9001 = vadd.f32 %v8957, 1.0
        %v9002 = vadd.f32 %v8959, 1.0
        %v9003 = vadd.f32 %v8961, 1.0
        %v9004 = vadd.f32 %v8963, 1.0
        %v9005 = vadd.f32 %v8965, 1.0
        %v9006 = vrcp.pop %v8966
        %v9007 = vmul.f32 %v8966, %v9006
        %v9008 = vsub.f32 1.0, %v9007
        %v9009 = vmul.f32 %v9006, %v9008
        %v9010 = vadd.f32 %v9006, %v9009
        %vm9011 = vweird.f32 %v8966
        %vm9012 = vweird.f32 %v9006
        %vm9013 = vmor %vm9011, %vm9012
        %v9014 = vsel %vm9013, %v9006, %v9010
        %v9015 = vand.u32 2147483647, %v8966
        %vm9016 = vcmp.eq.f32.partialorder %v9015, 8.507059e+37
        %v9017 = vand.u32 %v8966, 2147483648
        %v9018 = vor.u32 1.1754944e-38, %v9017
        %v9019 = vsel %vm9016, %v9018, %v9014
        %v9020 = vmul.f32 1.0, %v9019
        %v9021 = vrcp.pop %v8967
        %v9022 = vmul.f32 %v8967, %v9021
        %v9023 = vsub.f32 1.0, %v9022
        %v9024 = vmul.f32 %v9021, %v9023
        %v9025 = vadd.f32 %v9021, %v9024
        %vm9026 = vweird.f32 %v8967
        %vm9027 = vweird.f32 %v9021
        %vm9028 = vmor %vm9026, %vm9027
        %v9029 = vsel %vm9028, %v9021, %v9025
        %v9030 = vand.u32 2147483647, %v8967
        %vm9031 = vcmp.eq.f32.partialorder %v9030, 8.507059e+37
        %v9032 = vand.u32 %v8967, 2147483648
        %v9033 = vor.u32 1.1754944e-38, %v9032
        %v9034 = vsel %vm9031, %v9033, %v9029
        %v9035 = vmul.f32 1.0, %v9034
        %v9036 = vrcp.pop %v8968
        %v9037 = vmul.f32 %v8968, %v9036
        %v9038 = vsub.f32 1.0, %v9037
        %v9039 = vmul.f32 %v9036, %v9038
        %v9040 = vadd.f32 %v9036, %v9039
        %vm9041 = vweird.f32 %v8968
        %vm9042 = vweird.f32 %v9036
        %vm9043 = vmor %vm9041, %vm9042
        %v9044 = vsel %vm9043, %v9036, %v9040
        %v9045 = vand.u32 2147483647, %v8968
        %vm9046 = vcmp.eq.f32.partialorder %v9045, 8.507059e+37
        %v9047 = vand.u32 %v8968, 2147483648
        %v9048 = vor.u32 1.1754944e-38, %v9047
        %v9049 = vsel %vm9046, %v9048, %v9044
        %v9050 = vmul.f32 1.0, %v9049
        %v9051 = vrcp.pop %v8969
        %v9052 = vmul.f32 %v8969, %v9051
        %v9053 = vsub.f32 1.0, %v9052
        %v9054 = vmul.f32 %v9051, %v9053
        %v9055 = vadd.f32 %v9051, %v9054
        %vm9056 = vweird.f32 %v8969
        %vm9057 = vweird.f32 %v9051
        %vm9058 = vmor %vm9056, %vm9057
        %v9059 = vsel %vm9058, %v9051, %v9055
        %v9060 = vand.u32 2147483647, %v8969
        %vm9061 = vcmp.eq.f32.partialorder %v9060, 8.507059e+37
        %v9062 = vand.u32 %v8969, 2147483648
        %v9063 = vor.u32 1.1754944e-38, %v9062
        %v9064 = vsel %vm9061, %v9063, %v9059
        %v9065 = vmul.f32 1.0, %v9064
        %v9066 = vrcp.pop %v8970
        %v9067 = vmul.f32 %v8970, %v9066
        %v9068 = vsub.f32 1.0, %v9067
        %v9069 = vmul.f32 %v9066, %v9068
        %v9070 = vadd.f32 %v9066, %v9069
        %vm9071 = vweird.f32 %v8970
        %vm9072 = vweird.f32 %v9066
        %vm9073 = vmor %vm9071, %vm9072
        %v9074 = vsel %vm9073, %v9066, %v9070
        %v9075 = vand.u32 2147483647, %v8970
        %vm9076 = vcmp.eq.f32.partialorder %v9075, 8.507059e+37
        %v9077 = vand.u32 %v8970, 2147483648
        %v9078 = vor.u32 1.1754944e-38, %v9077
        %v9079 = vsel %vm9076, %v9078, %v9074
        %v9080 = vmul.f32 1.0, %v9079
        %v9081 = vrcp.pop %v8971
        %v9082 = vmul.f32 %v8971, %v9081
        %v9083 = vsub.f32 1.0, %v9082
        %v9084 = vmul.f32 %v9081, %v9083
        %v9085 = vadd.f32 %v9081, %v9084
        %vm9086 = vweird.f32 %v8971
        %vm9087 = vweird.f32 %v9081
        %vm9088 = vmor %vm9086, %vm9087
        %v9089 = vsel %vm9088, %v9081, %v9085
        %v9090 = vand.u32 2147483647, %v8971
        %vm9091 = vcmp.eq.f32.partialorder %v9090, 8.507059e+37
        %v9092 = vand.u32 %v8971, 2147483648
        %v9093 = vor.u32 1.1754944e-38, %v9092
        %v9094 = vsel %vm9091, %v9093, %v9089
        %v9095 = vmul.f32 1.0, %v9094
        %v9096 = vrcp.pop %v8972
        %v9097 = vmul.f32 %v8972, %v9096
        %v9098 = vsub.f32 1.0, %v9097
        %v9099 = vmul.f32 %v9096, %v9098
        %v9100 = vadd.f32 %v9096, %v9099
        %vm9101 = vweird.f32 %v8972
        %vm9102 = vweird.f32 %v9096
        %vm9103 = vmor %vm9101, %vm9102
        %v9104 = vsel %vm9103, %v9096, %v9100
        %v9105 = vand.u32 2147483647, %v8972
        %vm9106 = vcmp.eq.f32.partialorder %v9105, 8.507059e+37
        %v9107 = vand.u32 %v8972, 2147483648
        %v9108 = vor.u32 1.1754944e-38, %v9107
        %v9109 = vsel %vm9106, %v9108, %v9104
        %v9110 = vmul.f32 1.0, %v9109
        %v9111 = vrcp.pop %v8973
        %v9112 = vmul.f32 %v8973, %v9111
        %v9113 = vsub.f32 1.0, %v9112
        %v9114 = vmul.f32 %v9111, %v9113
        %v9115 = vadd.f32 %v9111, %v9114
        %vm9116 = vweird.f32 %v8973
        %vm9117 = vweird.f32 %v9111
        %vm9118 = vmor %vm9116, %vm9117
        %v9119 = vsel %vm9118, %v9111, %v9115
        %v9120 = vand.u32 2147483647, %v8973
        %vm9121 = vcmp.eq.f32.partialorder %v9120, 8.507059e+37
        %v9122 = vand.u32 %v8973, 2147483648
        %v9123 = vor.u32 1.1754944e-38, %v9122
        %v9124 = vsel %vm9121, %v9123, %v9119
        %v9125 = vmul.f32 1.0, %v9124
        %v9126 = vrcp.pop %v8974
        %v9127 = vmul.f32 %v8974, %v9126
        %v9128 = vsub.f32 1.0, %v9127
        %v9129 = vmul.f32 %v9126, %v9128
        %v9130 = vadd.f32 %v9126, %v9129
        %vm9131 = vweird.f32 %v8974
        %vm9132 = vweird.f32 %v9126
        %vm9133 = vmor %vm9131, %vm9132
        %v9134 = vsel %vm9133, %v9126, %v9130
        %v9135 = vand.u32 2147483647, %v8974
        %vm9136 = vcmp.eq.f32.partialorder %v9135, 8.507059e+37
        %v9137 = vand.u32 %v8974, 2147483648
        %v9138 = vor.u32 1.1754944e-38, %v9137
        %v9139 = vsel %vm9136, %v9138, %v9134
        %v9140 = vmul.f32 1.0, %v9139
        %v9141 = vrcp.pop %v8975
        %v9142 = vmul.f32 %v8975, %v9141
        %v9143 = vsub.f32 1.0, %v9142
        %v9144 = vmul.f32 %v9141, %v9143
        %v9145 = vadd.f32 %v9141, %v9144
        %vm9146 = vweird.f32 %v8975
        %vm9147 = vweird.f32 %v9141
        %vm9148 = vmor %vm9146, %vm9147
        %v9149 = vsel %vm9148, %v9141, %v9145
        %v9150 = vand.u32 2147483647, %v8975
        %vm9151 = vcmp.eq.f32.partialorder %v9150, 8.507059e+37
        %v9152 = vand.u32 %v8975, 2147483648
        %v9153 = vor.u32 1.1754944e-38, %v9152
        %v9154 = vsel %vm9151, %v9153, %v9149
        %v9155 = vmul.f32 1.0, %v9154
        %v9156 = vrcp.pop %v8976
        %v9157 = vmul.f32 %v8976, %v9156
        %v9158 = vsub.f32 1.0, %v9157
        %v9159 = vmul.f32 %v9156, %v9158
        %v9160 = vadd.f32 %v9156, %v9159
        %vm9161 = vweird.f32 %v8976
        %vm9162 = vweird.f32 %v9156
        %vm9163 = vmor %vm9161, %vm9162
        %v9164 = vsel %vm9163, %v9156, %v9160
        %v9165 = vand.u32 2147483647, %v8976
        %vm9166 = vcmp.eq.f32.partialorder %v9165, 8.507059e+37
        %v9167 = vand.u32 %v8976, 2147483648
        %v9168 = vor.u32 1.1754944e-38, %v9167
        %v9169 = vsel %vm9166, %v9168, %v9164
        %v9170 = vmul.f32 1.0, %v9169
        %v9171 = vrcp.pop %v8977
        %v9172 = vmul.f32 %v8977, %v9171
        %v9173 = vsub.f32 1.0, %v9172
        %v9174 = vmul.f32 %v9171, %v9173
        %v9175 = vadd.f32 %v9171, %v9174
        %vm9176 = vweird.f32 %v8977
        %vm9177 = vweird.f32 %v9171
        %vm9178 = vmor %vm9176, %vm9177
        %v9179 = vsel %vm9178, %v9171, %v9175
        %v9180 = vand.u32 2147483647, %v8977
        %vm9181 = vcmp.eq.f32.partialorder %v9180, 8.507059e+37
        %v9182 = vand.u32 %v8977, 2147483648
        %v9183 = vor.u32 1.1754944e-38, %v9182
        %v9184 = vsel %vm9181, %v9183, %v9179
        %v9185 = vmul.f32 1.0, %v9184
        %v9186 = vrcp.pop %v8978
        %v9187 = vmul.f32 %v8978, %v9186
        %v9188 = vsub.f32 1.0, %v9187
        %v9189 = vmul.f32 %v9186, %v9188
        %v9190 = vadd.f32 %v9186, %v9189
        %vm9191 = vweird.f32 %v8978
        %vm9192 = vweird.f32 %v9186
        %vm9193 = vmor %vm9191, %vm9192
        %v9194 = vsel %vm9193, %v9186, %v9190
        %v9195 = vand.u32 2147483647, %v8978
        %vm9196 = vcmp.eq.f32.partialorder %v9195, 8.507059e+37
        %v9197 = vand.u32 %v8978, 2147483648
        %v9198 = vor.u32 1.1754944e-38, %v9197
        %v9199 = vsel %vm9196, %v9198, %v9194
        %v9200 = vmul.f32 1.0, %v9199
        %v9201 = vrcp.pop %v8979
        %v9202 = vmul.f32 %v8979, %v9201
        %v9203 = vsub.f32 1.0, %v9202
        %v9204 = vmul.f32 %v9201, %v9203
        %v9205 = vadd.f32 %v9201, %v9204
        %vm9206 = vweird.f32 %v8979
        %vm9207 = vweird.f32 %v9201
        %vm9208 = vmor %vm9206, %vm9207
        %v9209 = vsel %vm9208, %v9201, %v9205
        %v9210 = vand.u32 2147483647, %v8979
        %vm9211 = vcmp.eq.f32.partialorder %v9210, 8.507059e+37
        %v9212 = vand.u32 %v8979, 2147483648
        %v9213 = vor.u32 1.1754944e-38, %v9212
        %v9214 = vsel %vm9211, %v9213, %v9209
        %v9215 = vmul.f32 1.0, %v9214
        %v9216 = vrcp.pop %v8980
        %v9217 = vmul.f32 %v8980, %v9216
        %v9218 = vsub.f32 1.0, %v9217
        %v9219 = vmul.f32 %v9216, %v9218
        %v9220 = vadd.f32 %v9216, %v9219
        %vm9221 = vweird.f32 %v8980
        %vm9222 = vweird.f32 %v9216
        %vm9223 = vmor %vm9221, %vm9222
        %v9224 = vsel %vm9223, %v9216, %v9220
        %v9225 = vand.u32 2147483647, %v8980
        %vm9226 = vcmp.eq.f32.partialorder %v9225, 8.507059e+37
        %v9227 = vand.u32 %v8980, 2147483648
        %v9228 = vor.u32 1.1754944e-38, %v9227
        %v9229 = vsel %vm9226, %v9228, %v9224
        %v9230 = vmul.f32 1.0, %v9229
        %v9231 = vrcp.pop %v8981
        %v9232 = vmul.f32 %v8981, %v9231
        %v9233 = vsub.f32 1.0, %v9232
        %v9234 = vmul.f32 %v9231, %v9233
        %v9235 = vadd.f32 %v9231, %v9234
        %vm9236 = vweird.f32 %v8981
        %vm9237 = vweird.f32 %v9231
        %vm9238 = vmor %vm9236, %vm9237
        %v9239 = vsel %vm9238, %v9231, %v9235
        %v9240 = vand.u32 2147483647, %v8981
        %vm9241 = vcmp.eq.f32.partialorder %v9240, 8.507059e+37
        %v9242 = vand.u32 %v8981, 2147483648
        %v9243 = vor.u32 1.1754944e-38, %v9242
        %v9244 = vsel %vm9241, %v9243, %v9239
        %v9245 = vmul.f32 1.0, %v9244
        %v9246 = vrcp.pop %v8982
        %v9247 = vmul.f32 %v8982, %v9246
        %v9248 = vsub.f32 1.0, %v9247
        %v9249 = vmul.f32 %v9246, %v9248
        %v9250 = vadd.f32 %v9246, %v9249
        %vm9251 = vweird.f32 %v8982
        %vm9252 = vweird.f32 %v9246
        %vm9253 = vmor %vm9251, %vm9252
        %v9254 = vsel %vm9253, %v9246, %v9250
        %v9255 = vand.u32 2147483647, %v8982
        %vm9256 = vcmp.eq.f32.partialorder %v9255, 8.507059e+37
        %v9257 = vand.u32 %v8982, 2147483648
        %v9258 = vor.u32 1.1754944e-38, %v9257
        %v9259 = vsel %vm9256, %v9258, %v9254
        %v9260 = vmul.f32 1.0, %v9259
        %v9261 = vrcp.pop %v8983
        %v9262 = vmul.f32 %v8983, %v9261
        %v9263 = vsub.f32 1.0, %v9262
        %v9264 = vmul.f32 %v9261, %v9263
        %v9265 = vadd.f32 %v9261, %v9264
        %vm9266 = vweird.f32 %v8983
        %vm9267 = vweird.f32 %v9261
        %vm9268 = vmor %vm9266, %vm9267
        %v9269 = vsel %vm9268, %v9261, %v9265
        %v9270 = vand.u32 2147483647, %v8983
        %vm9271 = vcmp.eq.f32.partialorder %v9270, 8.507059e+37
        %v9272 = vand.u32 %v8983, 2147483648
        %v9273 = vor.u32 1.1754944e-38, %v9272
        %v9274 = vsel %vm9271, %v9273, %v9269
        %v9275 = vmul.f32 1.0, %v9274
        %v9276 = vrcp.pop %v8984
        %v9277 = vmul.f32 %v8984, %v9276
        %v9278 = vsub.f32 1.0, %v9277
        %v9279 = vmul.f32 %v9276, %v9278
        %v9280 = vadd.f32 %v9276, %v9279
        %vm9281 = vweird.f32 %v8984
        %vm9282 = vweird.f32 %v9276
        %vm9283 = vmor %vm9281, %vm9282
        %v9284 = vsel %vm9283, %v9276, %v9280
        %v9285 = vand.u32 2147483647, %v8984
        %vm9286 = vcmp.eq.f32.partialorder %v9285, 8.507059e+37
        %v9287 = vand.u32 %v8984, 2147483648
        %v9288 = vor.u32 1.1754944e-38, %v9287
        %v9289 = vsel %vm9286, %v9288, %v9284
        %v9290 = vmul.f32 1.0, %v9289
        %v9291 = vrcp.pop %v8985
        %v9292 = vmul.f32 %v8985, %v9291
        %v9293 = vsub.f32 1.0, %v9292
        %v9294 = vmul.f32 %v9291, %v9293
        %v9295 = vadd.f32 %v9291, %v9294
        %vm9296 = vweird.f32 %v8985
        %vm9297 = vweird.f32 %v9291
        %vm9298 = vmor %vm9296, %vm9297
        %v9299 = vsel %vm9298, %v9291, %v9295
        %v9300 = vand.u32 2147483647, %v8985
        %vm9301 = vcmp.eq.f32.partialorder %v9300, 8.507059e+37
        %v9302 = vand.u32 %v8985, 2147483648
        %v9303 = vor.u32 1.1754944e-38, %v9302
        %v9304 = vsel %vm9301, %v9303, %v9299
        %v9305 = vmul.f32 1.0, %v9304
        %v9306 = vrcp.pop %v8986
        %v9307 = vmul.f32 %v8986, %v9306
        %v9308 = vsub.f32 1.0, %v9307
        %v9309 = vmul.f32 %v9306, %v9308
        %v9310 = vadd.f32 %v9306, %v9309
        %vm9311 = vweird.f32 %v8986
        %vm9312 = vweird.f32 %v9306
        %vm9313 = vmor %vm9311, %vm9312
        %v9314 = vsel %vm9313, %v9306, %v9310
        %v9315 = vand.u32 2147483647, %v8986
        %vm9316 = vcmp.eq.f32.partialorder %v9315, 8.507059e+37
        %v9317 = vand.u32 %v8986, 2147483648
        %v9318 = vor.u32 1.1754944e-38, %v9317
        %v9319 = vsel %vm9316, %v9318, %v9314
        %v9320 = vmul.f32 1.0, %v9319
        %v9321 = vrcp.pop %v8987
        %v9322 = vmul.f32 %v8987, %v9321
        %v9323 = vsub.f32 1.0, %v9322
        %v9324 = vmul.f32 %v9321, %v9323
        %v9325 = vadd.f32 %v9321, %v9324
        %vm9326 = vweird.f32 %v8987
        %vm9327 = vweird.f32 %v9321
        %vm9328 = vmor %vm9326, %vm9327
        %v9329 = vsel %vm9328, %v9321, %v9325
        %v9330 = vand.u32 2147483647, %v8987
        %vm9331 = vcmp.eq.f32.partialorder %v9330, 8.507059e+37
        %v9332 = vand.u32 %v8987, 2147483648
        %v9333 = vor.u32 1.1754944e-38, %v9332
        %v9334 = vsel %vm9331, %v9333, %v9329
        %v9335 = vmul.f32 1.0, %v9334
        %v9336 = vrcp.pop %v8988
        %v9337 = vmul.f32 %v8988, %v9336
        %v9338 = vsub.f32 1.0, %v9337
        %v9339 = vmul.f32 %v9336, %v9338
        %v9340 = vadd.f32 %v9336, %v9339
        %vm9341 = vweird.f32 %v8988
        %vm9342 = vweird.f32 %v9336
        %vm9343 = vmor %vm9341, %vm9342
        %v9344 = vsel %vm9343, %v9336, %v9340
        %v9345 = vand.u32 2147483647, %v8988
        %vm9346 = vcmp.eq.f32.partialorder %v9345, 8.507059e+37
        %v9347 = vand.u32 %v8988, 2147483648
        %v9348 = vor.u32 1.1754944e-38, %v9347
        %v9349 = vsel %vm9346, %v9348, %v9344
        %v9350 = vmul.f32 1.0, %v9349
        %v9351 = vrcp.pop %v8989
        %v9352 = vmul.f32 %v8989, %v9351
        %v9353 = vsub.f32 1.0, %v9352
        %v9354 = vmul.f32 %v9351, %v9353
        %v9355 = vadd.f32 %v9351, %v9354
        %vm9356 = vweird.f32 %v8989
        %vm9357 = vweird.f32 %v9351
        %vm9358 = vmor %vm9356, %vm9357
        %v9359 = vsel %vm9358, %v9351, %v9355
        %v9360 = vand.u32 2147483647, %v8989
        %vm9361 = vcmp.eq.f32.partialorder %v9360, 8.507059e+37
        %v9362 = vand.u32 %v8989, 2147483648
        %v9363 = vor.u32 1.1754944e-38, %v9362
        %v9364 = vsel %vm9361, %v9363, %v9359
        %v9365 = vmul.f32 1.0, %v9364
        %v9366 = vrcp.pop %v8990
        %v9367 = vmul.f32 %v8990, %v9366
        %v9368 = vsub.f32 1.0, %v9367
        %v9369 = vmul.f32 %v9366, %v9368
        %v9370 = vadd.f32 %v9366, %v9369
        %vm9371 = vweird.f32 %v8990
        %vm9372 = vweird.f32 %v9366
        %vm9373 = vmor %vm9371, %vm9372
        %v9374 = vsel %vm9373, %v9366, %v9370
        %v9375 = vand.u32 2147483647, %v8990
        %vm9376 = vcmp.eq.f32.partialorder %v9375, 8.507059e+37
        %v9377 = vand.u32 %v8990, 2147483648
        %v9378 = vor.u32 1.1754944e-38, %v9377
        %v9379 = vsel %vm9376, %v9378, %v9374
        %v9380 = vmul.f32 1.0, %v9379
        %v9381 = vrcp.pop %v8991
        %v9382 = vmul.f32 %v8991, %v9381
        %v9383 = vsub.f32 1.0, %v9382
        %v9384 = vmul.f32 %v9381, %v9383
        %v9385 = vadd.f32 %v9381, %v9384
        %vm9386 = vweird.f32 %v8991
        %vm9387 = vweird.f32 %v9381
        %vm9388 = vmor %vm9386, %vm9387
        %v9389 = vsel %vm9388, %v9381, %v9385
        %v9390 = vand.u32 2147483647, %v8991
        %vm9391 = vcmp.eq.f32.partialorder %v9390, 8.507059e+37
        %v9392 = vand.u32 %v8991, 2147483648
        %v9393 = vor.u32 1.1754944e-38, %v9392
        %v9394 = vsel %vm9391, %v9393, %v9389
        %v9395 = vmul.f32 1.0, %v9394
        %v9396 = vrcp.pop %v8992
        %v9397 = vmul.f32 %v8992, %v9396
        %v9398 = vsub.f32 1.0, %v9397
        %v9399 = vmul.f32 %v9396, %v9398
        %v9400 = vadd.f32 %v9396, %v9399
        %vm9401 = vweird.f32 %v8992
        %vm9402 = vweird.f32 %v9396
        %vm9403 = vmor %vm9401, %vm9402
        %v9404 = vsel %vm9403, %v9396, %v9400
        %v9405 = vand.u32 2147483647, %v8992
        %vm9406 = vcmp.eq.f32.partialorder %v9405, 8.507059e+37
        %v9407 = vand.u32 %v8992, 2147483648
        %v9408 = vor.u32 1.1754944e-38, %v9407
        %v9409 = vsel %vm9406, %v9408, %v9404
        %v9410 = vmul.f32 1.0, %v9409
        %v9411 = vrcp.pop %v8993
        %v9412 = vmul.f32 %v8993, %v9411
        %v9413 = vsub.f32 1.0, %v9412
        %v9414 = vmul.f32 %v9411, %v9413
        %v9415 = vadd.f32 %v9411, %v9414
        %vm9416 = vweird.f32 %v8993
        %vm9417 = vweird.f32 %v9411
        %vm9418 = vmor %vm9416, %vm9417
        %v9419 = vsel %vm9418, %v9411, %v9415
        %v9420 = vand.u32 2147483647, %v8993
        %vm9421 = vcmp.eq.f32.partialorder %v9420, 8.507059e+37
        %v9422 = vand.u32 %v8993, 2147483648
        %v9423 = vor.u32 1.1754944e-38, %v9422
        %v9424 = vsel %vm9421, %v9423, %v9419
        %v9425 = vmul.f32 1.0, %v9424
        %v9426 = vrcp.pop %v8994
        %v9427 = vmul.f32 %v8994, %v9426
        %v9428 = vsub.f32 1.0, %v9427
        %v9429 = vmul.f32 %v9426, %v9428
        %v9430 = vadd.f32 %v9426, %v9429
        %vm9431 = vweird.f32 %v8994
        %vm9432 = vweird.f32 %v9426
        %vm9433 = vmor %vm9431, %vm9432
        %v9434 = vsel %vm9433, %v9426, %v9430
        %v9435 = vand.u32 2147483647, %v8994
        %vm9436 = vcmp.eq.f32.partialorder %v9435, 8.507059e+37
        %v9437 = vand.u32 %v8994, 2147483648
        %v9438 = vor.u32 1.1754944e-38, %v9437
        %v9439 = vsel %vm9436, %v9438, %v9434
        %v9440 = vmul.f32 1.0, %v9439
        %v9441 = vrcp.pop %v8995
        %v9442 = vmul.f32 %v8995, %v9441
        %v9443 = vsub.f32 1.0, %v9442
        %v9444 = vmul.f32 %v9441, %v9443
        %v9445 = vadd.f32 %v9441, %v9444
        %vm9446 = vweird.f32 %v8995
        %vm9447 = vweird.f32 %v9441
        %vm9448 = vmor %vm9446, %vm9447
        %v9449 = vsel %vm9448, %v9441, %v9445
        %v9450 = vand.u32 2147483647, %v8995
        %vm9451 = vcmp.eq.f32.partialorder %v9450, 8.507059e+37
        %v9452 = vand.u32 %v8995, 2147483648
        %v9453 = vor.u32 1.1754944e-38, %v9452
        %v9454 = vsel %vm9451, %v9453, %v9449
        %v9455 = vmul.f32 1.0, %v9454
        %v9456 = vrcp.pop %v8996
        %v9457 = vmul.f32 %v8996, %v9456
        %v9458 = vsub.f32 1.0, %v9457
        %v9459 = vmul.f32 %v9456, %v9458
        %v9460 = vadd.f32 %v9456, %v9459
        %vm9461 = vweird.f32 %v8996
        %vm9462 = vweird.f32 %v9456
        %vm9463 = vmor %vm9461, %vm9462
        %v9464 = vsel %vm9463, %v9456, %v9460
        %v9465 = vand.u32 2147483647, %v8996
        %vm9466 = vcmp.eq.f32.partialorder %v9465, 8.507059e+37
        %v9467 = vand.u32 %v8996, 2147483648
        %v9468 = vor.u32 1.1754944e-38, %v9467
        %v9469 = vsel %vm9466, %v9468, %v9464
        %v9470 = vmul.f32 1.0, %v9469
        %v9471 = vrcp.pop %v8997
        %v9472 = vmul.f32 %v8997, %v9471
        %v9473 = vsub.f32 1.0, %v9472
        %v9474 = vmul.f32 %v9471, %v9473
        %v9475 = vadd.f32 %v9471, %v9474
        %vm9476 = vweird.f32 %v8997
        %vm9477 = vweird.f32 %v9471
        %vm9478 = vmor %vm9476, %vm9477
        %v9479 = vsel %vm9478, %v9471, %v9475
        %v9480 = vand.u32 2147483647, %v8997
        %vm9481 = vcmp.eq.f32.partialorder %v9480, 8.507059e+37
        %v9482 = vand.u32 %v8997, 2147483648
        %v9483 = vor.u32 1.1754944e-38, %v9482
        %v9484 = vsel %vm9481, %v9483, %v9479
        %v9485 = vmul.f32 1.0, %v9484
        %v9486 = vrcp.pop %v8998
        %v9487 = vmul.f32 %v8998, %v9486
        %v9488 = vsub.f32 1.0, %v9487
        %v9489 = vmul.f32 %v9486, %v9488
        %v9490 = vadd.f32 %v9486, %v9489
        %vm9491 = vweird.f32 %v8998
        %vm9492 = vweird.f32 %v9486
        %vm9493 = vmor %vm9491, %vm9492
        %v9494 = vsel %vm9493, %v9486, %v9490
        %v9495 = vand.u32 2147483647, %v8998
        %vm9496 = vcmp.eq.f32.partialorder %v9495, 8.507059e+37
        %v9497 = vand.u32 %v8998, 2147483648
        %v9498 = vor.u32 1.1754944e-38, %v9497
        %v9499 = vsel %vm9496, %v9498, %v9494
        %v9500 = vmul.f32 1.0, %v9499
        %v9501 = vrcp.pop %v8999
        %v9502 = vmul.f32 %v8999, %v9501
        %v9503 = vsub.f32 1.0, %v9502
        %v9504 = vmul.f32 %v9501, %v9503
        %v9505 = vadd.f32 %v9501, %v9504
        %vm9506 = vweird.f32 %v8999
        %vm9507 = vweird.f32 %v9501
        %vm9508 = vmor %vm9506, %vm9507
        %v9509 = vsel %vm9508, %v9501, %v9505
        %v9510 = vand.u32 2147483647, %v8999
        %vm9511 = vcmp.eq.f32.partialorder %v9510, 8.507059e+37
        %v9512 = vand.u32 %v8999, 2147483648
        %v9513 = vor.u32 1.1754944e-38, %v9512
        %v9514 = vsel %vm9511, %v9513, %v9509
        %v9515 = vmul.f32 1.0, %v9514
        %v9516 = vrcp.pop %v9000
        %v9517 = vmul.f32 %v9000, %v9516
        %v9518 = vsub.f32 1.0, %v9517
        %v9519 = vmul.f32 %v9516, %v9518
        %v9520 = vadd.f32 %v9516, %v9519
        %vm9521 = vweird.f32 %v9000
        %vm9522 = vweird.f32 %v9516
        %vm9523 = vmor %vm9521, %vm9522
        %v9524 = vsel %vm9523, %v9516, %v9520
        %v9525 = vand.u32 2147483647, %v9000
        %vm9526 = vcmp.eq.f32.partialorder %v9525, 8.507059e+37
        %v9527 = vand.u32 %v9000, 2147483648
        %v9528 = vor.u32 1.1754944e-38, %v9527
        %v9529 = vsel %vm9526, %v9528, %v9524
        %v9530 = vmul.f32 1.0, %v9529
        %v9531 = vrcp.pop %v9001
        %v9532 = vmul.f32 %v9001, %v9531
        %v9533 = vsub.f32 1.0, %v9532
        %v9534 = vmul.f32 %v9531, %v9533
        %v9535 = vadd.f32 %v9531, %v9534
        %vm9536 = vweird.f32 %v9001
        %vm9537 = vweird.f32 %v9531
        %vm9538 = vmor %vm9536, %vm9537
        %v9539 = vsel %vm9538, %v9531, %v9535
        %v9540 = vand.u32 2147483647, %v9001
        %vm9541 = vcmp.eq.f32.partialorder %v9540, 8.507059e+37
        %v9542 = vand.u32 %v9001, 2147483648
        %v9543 = vor.u32 1.1754944e-38, %v9542
        %v9544 = vsel %vm9541, %v9543, %v9539
        %v9545 = vmul.f32 1.0, %v9544
        %v9546 = vrcp.pop %v9002
        %v9547 = vmul.f32 %v9002, %v9546
        %v9548 = vsub.f32 1.0, %v9547
        %v9549 = vmul.f32 %v9546, %v9548
        %v9550 = vadd.f32 %v9546, %v9549
        %vm9551 = vweird.f32 %v9002
        %vm9552 = vweird.f32 %v9546
        %vm9553 = vmor %vm9551, %vm9552
        %v9554 = vsel %vm9553, %v9546, %v9550
        %v9555 = vand.u32 2147483647, %v9002
        %vm9556 = vcmp.eq.f32.partialorder %v9555, 8.507059e+37
        %v9557 = vand.u32 %v9002, 2147483648
        %v9558 = vor.u32 1.1754944e-38, %v9557
        %v9559 = vsel %vm9556, %v9558, %v9554
        %v9560 = vmul.f32 1.0, %v9559
        %v9561 = vrcp.pop %v9003
        %v9562 = vmul.f32 %v9003, %v9561
        %v9563 = vsub.f32 1.0, %v9562
        %v9564 = vmul.f32 %v9561, %v9563
        %v9565 = vadd.f32 %v9561, %v9564
        %vm9566 = vweird.f32 %v9003
        %vm9567 = vweird.f32 %v9561
        %vm9568 = vmor %vm9566, %vm9567
        %v9569 = vsel %vm9568, %v9561, %v9565
        %v9570 = vand.u32 2147483647, %v9003
        %vm9571 = vcmp.eq.f32.partialorder %v9570, 8.507059e+37
        %v9572 = vand.u32 %v9003, 2147483648
        %v9573 = vor.u32 1.1754944e-38, %v9572
        %v9574 = vsel %vm9571, %v9573, %v9569
        %v9575 = vmul.f32 1.0, %v9574
        %v9576 = vrcp.pop %v9004
        %v9577 = vmul.f32 %v9004, %v9576
        %v9578 = vsub.f32 1.0, %v9577
        %v9579 = vmul.f32 %v9576, %v9578
        %v9580 = vadd.f32 %v9576, %v9579
        %vm9581 = vweird.f32 %v9004
        %vm9582 = vweird.f32 %v9576
        %vm9583 = vmor %vm9581, %vm9582
        %v9584 = vsel %vm9583, %v9576, %v9580
        %v9585 = vand.u32 2147483647, %v9004
        %vm9586 = vcmp.eq.f32.partialorder %v9585, 8.507059e+37
        %v9587 = vand.u32 %v9004, 2147483648
        %v9588 = vor.u32 1.1754944e-38, %v9587
        %v9589 = vsel %vm9586, %v9588, %v9584
        %v9590 = vmul.f32 1.0, %v9589
        %v9591 = vrcp.pop %v9005
        %v9592 = vmul.f32 %v9005, %v9591
        %v9593 = vsub.f32 1.0, %v9592
        %v9594 = vmul.f32 %v9591, %v9593
        %v9595 = vadd.f32 %v9591, %v9594
        %vm9596 = vweird.f32 %v9005
        %vm9597 = vweird.f32 %v9591
        %vm9598 = vmor %vm9596, %vm9597
        %v9599 = vsel %vm9598, %v9591, %v9595
        %v9600 = vand.u32 2147483647, %v9005
        %vm9601 = vcmp.eq.f32.partialorder %v9600, 8.507059e+37
        %v9602 = vand.u32 %v9005, 2147483648
        %v9603 = vor.u32 1.1754944e-38, %v9602
        %v9604 = vsel %vm9601, %v9603, %v9599
        %v9605 = vmul.f32 1.0, %v9604
        %9607 = vset.pattern.permute.xlu0 0
        %9608 = vperm.xlu0 %9607, %v9020
        %v9609 = vpop.permute.xlu0 %9608
        %9612 = vset.pattern.permute.xlu0 0
        %9613 = vperm.xlu0 %9612, %v9035
        %v9614 = vpop.permute.xlu0 %9613
        %9617 = vset.pattern.permute.xlu0 0
        %9618 = vperm.xlu0 %9617, %v9050
        %v9619 = vpop.permute.xlu0 %9618
        %9622 = vset.pattern.permute.xlu0 0
        %9623 = vperm.xlu0 %9622, %v9065
        %v9624 = vpop.permute.xlu0 %9623
        %9627 = vset.pattern.permute.xlu0 0
        %9628 = vperm.xlu0 %9627, %v9080
        %v9629 = vpop.permute.xlu0 %9628
        %9632 = vset.pattern.permute.xlu0 0
        %9633 = vperm.xlu0 %9632, %v9095
        %v9634 = vpop.permute.xlu0 %9633
        %9637 = vset.pattern.permute.xlu0 0
        %9638 = vperm.xlu0 %9637, %v9110
        %v9639 = vpop.permute.xlu0 %9638
        %9642 = vset.pattern.permute.xlu0 0
        %9643 = vperm.xlu0 %9642, %v9125
        %v9644 = vpop.permute.xlu0 %9643
        %9647 = vset.pattern.permute.xlu0 0
        %9648 = vperm.xlu0 %9647, %v9140
        %v9649 = vpop.permute.xlu0 %9648
        %9652 = vset.pattern.permute.xlu0 0
        %9653 = vperm.xlu0 %9652, %v9155
        %v9654 = vpop.permute.xlu0 %9653
        %9657 = vset.pattern.permute.xlu0 0
        %9658 = vperm.xlu0 %9657, %v9170
        %v9659 = vpop.permute.xlu0 %9658
        %9662 = vset.pattern.permute.xlu0 0
        %9663 = vperm.xlu0 %9662, %v9185
        %v9664 = vpop.permute.xlu0 %9663
        %9667 = vset.pattern.permute.xlu0 0
        %9668 = vperm.xlu0 %9667, %v9200
        %v9669 = vpop.permute.xlu0 %9668
        %9672 = vset.pattern.permute.xlu0 0
        %9673 = vperm.xlu0 %9672, %v9215
        %v9674 = vpop.permute.xlu0 %9673
        %9677 = vset.pattern.permute.xlu0 0
        %9678 = vperm.xlu0 %9677, %v9230
        %v9679 = vpop.permute.xlu0 %9678
        %9682 = vset.pattern.permute.xlu0 0
        %9683 = vperm.xlu0 %9682, %v9245
        %v9684 = vpop.permute.xlu0 %9683
        %9687 = vset.pattern.permute.xlu0 0
        %9688 = vperm.xlu0 %9687, %v9260
        %v9689 = vpop.permute.xlu0 %9688
        %9692 = vset.pattern.permute.xlu0 0
        %9693 = vperm.xlu0 %9692, %v9275
        %v9694 = vpop.permute.xlu0 %9693
        %9697 = vset.pattern.permute.xlu0 0
        %9698 = vperm.xlu0 %9697, %v9290
        %v9699 = vpop.permute.xlu0 %9698
        %9702 = vset.pattern.permute.xlu0 0
        %9703 = vperm.xlu0 %9702, %v9305
        %v9704 = vpop.permute.xlu0 %9703
        %9707 = vset.pattern.permute.xlu0 0
        %9708 = vperm.xlu0 %9707, %v9320
        %v9709 = vpop.permute.xlu0 %9708
        %9712 = vset.pattern.permute.xlu0 0
        %9713 = vperm.xlu0 %9712, %v9335
        %v9714 = vpop.permute.xlu0 %9713
        %9717 = vset.pattern.permute.xlu0 0
        %9718 = vperm.xlu0 %9717, %v9350
        %v9719 = vpop.permute.xlu0 %9718
        %9722 = vset.pattern.permute.xlu0 0
        %9723 = vperm.xlu0 %9722, %v9365
        %v9724 = vpop.permute.xlu0 %9723
        %9727 = vset.pattern.permute.xlu0 0
        %9728 = vperm.xlu0 %9727, %v9380
        %v9729 = vpop.permute.xlu0 %9728
        %9732 = vset.pattern.permute.xlu0 0
        %9733 = vperm.xlu0 %9732, %v9395
        %v9734 = vpop.permute.xlu0 %9733
        %9737 = vset.pattern.permute.xlu0 0
        %9738 = vperm.xlu0 %9737, %v9410
        %v9739 = vpop.permute.xlu0 %9738
        %9742 = vset.pattern.permute.xlu0 0
        %9743 = vperm.xlu0 %9742, %v9425
        %v9744 = vpop.permute.xlu0 %9743
        %9747 = vset.pattern.permute.xlu0 0
        %9748 = vperm.xlu0 %9747, %v9440
        %v9749 = vpop.permute.xlu0 %9748
        %9752 = vset.pattern.permute.xlu0 0
        %9753 = vperm.xlu0 %9752, %v9455
        %v9754 = vpop.permute.xlu0 %9753
        %9757 = vset.pattern.permute.xlu0 0
        %9758 = vperm.xlu0 %9757, %v9470
        %v9759 = vpop.permute.xlu0 %9758
        %9762 = vset.pattern.permute.xlu0 0
        %9763 = vperm.xlu0 %9762, %v9485
        %v9764 = vpop.permute.xlu0 %9763
        %9767 = vset.pattern.permute.xlu0 0
        %9768 = vperm.xlu0 %9767, %v9500
        %v9769 = vpop.permute.xlu0 %9768
        %9772 = vset.pattern.permute.xlu0 0
        %9773 = vperm.xlu0 %9772, %v9515
        %v9774 = vpop.permute.xlu0 %9773
        %9777 = vset.pattern.permute.xlu0 0
        %9778 = vperm.xlu0 %9777, %v9530
        %v9779 = vpop.permute.xlu0 %9778
        %9782 = vset.pattern.permute.xlu0 0
        %9783 = vperm.xlu0 %9782, %v9545
        %v9784 = vpop.permute.xlu0 %9783
        %9787 = vset.pattern.permute.xlu0 0
        %9788 = vperm.xlu0 %9787, %v9560
        %v9789 = vpop.permute.xlu0 %9788
        %9792 = vset.pattern.permute.xlu0 0
        %9793 = vperm.xlu0 %9792, %v9575
        %v9794 = vpop.permute.xlu0 %9793
        %9797 = vset.pattern.permute.xlu0 0
        %9798 = vperm.xlu0 %9797, %v9590
        %v9799 = vpop.permute.xlu0 %9798
        %9802 = vset.pattern.permute.xlu0 0
        %9803 = vperm.xlu0 %9802, %v9605
        %v9804 = vpop.permute.xlu0 %9803
        %v9806 = vmul.f32 %v8360, %v9609
        %v9807 = vmul.f32 %v8361, %v9614
        %v9808 = vmul.f32 %v8362, %v9619
        %v9809 = vmul.f32 %v8363, %v9624
        %v9810 = vmul.f32 %v8364, %v9629
        %v9811 = vmul.f32 %v8365, %v9634
        %v9812 = vmul.f32 %v8366, %v9639
        %v9813 = vmul.f32 %v8367, %v9644
        %v9814 = vmul.f32 %v8368, %v9649
        %v9815 = vmul.f32 %v8369, %v9654
        %v9816 = vmul.f32 %v8370, %v9659
        %v9817 = vmul.f32 %v8371, %v9664
        %v9818 = vmul.f32 %v8372, %v9669
        %v9819 = vmul.f32 %v8373, %v9674
        %v9820 = vmul.f32 %v8374, %v9679
        %v9821 = vmul.f32 %v8375, %v9684
        %v9822 = vmul.f32 %v8376, %v9689
        %v9823 = vmul.f32 %v8377, %v9694
        %v9824 = vmul.f32 %v8378, %v9699
        %v9825 = vmul.f32 %v8379, %v9704
        %v9826 = vmul.f32 %v8380, %v9709
        %v9827 = vmul.f32 %v8381, %v9714
        %v9828 = vmul.f32 %v8382, %v9719
        %v9829 = vmul.f32 %v8383, %v9724
        %v9830 = vmul.f32 %v8384, %v9729
        %v9831 = vmul.f32 %v8385, %v9734
        %v9832 = vmul.f32 %v8386, %v9739
        %v9833 = vmul.f32 %v8387, %v9744
        %v9834 = vmul.f32 %v8388, %v9749
        %v9835 = vmul.f32 %v8389, %v9754
        %v9836 = vmul.f32 %v8390, %v9759
        %v9837 = vmul.f32 %v8391, %v9764
        %v9838 = vmul.f32 %v8392, %v9769
        %v9839 = vmul.f32 %v8393, %v9774
        %v9840 = vmul.f32 %v8394, %v9779
        %v9841 = vmul.f32 %v8395, %v9784
        %v9842 = vmul.f32 %v8396, %v9789
        %v9843 = vmul.f32 %v8397, %v9794
        %v9844 = vmul.f32 %v8398, %v9799
        %v9845 = vmul.f32 %v8399, %v9804
        %v9846 = vadd.f32 %v9806, %v9807
        %v9847 = vadd.f32 %v9846, %v9808
        %v9848 = vadd.f32 %v9847, %v9809
        %v9849 = vadd.f32 %v9848, %v9810
        %v9850 = vadd.f32 %v9849, %v9811
        %v9851 = vadd.f32 %v9850, %v9812
        %v9852 = vadd.f32 %v9851, %v9813
        %v9853 = vadd.f32 %v9852, %v9814
        %v9854 = vadd.f32 %v9853, %v9815
        %v9855 = vadd.f32 %v9854, %v9816
        %v9856 = vadd.f32 %v9855, %v9817
        %v9857 = vadd.f32 %v9856, %v9818
        %v9858 = vadd.f32 %v9857, %v9819
        %v9859 = vadd.f32 %v9858, %v9820
        %v9860 = vadd.f32 %v9859, %v9821
        %v9861 = vadd.f32 %v9860, %v9822
        %v9862 = vadd.f32 %v9861, %v9823
        %v9863 = vadd.f32 %v9862, %v9824
        %v9864 = vadd.f32 %v9863, %v9825
        %v9865 = vadd.f32 %v9864, %v9826
        %v9866 = vadd.f32 %v9865, %v9827
        %v9867 = vadd.f32 %v9866, %v9828
        %v9868 = vadd.f32 %v9867, %v9829
        %v9869 = vadd.f32 %v9868, %v9830
        %v9870 = vadd.f32 %v9869, %v9831
        %v9871 = vadd.f32 %v9870, %v9832
        %v9872 = vadd.f32 %v9871, %v9833
        %v9873 = vadd.f32 %v9872, %v9834
        %v9874 = vadd.f32 %v9873, %v9835
        %v9875 = vadd.f32 %v9874, %v9836
        %v9876 = vadd.f32 %v9875, %v9837
        %v9877 = vadd.f32 %v9876, %v9838
        %v9878 = vadd.f32 %v9877, %v9839
        %v9879 = vadd.f32 %v9878, %v9840
        %v9880 = vadd.f32 %v9879, %v9841
        %v9881 = vadd.f32 %v9880, %v9842
        %v9882 = vadd.f32 %v9881, %v9843
        %v9883 = vadd.f32 %v9882, %v9844
        %v9884 = vadd.f32 %v9883, %v9845
        %v9885 = vrot.slane %v9884, 4
        %v9886 = vadd.f32 %v9884, %v9885
        %v9887 = vrot.slane %v9886, 2
        %v9888 = vadd.f32 %v9886, %v9887
        %v9889 = vrot.slane %v9888, 1
        %v9890 = vadd.f32 %v9888, %v9889
        %v9891 = vmul.f32 %v9890, 0.003125
        %9892 = vst [vmem:[%s398] sm:$0x1] %v9891
        %s9893 = sand.u32 %s272, 1
        %s9894 = scalar_lea.sflag [#allocation5], %s9893
        %s9895 = sand.u32 %s272, 1
        %s9896 = scalar_lea.vmem [#allocation6], %s9895
        // Predicated region
        $region69: #{tpu_custom_call.1} parent=63 // pred_check
          %p9897 = pneg %p282
        $region70: #{tpu_custom_call.1} parent=63 // pred_check_branch
          %9899 = sbr.rel (%p9897) target = $region72
        $region71: #{tpu_custom_call.1} parent=63 // pred_region
          %9901 = vsyncadd %s9894, 0
          %s9902 = scalar_lea.hbm %s11, %s28
          %s9904 = sshll.u32 %s9896, 4
          %s9905 = int_to_ptr.vmem [resolvable:$true] %s9904
          %s9906 = sshll.u32 %s9902, 4
          %s9907 = int_to_ptr.hbm [resolvable:$true] %s9906
          %9909 = dma.vmem_to_hbm [thread:$0]  %s9905, 16, %s9907, %s9894
        $region72: #{tpu_custom_call.1} parent=63 // pred_fallthru
          _
      $region64: #{tpu_custom_call.1} parent=5 // pred_fallthru
        _
      %p9910 = scmp.le.s32.totalorder 2, %s23
      // Predicated region
      $region73: #{tpu_custom_call.1} parent=5 // pred_check
        %p9911 = pneg %p9910
      $region74: #{tpu_custom_call.1} parent=5 // pred_check_branch
        %9913 = sbr.rel (%p9911) target = $region76
      $region75: #{tpu_custom_call.1} parent=5 // pred_region
        %s9914 = ssub.s32 %s23, 2
        // Predicated region
        $region77: #{tpu_custom_call.1} parent=75 // pred_check
          %p9915 = pneg %p288
        $region78: #{tpu_custom_call.1} parent=75 // pred_check_branch
          %9917 = sbr.rel (%p9915) target = $region80
        $region79: #{tpu_custom_call.1} parent=75 // pred_region
          %s9918 = sand.u32 %s273, 1
          %s9919 = scalar_lea.sflag [#allocation5], %s9918
          %s9920 = sand.u32 %s273, 1
          %s9921 = scalar_lea.vmem [#allocation6], %s9920
          %9923 = dma.done %s9919, 16
        $region80: #{tpu_custom_call.1} parent=75 // pred_fallthru
          _
      $region76: #{tpu_custom_call.1} parent=5 // pred_fallthru
        _
    $region6: #{tpu_custom_call.1} parent=1 // loop_footer
      %s27 = sadd.s32 1, %s23
    $region7: #{tpu_custom_call.1} parent=1 // loop_footer_branch
      %22 = sbr.rel target = $region3
    $region8: #{tpu_custom_call.1} parent=1 // loop_exit
      _
    %9924 = vsyncpa [#allocation4], 1
    %s9925 = scalar_lea.sflag [#allocation4], 1
    %9926 = vsyncpa %s9925, 1
    %9927 = vsyncpa [#allocation5], 1
    %s9928 = scalar_lea.sflag [#allocation5], 1
    %9929 = vsyncpa %s9928, 1

</llo_original>
